<compile_context>
chip_gen: v5e
topology: v5e:2x2
jax: 0.10.0
libtpu: 0.0.40
codegen_flags: <defaults>
</compile_context>

<pallas_src>
import math

import jax
import jax.numpy as jnp
from jax.experimental import pallas as pl
from jax.experimental.pallas import tpu as pltpu


IN = 784        # fc1 input / fc4 output width
H = 400         # real hidden width of fc1 / fc3
HP = 512        # lane-aligned padded hidden width (4 * 128)
CDIM = 10       # conditioning-vector width (13 - 3)
ZP = 128        # lane-dense padded z width (real z lives in lanes 0:3)


# ------------------------------ Pallas kernel ------------------------------

def _vae_fused_kernel(x_ref, c_ref, w1_ref, b1_ref, w2_ref, b2_ref,
                      w3c_ref, w3z_ref, b3_ref, w4_ref, b4_ref,
                      x1_ref, x2_ref, x3_ref, z_ref):
    f32 = jnp.float32
    wdt = w1_ref.dtype

    # ---- encoders: all three fc1's fused into one (B,784)@(784,1536) ------
    h = jnp.dot(x_ref[...], w1_ref[...], preferred_element_type=f32)
    h = jnp.maximum(h + b1_ref[...], 0.0)                    # (B, 3*HP) f32
    h_lo = h.astype(wdt)

    z_small = []
    for e in range(3):
        he = h_lo[:, e * HP:(e + 1) * HP]                    # lane-aligned slice
        # fc21|fc22 packed into one (HP, 256) weight: fc21 -> lanes 0:3,
        # fc22 -> lanes 128:131, remaining lanes are exact zeros.
        ns = jnp.dot(he, w2_ref[e], preferred_element_type=f32) + b2_ref[e]
        n = jnp.maximum(ns[:, :ZP], 0.0)                     # relu(fc21)
        s = jax.nn.sigmoid(ns[:, ZP:])                       # sigmoid(fc22)
        p = n * s                                            # zeros beyond lane 3
        sq = jnp.sum(p * p, axis=1, keepdims=True)
        # F.normalize: p / max(||p||, 1e-12) == p * rsqrt(max(||p||^2, 1e-24))
        zp = p * jax.lax.rsqrt(jnp.maximum(sq, 1e-24))
        z_ref[e] = zp                                        # lane-dense store
        z_small.append(zp[:, :3].astype(wdt))                # (B,3) for decoders

    # ---- decoders: the three fc3's fused; c1/c2 are prefixes of c3, so the
    #      concatenation is folded into zero-padded stacked weight blocks. ----
    hd = (jnp.dot(c_ref[...], w3c_ref[...], preferred_element_type=f32)
          + jnp.dot(z_small[0], w3z_ref[0], preferred_element_type=f32)
          + jnp.dot(z_small[1], w3z_ref[1], preferred_element_type=f32)
          + jnp.dot(z_small[2], w3z_ref[2], preferred_element_type=f32))
    hd = jnp.maximum(hd + b3_ref[...], 0.0)                  # (B, 3*HP) f32
    hd_lo = hd.astype(wdt)

    # fc4 per decoder (distinct weights) — still inside the same fused kernel.
    for d, o_ref in enumerate((x1_ref, x2_ref, x3_ref)):
        hdd = hd_lo[:, d * HP:(d + 1) * HP]
        o = jnp.dot(hdd, w4_ref[d], preferred_element_type=f32) + b4_ref[d]
        o_ref[...] = jax.nn.sigmoid(o)


# ------------------------------ Wrapper -------------------------------------

def _vmem_spec():
    return pl.BlockSpec(memory_space=pltpu.MemorySpace.VMEM)


def _nbytes(shape, dtype):
    return math.prod(shape) * jnp.dtype(dtype).itemsize


@jax.jit
def vae_forward(packed, x, c):
    wdt = packed["W1"].dtype
    x2d = x.reshape((-1, IN)).astype(wdt)
    cb = c.astype(wdt)
    B = x2d.shape[0]

    inputs = (x2d, cb, packed["W1"], packed["b1"], packed["W2"], packed["b2"],
              packed["W3c"], packed["W3z"], packed["b3"], packed["W4"],
              packed["b4"])
    out_shape = (
        jax.ShapeDtypeStruct((B, IN), jnp.float32),
        jax.ShapeDtypeStruct((B, IN), jnp.float32),
        jax.ShapeDtypeStruct((B, IN), jnp.float32),
        jax.ShapeDtypeStruct((3, B, ZP), jnp.float32),
    )

    # Advisory cost estimate so XLA schedules the custom call sensibly.
    flops = 2 * B * (IN * 3 * HP          # fused fc1
                     + 3 * HP * 2 * ZP    # 3x packed fc21|fc22
                     + CDIM * 3 * HP      # fused fc3, c part
                     + 3 * 3 * 3 * HP     # fused fc3, z parts
                     + 3 * HP * IN)       # 3x fc4
    transcendentals = B * 3 * (ZP + IN) + 3 * B
    bytes_accessed = (sum(_nbytes(a.shape, a.dtype) for a in inputs)
                      + sum(_nbytes(s.shape, s.dtype) for s in out_shape))

    x1, x2, x3, z_all = pl.pallas_call(
        _vae_fused_kernel,
        out_shape=out_shape,
        in_specs=[_vmem_spec() for _ in inputs],
        out_specs=tuple(_vmem_spec() for _ in out_shape),
        compiler_params=pltpu.CompilerParams(
            vmem_limit_bytes=32 * 1024 * 1024),
        cost_estimate=pl.CostEstimate(flops=flops,
                                      transcendentals=transcendentals,
                                      bytes_accessed=bytes_accessed),
    )(*inputs)

    z1 = z_all[0, :, :3]
    z2 = z_all[1, :, :3]
    z3 = z_all[2, :, :3]
    return x1, x2, x3, z1, z2, z3


# ------------------------------ Parameters ----------------------------------

def _linear_init(key, fan_in, fan_out):
    """PyTorch nn.Linear default init; weight stored as [in, out]."""
    kw, kb = jax.random.split(key)
    bound = 1.0 / jnp.sqrt(jnp.float32(fan_in))
    w = jax.random.uniform(kw, (fan_in, fan_out), jnp.float32, -bound, bound)
    b = jax.random.uniform(kb, (fan_out,), jnp.float32, -bound, bound)
    return w, b


def make_raw_params(key):
    ks = jax.random.split(key, 6)
    encoders = []
    for i in range(3):
        k1, k2, k3 = jax.random.split(ks[i], 3)
        w1, b1 = _linear_init(k1, IN, H)
        w21, b21 = _linear_init(k2, H, 3)
        w22, b22 = _linear_init(k3, H, 3)
        encoders.append(dict(w1=w1, b1=b1, w21=w21, b21=b21, w22=w22, b22=b22))
    decoders = []
    for i, cdim in enumerate((13, 16, 19)):
        k3, k4 = jax.random.split(ks[3 + i])
        w3, b3 = _linear_init(k3, cdim, H)
        w4, b4 = _linear_init(k4, H, IN)
        decoders.append(dict(w3=w3, b3=b3, w4=w4, b4=b4))
    return encoders, decoders


def pack_params(encoders, decoders, weight_dtype=jnp.bfloat16):
    """Pack per-module weights into fused, lane-aligned, zero-padded slabs."""
    W1 = jnp.zeros((IN, 3 * HP), jnp.float32)
    b1 = jnp.zeros((1, 3 * HP), jnp.float32)
    W2 = jnp.zeros((3, HP, 2 * ZP), jnp.float32)
    b2 = jnp.zeros((3, 1, 2 * ZP), jnp.float32)
    for e, p in enumerate(encoders):
        W1 = W1.at[:, e * HP:e * HP + H].set(p["w1"])
        b1 = b1.at[0, e * HP:e * HP + H].set(p["b1"])
        W2 = W2.at[e, :H, 0:3].set(p["w21"])
        W2 = W2.at[e, :H, ZP:ZP + 3].set(p["w22"])
        b2 = b2.at[e, 0, 0:3].set(p["b21"])
        b2 = b2.at[e, 0, ZP:ZP + 3].set(p["b22"])

    W3c = jnp.zeros((CDIM, 3 * HP), jnp.float32)
    W3z = jnp.zeros((3, 3, 3 * HP), jnp.float32)
    b3 = jnp.zeros((1, 3 * HP), jnp.float32)
    W4 = jnp.zeros((3, HP, IN), jnp.float32)
    b4 = jnp.zeros((3, 1, IN), jnp.float32)
    for d, p in enumerate(decoders):
        cdim = p["w3"].shape[0]                  # 13 / 16 / 19
        W3c = W3c.at[:, d * HP:d * HP + H].set(p["w3"][:CDIM])
        for e in range(3):
            lo = CDIM + 3 * e
            if lo + 3 <= cdim:                   # z_{e+1} feeds decoder d iff e <= d
                W3z = W3z.at[e, :, d * HP:d * HP + H].set(p["w3"][lo:lo + 3])
        b3 = b3.at[0, d * HP:d * HP + H].set(p["b3"])
        W4 = W4.at[d, :H, :].set(p["w4"])
        b4 = b4.at[d, 0, :].set(p["b4"])

    return dict(W1=W1.astype(weight_dtype), b1=b1,
                W2=W2.astype(weight_dtype), b2=b2,
                W3c=W3c.astype(weight_dtype), W3z=W3z.astype(weight_dtype),
                b3=b3, W4=W4.astype(weight_dtype), b4=b4)


# ------------------------------ Reference (pure JAX) -------------------------

def vae_reference(encoders, decoders, x, c, weight_dtype=jnp.bfloat16):
    """Unfused mirror of the original module, same bf16/f32 numeric path."""
    f32 = jnp.float32
    x2d = x.reshape((-1, IN)).astype(weight_dtype)
    cb = c.astype(weight_dtype)
    zs = []
    for p in encoders:
        h = jnp.maximum(jnp.dot(x2d, p["w1"].astype(weight_dtype),
                                preferred_element_type=f32) + p["b1"], 0.0)
        hb = h.astype(weight_dtype)
        n = jnp.maximum(jnp.dot(hb, p["w21"].astype(weight_dtype),
                                preferred_element_type=f32) + p["b21"], 0.0)
        s = jax.nn.sigmoid(jnp.dot(hb, p["w22"].astype(weight_dtype),
                                   preferred_element_type=f32) + p["b22"])
        q = n * s
        z = q * jax.lax.rsqrt(
            jnp.maximum(jnp.sum(q * q, axis=1, keepdims=True), 1e-24))
        zs.append(z)
    outs = []
    feats = [cb]
    for d, p in enumerate(decoders):
        feats.append(zs[d].astype(weight_dtype))
        cz = jnp.concatenate(feats, axis=1)
        h = jnp.maximum(jnp.dot(cz, p["w3"].astype(weight_dtype),
                                preferred_element_type=f32) + p["b3"], 0.0)
        o = jax.nn.sigmoid(jnp.dot(h.astype(weight_dtype),
                                   p["w4"].astype(weight_dtype),
                                   preferred_element_type=f32) + p["b4"])
        outs.append(o)
    return outs[0], outs[1], outs[2], zs[0], zs[1], zs[2]


# ------------------------------ Main -----------------------------------------

if __name__ == "__main__":
    key = jax.random.PRNGKey(0)
    kp, kx, kc = jax.random.split(key, 3)

    encoders, decoders = make_raw_params(kp)
    packed = pack_params(encoders, decoders)

    B = 4
    # x consistent with the module's x.view(-1, 784): MNIST-like (B, 1, 28, 28)
    x = jax.random.normal(kx, (B, 1, 28, 28), jnp.float32)
    # c has 10 features so c_dim + 3 = 13 (d1), +3 = 16 (d2), +3 = 19 (d3)
    c = jax.random.normal(kc, (B, CDIM), jnp.float32)

    outs = jax.block_until_ready(vae_forward(packed, x, c))
    x1, x2, x3, z1, z2, z3 = outs

    assert x1.shape == (B, IN) and x2.shape == (B, IN) and x3.shape == (B, IN)
    assert z1.shape == (B, 3) and z2.shape == (B, 3) and z3.shape == (B, 3)

    # Each z row is L2-normalized (or exactly zero when relu kills all 3 lanes).
    for z in (z1, z2, z3):
        nrm = jnp.linalg.norm(z, axis=1)
        assert bool(jnp.all((jnp.abs(nrm - 1.0) < 1e-3) | (nrm < 1e-3)))

    # Cross-check the fused kernel against the unfused pure-JAX reference
    # (same bf16-weights / f32-accumulate path; tolerance covers op-order noise).
    ref = jax.block_until_ready(vae_reference(encoders, decoders, x, c))
    for got, want in zip(outs, ref):
        assert got.shape == want.shape
        assert bool(jnp.allclose(got, want, atol=2e-2, rtol=2e-2)), (
            float(jnp.max(jnp.abs(got - want))))

    print("KERNEL_OK")
</pallas_src>

<mosaic_0001>
module attributes {stable_mosaic.version = 11 : i64} {
  func.func @_vae_fused_kernel(%arg0: memref<4x784xbf16, #tpu.memory_space<vmem>>, %arg1: memref<4x10xbf16, #tpu.memory_space<vmem>>, %arg2: memref<784x1536xbf16, #tpu.memory_space<vmem>>, %arg3: memref<1x1536xf32, #tpu.memory_space<vmem>>, %arg4: memref<3x512x256xbf16, #tpu.memory_space<vmem>>, %arg5: memref<3x1x256xf32, #tpu.memory_space<vmem>>, %arg6: memref<10x1536xbf16, #tpu.memory_space<vmem>>, %arg7: memref<3x3x1536xbf16, #tpu.memory_space<vmem>>, %arg8: memref<1x1536xf32, #tpu.memory_space<vmem>>, %arg9: memref<3x512x784xbf16, #tpu.memory_space<vmem>>, %arg10: memref<3x1x784xf32, #tpu.memory_space<vmem>>, %arg11: memref<4x784xf32, #tpu.memory_space<vmem>>, %arg12: memref<4x784xf32, #tpu.memory_space<vmem>>, %arg13: memref<4x784xf32, #tpu.memory_space<vmem>>, %arg14: memref<3x4x128xf32, #tpu.memory_space<vmem>>) attributes {dimension_semantics = [], scalar_prefetch = 0 : i64, scratch_operands = 0 : i64, tpu.core_type = #tpu.core_type<tc>} {
    %c0 = arith.constant 0 : index
    %c0_0 = arith.constant 0 : index
    %0 = vector.load %arg0[%c0, %c0_0] : memref<4x784xbf16, #tpu.memory_space<vmem>>, vector<4x784xbf16>
    %c0_1 = arith.constant 0 : index
    %c0_2 = arith.constant 0 : index
    %1 = vector.load %arg2[%c0_1, %c0_2] : memref<784x1536xbf16, #tpu.memory_space<vmem>>, vector<784x1536xbf16>
    %cst = arith.constant dense<0.000000e+00> : vector<4x1536xf32>
    %2 = tpu.matmul %0, %1, %cst {dimension_numbers = #tpu.dot_dimension_numbers<[1], [0], [0], [1], [0, 0, 1, 1], [], []>} : vector<4x784xbf16>, vector<784x1536xbf16>, vector<4x1536xf32> -> vector<4x1536xf32>
    %c0_3 = arith.constant 0 : index
    %c0_4 = arith.constant 0 : index
    %3 = vector.load %arg3[%c0_3, %c0_4] : memref<1x1536xf32, #tpu.memory_space<vmem>>, vector<1x1536xf32>
    %4 = vector.broadcast %3 : vector<1x1536xf32> to vector<4x1536xf32>
    %5 = arith.addf %2, %4 : vector<4x1536xf32>
    %cst_5 = arith.constant 0.000000e+00 : f32
    %6 = vector.broadcast %cst_5 : f32 to vector<4x1536xf32>
    %7 = arith.maximumf %5, %6 : vector<4x1536xf32>
    %8 = arith.truncf %7 : vector<4x1536xf32> to vector<4x1536xbf16>
    %9 = vector.extract_strided_slice %8 {offsets = [0, 0], sizes = [4, 512], strides = [1, 1]} : vector<4x1536xbf16> to vector<4x512xbf16>
    %c0_6 = arith.constant 0 : index
    %c0_7 = arith.constant 0 : index
    %c0_8 = arith.constant 0 : index
    %10 = vector.load %arg4[%c0_6, %c0_7, %c0_8] : memref<3x512x256xbf16, #tpu.memory_space<vmem>>, vector<1x512x256xbf16>
    %11 = vector.shape_cast %10 : vector<1x512x256xbf16> to vector<512x256xbf16>
    %cst_9 = arith.constant dense<0.000000e+00> : vector<4x256xf32>
    %12 = tpu.matmul %9, %11, %cst_9 {dimension_numbers = #tpu.dot_dimension_numbers<[1], [0], [0], [1], [0, 0, 1, 1], [], []>} : vector<4x512xbf16>, vector<512x256xbf16>, vector<4x256xf32> -> vector<4x256xf32>
    %c0_10 = arith.constant 0 : index
    %c0_11 = arith.constant 0 : index
    %c0_12 = arith.constant 0 : index
    %13 = vector.load %arg5[%c0_10, %c0_11, %c0_12] : memref<3x1x256xf32, #tpu.memory_space<vmem>>, vector<1x1x256xf32>
    %14 = vector.shape_cast %13 : vector<1x1x256xf32> to vector<1x256xf32>
    %15 = vector.broadcast %14 : vector<1x256xf32> to vector<4x256xf32>
    %16 = arith.addf %12, %15 : vector<4x256xf32>
    %17 = vector.extract_strided_slice %16 {offsets = [0, 0], sizes = [4, 128], strides = [1, 1]} : vector<4x256xf32> to vector<4x128xf32>
    %cst_13 = arith.constant 0.000000e+00 : f32
    %18 = vector.broadcast %cst_13 : f32 to vector<4x128xf32>
    %19 = arith.maximumf %17, %18 : vector<4x128xf32>
    %20 = vector.extract_strided_slice %16 {offsets = [0, 128], sizes = [4, 128], strides = [1, 1]} : vector<4x256xf32> to vector<4x128xf32>
    %21 = arith.negf %20 : vector<4x128xf32>
    %22 = math.exp %21 : vector<4x128xf32>
    %cst_14 = arith.constant 1.000000e+00 : f32
    %23 = vector.broadcast %cst_14 : f32 to vector<4x128xf32>
    %24 = arith.addf %23, %22 : vector<4x128xf32>
    %25 = arith.divf %23, %24 : vector<4x128xf32>
    %26 = arith.mulf %19, %25 : vector<4x128xf32>
    %27 = arith.mulf %26, %26 : vector<4x128xf32>
    %cst_15 = arith.constant dense<0.000000e+00> : vector<4xf32>
    %28 = vector.multi_reduction <add>, %27, %cst_15 [1] : vector<4x128xf32> to vector<4xf32>
    %29 = vector.shape_cast %28 : vector<4xf32> to vector<4x1xf32>
    %cst_16 = arith.constant 1.000000e-24 : f32
    %30 = vector.broadcast %cst_16 : f32 to vector<4x1xf32>
    %31 = arith.maximumf %29, %30 : vector<4x1xf32>
    %32 = math.rsqrt %31 : vector<4x1xf32>
    %33 = vector.broadcast %32 : vector<4x1xf32> to vector<4x128xf32>
    %34 = arith.mulf %26, %33 : vector<4x128xf32>
    %c0_17 = arith.constant 0 : index
    %c0_18 = arith.constant 0 : index
    %c0_19 = arith.constant 0 : index
    %35 = vector.load %arg14[%c0_17, %c0_18, %c0_19] : memref<3x4x128xf32, #tpu.memory_space<vmem>>, vector<1x4x128xf32>
    %36 = vector.shape_cast %35 : vector<1x4x128xf32> to vector<4x128xf32>
    %37 = vector.shape_cast %34 : vector<4x128xf32> to vector<1x4x128xf32>
    tpu.vector_store %arg14[%c0_17, %c0_18, %c0_19], %37 {strides = array<i32>} : memref<3x4x128xf32, #tpu.memory_space<vmem>>, vector<1x4x128xf32>,
    %38 = vector.extract_strided_slice %34 {offsets = [0, 0], sizes = [4, 3], strides = [1, 1]} : vector<4x128xf32> to vector<4x3xf32>
    %39 = arith.truncf %38 : vector<4x3xf32> to vector<4x3xbf16>
    %40 = vector.extract_strided_slice %8 {offsets = [0, 512], sizes = [4, 512], strides = [1, 1]} : vector<4x1536xbf16> to vector<4x512xbf16>
    %c1 = arith.constant 1 : index
    %c0_20 = arith.constant 0 : index
    %c0_21 = arith.constant 0 : index
    %41 = vector.load %arg4[%c1, %c0_20, %c0_21] : memref<3x512x256xbf16, #tpu.memory_space<vmem>>, vector<1x512x256xbf16>
    %42 = vector.shape_cast %41 : vector<1x512x256xbf16> to vector<512x256xbf16>
    %cst_22 = arith.constant dense<0.000000e+00> : vector<4x256xf32>
    %43 = tpu.matmul %40, %42, %cst_22 {dimension_numbers = #tpu.dot_dimension_numbers<[1], [0], [0], [1], [0, 0, 1, 1], [], []>} : vector<4x512xbf16>, vector<512x256xbf16>, vector<4x256xf32> -> vector<4x256xf32>
    %c1_23 = arith.constant 1 : index
    %c0_24 = arith.constant 0 : index
    %c0_25 = arith.constant 0 : index
    %44 = vector.load %arg5[%c1_23, %c0_24, %c0_25] : memref<3x1x256xf32, #tpu.memory_space<vmem>>, vector<1x1x256xf32>
    %45 = vector.shape_cast %44 : vector<1x1x256xf32> to vector<1x256xf32>
    %46 = vector.broadcast %45 : vector<1x256xf32> to vector<4x256xf32>
    %47 = arith.addf %43, %46 : vector<4x256xf32>
    %48 = vector.extract_strided_slice %47 {offsets = [0, 0], sizes = [4, 128], strides = [1, 1]} : vector<4x256xf32> to vector<4x128xf32>
    %cst_26 = arith.constant 0.000000e+00 : f32
    %49 = vector.broadcast %cst_26 : f32 to vector<4x128xf32>
    %50 = arith.maximumf %48, %49 : vector<4x128xf32>
    %51 = vector.extract_strided_slice %47 {offsets = [0, 128], sizes = [4, 128], strides = [1, 1]} : vector<4x256xf32> to vector<4x128xf32>
    %52 = arith.negf %51 : vector<4x128xf32>
    %53 = math.exp %52 : vector<4x128xf32>
    %cst_27 = arith.constant 1.000000e+00 : f32
    %54 = vector.broadcast %cst_27 : f32 to vector<4x128xf32>
    %55 = arith.addf %54, %53 : vector<4x128xf32>
    %56 = arith.divf %54, %55 : vector<4x128xf32>
    %57 = arith.mulf %50, %56 : vector<4x128xf32>
    %58 = arith.mulf %57, %57 : vector<4x128xf32>
    %cst_28 = arith.constant dense<0.000000e+00> : vector<4xf32>
    %59 = vector.multi_reduction <add>, %58, %cst_28 [1] : vector<4x128xf32> to vector<4xf32>
    %60 = vector.shape_cast %59 : vector<4xf32> to vector<4x1xf32>
    %cst_29 = arith.constant 1.000000e-24 : f32
    %61 = vector.broadcast %cst_29 : f32 to vector<4x1xf32>
    %62 = arith.maximumf %60, %61 : vector<4x1xf32>
    %63 = math.rsqrt %62 : vector<4x1xf32>
    %64 = vector.broadcast %63 : vector<4x1xf32> to vector<4x128xf32>
    %65 = arith.mulf %57, %64 : vector<4x128xf32>
    %c1_30 = arith.constant 1 : index
    %c0_31 = arith.constant 0 : index
    %c0_32 = arith.constant 0 : index
    %66 = vector.load %arg14[%c1_30, %c0_31, %c0_32] : memref<3x4x128xf32, #tpu.memory_space<vmem>>, vector<1x4x128xf32>
    %67 = vector.shape_cast %66 : vector<1x4x128xf32> to vector<4x128xf32>
    %68 = vector.shape_cast %65 : vector<4x128xf32> to vector<1x4x128xf32>
    tpu.vector_store %arg14[%c1_30, %c0_31, %c0_32], %68 {strides = array<i32>} : memref<3x4x128xf32, #tpu.memory_space<vmem>>, vector<1x4x128xf32>,
    %69 = vector.extract_strided_slice %65 {offsets = [0, 0], sizes = [4, 3], strides = [1, 1]} : vector<4x128xf32> to vector<4x3xf32>
    %70 = arith.truncf %69 : vector<4x3xf32> to vector<4x3xbf16>
    %71 = vector.extract_strided_slice %8 {offsets = [0, 1024], sizes = [4, 512], strides = [1, 1]} : vector<4x1536xbf16> to vector<4x512xbf16>
    %c2 = arith.constant 2 : index
    %c0_33 = arith.constant 0 : index
    %c0_34 = arith.constant 0 : index
    %72 = vector.load %arg4[%c2, %c0_33, %c0_34] : memref<3x512x256xbf16, #tpu.memory_space<vmem>>, vector<1x512x256xbf16>
    %73 = vector.shape_cast %72 : vector<1x512x256xbf16> to vector<512x256xbf16>
    %cst_35 = arith.constant dense<0.000000e+00> : vector<4x256xf32>
    %74 = tpu.matmul %71, %73, %cst_35 {dimension_numbers = #tpu.dot_dimension_numbers<[1], [0], [0], [1], [0, 0, 1, 1], [], []>} : vector<4x512xbf16>, vector<512x256xbf16>, vector<4x256xf32> -> vector<4x256xf32>
    %c2_36 = arith.constant 2 : index
    %c0_37 = arith.constant 0 : index
    %c0_38 = arith.constant 0 : index
    %75 = vector.load %arg5[%c2_36, %c0_37, %c0_38] : memref<3x1x256xf32, #tpu.memory_space<vmem>>, vector<1x1x256xf32>
    %76 = vector.shape_cast %75 : vector<1x1x256xf32> to vector<1x256xf32>
    %77 = vector.broadcast %76 : vector<1x256xf32> to vector<4x256xf32>
    %78 = arith.addf %74, %77 : vector<4x256xf32>
    %79 = vector.extract_strided_slice %78 {offsets = [0, 0], sizes = [4, 128], strides = [1, 1]} : vector<4x256xf32> to vector<4x128xf32>
    %cst_39 = arith.constant 0.000000e+00 : f32
    %80 = vector.broadcast %cst_39 : f32 to vector<4x128xf32>
    %81 = arith.maximumf %79, %80 : vector<4x128xf32>
    %82 = vector.extract_strided_slice %78 {offsets = [0, 128], sizes = [4, 128], strides = [1, 1]} : vector<4x256xf32> to vector<4x128xf32>
    %83 = arith.negf %82 : vector<4x128xf32>
    %84 = math.exp %83 : vector<4x128xf32>
    %cst_40 = arith.constant 1.000000e+00 : f32
    %85 = vector.broadcast %cst_40 : f32 to vector<4x128xf32>
    %86 = arith.addf %85, %84 : vector<4x128xf32>
    %87 = arith.divf %85, %86 : vector<4x128xf32>
    %88 = arith.mulf %81, %87 : vector<4x128xf32>
    %89 = arith.mulf %88, %88 : vector<4x128xf32>
    %cst_41 = arith.constant dense<0.000000e+00> : vector<4xf32>
    %90 = vector.multi_reduction <add>, %89, %cst_41 [1] : vector<4x128xf32> to vector<4xf32>
    %91 = vector.shape_cast %90 : vector<4xf32> to vector<4x1xf32>
    %cst_42 = arith.constant 1.000000e-24 : f32
    %92 = vector.broadcast %cst_42 : f32 to vector<4x1xf32>
    %93 = arith.maximumf %91, %92 : vector<4x1xf32>
    %94 = math.rsqrt %93 : vector<4x1xf32>
    %95 = vector.broadcast %94 : vector<4x1xf32> to vector<4x128xf32>
    %96 = arith.mulf %88, %95 : vector<4x128xf32>
    %c2_43 = arith.constant 2 : index
    %c0_44 = arith.constant 0 : index
    %c0_45 = arith.constant 0 : index
    %97 = vector.load %arg14[%c2_43, %c0_44, %c0_45] : memref<3x4x128xf32, #tpu.memory_space<vmem>>, vector<1x4x128xf32>
    %98 = vector.shape_cast %97 : vector<1x4x128xf32> to vector<4x128xf32>
    %99 = vector.shape_cast %96 : vector<4x128xf32> to vector<1x4x128xf32>
    tpu.vector_store %arg14[%c2_43, %c0_44, %c0_45], %99 {strides = array<i32>} : memref<3x4x128xf32, #tpu.memory_space<vmem>>, vector<1x4x128xf32>,
    %100 = vector.extract_strided_slice %96 {offsets = [0, 0], sizes = [4, 3], strides = [1, 1]} : vector<4x128xf32> to vector<4x3xf32>
    %101 = arith.truncf %100 : vector<4x3xf32> to vector<4x3xbf16>
    %c0_46 = arith.constant 0 : index
    %c0_47 = arith.constant 0 : index
    %102 = vector.load %arg1[%c0_46, %c0_47] : memref<4x10xbf16, #tpu.memory_space<vmem>>, vector<4x10xbf16>
    %c0_48 = arith.constant 0 : index
    %c0_49 = arith.constant 0 : index
    %103 = vector.load %arg6[%c0_48, %c0_49] : memref<10x1536xbf16, #tpu.memory_space<vmem>>, vector<10x1536xbf16>
    %cst_50 = arith.constant dense<0.000000e+00> : vector<4x1536xf32>
    %104 = tpu.matmul %102, %103, %cst_50 {dimension_numbers = #tpu.dot_dimension_numbers<[1], [0], [0], [1], [0, 0, 1, 1], [], []>} : vector<4x10xbf16>, vector<10x1536xbf16>, vector<4x1536xf32> -> vector<4x1536xf32>
    %c0_51 = arith.constant 0 : index
    %c0_52 = arith.constant 0 : index
    %c0_53 = arith.constant 0 : index
    %105 = vector.load %arg7[%c0_51, %c0_52, %c0_53] : memref<3x3x1536xbf16, #tpu.memory_space<vmem>>, vector<1x3x1536xbf16>
    %106 = vector.shape_cast %105 : vector<1x3x1536xbf16> to vector<3x1536xbf16>
    %cst_54 = arith.constant dense<0.000000e+00> : vector<4x1536xf32>
    %107 = tpu.matmul %39, %106, %cst_54 {dimension_numbers = #tpu.dot_dimension_numbers<[1], [0], [0], [1], [0, 0, 1, 1], [], []>} : vector<4x3xbf16>, vector<3x1536xbf16>, vector<4x1536xf32> -> vector<4x1536xf32>
    %108 = arith.addf %104, %107 : vector<4x1536xf32>
    %c1_55 = arith.constant 1 : index
    %c0_56 = arith.constant 0 : index
    %c0_57 = arith.constant 0 : index
    %109 = vector.load %arg7[%c1_55, %c0_56, %c0_57] : memref<3x3x1536xbf16, #tpu.memory_space<vmem>>, vector<1x3x1536xbf16>
    %110 = vector.shape_cast %109 : vector<1x3x1536xbf16> to vector<3x1536xbf16>
    %cst_58 = arith.constant dense<0.000000e+00> : vector<4x1536xf32>
    %111 = tpu.matmul %70, %110, %cst_58 {dimension_numbers = #tpu.dot_dimension_numbers<[1], [0], [0], [1], [0, 0, 1, 1], [], []>} : vector<4x3xbf16>, vector<3x1536xbf16>, vector<4x1536xf32> -> vector<4x1536xf32>
    %112 = arith.addf %108, %111 : vector<4x1536xf32>
    %c2_59 = arith.constant 2 : index
    %c0_60 = arith.constant 0 : index
    %c0_61 = arith.constant 0 : index
    %113 = vector.load %arg7[%c2_59, %c0_60, %c0_61] : memref<3x3x1536xbf16, #tpu.memory_space<vmem>>, vector<1x3x1536xbf16>
    %114 = vector.shape_cast %113 : vector<1x3x1536xbf16> to vector<3x1536xbf16>
    %cst_62 = arith.constant dense<0.000000e+00> : vector<4x1536xf32>
    %115 = tpu.matmul %101, %114, %cst_62 {dimension_numbers = #tpu.dot_dimension_numbers<[1], [0], [0], [1], [0, 0, 1, 1], [], []>} : vector<4x3xbf16>, vector<3x1536xbf16>, vector<4x1536xf32> -> vector<4x1536xf32>
    %116 = arith.addf %112, %115 : vector<4x1536xf32>
    %c0_63 = arith.constant 0 : index
    %c0_64 = arith.constant 0 : index
    %117 = vector.load %arg8[%c0_63, %c0_64] : memref<1x1536xf32, #tpu.memory_space<vmem>>, vector<1x1536xf32>
    %118 = vector.broadcast %117 : vector<1x1536xf32> to vector<4x1536xf32>
    %119 = arith.addf %116, %118 : vector<4x1536xf32>
    %cst_65 = arith.constant 0.000000e+00 : f32
    %120 = vector.broadcast %cst_65 : f32 to vector<4x1536xf32>
    %121 = arith.maximumf %119, %120 : vector<4x1536xf32>
    %122 = arith.truncf %121 : vector<4x1536xf32> to vector<4x1536xbf16>
    %123 = vector.extract_strided_slice %122 {offsets = [0, 0], sizes = [4, 512], strides = [1, 1]} : vector<4x1536xbf16> to vector<4x512xbf16>
    %c0_66 = arith.constant 0 : index
    %c0_67 = arith.constant 0 : index
    %c0_68 = arith.constant 0 : index
    %124 = vector.load %arg9[%c0_66, %c0_67, %c0_68] : memref<3x512x784xbf16, #tpu.memory_space<vmem>>, vector<1x512x784xbf16>
    %125 = vector.shape_cast %124 : vector<1x512x784xbf16> to vector<512x784xbf16>
    %cst_69 = arith.constant dense<0.000000e+00> : vector<4x784xf32>
    %126 = tpu.matmul %123, %125, %cst_69 {dimension_numbers = #tpu.dot_dimension_numbers<[1], [0], [0], [1], [0, 0, 1, 1], [], []>} : vector<4x512xbf16>, vector<512x784xbf16>, vector<4x784xf32> -> vector<4x784xf32>
    %c0_70 = arith.constant 0 : index
    %c0_71 = arith.constant 0 : index
    %c0_72 = arith.constant 0 : index
    %127 = vector.load %arg10[%c0_70, %c0_71, %c0_72] : memref<3x1x784xf32, #tpu.memory_space<vmem>>, vector<1x1x784xf32>
    %128 = vector.shape_cast %127 : vector<1x1x784xf32> to vector<1x784xf32>
    %129 = vector.broadcast %128 : vector<1x784xf32> to vector<4x784xf32>
    %130 = arith.addf %126, %129 : vector<4x784xf32>
    %131 = arith.negf %130 : vector<4x784xf32>
    %132 = math.exp %131 : vector<4x784xf32>
    %cst_73 = arith.constant 1.000000e+00 : f32
    %133 = vector.broadcast %cst_73 : f32 to vector<4x784xf32>
    %134 = arith.addf %133, %132 : vector<4x784xf32>
    %135 = arith.divf %133, %134 : vector<4x784xf32>
    %c0_74 = arith.constant 0 : index
    %c0_75 = arith.constant 0 : index
    %136 = vector.load %arg11[%c0_74, %c0_75] : memref<4x784xf32, #tpu.memory_space<vmem>>, vector<4x784xf32>
    tpu.vector_store %arg11[%c0_74, %c0_75], %135 {strides = array<i32>} : memref<4x784xf32, #tpu.memory_space<vmem>>, vector<4x784xf32>,
    %137 = vector.extract_strided_slice %122 {offsets = [0, 512], sizes = [4, 512], strides = [1, 1]} : vector<4x1536xbf16> to vector<4x512xbf16>
    %c1_76 = arith.constant 1 : index
    %c0_77 = arith.constant 0 : index
    %c0_78 = arith.constant 0 : index
    %138 = vector.load %arg9[%c1_76, %c0_77, %c0_78] : memref<3x512x784xbf16, #tpu.memory_space<vmem>>, vector<1x512x784xbf16>
    %139 = vector.shape_cast %138 : vector<1x512x784xbf16> to vector<512x784xbf16>
    %cst_79 = arith.constant dense<0.000000e+00> : vector<4x784xf32>
    %140 = tpu.matmul %137, %139, %cst_79 {dimension_numbers = #tpu.dot_dimension_numbers<[1], [0], [0], [1], [0, 0, 1, 1], [], []>} : vector<4x512xbf16>, vector<512x784xbf16>, vector<4x784xf32> -> vector<4x784xf32>
    %c1_80 = arith.constant 1 : index
    %c0_81 = arith.constant 0 : index
    %c0_82 = arith.constant 0 : index
    %141 = vector.load %arg10[%c1_80, %c0_81, %c0_82] : memref<3x1x784xf32, #tpu.memory_space<vmem>>, vector<1x1x784xf32>
    %142 = vector.shape_cast %141 : vector<1x1x784xf32> to vector<1x784xf32>
    %143 = vector.broadcast %142 : vector<1x784xf32> to vector<4x784xf32>
    %144 = arith.addf %140, %143 : vector<4x784xf32>
    %145 = arith.negf %144 : vector<4x784xf32>
    %146 = math.exp %145 : vector<4x784xf32>
    %cst_83 = arith.constant 1.000000e+00 : f32
    %147 = vector.broadcast %cst_83 : f32 to vector<4x784xf32>
    %148 = arith.addf %147, %146 : vector<4x784xf32>
    %149 = arith.divf %147, %148 : vector<4x784xf32>
    %c0_84 = arith.constant 0 : index
    %c0_85 = arith.constant 0 : index
    %150 = vector.load %arg12[%c0_84, %c0_85] : memref<4x784xf32, #tpu.memory_space<vmem>>, vector<4x784xf32>
    tpu.vector_store %arg12[%c0_84, %c0_85], %149 {strides = array<i32>} : memref<4x784xf32, #tpu.memory_space<vmem>>, vector<4x784xf32>,
    %151 = vector.extract_strided_slice %122 {offsets = [0, 1024], sizes = [4, 512], strides = [1, 1]} : vector<4x1536xbf16> to vector<4x512xbf16>
    %c2_86 = arith.constant 2 : index
    %c0_87 = arith.constant 0 : index
    %c0_88 = arith.constant 0 : index
    %152 = vector.load %arg9[%c2_86, %c0_87, %c0_88] : memref<3x512x784xbf16, #tpu.memory_space<vmem>>, vector<1x512x784xbf16>
    %153 = vector.shape_cast %152 : vector<1x512x784xbf16> to vector<512x784xbf16>
    %cst_89 = arith.constant dense<0.000000e+00> : vector<4x784xf32>
    %154 = tpu.matmul %151, %153, %cst_89 {dimension_numbers = #tpu.dot_dimension_numbers<[1], [0], [0], [1], [0, 0, 1, 1], [], []>} : vector<4x512xbf16>, vector<512x784xbf16>, vector<4x784xf32> -> vector<4x784xf32>
    %c2_90 = arith.constant 2 : index
    %c0_91 = arith.constant 0 : index
    %c0_92 = arith.constant 0 : index
    %155 = vector.load %arg10[%c2_90, %c0_91, %c0_92] : memref<3x1x784xf32, #tpu.memory_space<vmem>>, vector<1x1x784xf32>
    %156 = vector.shape_cast %155 : vector<1x1x784xf32> to vector<1x784xf32>
    %157 = vector.broadcast %156 : vector<1x784xf32> to vector<4x784xf32>
    %158 = arith.addf %154, %157 : vector<4x784xf32>
    %159 = arith.negf %158 : vector<4x784xf32>
    %160 = math.exp %159 : vector<4x784xf32>
    %cst_93 = arith.constant 1.000000e+00 : f32
    %161 = vector.broadcast %cst_93 : f32 to vector<4x784xf32>
    %162 = arith.addf %161, %160 : vector<4x784xf32>
    %163 = arith.divf %161, %162 : vector<4x784xf32>
    %c0_94 = arith.constant 0 : index
    %c0_95 = arith.constant 0 : index
    %164 = vector.load %arg13[%c0_94, %c0_95] : memref<4x784xf32, #tpu.memory_space<vmem>>, vector<4x784xf32>
    tpu.vector_store %arg13[%c0_94, %c0_95], %163 {strides = array<i32>} : memref<4x784xf32, #tpu.memory_space<vmem>>, vector<4x784xf32>,
    return
  }
}

</mosaic_0001>

<llo_original>
// kernel: vae_forward.1
$region0: #{vae_forward.1}
  #allocation0 [shape = 'u32[]', space=smem, size = 0x4, offset = 0x4, fixed_abs, tag = 'smem constant byte address 0x4 - core index']
  #allocation1 [shape = 'u32[72,128]{1,0:T(1,128)}', space=vmem, size = 0x9000, scoped, tag = 'internal scratch']
  %s0 = inlined_call_operand.vmem [shape: bf16[4,784], index: 0, kind: input, shape index: {}]
  %s1 = inlined_call_operand.vmem [shape: bf16[4,10], index: 1, kind: input, shape index: {}]
  %s2 = inlined_call_operand.vmem [shape: bf16[784,1536], index: 2, kind: input, shape index: {}]
  %s3 = inlined_call_operand.vmem [shape: f32[1,1536], index: 3, kind: input, shape index: {}]
  %s4 = inlined_call_operand.vmem [shape: bf16[3,512,256], index: 4, kind: input, shape index: {}]
  %s5 = inlined_call_operand.vmem [shape: f32[3,1,256], index: 5, kind: input, shape index: {}]
  %s6 = inlined_call_operand.vmem [shape: bf16[10,1536], index: 6, kind: input, shape index: {}]
  %s7 = inlined_call_operand.vmem [shape: bf16[3,3,1536], index: 7, kind: input, shape index: {}]
  %s8 = inlined_call_operand.vmem [shape: f32[1,1536], index: 8, kind: input, shape index: {}]
  %s9 = inlined_call_operand.vmem [shape: bf16[3,512,784], index: 9, kind: input, shape index: {}]
  %s10 = inlined_call_operand.vmem [shape: f32[3,1,784], index: 10, kind: input, shape index: {}]
  %s11 = inlined_call_operand.hbm [shape: f32[4,784], index: 11, kind: output, shape index: {0}]
  %s12 = inlined_call_operand.hbm [shape: f32[4,784], index: 12, kind: output, shape index: {1}]
  %s13 = inlined_call_operand.hbm [shape: f32[4,784], index: 13, kind: output, shape index: {2}]
  %s14 = inlined_call_operand.vmem [shape: f32[3,4,128], index: 14, kind: output, shape index: {3}]
  %15 = xla_tuple %s11, %s12, %s13, %s14
  %s16 = sld [smem:[#allocation0]]
  $region78: #{vae_forward.1} parent=0
    _
  %s18 = ssub.s32 1, %s16
  %s19 = scalar_select 0, %s18, %s16
  $region1: #{vae_forward.1} parent=0
    #allocation2 [shape = 'u8[14336]{0}', space=vmem, size = 0x3800, scoped, tag = 'output window, operand 0, single buffered']
    #allocation3 [shape = 's32[1]{0}', space=sflag, size = 0x4, scoped, tag = 'scoped memory for vae_forward.1']
    #allocation4 [shape = 'u8[14336]{0}', space=vmem, size = 0x3800, scoped, tag = 'output window, operand 1, single buffered']
    #allocation5 [shape = 's32[1]{0}', space=sflag, size = 0x4, scoped, tag = 'scoped memory for vae_forward.1']
    #allocation6 [shape = 'u8[14336]{0}', space=vmem, size = 0x3800, scoped, tag = 'output window, operand 2, single buffered']
    %20 = vsyncpa [#allocation3], 0
    %21 = vsyncpa [#allocation5], 0
    // Predicated region
    $region2: #{vae_forward.1} parent=1 // pred_check
      _
    $region3: #{vae_forward.1} parent=1 // pred_check_branch
      %23 = sbr.rel (0) target = $region5
    $region4: #{vae_forward.1} parent=1 // pred_region
      _
    $region5: #{vae_forward.1} parent=1 // pred_fallthru
      _
    // Predicated region
    $region6: #{vae_forward.1} parent=1 // pred_check
      _
    $region7: #{vae_forward.1} parent=1 // pred_check_branch
      %25 = sbr.rel (0) target = $region9
    $region8: #{vae_forward.1} parent=1 // pred_region
      _
    $region9: #{vae_forward.1} parent=1 // pred_fallthru
      _
    // Predicated region
    $region10: #{vae_forward.1} parent=1 // pred_check
      _
    $region11: #{vae_forward.1} parent=1 // pred_check_branch
      %27 = sbr.rel (0) target = $region13
    $region12: #{vae_forward.1} parent=1 // pred_region
      _
    $region13: #{vae_forward.1} parent=1 // pred_fallthru
      _
    // Predicated region
    $region14: #{vae_forward.1} parent=1 // pred_check
      _
    $region15: #{vae_forward.1} parent=1 // pred_check_branch
      %29 = sbr.rel (0) target = $region17
    $region16: #{vae_forward.1} parent=1 // pred_region
      _
    $region17: #{vae_forward.1} parent=1 // pred_fallthru
      _
    // Predicated region
    $region18: #{vae_forward.1} parent=1 // pred_check
      _
    $region19: #{vae_forward.1} parent=1 // pred_check_branch
      %31 = sbr.rel (0) target = $region21
    $region20: #{vae_forward.1} parent=1 // pred_region
      _
    $region21: #{vae_forward.1} parent=1 // pred_fallthru
      _
    // Predicated region
    $region22: #{vae_forward.1} parent=1 // pred_check
      _
    $region23: #{vae_forward.1} parent=1 // pred_check_branch
      %33 = sbr.rel (0) target = $region25
    $region24: #{vae_forward.1} parent=1 // pred_region
      _
    $region25: #{vae_forward.1} parent=1 // pred_fallthru
      _
    // Predicated region
    $region26: #{vae_forward.1} parent=1 // pred_check
      _
    $region27: #{vae_forward.1} parent=1 // pred_check_branch
      %35 = sbr.rel (0) target = $region29
    $region28: #{vae_forward.1} parent=1 // pred_region
      _
    $region29: #{vae_forward.1} parent=1 // pred_fallthru
      _
    // Predicated region
    $region30: #{vae_forward.1} parent=1 // pred_check
      _
    $region31: #{vae_forward.1} parent=1 // pred_check_branch
      %37 = sbr.rel (0) target = $region33
    $region32: #{vae_forward.1} parent=1 // pred_region
      _
    $region33: #{vae_forward.1} parent=1 // pred_fallthru
      _
    // Predicated region
    $region34: #{vae_forward.1} parent=1 // pred_check
      _
    $region35: #{vae_forward.1} parent=1 // pred_check_branch
      %39 = sbr.rel (0) target = $region37
    $region36: #{vae_forward.1} parent=1 // pred_region
      _
    $region37: #{vae_forward.1} parent=1 // pred_fallthru
      _
    // Predicated region
    $region38: #{vae_forward.1} parent=1 // pred_check
      _
    $region39: #{vae_forward.1} parent=1 // pred_check_branch
      %41 = sbr.rel (0) target = $region41
    $region40: #{vae_forward.1} parent=1 // pred_region
      _
    $region41: #{vae_forward.1} parent=1 // pred_fallthru
      _
    // Predicated region
    $region42: #{vae_forward.1} parent=1 // pred_check
      _
    $region43: #{vae_forward.1} parent=1 // pred_check_branch
      %43 = sbr.rel (0) target = $region45
    $region44: #{vae_forward.1} parent=1 // pred_region
      _
    $region45: #{vae_forward.1} parent=1 // pred_fallthru
      _
    %v45 = vld [vmem:[%s0] sm:$0xff]
    %v46 = vld [vmem:[%s0 + $0x8] sm:$0x3f]
    %v47 = vld [vmem:[%s2] sm:$0xff]
    %v48 = vld [vmem:[%s2 + $0x8] sm:$0xff]
    %v49 = vld [vmem:[%s2 + $0x10] sm:$0xff]
    %v50 = vld [vmem:[%s2 + $0x18] sm:$0xff]
    %v51 = vld [vmem:[%s2 + $0x20] sm:$0xff]
    %v52 = vld [vmem:[%s2 + $0x28] sm:$0xff]
    %v53 = vld [vmem:[%s2 + $0x30] sm:$0xff]
    %v54 = vld [vmem:[%s2 + $0x38] sm:$0xff]
    %v55 = vld [vmem:[%s2 + $0x40] sm:$0xff]
    %v56 = vld [vmem:[%s2 + $0x48] sm:$0xff]
    %v57 = vld [vmem:[%s2 + $0x50] sm:$0xff]
    %v58 = vld [vmem:[%s2 + $0x58] sm:$0xff]
    %v59 = vld [vmem:[%s2 + $0x60] sm:$0xff]
    %v60 = vld [vmem:[%s2 + $0x68] sm:$0xff]
    %v61 = vld [vmem:[%s2 + $0x70] sm:$0xff]
    %v62 = vld [vmem:[%s2 + $0x78] sm:$0xff]
    %v63 = vld [vmem:[%s2 + $0x80] sm:$0xff]
    %v64 = vld [vmem:[%s2 + $0x88] sm:$0xff]
    %v65 = vld [vmem:[%s2 + $0x90] sm:$0xff]
    %v66 = vld [vmem:[%s2 + $0x98] sm:$0xff]
    %v67 = vld [vmem:[%s2 + $0xa0] sm:$0xff]
    %v68 = vld [vmem:[%s2 + $0xa8] sm:$0xff]
    %v69 = vld [vmem:[%s2 + $0xb0] sm:$0xff]
    %v70 = vld [vmem:[%s2 + $0xb8] sm:$0xff]
    %v71 = vld [vmem:[%s2 + $0xc0] sm:$0xff]
    %v72 = vld [vmem:[%s2 + $0xc8] sm:$0xff]
    %v73 = vld [vmem:[%s2 + $0xd0] sm:$0xff]
    %v74 = vld [vmem:[%s2 + $0xd8] sm:$0xff]
    %v75 = vld [vmem:[%s2 + $0xe0] sm:$0xff]
    %v76 = vld [vmem:[%s2 + $0xe8] sm:$0xff]
    %v77 = vld [vmem:[%s2 + $0xf0] sm:$0xff]
    %v78 = vld [vmem:[%s2 + $0xf8] sm:$0xff]
    %v79 = vld [vmem:[%s2 + $0x100] sm:$0xff]
    %v80 = vld [vmem:[%s2 + $0x108] sm:$0xff]
    %v81 = vld [vmem:[%s2 + $0x110] sm:$0xff]
    %v82 = vld [vmem:[%s2 + $0x118] sm:$0xff]
    %v83 = vld [vmem:[%s2 + $0x120] sm:$0xff]
    %v84 = vld [vmem:[%s2 + $0x128] sm:$0xff]
    %v85 = vld [vmem:[%s2 + $0x130] sm:$0xff]
    %v86 = vld [vmem:[%s2 + $0x138] sm:$0xff]
    %v87 = vld [vmem:[%s2 + $0x140] sm:$0xff]
    %v88 = vld [vmem:[%s2 + $0x148] sm:$0xff]
    %v89 = vld [vmem:[%s2 + $0x150] sm:$0xff]
    %v90 = vld [vmem:[%s2 + $0x158] sm:$0xff]
    %v91 = vld [vmem:[%s2 + $0x160] sm:$0xff]
    %v92 = vld [vmem:[%s2 + $0x168] sm:$0xff]
    %v93 = vld [vmem:[%s2 + $0x170] sm:$0xff]
    %v94 = vld [vmem:[%s2 + $0x178] sm:$0xff]
    %v95 = vld [vmem:[%s2 + $0x180] sm:$0xff]
    %v96 = vld [vmem:[%s2 + $0x188] sm:$0xff]
    %v97 = vld [vmem:[%s2 + $0x190] sm:$0xff]
    %v98 = vld [vmem:[%s2 + $0x198] sm:$0xff]
    %v99 = vld [vmem:[%s2 + $0x1a0] sm:$0xff]
    %v100 = vld [vmem:[%s2 + $0x1a8] sm:$0xff]
    %v101 = vld [vmem:[%s2 + $0x1b0] sm:$0xff]
    %v102 = vld [vmem:[%s2 + $0x1b8] sm:$0xff]
    %v103 = vld [vmem:[%s2 + $0x1c0] sm:$0xff]
    %v104 = vld [vmem:[%s2 + $0x1c8] sm:$0xff]
    %v105 = vld [vmem:[%s2 + $0x1d0] sm:$0xff]
    %v106 = vld [vmem:[%s2 + $0x1d8] sm:$0xff]
    %v107 = vld [vmem:[%s2 + $0x1e0] sm:$0xff]
    %v108 = vld [vmem:[%s2 + $0x1e8] sm:$0xff]
    %v109 = vld [vmem:[%s2 + $0x1f0] sm:$0xff]
    %v110 = vld [vmem:[%s2 + $0x1f8] sm:$0xff]
    %v111 = vld [vmem:[%s2 + $0x200] sm:$0xff]
    %v112 = vld [vmem:[%s2 + $0x208] sm:$0xff]
    %v113 = vld [vmem:[%s2 + $0x210] sm:$0xff]
    %v114 = vld [vmem:[%s2 + $0x218] sm:$0xff]
    %v115 = vld [vmem:[%s2 + $0x220] sm:$0xff]
    %v116 = vld [vmem:[%s2 + $0x228] sm:$0xff]
    %v117 = vld [vmem:[%s2 + $0x230] sm:$0xff]
    %v118 = vld [vmem:[%s2 + $0x238] sm:$0xff]
    %v119 = vld [vmem:[%s2 + $0x240] sm:$0xff]
    %v120 = vld [vmem:[%s2 + $0x248] sm:$0xff]
    %v121 = vld [vmem:[%s2 + $0x250] sm:$0xff]
    %v122 = vld [vmem:[%s2 + $0x258] sm:$0xff]
    %v123 = vld [vmem:[%s2 + $0x260] sm:$0xff]
    %v124 = vld [vmem:[%s2 + $0x268] sm:$0xff]
    %v125 = vld [vmem:[%s2 + $0x270] sm:$0xff]
    %v126 = vld [vmem:[%s2 + $0x278] sm:$0xff]
    %v127 = vld [vmem:[%s2 + $0x280] sm:$0xff]
    %v128 = vld [vmem:[%s2 + $0x288] sm:$0xff]
    %v129 = vld [vmem:[%s2 + $0x290] sm:$0xff]
    %v130 = vld [vmem:[%s2 + $0x298] sm:$0xff]
    %v131 = vld [vmem:[%s2 + $0x2a0] sm:$0xff]
    %v132 = vld [vmem:[%s2 + $0x2a8] sm:$0xff]
    %v133 = vld [vmem:[%s2 + $0x2b0] sm:$0xff]
    %v134 = vld [vmem:[%s2 + $0x2b8] sm:$0xff]
    %v135 = vld [vmem:[%s2 + $0x2c0] sm:$0xff]
    %v136 = vld [vmem:[%s2 + $0x2c8] sm:$0xff]
    %v137 = vld [vmem:[%s2 + $0x2d0] sm:$0xff]
    %v138 = vld [vmem:[%s2 + $0x2d8] sm:$0xff]
    %v139 = vld [vmem:[%s2 + $0x2e0] sm:$0xff]
    %v140 = vld [vmem:[%s2 + $0x2e8] sm:$0xff]
    %v141 = vld [vmem:[%s2 + $0x2f0] sm:$0xff]
    %v142 = vld [vmem:[%s2 + $0x2f8] sm:$0xff]
    %v143 = vld [vmem:[%s2 + $0x300] sm:$0xff]
    %v144 = vld [vmem:[%s2 + $0x308] sm:$0xff]
    %v145 = vld [vmem:[%s2 + $0x310] sm:$0xff]
    %v146 = vld [vmem:[%s2 + $0x318] sm:$0xff]
    %v147 = vld [vmem:[%s2 + $0x320] sm:$0xff]
    %v148 = vld [vmem:[%s2 + $0x328] sm:$0xff]
    %v149 = vld [vmem:[%s2 + $0x330] sm:$0xff]
    %v150 = vld [vmem:[%s2 + $0x338] sm:$0xff]
    %v151 = vld [vmem:[%s2 + $0x340] sm:$0xff]
    %v152 = vld [vmem:[%s2 + $0x348] sm:$0xff]
    %v153 = vld [vmem:[%s2 + $0x350] sm:$0xff]
    %v154 = vld [vmem:[%s2 + $0x358] sm:$0xff]
    %v155 = vld [vmem:[%s2 + $0x360] sm:$0xff]
    %v156 = vld [vmem:[%s2 + $0x368] sm:$0xff]
    %v157 = vld [vmem:[%s2 + $0x370] sm:$0xff]
    %v158 = vld [vmem:[%s2 + $0x378] sm:$0xff]
    %v159 = vld [vmem:[%s2 + $0x380] sm:$0xff]
    %v160 = vld [vmem:[%s2 + $0x388] sm:$0xff]
    %v161 = vld [vmem:[%s2 + $0x390] sm:$0xff]
    %v162 = vld [vmem:[%s2 + $0x398] sm:$0xff]
    %v163 = vld [vmem:[%s2 + $0x3a0] sm:$0xff]
    %v164 = vld [vmem:[%s2 + $0x3a8] sm:$0xff]
    %v165 = vld [vmem:[%s2 + $0x3b0] sm:$0xff]
    %v166 = vld [vmem:[%s2 + $0x3b8] sm:$0xff]
    %v167 = vld [vmem:[%s2 + $0x3c0] sm:$0xff]
    %v168 = vld [vmem:[%s2 + $0x3c8] sm:$0xff]
    %v169 = vld [vmem:[%s2 + $0x3d0] sm:$0xff]
    %v170 = vld [vmem:[%s2 + $0x3d8] sm:$0xff]
    %v171 = vld [vmem:[%s2 + $0x3e0] sm:$0xff]
    %v172 = vld [vmem:[%s2 + $0x3e8] sm:$0xff]
    %v173 = vld [vmem:[%s2 + $0x3f0] sm:$0xff]
    %v174 = vld [vmem:[%s2 + $0x3f8] sm:$0xff]
    %v175 = vld [vmem:[%s2 + $0x400] sm:$0xff]
    %v176 = vld [vmem:[%s2 + $0x408] sm:$0xff]
    %v177 = vld [vmem:[%s2 + $0x410] sm:$0xff]
    %v178 = vld [vmem:[%s2 + $0x418] sm:$0xff]
    %v179 = vld [vmem:[%s2 + $0x420] sm:$0xff]
    %v180 = vld [vmem:[%s2 + $0x428] sm:$0xff]
    %v181 = vld [vmem:[%s2 + $0x430] sm:$0xff]
    %v182 = vld [vmem:[%s2 + $0x438] sm:$0xff]
    %v183 = vld [vmem:[%s2 + $0x440] sm:$0xff]
    %v184 = vld [vmem:[%s2 + $0x448] sm:$0xff]
    %v185 = vld [vmem:[%s2 + $0x450] sm:$0xff]
    %v186 = vld [vmem:[%s2 + $0x458] sm:$0xff]
    %v187 = vld [vmem:[%s2 + $0x460] sm:$0xff]
    %v188 = vld [vmem:[%s2 + $0x468] sm:$0xff]
    %v189 = vld [vmem:[%s2 + $0x470] sm:$0xff]
    %v190 = vld [vmem:[%s2 + $0x478] sm:$0xff]
    %v191 = vld [vmem:[%s2 + $0x480] sm:$0xff]
    %v192 = vld [vmem:[%s2 + $0x488] sm:$0xff]
    %v193 = vld [vmem:[%s2 + $0x490] sm:$0xff]
    %v194 = vld [vmem:[%s2 + $0x498] sm:$0xff]
    %v195 = vld [vmem:[%s2 + $0x4a0] sm:$0xff]
    %v196 = vld [vmem:[%s2 + $0x4a8] sm:$0xff]
    %v197 = vld [vmem:[%s2 + $0x4b0] sm:$0xff]
    %v198 = vld [vmem:[%s2 + $0x4b8] sm:$0xff]
    %v199 = vld [vmem:[%s2 + $0x4c0] sm:$0xff]
    %v200 = vld [vmem:[%s2 + $0x4c8] sm:$0xff]
    %v201 = vld [vmem:[%s2 + $0x4d0] sm:$0xff]
    %v202 = vld [vmem:[%s2 + $0x4d8] sm:$0xff]
    %v203 = vld [vmem:[%s2 + $0x4e0] sm:$0xff]
    %v204 = vld [vmem:[%s2 + $0x4e8] sm:$0xff]
    %v205 = vld [vmem:[%s2 + $0x4f0] sm:$0xff]
    %v206 = vld [vmem:[%s2 + $0x4f8] sm:$0xff]
    %v207 = vld [vmem:[%s2 + $0x500] sm:$0xff]
    %v208 = vld [vmem:[%s2 + $0x508] sm:$0xff]
    %v209 = vld [vmem:[%s2 + $0x510] sm:$0xff]
    %v210 = vld [vmem:[%s2 + $0x518] sm:$0xff]
    %v211 = vld [vmem:[%s2 + $0x520] sm:$0xff]
    %v212 = vld [vmem:[%s2 + $0x528] sm:$0xff]
    %v213 = vld [vmem:[%s2 + $0x530] sm:$0xff]
    %v214 = vld [vmem:[%s2 + $0x538] sm:$0xff]
    %v215 = vld [vmem:[%s2 + $0x540] sm:$0xff]
    %v216 = vld [vmem:[%s2 + $0x548] sm:$0xff]
    %v217 = vld [vmem:[%s2 + $0x550] sm:$0xff]
    %v218 = vld [vmem:[%s2 + $0x558] sm:$0xff]
    %v219 = vld [vmem:[%s2 + $0x560] sm:$0xff]
    %v220 = vld [vmem:[%s2 + $0x568] sm:$0xff]
    %v221 = vld [vmem:[%s2 + $0x570] sm:$0xff]
    %v222 = vld [vmem:[%s2 + $0x578] sm:$0xff]
    %v223 = vld [vmem:[%s2 + $0x580] sm:$0xff]
    %v224 = vld [vmem:[%s2 + $0x588] sm:$0xff]
    %v225 = vld [vmem:[%s2 + $0x590] sm:$0xff]
    %v226 = vld [vmem:[%s2 + $0x598] sm:$0xff]
    %v227 = vld [vmem:[%s2 + $0x5a0] sm:$0xff]
    %v228 = vld [vmem:[%s2 + $0x5a8] sm:$0xff]
    %v229 = vld [vmem:[%s2 + $0x5b0] sm:$0xff]
    %v230 = vld [vmem:[%s2 + $0x5b8] sm:$0xff]
    %v231 = vld [vmem:[%s2 + $0x5c0] sm:$0xff]
    %v232 = vld [vmem:[%s2 + $0x5c8] sm:$0xff]
    %v233 = vld [vmem:[%s2 + $0x5d0] sm:$0xff]
    %v234 = vld [vmem:[%s2 + $0x5d8] sm:$0xff]
    %v235 = vld [vmem:[%s2 + $0x5e0] sm:$0xff]
    %v236 = vld [vmem:[%s2 + $0x5e8] sm:$0xff]
    %v237 = vld [vmem:[%s2 + $0x5f0] sm:$0xff]
    %v238 = vld [vmem:[%s2 + $0x5f8] sm:$0xff]
    %v239 = vld [vmem:[%s2 + $0x600] sm:$0xff]
    %v240 = vld [vmem:[%s2 + $0x608] sm:$0xff]
    %v241 = vld [vmem:[%s2 + $0x610] sm:$0xff]
    %v242 = vld [vmem:[%s2 + $0x618] sm:$0xff]
    %v243 = vld [vmem:[%s2 + $0x620] sm:$0xff]
    %v244 = vld [vmem:[%s2 + $0x628] sm:$0xff]
    %v245 = vld [vmem:[%s2 + $0x630] sm:$0xff]
    %v246 = vld [vmem:[%s2 + $0x638] sm:$0xff]
    %v247 = vld [vmem:[%s2 + $0x640] sm:$0xff]
    %v248 = vld [vmem:[%s2 + $0x648] sm:$0xff]
    %v249 = vld [vmem:[%s2 + $0x650] sm:$0xff]
    %v250 = vld [vmem:[%s2 + $0x658] sm:$0xff]
    %v251 = vld [vmem:[%s2 + $0x660] sm:$0xff]
    %v252 = vld [vmem:[%s2 + $0x668] sm:$0xff]
    %v253 = vld [vmem:[%s2 + $0x670] sm:$0xff]
    %v254 = vld [vmem:[%s2 + $0x678] sm:$0xff]
    %v255 = vld [vmem:[%s2 + $0x680] sm:$0xff]
    %v256 = vld [vmem:[%s2 + $0x688] sm:$0xff]
    %v257 = vld [vmem:[%s2 + $0x690] sm:$0xff]
    %v258 = vld [vmem:[%s2 + $0x698] sm:$0xff]
    %v259 = vld [vmem:[%s2 + $0x6a0] sm:$0xff]
    %v260 = vld [vmem:[%s2 + $0x6a8] sm:$0xff]
    %v261 = vld [vmem:[%s2 + $0x6b0] sm:$0xff]
    %v262 = vld [vmem:[%s2 + $0x6b8] sm:$0xff]
    %v263 = vld [vmem:[%s2 + $0x6c0] sm:$0xff]
    %v264 = vld [vmem:[%s2 + $0x6c8] sm:$0xff]
    %v265 = vld [vmem:[%s2 + $0x6d0] sm:$0xff]
    %v266 = vld [vmem:[%s2 + $0x6d8] sm:$0xff]
    %v267 = vld [vmem:[%s2 + $0x6e0] sm:$0xff]
    %v268 = vld [vmem:[%s2 + $0x6e8] sm:$0xff]
    %v269 = vld [vmem:[%s2 + $0x6f0] sm:$0xff]
    %v270 = vld [vmem:[%s2 + $0x6f8] sm:$0xff]
    %v271 = vld [vmem:[%s2 + $0x700] sm:$0xff]
    %v272 = vld [vmem:[%s2 + $0x708] sm:$0xff]
    %v273 = vld [vmem:[%s2 + $0x710] sm:$0xff]
    %v274 = vld [vmem:[%s2 + $0x718] sm:$0xff]
    %v275 = vld [vmem:[%s2 + $0x720] sm:$0xff]
    %v276 = vld [vmem:[%s2 + $0x728] sm:$0xff]
    %v277 = vld [vmem:[%s2 + $0x730] sm:$0xff]
    %v278 = vld [vmem:[%s2 + $0x738] sm:$0xff]
    %v279 = vld [vmem:[%s2 + $0x740] sm:$0xff]
    %v280 = vld [vmem:[%s2 + $0x748] sm:$0xff]
    %v281 = vld [vmem:[%s2 + $0x750] sm:$0xff]
    %v282 = vld [vmem:[%s2 + $0x758] sm:$0xff]
    %v283 = vld [vmem:[%s2 + $0x760] sm:$0xff]
    %v284 = vld [vmem:[%s2 + $0x768] sm:$0xff]
    %v285 = vld [vmem:[%s2 + $0x770] sm:$0xff]
    %v286 = vld [vmem:[%s2 + $0x778] sm:$0xff]
    %v287 = vld [vmem:[%s2 + $0x780] sm:$0xff]
    %v288 = vld [vmem:[%s2 + $0x788] sm:$0xff]
    %v289 = vld [vmem:[%s2 + $0x790] sm:$0xff]
    %v290 = vld [vmem:[%s2 + $0x798] sm:$0xff]
    %v291 = vld [vmem:[%s2 + $0x7a0] sm:$0xff]
    %v292 = vld [vmem:[%s2 + $0x7a8] sm:$0xff]
    %v293 = vld [vmem:[%s2 + $0x7b0] sm:$0xff]
    %v294 = vld [vmem:[%s2 + $0x7b8] sm:$0xff]
    %v295 = vld [vmem:[%s2 + $0x7c0] sm:$0xff]
    %v296 = vld [vmem:[%s2 + $0x7c8] sm:$0xff]
    %v297 = vld [vmem:[%s2 + $0x7d0] sm:$0xff]
    %v298 = vld [vmem:[%s2 + $0x7d8] sm:$0xff]
    %v299 = vld [vmem:[%s2 + $0x7e0] sm:$0xff]
    %v300 = vld [vmem:[%s2 + $0x7e8] sm:$0xff]
    %v301 = vld [vmem:[%s2 + $0x7f0] sm:$0xff]
    %v302 = vld [vmem:[%s2 + $0x7f8] sm:$0xff]
    %v303 = vld [vmem:[%s2 + $0x800] sm:$0xff]
    %v304 = vld [vmem:[%s2 + $0x808] sm:$0xff]
    %v305 = vld [vmem:[%s2 + $0x810] sm:$0xff]
    %v306 = vld [vmem:[%s2 + $0x818] sm:$0xff]
    %v307 = vld [vmem:[%s2 + $0x820] sm:$0xff]
    %v308 = vld [vmem:[%s2 + $0x828] sm:$0xff]
    %v309 = vld [vmem:[%s2 + $0x830] sm:$0xff]
    %v310 = vld [vmem:[%s2 + $0x838] sm:$0xff]
    %v311 = vld [vmem:[%s2 + $0x840] sm:$0xff]
    %v312 = vld [vmem:[%s2 + $0x848] sm:$0xff]
    %v313 = vld [vmem:[%s2 + $0x850] sm:$0xff]
    %v314 = vld [vmem:[%s2 + $0x858] sm:$0xff]
    %v315 = vld [vmem:[%s2 + $0x860] sm:$0xff]
    %v316 = vld [vmem:[%s2 + $0x868] sm:$0xff]
    %v317 = vld [vmem:[%s2 + $0x870] sm:$0xff]
    %v318 = vld [vmem:[%s2 + $0x878] sm:$0xff]
    %v319 = vld [vmem:[%s2 + $0x880] sm:$0xff]
    %v320 = vld [vmem:[%s2 + $0x888] sm:$0xff]
    %v321 = vld [vmem:[%s2 + $0x890] sm:$0xff]
    %v322 = vld [vmem:[%s2 + $0x898] sm:$0xff]
    %v323 = vld [vmem:[%s2 + $0x8a0] sm:$0xff]
    %v324 = vld [vmem:[%s2 + $0x8a8] sm:$0xff]
    %v325 = vld [vmem:[%s2 + $0x8b0] sm:$0xff]
    %v326 = vld [vmem:[%s2 + $0x8b8] sm:$0xff]
    %v327 = vld [vmem:[%s2 + $0x8c0] sm:$0xff]
    %v328 = vld [vmem:[%s2 + $0x8c8] sm:$0xff]
    %v329 = vld [vmem:[%s2 + $0x8d0] sm:$0xff]
    %v330 = vld [vmem:[%s2 + $0x8d8] sm:$0xff]
    %v331 = vld [vmem:[%s2 + $0x8e0] sm:$0xff]
    %v332 = vld [vmem:[%s2 + $0x8e8] sm:$0xff]
    %v333 = vld [vmem:[%s2 + $0x8f0] sm:$0xff]
    %v334 = vld [vmem:[%s2 + $0x8f8] sm:$0xff]
    %v335 = vld [vmem:[%s2 + $0x900] sm:$0xff]
    %v336 = vld [vmem:[%s2 + $0x908] sm:$0xff]
    %v337 = vld [vmem:[%s2 + $0x910] sm:$0xff]
    %v338 = vld [vmem:[%s2 + $0x918] sm:$0xff]
    %v339 = vld [vmem:[%s2 + $0x920] sm:$0xff]
    %v340 = vld [vmem:[%s2 + $0x928] sm:$0xff]
    %v341 = vld [vmem:[%s2 + $0x930] sm:$0xff]
    %v342 = vld [vmem:[%s2 + $0x938] sm:$0xff]
    %v343 = vld [vmem:[%s2 + $0x940] sm:$0xff]
    %v344 = vld [vmem:[%s2 + $0x948] sm:$0xff]
    %v345 = vld [vmem:[%s2 + $0x950] sm:$0xff]
    %v346 = vld [vmem:[%s2 + $0x958] sm:$0xff]
    %v347 = vld [vmem:[%s2 + $0x960] sm:$0xff]
    %v348 = vld [vmem:[%s2 + $0x968] sm:$0xff]
    %v349 = vld [vmem:[%s2 + $0x970] sm:$0xff]
    %v350 = vld [vmem:[%s2 + $0x978] sm:$0xff]
    %v351 = vld [vmem:[%s2 + $0x980] sm:$0xff]
    %v352 = vld [vmem:[%s2 + $0x988] sm:$0xff]
    %v353 = vld [vmem:[%s2 + $0x990] sm:$0xff]
    %v354 = vld [vmem:[%s2 + $0x998] sm:$0xff]
    %v355 = vld [vmem:[%s2 + $0x9a0] sm:$0xff]
    %v356 = vld [vmem:[%s2 + $0x9a8] sm:$0xff]
    %v357 = vld [vmem:[%s2 + $0x9b0] sm:$0xff]
    %v358 = vld [vmem:[%s2 + $0x9b8] sm:$0xff]
    %v359 = vld [vmem:[%s2 + $0x9c0] sm:$0xff]
    %v360 = vld [vmem:[%s2 + $0x9c8] sm:$0xff]
    %v361 = vld [vmem:[%s2 + $0x9d0] sm:$0xff]
    %v362 = vld [vmem:[%s2 + $0x9d8] sm:$0xff]
    %v363 = vld [vmem:[%s2 + $0x9e0] sm:$0xff]
    %v364 = vld [vmem:[%s2 + $0x9e8] sm:$0xff]
    %v365 = vld [vmem:[%s2 + $0x9f0] sm:$0xff]
    %v366 = vld [vmem:[%s2 + $0x9f8] sm:$0xff]
    %v367 = vld [vmem:[%s2 + $0xa00] sm:$0xff]
    %v368 = vld [vmem:[%s2 + $0xa08] sm:$0xff]
    %v369 = vld [vmem:[%s2 + $0xa10] sm:$0xff]
    %v370 = vld [vmem:[%s2 + $0xa18] sm:$0xff]
    %v371 = vld [vmem:[%s2 + $0xa20] sm:$0xff]
    %v372 = vld [vmem:[%s2 + $0xa28] sm:$0xff]
    %v373 = vld [vmem:[%s2 + $0xa30] sm:$0xff]
    %v374 = vld [vmem:[%s2 + $0xa38] sm:$0xff]
    %v375 = vld [vmem:[%s2 + $0xa40] sm:$0xff]
    %v376 = vld [vmem:[%s2 + $0xa48] sm:$0xff]
    %v377 = vld [vmem:[%s2 + $0xa50] sm:$0xff]
    %v378 = vld [vmem:[%s2 + $0xa58] sm:$0xff]
    %v379 = vld [vmem:[%s2 + $0xa60] sm:$0xff]
    %v380 = vld [vmem:[%s2 + $0xa68] sm:$0xff]
    %v381 = vld [vmem:[%s2 + $0xa70] sm:$0xff]
    %v382 = vld [vmem:[%s2 + $0xa78] sm:$0xff]
    %v383 = vld [vmem:[%s2 + $0xa80] sm:$0xff]
    %v384 = vld [vmem:[%s2 + $0xa88] sm:$0xff]
    %v385 = vld [vmem:[%s2 + $0xa90] sm:$0xff]
    %v386 = vld [vmem:[%s2 + $0xa98] sm:$0xff]
    %v387 = vld [vmem:[%s2 + $0xaa0] sm:$0xff]
    %v388 = vld [vmem:[%s2 + $0xaa8] sm:$0xff]
    %v389 = vld [vmem:[%s2 + $0xab0] sm:$0xff]
    %v390 = vld [vmem:[%s2 + $0xab8] sm:$0xff]
    %v391 = vld [vmem:[%s2 + $0xac0] sm:$0xff]
    %v392 = vld [vmem:[%s2 + $0xac8] sm:$0xff]
    %v393 = vld [vmem:[%s2 + $0xad0] sm:$0xff]
    %v394 = vld [vmem:[%s2 + $0xad8] sm:$0xff]
    %v395 = vld [vmem:[%s2 + $0xae0] sm:$0xff]
    %v396 = vld [vmem:[%s2 + $0xae8] sm:$0xff]
    %v397 = vld [vmem:[%s2 + $0xaf0] sm:$0xff]
    %v398 = vld [vmem:[%s2 + $0xaf8] sm:$0xff]
    %v399 = vld [vmem:[%s2 + $0xb00] sm:$0xff]
    %v400 = vld [vmem:[%s2 + $0xb08] sm:$0xff]
    %v401 = vld [vmem:[%s2 + $0xb10] sm:$0xff]
    %v402 = vld [vmem:[%s2 + $0xb18] sm:$0xff]
    %v403 = vld [vmem:[%s2 + $0xb20] sm:$0xff]
    %v404 = vld [vmem:[%s2 + $0xb28] sm:$0xff]
    %v405 = vld [vmem:[%s2 + $0xb30] sm:$0xff]
    %v406 = vld [vmem:[%s2 + $0xb38] sm:$0xff]
    %v407 = vld [vmem:[%s2 + $0xb40] sm:$0xff]
    %v408 = vld [vmem:[%s2 + $0xb48] sm:$0xff]
    %v409 = vld [vmem:[%s2 + $0xb50] sm:$0xff]
    %v410 = vld [vmem:[%s2 + $0xb58] sm:$0xff]
    %v411 = vld [vmem:[%s2 + $0xb60] sm:$0xff]
    %v412 = vld [vmem:[%s2 + $0xb68] sm:$0xff]
    %v413 = vld [vmem:[%s2 + $0xb70] sm:$0xff]
    %v414 = vld [vmem:[%s2 + $0xb78] sm:$0xff]
    %v415 = vld [vmem:[%s2 + $0xb80] sm:$0xff]
    %v416 = vld [vmem:[%s2 + $0xb88] sm:$0xff]
    %v417 = vld [vmem:[%s2 + $0xb90] sm:$0xff]
    %v418 = vld [vmem:[%s2 + $0xb98] sm:$0xff]
    %v419 = vld [vmem:[%s2 + $0xba0] sm:$0xff]
    %v420 = vld [vmem:[%s2 + $0xba8] sm:$0xff]
    %v421 = vld [vmem:[%s2 + $0xbb0] sm:$0xff]
    %v422 = vld [vmem:[%s2 + $0xbb8] sm:$0xff]
    %v423 = vld [vmem:[%s2 + $0xbc0] sm:$0xff]
    %v424 = vld [vmem:[%s2 + $0xbc8] sm:$0xff]
    %v425 = vld [vmem:[%s2 + $0xbd0] sm:$0xff]
    %v426 = vld [vmem:[%s2 + $0xbd8] sm:$0xff]
    %v427 = vld [vmem:[%s2 + $0xbe0] sm:$0xff]
    %v428 = vld [vmem:[%s2 + $0xbe8] sm:$0xff]
    %v429 = vld [vmem:[%s2 + $0xbf0] sm:$0xff]
    %v430 = vld [vmem:[%s2 + $0xbf8] sm:$0xff]
    %v431 = vld [vmem:[%s2 + $0xc00] sm:$0xff]
    %v432 = vld [vmem:[%s2 + $0xc08] sm:$0xff]
    %v433 = vld [vmem:[%s2 + $0xc10] sm:$0xff]
    %v434 = vld [vmem:[%s2 + $0xc18] sm:$0xff]
    %v435 = vld [vmem:[%s2 + $0xc20] sm:$0xff]
    %v436 = vld [vmem:[%s2 + $0xc28] sm:$0xff]
    %v437 = vld [vmem:[%s2 + $0xc30] sm:$0xff]
    %v438 = vld [vmem:[%s2 + $0xc38] sm:$0xff]
    %v439 = vld [vmem:[%s2 + $0xc40] sm:$0xff]
    %v440 = vld [vmem:[%s2 + $0xc48] sm:$0xff]
    %v441 = vld [vmem:[%s2 + $0xc50] sm:$0xff]
    %v442 = vld [vmem:[%s2 + $0xc58] sm:$0xff]
    %v443 = vld [vmem:[%s2 + $0xc60] sm:$0xff]
    %v444 = vld [vmem:[%s2 + $0xc68] sm:$0xff]
    %v445 = vld [vmem:[%s2 + $0xc70] sm:$0xff]
    %v446 = vld [vmem:[%s2 + $0xc78] sm:$0xff]
    %v447 = vld [vmem:[%s2 + $0xc80] sm:$0xff]
    %v448 = vld [vmem:[%s2 + $0xc88] sm:$0xff]
    %v449 = vld [vmem:[%s2 + $0xc90] sm:$0xff]
    %v450 = vld [vmem:[%s2 + $0xc98] sm:$0xff]
    %v451 = vld [vmem:[%s2 + $0xca0] sm:$0xff]
    %v452 = vld [vmem:[%s2 + $0xca8] sm:$0xff]
    %v453 = vld [vmem:[%s2 + $0xcb0] sm:$0xff]
    %v454 = vld [vmem:[%s2 + $0xcb8] sm:$0xff]
    %v455 = vld [vmem:[%s2 + $0xcc0] sm:$0xff]
    %v456 = vld [vmem:[%s2 + $0xcc8] sm:$0xff]
    %v457 = vld [vmem:[%s2 + $0xcd0] sm:$0xff]
    %v458 = vld [vmem:[%s2 + $0xcd8] sm:$0xff]
    %v459 = vld [vmem:[%s2 + $0xce0] sm:$0xff]
    %v460 = vld [vmem:[%s2 + $0xce8] sm:$0xff]
    %v461 = vld [vmem:[%s2 + $0xcf0] sm:$0xff]
    %v462 = vld [vmem:[%s2 + $0xcf8] sm:$0xff]
    %v463 = vld [vmem:[%s2 + $0xd00] sm:$0xff]
    %v464 = vld [vmem:[%s2 + $0xd08] sm:$0xff]
    %v465 = vld [vmem:[%s2 + $0xd10] sm:$0xff]
    %v466 = vld [vmem:[%s2 + $0xd18] sm:$0xff]
    %v467 = vld [vmem:[%s2 + $0xd20] sm:$0xff]
    %v468 = vld [vmem:[%s2 + $0xd28] sm:$0xff]
    %v469 = vld [vmem:[%s2 + $0xd30] sm:$0xff]
    %v470 = vld [vmem:[%s2 + $0xd38] sm:$0xff]
    %v471 = vld [vmem:[%s2 + $0xd40] sm:$0xff]
    %v472 = vld [vmem:[%s2 + $0xd48] sm:$0xff]
    %v473 = vld [vmem:[%s2 + $0xd50] sm:$0xff]
    %v474 = vld [vmem:[%s2 + $0xd58] sm:$0xff]
    %v475 = vld [vmem:[%s2 + $0xd60] sm:$0xff]
    %v476 = vld [vmem:[%s2 + $0xd68] sm:$0xff]
    %v477 = vld [vmem:[%s2 + $0xd70] sm:$0xff]
    %v478 = vld [vmem:[%s2 + $0xd78] sm:$0xff]
    %v479 = vld [vmem:[%s2 + $0xd80] sm:$0xff]
    %v480 = vld [vmem:[%s2 + $0xd88] sm:$0xff]
    %v481 = vld [vmem:[%s2 + $0xd90] sm:$0xff]
    %v482 = vld [vmem:[%s2 + $0xd98] sm:$0xff]
    %v483 = vld [vmem:[%s2 + $0xda0] sm:$0xff]
    %v484 = vld [vmem:[%s2 + $0xda8] sm:$0xff]
    %v485 = vld [vmem:[%s2 + $0xdb0] sm:$0xff]
    %v486 = vld [vmem:[%s2 + $0xdb8] sm:$0xff]
    %v487 = vld [vmem:[%s2 + $0xdc0] sm:$0xff]
    %v488 = vld [vmem:[%s2 + $0xdc8] sm:$0xff]
    %v489 = vld [vmem:[%s2 + $0xdd0] sm:$0xff]
    %v490 = vld [vmem:[%s2 + $0xdd8] sm:$0xff]
    %v491 = vld [vmem:[%s2 + $0xde0] sm:$0xff]
    %v492 = vld [vmem:[%s2 + $0xde8] sm:$0xff]
    %v493 = vld [vmem:[%s2 + $0xdf0] sm:$0xff]
    %v494 = vld [vmem:[%s2 + $0xdf8] sm:$0xff]
    %v495 = vld [vmem:[%s2 + $0xe00] sm:$0xff]
    %v496 = vld [vmem:[%s2 + $0xe08] sm:$0xff]
    %v497 = vld [vmem:[%s2 + $0xe10] sm:$0xff]
    %v498 = vld [vmem:[%s2 + $0xe18] sm:$0xff]
    %v499 = vld [vmem:[%s2 + $0xe20] sm:$0xff]
    %v500 = vld [vmem:[%s2 + $0xe28] sm:$0xff]
    %v501 = vld [vmem:[%s2 + $0xe30] sm:$0xff]
    %v502 = vld [vmem:[%s2 + $0xe38] sm:$0xff]
    %v503 = vld [vmem:[%s2 + $0xe40] sm:$0xff]
    %v504 = vld [vmem:[%s2 + $0xe48] sm:$0xff]
    %v505 = vld [vmem:[%s2 + $0xe50] sm:$0xff]
    %v506 = vld [vmem:[%s2 + $0xe58] sm:$0xff]
    %v507 = vld [vmem:[%s2 + $0xe60] sm:$0xff]
    %v508 = vld [vmem:[%s2 + $0xe68] sm:$0xff]
    %v509 = vld [vmem:[%s2 + $0xe70] sm:$0xff]
    %v510 = vld [vmem:[%s2 + $0xe78] sm:$0xff]
    %v511 = vld [vmem:[%s2 + $0xe80] sm:$0xff]
    %v512 = vld [vmem:[%s2 + $0xe88] sm:$0xff]
    %v513 = vld [vmem:[%s2 + $0xe90] sm:$0xff]
    %v514 = vld [vmem:[%s2 + $0xe98] sm:$0xff]
    %v515 = vld [vmem:[%s2 + $0xea0] sm:$0xff]
    %v516 = vld [vmem:[%s2 + $0xea8] sm:$0xff]
    %v517 = vld [vmem:[%s2 + $0xeb0] sm:$0xff]
    %v518 = vld [vmem:[%s2 + $0xeb8] sm:$0xff]
    %v519 = vld [vmem:[%s2 + $0xec0] sm:$0xff]
    %v520 = vld [vmem:[%s2 + $0xec8] sm:$0xff]
    %v521 = vld [vmem:[%s2 + $0xed0] sm:$0xff]
    %v522 = vld [vmem:[%s2 + $0xed8] sm:$0xff]
    %v523 = vld [vmem:[%s2 + $0xee0] sm:$0xff]
    %v524 = vld [vmem:[%s2 + $0xee8] sm:$0xff]
    %v525 = vld [vmem:[%s2 + $0xef0] sm:$0xff]
    %v526 = vld [vmem:[%s2 + $0xef8] sm:$0xff]
    %v527 = vld [vmem:[%s2 + $0xf00] sm:$0xff]
    %v528 = vld [vmem:[%s2 + $0xf08] sm:$0xff]
    %v529 = vld [vmem:[%s2 + $0xf10] sm:$0xff]
    %v530 = vld [vmem:[%s2 + $0xf18] sm:$0xff]
    %v531 = vld [vmem:[%s2 + $0xf20] sm:$0xff]
    %v532 = vld [vmem:[%s2 + $0xf28] sm:$0xff]
    %v533 = vld [vmem:[%s2 + $0xf30] sm:$0xff]
    %v534 = vld [vmem:[%s2 + $0xf38] sm:$0xff]
    %v535 = vld [vmem:[%s2 + $0xf40] sm:$0xff]
    %v536 = vld [vmem:[%s2 + $0xf48] sm:$0xff]
    %v537 = vld [vmem:[%s2 + $0xf50] sm:$0xff]
    %v538 = vld [vmem:[%s2 + $0xf58] sm:$0xff]
    %v539 = vld [vmem:[%s2 + $0xf60] sm:$0xff]
    %v540 = vld [vmem:[%s2 + $0xf68] sm:$0xff]
    %v541 = vld [vmem:[%s2 + $0xf70] sm:$0xff]
    %v542 = vld [vmem:[%s2 + $0xf78] sm:$0xff]
    %v543 = vld [vmem:[%s2 + $0xf80] sm:$0xff]
    %v544 = vld [vmem:[%s2 + $0xf88] sm:$0xff]
    %v545 = vld [vmem:[%s2 + $0xf90] sm:$0xff]
    %v546 = vld [vmem:[%s2 + $0xf98] sm:$0xff]
    %v547 = vld [vmem:[%s2 + $0xfa0] sm:$0xff]
    %v548 = vld [vmem:[%s2 + $0xfa8] sm:$0xff]
    %v549 = vld [vmem:[%s2 + $0xfb0] sm:$0xff]
    %v550 = vld [vmem:[%s2 + $0xfb8] sm:$0xff]
    %v551 = vld [vmem:[%s2 + $0xfc0] sm:$0xff]
    %v552 = vld [vmem:[%s2 + $0xfc8] sm:$0xff]
    %v553 = vld [vmem:[%s2 + $0xfd0] sm:$0xff]
    %v554 = vld [vmem:[%s2 + $0xfd8] sm:$0xff]
    %v555 = vld [vmem:[%s2 + $0xfe0] sm:$0xff]
    %v556 = vld [vmem:[%s2 + $0xfe8] sm:$0xff]
    %v557 = vld [vmem:[%s2 + $0xff0] sm:$0xff]
    %v558 = vld [vmem:[%s2 + $0xff8] sm:$0xff]
    %v559 = vld [vmem:[%s2 + $0x1000] sm:$0xff]
    %v560 = vld [vmem:[%s2 + $0x1008] sm:$0xff]
    %v561 = vld [vmem:[%s2 + $0x1010] sm:$0xff]
    %v562 = vld [vmem:[%s2 + $0x1018] sm:$0xff]
    %v563 = vld [vmem:[%s2 + $0x1020] sm:$0xff]
    %v564 = vld [vmem:[%s2 + $0x1028] sm:$0xff]
    %v565 = vld [vmem:[%s2 + $0x1030] sm:$0xff]
    %v566 = vld [vmem:[%s2 + $0x1038] sm:$0xff]
    %v567 = vld [vmem:[%s2 + $0x1040] sm:$0xff]
    %v568 = vld [vmem:[%s2 + $0x1048] sm:$0xff]
    %v569 = vld [vmem:[%s2 + $0x1050] sm:$0xff]
    %v570 = vld [vmem:[%s2 + $0x1058] sm:$0xff]
    %v571 = vld [vmem:[%s2 + $0x1060] sm:$0xff]
    %v572 = vld [vmem:[%s2 + $0x1068] sm:$0xff]
    %v573 = vld [vmem:[%s2 + $0x1070] sm:$0xff]
    %v574 = vld [vmem:[%s2 + $0x1078] sm:$0xff]
    %v575 = vld [vmem:[%s2 + $0x1080] sm:$0xff]
    %v576 = vld [vmem:[%s2 + $0x1088] sm:$0xff]
    %v577 = vld [vmem:[%s2 + $0x1090] sm:$0xff]
    %v578 = vld [vmem:[%s2 + $0x1098] sm:$0xff]
    %v579 = vld [vmem:[%s2 + $0x10a0] sm:$0xff]
    %v580 = vld [vmem:[%s2 + $0x10a8] sm:$0xff]
    %v581 = vld [vmem:[%s2 + $0x10b0] sm:$0xff]
    %v582 = vld [vmem:[%s2 + $0x10b8] sm:$0xff]
    %v583 = vld [vmem:[%s2 + $0x10c0] sm:$0xff]
    %v584 = vld [vmem:[%s2 + $0x10c8] sm:$0xff]
    %v585 = vld [vmem:[%s2 + $0x10d0] sm:$0xff]
    %v586 = vld [vmem:[%s2 + $0x10d8] sm:$0xff]
    %v587 = vld [vmem:[%s2 + $0x10e0] sm:$0xff]
    %v588 = vld [vmem:[%s2 + $0x10e8] sm:$0xff]
    %v589 = vld [vmem:[%s2 + $0x10f0] sm:$0xff]
    %v590 = vld [vmem:[%s2 + $0x10f8] sm:$0xff]
    %v591 = vld [vmem:[%s2 + $0x1100] sm:$0xff]
    %v592 = vld [vmem:[%s2 + $0x1108] sm:$0xff]
    %v593 = vld [vmem:[%s2 + $0x1110] sm:$0xff]
    %v594 = vld [vmem:[%s2 + $0x1118] sm:$0xff]
    %v595 = vld [vmem:[%s2 + $0x1120] sm:$0xff]
    %v596 = vld [vmem:[%s2 + $0x1128] sm:$0xff]
    %v597 = vld [vmem:[%s2 + $0x1130] sm:$0xff]
    %v598 = vld [vmem:[%s2 + $0x1138] sm:$0xff]
    %v599 = vld [vmem:[%s2 + $0x1140] sm:$0xff]
    %v600 = vld [vmem:[%s2 + $0x1148] sm:$0xff]
    %v601 = vld [vmem:[%s2 + $0x1150] sm:$0xff]
    %v602 = vld [vmem:[%s2 + $0x1158] sm:$0xff]
    %v603 = vld [vmem:[%s2 + $0x1160] sm:$0xff]
    %v604 = vld [vmem:[%s2 + $0x1168] sm:$0xff]
    %v605 = vld [vmem:[%s2 + $0x1170] sm:$0xff]
    %v606 = vld [vmem:[%s2 + $0x1178] sm:$0xff]
    %v607 = vld [vmem:[%s2 + $0x1180] sm:$0xff]
    %v608 = vld [vmem:[%s2 + $0x1188] sm:$0xff]
    %v609 = vld [vmem:[%s2 + $0x1190] sm:$0xff]
    %v610 = vld [vmem:[%s2 + $0x1198] sm:$0xff]
    %v611 = vld [vmem:[%s2 + $0x11a0] sm:$0xff]
    %v612 = vld [vmem:[%s2 + $0x11a8] sm:$0xff]
    %v613 = vld [vmem:[%s2 + $0x11b0] sm:$0xff]
    %v614 = vld [vmem:[%s2 + $0x11b8] sm:$0xff]
    %v615 = vld [vmem:[%s2 + $0x11c0] sm:$0xff]
    %v616 = vld [vmem:[%s2 + $0x11c8] sm:$0xff]
    %v617 = vld [vmem:[%s2 + $0x11d0] sm:$0xff]
    %v618 = vld [vmem:[%s2 + $0x11d8] sm:$0xff]
    %v619 = vld [vmem:[%s2 + $0x11e0] sm:$0xff]
    %v620 = vld [vmem:[%s2 + $0x11e8] sm:$0xff]
    %v621 = vld [vmem:[%s2 + $0x11f0] sm:$0xff]
    %v622 = vld [vmem:[%s2 + $0x11f8] sm:$0xff]
    %v623 = vld [vmem:[%s2 + $0x1200] sm:$0xff]
    %v624 = vld [vmem:[%s2 + $0x1208] sm:$0xff]
    %v625 = vld [vmem:[%s2 + $0x1210] sm:$0xff]
    %v626 = vld [vmem:[%s2 + $0x1218] sm:$0xff]
    %v627 = vld [vmem:[%s2 + $0x1220] sm:$0xff]
    %v628 = vld [vmem:[%s2 + $0x1228] sm:$0xff]
    %v629 = vld [vmem:[%s2 + $0x1230] sm:$0xff]
    %v630 = vld [vmem:[%s2 + $0x1238] sm:$0xff]
    %v631 = vld [vmem:[%s2 + $0x1240] sm:$0xff]
    %v632 = vld [vmem:[%s2 + $0x1248] sm:$0xff]
    %v633 = vld [vmem:[%s2 + $0x1250] sm:$0xff]
    %v634 = vld [vmem:[%s2 + $0x1258] sm:$0xff]
    %v635 = vld [vmem:[%s3] sm:$0xff]
    %v636 = vld [vmem:[%s3 + $0x8] sm:$0xf]
    %v639 = vperm.slane %v635, 0
    %v640 = vperm.slane %v635, 1
    %v641 = vperm.slane %v635, 2
    %v642 = vperm.slane %v635, 3
    %v643 = vperm.slane %v635, 4
    %v644 = vperm.slane %v635, 5
    %v645 = vperm.slane %v635, 6
    %v646 = vperm.slane %v635, 7
    %v647 = vperm.slane %v636, 0
    %v648 = vperm.slane %v636, 1
    %v649 = vperm.slane %v636, 2
    %v650 = vperm.slane %v636, 3
    %664 = vst [vmem:[#allocation1] ss:$4 sm:$0xff] %v45
    %s666 = scalar_lea.vmem [#allocation1], 32
    %667 = vst [vmem:[%s666] ss:$4 sm:$0xff] %v46
    %v668 = vld.sshfl [vmem:[#allocation1] sm:$0xff pattern:$0x73625140]
    %v669 = vld.sshfl [vmem:[#allocation1 + $0x8] sm:$0xff pattern:$0x73625140]
    %v670 = vld.sshfl [vmem:[#allocation1 + $0x10] sm:$0xff pattern:$0x73625140]
    %v671 = vld.sshfl [vmem:[#allocation1 + $0x18] sm:$0xff pattern:$0x73625140]
    %v672 = vld.sshfl [vmem:[#allocation1 + $0x20] sm:$0xff pattern:$0x73625140]
    %v673 = vld.sshfl [vmem:[#allocation1 + $0x28] sm:$0xff pattern:$0x73625140]
    %v674 = vld.sshfl [vmem:[#allocation1 + $0x30] sm:$0xff pattern:$0x73625140]
    %v1269 = vunpack.c.l.b16 %v47
    %v1270 = vunpack.c.h.b16 %v47
    %v1271 = vunpack.c.l.b16 %v48
    %v1272 = vunpack.c.h.b16 %v48
    %v1273 = vunpack.c.l.b16 %v49
    %v1274 = vunpack.c.h.b16 %v49
    %v1275 = vunpack.c.l.b16 %v50
    %v1276 = vunpack.c.h.b16 %v50
    %v1277 = vunpack.c.l.b16 %v51
    %v1278 = vunpack.c.h.b16 %v51
    %v1279 = vunpack.c.l.b16 %v52
    %v1280 = vunpack.c.h.b16 %v52
    %v1281 = vunpack.c.l.b16 %v53
    %v1282 = vunpack.c.h.b16 %v53
    %v1283 = vunpack.c.l.b16 %v54
    %v1284 = vunpack.c.h.b16 %v54
    %v1285 = vunpack.c.l.b16 %v55
    %v1286 = vunpack.c.h.b16 %v55
    %v1287 = vunpack.c.l.b16 %v56
    %v1288 = vunpack.c.h.b16 %v56
    %v1289 = vunpack.c.l.b16 %v57
    %v1290 = vunpack.c.h.b16 %v57
    %v1291 = vunpack.c.l.b16 %v58
    %v1292 = vunpack.c.h.b16 %v58
    %v1293 = vunpack.c.l.b16 %v59
    %v1294 = vunpack.c.h.b16 %v59
    %v1295 = vunpack.c.l.b16 %v60
    %v1296 = vunpack.c.h.b16 %v60
    %v1297 = vunpack.c.l.b16 %v61
    %v1298 = vunpack.c.h.b16 %v61
    %v1299 = vunpack.c.l.b16 %v62
    %v1300 = vunpack.c.h.b16 %v62
    %v1301 = vunpack.c.l.b16 %v63
    %v1302 = vunpack.c.h.b16 %v63
    %v1303 = vunpack.c.l.b16 %v64
    %v1304 = vunpack.c.h.b16 %v64
    %v1305 = vunpack.c.l.b16 %v65
    %v1306 = vunpack.c.h.b16 %v65
    %v1307 = vunpack.c.l.b16 %v66
    %v1308 = vunpack.c.h.b16 %v66
    %v1309 = vunpack.c.l.b16 %v67
    %v1310 = vunpack.c.h.b16 %v67
    %v1311 = vunpack.c.l.b16 %v68
    %v1312 = vunpack.c.h.b16 %v68
    %v1313 = vunpack.c.l.b16 %v69
    %v1314 = vunpack.c.h.b16 %v69
    %v1315 = vunpack.c.l.b16 %v70
    %v1316 = vunpack.c.h.b16 %v70
    %v1317 = vunpack.c.l.b16 %v71
    %v1318 = vunpack.c.h.b16 %v71
    %v1319 = vunpack.c.l.b16 %v72
    %v1320 = vunpack.c.h.b16 %v72
    %v1321 = vunpack.c.l.b16 %v73
    %v1322 = vunpack.c.h.b16 %v73
    %v1323 = vunpack.c.l.b16 %v74
    %v1324 = vunpack.c.h.b16 %v74
    %v1325 = vunpack.c.l.b16 %v75
    %v1326 = vunpack.c.h.b16 %v75
    %v1327 = vunpack.c.l.b16 %v76
    %v1328 = vunpack.c.h.b16 %v76
    %v1329 = vunpack.c.l.b16 %v77
    %v1330 = vunpack.c.h.b16 %v77
    %v1331 = vunpack.c.l.b16 %v78
    %v1332 = vunpack.c.h.b16 %v78
    %v1333 = vunpack.c.l.b16 %v79
    %v1334 = vunpack.c.h.b16 %v79
    %v1335 = vunpack.c.l.b16 %v80
    %v1336 = vunpack.c.h.b16 %v80
    %v1337 = vunpack.c.l.b16 %v81
    %v1338 = vunpack.c.h.b16 %v81
    %v1339 = vunpack.c.l.b16 %v82
    %v1340 = vunpack.c.h.b16 %v82
    %v1341 = vunpack.c.l.b16 %v83
    %v1342 = vunpack.c.h.b16 %v83
    %v1343 = vunpack.c.l.b16 %v84
    %v1344 = vunpack.c.h.b16 %v84
    %v1345 = vunpack.c.l.b16 %v85
    %v1346 = vunpack.c.h.b16 %v85
    %v1347 = vunpack.c.l.b16 %v86
    %v1348 = vunpack.c.h.b16 %v86
    %v1349 = vunpack.c.l.b16 %v87
    %v1350 = vunpack.c.h.b16 %v87
    %v1351 = vunpack.c.l.b16 %v88
    %v1352 = vunpack.c.h.b16 %v88
    %v1353 = vunpack.c.l.b16 %v89
    %v1354 = vunpack.c.h.b16 %v89
    %v1355 = vunpack.c.l.b16 %v90
    %v1356 = vunpack.c.h.b16 %v90
    %v1357 = vunpack.c.l.b16 %v91
    %v1358 = vunpack.c.h.b16 %v91
    %v1359 = vunpack.c.l.b16 %v92
    %v1360 = vunpack.c.h.b16 %v92
    %v1361 = vunpack.c.l.b16 %v93
    %v1362 = vunpack.c.h.b16 %v93
    %v1363 = vunpack.c.l.b16 %v94
    %v1364 = vunpack.c.h.b16 %v94
    %v1365 = vunpack.c.l.b16 %v95
    %v1366 = vunpack.c.h.b16 %v95
    %v1367 = vunpack.c.l.b16 %v96
    %v1368 = vunpack.c.h.b16 %v96
    %v1369 = vunpack.c.l.b16 %v97
    %v1370 = vunpack.c.h.b16 %v97
    %v1371 = vunpack.c.l.b16 %v98
    %v1372 = vunpack.c.h.b16 %v98
    %v1373 = vunpack.c.l.b16 %v99
    %v1374 = vunpack.c.h.b16 %v99
    %v1375 = vunpack.c.l.b16 %v100
    %v1376 = vunpack.c.h.b16 %v100
    %v1377 = vunpack.c.l.b16 %v101
    %v1378 = vunpack.c.h.b16 %v101
    %v1379 = vunpack.c.l.b16 %v102
    %v1380 = vunpack.c.h.b16 %v102
    %v1381 = vunpack.c.l.b16 %v103
    %v1382 = vunpack.c.h.b16 %v103
    %v1383 = vunpack.c.l.b16 %v104
    %v1384 = vunpack.c.h.b16 %v104
    %v1385 = vunpack.c.l.b16 %v105
    %v1386 = vunpack.c.h.b16 %v105
    %v1387 = vunpack.c.l.b16 %v106
    %v1388 = vunpack.c.h.b16 %v106
    %v1389 = vunpack.c.l.b16 %v107
    %v1390 = vunpack.c.h.b16 %v107
    %v1391 = vunpack.c.l.b16 %v108
    %v1392 = vunpack.c.h.b16 %v108
    %v1393 = vunpack.c.l.b16 %v109
    %v1394 = vunpack.c.h.b16 %v109
    %v1395 = vunpack.c.l.b16 %v110
    %v1396 = vunpack.c.h.b16 %v110
    %v1397 = vunpack.c.l.b16 %v111
    %v1398 = vunpack.c.h.b16 %v111
    %v1399 = vunpack.c.l.b16 %v112
    %v1400 = vunpack.c.h.b16 %v112
    %v1401 = vunpack.c.l.b16 %v113
    %v1402 = vunpack.c.h.b16 %v113
    %v1403 = vunpack.c.l.b16 %v114
    %v1404 = vunpack.c.h.b16 %v114
    %v1405 = vunpack.c.l.b16 %v115
    %v1406 = vunpack.c.h.b16 %v115
    %v1407 = vunpack.c.l.b16 %v116
    %v1408 = vunpack.c.h.b16 %v116
    %v1409 = vunpack.c.l.b16 %v117
    %v1410 = vunpack.c.h.b16 %v117
    %v1411 = vunpack.c.l.b16 %v118
    %v1412 = vunpack.c.h.b16 %v118
    %v1413 = vunpack.c.l.b16 %v119
    %v1414 = vunpack.c.h.b16 %v119
    %v1415 = vunpack.c.l.b16 %v120
    %v1416 = vunpack.c.h.b16 %v120
    %v1417 = vunpack.c.l.b16 %v121
    %v1418 = vunpack.c.h.b16 %v121
    %v1419 = vunpack.c.l.b16 %v122
    %v1420 = vunpack.c.h.b16 %v122
    %v1421 = vunpack.c.l.b16 %v123
    %v1422 = vunpack.c.h.b16 %v123
    %v1423 = vunpack.c.l.b16 %v124
    %v1424 = vunpack.c.h.b16 %v124
    %v1425 = vunpack.c.l.b16 %v125
    %v1426 = vunpack.c.h.b16 %v125
    %v1427 = vunpack.c.l.b16 %v126
    %v1428 = vunpack.c.h.b16 %v126
    %v1429 = vunpack.c.l.b16 %v127
    %v1430 = vunpack.c.h.b16 %v127
    %v1431 = vunpack.c.l.b16 %v128
    %v1432 = vunpack.c.h.b16 %v128
    %v1433 = vunpack.c.l.b16 %v129
    %v1434 = vunpack.c.h.b16 %v129
    %v1435 = vunpack.c.l.b16 %v130
    %v1436 = vunpack.c.h.b16 %v130
    %v1437 = vunpack.c.l.b16 %v131
    %v1438 = vunpack.c.h.b16 %v131
    %v1439 = vunpack.c.l.b16 %v132
    %v1440 = vunpack.c.h.b16 %v132
    %v1441 = vunpack.c.l.b16 %v133
    %v1442 = vunpack.c.h.b16 %v133
    %v1443 = vunpack.c.l.b16 %v134
    %v1444 = vunpack.c.h.b16 %v134
    %v1445 = vunpack.c.l.b16 %v135
    %v1446 = vunpack.c.h.b16 %v135
    %v1447 = vunpack.c.l.b16 %v136
    %v1448 = vunpack.c.h.b16 %v136
    %v1449 = vunpack.c.l.b16 %v137
    %v1450 = vunpack.c.h.b16 %v137
    %v1451 = vunpack.c.l.b16 %v138
    %v1452 = vunpack.c.h.b16 %v138
    %v1453 = vunpack.c.l.b16 %v139
    %v1454 = vunpack.c.h.b16 %v139
    %v1455 = vunpack.c.l.b16 %v140
    %v1456 = vunpack.c.h.b16 %v140
    %v1457 = vunpack.c.l.b16 %v141
    %v1458 = vunpack.c.h.b16 %v141
    %v1459 = vunpack.c.l.b16 %v142
    %v1460 = vunpack.c.h.b16 %v142
    %v1461 = vunpack.c.l.b16 %v143
    %v1462 = vunpack.c.h.b16 %v143
    %v1463 = vunpack.c.l.b16 %v144
    %v1464 = vunpack.c.h.b16 %v144
    %v1465 = vunpack.c.l.b16 %v145
    %v1466 = vunpack.c.h.b16 %v145
    %v1467 = vunpack.c.l.b16 %v146
    %v1468 = vunpack.c.h.b16 %v146
    %v1469 = vunpack.c.l.b16 %v147
    %v1470 = vunpack.c.h.b16 %v147
    %v1471 = vunpack.c.l.b16 %v148
    %v1472 = vunpack.c.h.b16 %v148
    %v1473 = vunpack.c.l.b16 %v149
    %v1474 = vunpack.c.h.b16 %v149
    %v1475 = vunpack.c.l.b16 %v150
    %v1476 = vunpack.c.h.b16 %v150
    %v1477 = vunpack.c.l.b16 %v151
    %v1478 = vunpack.c.h.b16 %v151
    %v1479 = vunpack.c.l.b16 %v152
    %v1480 = vunpack.c.h.b16 %v152
    %v1481 = vunpack.c.l.b16 %v153
    %v1482 = vunpack.c.h.b16 %v153
    %v1483 = vunpack.c.l.b16 %v154
    %v1484 = vunpack.c.h.b16 %v154
    %v1485 = vunpack.c.l.b16 %v155
    %v1486 = vunpack.c.h.b16 %v155
    %v1487 = vunpack.c.l.b16 %v156
    %v1488 = vunpack.c.h.b16 %v156
    %v1489 = vunpack.c.l.b16 %v157
    %v1490 = vunpack.c.h.b16 %v157
    %v1491 = vunpack.c.l.b16 %v158
    %v1492 = vunpack.c.h.b16 %v158
    %v1493 = vunpack.c.l.b16 %v159
    %v1494 = vunpack.c.h.b16 %v159
    %v1495 = vunpack.c.l.b16 %v160
    %v1496 = vunpack.c.h.b16 %v160
    %v1497 = vunpack.c.l.b16 %v161
    %v1498 = vunpack.c.h.b16 %v161
    %v1499 = vunpack.c.l.b16 %v162
    %v1500 = vunpack.c.h.b16 %v162
    %v1501 = vunpack.c.l.b16 %v163
    %v1502 = vunpack.c.h.b16 %v163
    %v1503 = vunpack.c.l.b16 %v164
    %v1504 = vunpack.c.h.b16 %v164
    %v1505 = vunpack.c.l.b16 %v165
    %v1506 = vunpack.c.h.b16 %v165
    %v1507 = vunpack.c.l.b16 %v166
    %v1508 = vunpack.c.h.b16 %v166
    %v1509 = vunpack.c.l.b16 %v167
    %v1510 = vunpack.c.h.b16 %v167
    %v1511 = vunpack.c.l.b16 %v168
    %v1512 = vunpack.c.h.b16 %v168
    %v1513 = vunpack.c.l.b16 %v169
    %v1514 = vunpack.c.h.b16 %v169
    %v1515 = vunpack.c.l.b16 %v170
    %v1516 = vunpack.c.h.b16 %v170
    %v1517 = vunpack.c.l.b16 %v171
    %v1518 = vunpack.c.h.b16 %v171
    %v1519 = vunpack.c.l.b16 %v172
    %v1520 = vunpack.c.h.b16 %v172
    %v1521 = vunpack.c.l.b16 %v173
    %v1522 = vunpack.c.h.b16 %v173
    %v1523 = vunpack.c.l.b16 %v174
    %v1524 = vunpack.c.h.b16 %v174
    %v1525 = vunpack.c.l.b16 %v175
    %v1526 = vunpack.c.h.b16 %v175
    %v1527 = vunpack.c.l.b16 %v176
    %v1528 = vunpack.c.h.b16 %v176
    %v1529 = vunpack.c.l.b16 %v177
    %v1530 = vunpack.c.h.b16 %v177
    %v1531 = vunpack.c.l.b16 %v178
    %v1532 = vunpack.c.h.b16 %v178
    %v1533 = vunpack.c.l.b16 %v179
    %v1534 = vunpack.c.h.b16 %v179
    %v1535 = vunpack.c.l.b16 %v180
    %v1536 = vunpack.c.h.b16 %v180
    %v1537 = vunpack.c.l.b16 %v181
    %v1538 = vunpack.c.h.b16 %v181
    %v1539 = vunpack.c.l.b16 %v182
    %v1540 = vunpack.c.h.b16 %v182
    %v1541 = vunpack.c.l.b16 %v183
    %v1542 = vunpack.c.h.b16 %v183
    %v1543 = vunpack.c.l.b16 %v184
    %v1544 = vunpack.c.h.b16 %v184
    %v1545 = vunpack.c.l.b16 %v185
    %v1546 = vunpack.c.h.b16 %v185
    %v1547 = vunpack.c.l.b16 %v186
    %v1548 = vunpack.c.h.b16 %v186
    %v1549 = vunpack.c.l.b16 %v187
    %v1550 = vunpack.c.h.b16 %v187
    %v1551 = vunpack.c.l.b16 %v188
    %v1552 = vunpack.c.h.b16 %v188
    %v1553 = vunpack.c.l.b16 %v189
    %v1554 = vunpack.c.h.b16 %v189
    %v1555 = vunpack.c.l.b16 %v190
    %v1556 = vunpack.c.h.b16 %v190
    %v1557 = vunpack.c.l.b16 %v191
    %v1558 = vunpack.c.h.b16 %v191
    %v1559 = vunpack.c.l.b16 %v192
    %v1560 = vunpack.c.h.b16 %v192
    %v1561 = vunpack.c.l.b16 %v193
    %v1562 = vunpack.c.h.b16 %v193
    %v1563 = vunpack.c.l.b16 %v194
    %v1564 = vunpack.c.h.b16 %v194
    %v1565 = vunpack.c.l.b16 %v195
    %v1566 = vunpack.c.h.b16 %v195
    %v1567 = vunpack.c.l.b16 %v196
    %v1568 = vunpack.c.h.b16 %v196
    %v1569 = vunpack.c.l.b16 %v197
    %v1570 = vunpack.c.h.b16 %v197
    %v1571 = vunpack.c.l.b16 %v198
    %v1572 = vunpack.c.h.b16 %v198
    %v1573 = vunpack.c.l.b16 %v199
    %v1574 = vunpack.c.h.b16 %v199
    %v1575 = vunpack.c.l.b16 %v200
    %v1576 = vunpack.c.h.b16 %v200
    %v1577 = vunpack.c.l.b16 %v201
    %v1578 = vunpack.c.h.b16 %v201
    %v1579 = vunpack.c.l.b16 %v202
    %v1580 = vunpack.c.h.b16 %v202
    %v1581 = vunpack.c.l.b16 %v203
    %v1582 = vunpack.c.h.b16 %v203
    %v1583 = vunpack.c.l.b16 %v204
    %v1584 = vunpack.c.h.b16 %v204
    %v1585 = vunpack.c.l.b16 %v205
    %v1586 = vunpack.c.h.b16 %v205
    %v1587 = vunpack.c.l.b16 %v206
    %v1588 = vunpack.c.h.b16 %v206
    %v1589 = vunpack.c.l.b16 %v207
    %v1590 = vunpack.c.h.b16 %v207
    %v1591 = vunpack.c.l.b16 %v208
    %v1592 = vunpack.c.h.b16 %v208
    %v1593 = vunpack.c.l.b16 %v209
    %v1594 = vunpack.c.h.b16 %v209
    %v1595 = vunpack.c.l.b16 %v210
    %v1596 = vunpack.c.h.b16 %v210
    %v1597 = vunpack.c.l.b16 %v211
    %v1598 = vunpack.c.h.b16 %v211
    %v1599 = vunpack.c.l.b16 %v212
    %v1600 = vunpack.c.h.b16 %v212
    %v1601 = vunpack.c.l.b16 %v213
    %v1602 = vunpack.c.h.b16 %v213
    %v1603 = vunpack.c.l.b16 %v214
    %v1604 = vunpack.c.h.b16 %v214
    %v1605 = vunpack.c.l.b16 %v215
    %v1606 = vunpack.c.h.b16 %v215
    %v1607 = vunpack.c.l.b16 %v216
    %v1608 = vunpack.c.h.b16 %v216
    %v1609 = vunpack.c.l.b16 %v217
    %v1610 = vunpack.c.h.b16 %v217
    %v1611 = vunpack.c.l.b16 %v218
    %v1612 = vunpack.c.h.b16 %v218
    %v1613 = vunpack.c.l.b16 %v219
    %v1614 = vunpack.c.h.b16 %v219
    %v1615 = vunpack.c.l.b16 %v220
    %v1616 = vunpack.c.h.b16 %v220
    %v1617 = vunpack.c.l.b16 %v221
    %v1618 = vunpack.c.h.b16 %v221
    %v1619 = vunpack.c.l.b16 %v222
    %v1620 = vunpack.c.h.b16 %v222
    %v1621 = vunpack.c.l.b16 %v223
    %v1622 = vunpack.c.h.b16 %v223
    %v1623 = vunpack.c.l.b16 %v224
    %v1624 = vunpack.c.h.b16 %v224
    %v1625 = vunpack.c.l.b16 %v225
    %v1626 = vunpack.c.h.b16 %v225
    %v1627 = vunpack.c.l.b16 %v226
    %v1628 = vunpack.c.h.b16 %v226
    %v1629 = vunpack.c.l.b16 %v227
    %v1630 = vunpack.c.h.b16 %v227
    %v1631 = vunpack.c.l.b16 %v228
    %v1632 = vunpack.c.h.b16 %v228
    %v1633 = vunpack.c.l.b16 %v229
    %v1634 = vunpack.c.h.b16 %v229
    %v1635 = vunpack.c.l.b16 %v230
    %v1636 = vunpack.c.h.b16 %v230
    %v1637 = vunpack.c.l.b16 %v231
    %v1638 = vunpack.c.h.b16 %v231
    %v1639 = vunpack.c.l.b16 %v232
    %v1640 = vunpack.c.h.b16 %v232
    %v1641 = vunpack.c.l.b16 %v233
    %v1642 = vunpack.c.h.b16 %v233
    %v1643 = vunpack.c.l.b16 %v234
    %v1644 = vunpack.c.h.b16 %v234
    %v1645 = vunpack.c.l.b16 %v235
    %v1646 = vunpack.c.h.b16 %v235
    %v1647 = vunpack.c.l.b16 %v236
    %v1648 = vunpack.c.h.b16 %v236
    %v1649 = vunpack.c.l.b16 %v237
    %v1650 = vunpack.c.h.b16 %v237
    %v1651 = vunpack.c.l.b16 %v238
    %v1652 = vunpack.c.h.b16 %v238
    %v1653 = vunpack.c.l.b16 %v239
    %v1654 = vunpack.c.h.b16 %v239
    %v1655 = vunpack.c.l.b16 %v240
    %v1656 = vunpack.c.h.b16 %v240
    %v1657 = vunpack.c.l.b16 %v241
    %v1658 = vunpack.c.h.b16 %v241
    %v1659 = vunpack.c.l.b16 %v242
    %v1660 = vunpack.c.h.b16 %v242
    %v1661 = vunpack.c.l.b16 %v243
    %v1662 = vunpack.c.h.b16 %v243
    %v1663 = vunpack.c.l.b16 %v244
    %v1664 = vunpack.c.h.b16 %v244
    %v1665 = vunpack.c.l.b16 %v245
    %v1666 = vunpack.c.h.b16 %v245
    %v1667 = vunpack.c.l.b16 %v246
    %v1668 = vunpack.c.h.b16 %v246
    %v1669 = vunpack.c.l.b16 %v247
    %v1670 = vunpack.c.h.b16 %v247
    %v1671 = vunpack.c.l.b16 %v248
    %v1672 = vunpack.c.h.b16 %v248
    %v1673 = vunpack.c.l.b16 %v249
    %v1674 = vunpack.c.h.b16 %v249
    %v1675 = vunpack.c.l.b16 %v250
    %v1676 = vunpack.c.h.b16 %v250
    %v1677 = vunpack.c.l.b16 %v251
    %v1678 = vunpack.c.h.b16 %v251
    %v1679 = vunpack.c.l.b16 %v252
    %v1680 = vunpack.c.h.b16 %v252
    %v1681 = vunpack.c.l.b16 %v253
    %v1682 = vunpack.c.h.b16 %v253
    %v1683 = vunpack.c.l.b16 %v254
    %v1684 = vunpack.c.h.b16 %v254
    %v1685 = vunpack.c.l.b16 %v255
    %v1686 = vunpack.c.h.b16 %v255
    %v1687 = vunpack.c.l.b16 %v256
    %v1688 = vunpack.c.h.b16 %v256
    %v1689 = vunpack.c.l.b16 %v257
    %v1690 = vunpack.c.h.b16 %v257
    %v1691 = vunpack.c.l.b16 %v258
    %v1692 = vunpack.c.h.b16 %v258
    %v1693 = vunpack.c.l.b16 %v259
    %v1694 = vunpack.c.h.b16 %v259
    %v1695 = vunpack.c.l.b16 %v260
    %v1696 = vunpack.c.h.b16 %v260
    %v1697 = vunpack.c.l.b16 %v261
    %v1698 = vunpack.c.h.b16 %v261
    %v1699 = vunpack.c.l.b16 %v262
    %v1700 = vunpack.c.h.b16 %v262
    %v1701 = vunpack.c.l.b16 %v263
    %v1702 = vunpack.c.h.b16 %v263
    %v1703 = vunpack.c.l.b16 %v264
    %v1704 = vunpack.c.h.b16 %v264
    %v1705 = vunpack.c.l.b16 %v265
    %v1706 = vunpack.c.h.b16 %v265
    %v1707 = vunpack.c.l.b16 %v266
    %v1708 = vunpack.c.h.b16 %v266
    %v1709 = vunpack.c.l.b16 %v267
    %v1710 = vunpack.c.h.b16 %v267
    %v1711 = vunpack.c.l.b16 %v268
    %v1712 = vunpack.c.h.b16 %v268
    %v1713 = vunpack.c.l.b16 %v269
    %v1714 = vunpack.c.h.b16 %v269
    %v1715 = vunpack.c.l.b16 %v270
    %v1716 = vunpack.c.h.b16 %v270
    %v1717 = vunpack.c.l.b16 %v271
    %v1718 = vunpack.c.h.b16 %v271
    %v1719 = vunpack.c.l.b16 %v272
    %v1720 = vunpack.c.h.b16 %v272
    %v1721 = vunpack.c.l.b16 %v273
    %v1722 = vunpack.c.h.b16 %v273
    %v1723 = vunpack.c.l.b16 %v274
    %v1724 = vunpack.c.h.b16 %v274
    %v1725 = vunpack.c.l.b16 %v275
    %v1726 = vunpack.c.h.b16 %v275
    %v1727 = vunpack.c.l.b16 %v276
    %v1728 = vunpack.c.h.b16 %v276
    %v1729 = vunpack.c.l.b16 %v277
    %v1730 = vunpack.c.h.b16 %v277
    %v1731 = vunpack.c.l.b16 %v278
    %v1732 = vunpack.c.h.b16 %v278
    %v1733 = vunpack.c.l.b16 %v279
    %v1734 = vunpack.c.h.b16 %v279
    %v1735 = vunpack.c.l.b16 %v280
    %v1736 = vunpack.c.h.b16 %v280
    %v1737 = vunpack.c.l.b16 %v281
    %v1738 = vunpack.c.h.b16 %v281
    %v1739 = vunpack.c.l.b16 %v282
    %v1740 = vunpack.c.h.b16 %v282
    %v1741 = vunpack.c.l.b16 %v283
    %v1742 = vunpack.c.h.b16 %v283
    %v1743 = vunpack.c.l.b16 %v284
    %v1744 = vunpack.c.h.b16 %v284
    %v1745 = vunpack.c.l.b16 %v285
    %v1746 = vunpack.c.h.b16 %v285
    %v1747 = vunpack.c.l.b16 %v286
    %v1748 = vunpack.c.h.b16 %v286
    %v1749 = vunpack.c.l.b16 %v287
    %v1750 = vunpack.c.h.b16 %v287
    %v1751 = vunpack.c.l.b16 %v288
    %v1752 = vunpack.c.h.b16 %v288
    %v1753 = vunpack.c.l.b16 %v289
    %v1754 = vunpack.c.h.b16 %v289
    %v1755 = vunpack.c.l.b16 %v290
    %v1756 = vunpack.c.h.b16 %v290
    %v1757 = vunpack.c.l.b16 %v291
    %v1758 = vunpack.c.h.b16 %v291
    %v1759 = vunpack.c.l.b16 %v292
    %v1760 = vunpack.c.h.b16 %v292
    %v1761 = vunpack.c.l.b16 %v293
    %v1762 = vunpack.c.h.b16 %v293
    %v1763 = vunpack.c.l.b16 %v294
    %v1764 = vunpack.c.h.b16 %v294
    %v1765 = vunpack.c.l.b16 %v295
    %v1766 = vunpack.c.h.b16 %v295
    %v1767 = vunpack.c.l.b16 %v296
    %v1768 = vunpack.c.h.b16 %v296
    %v1769 = vunpack.c.l.b16 %v297
    %v1770 = vunpack.c.h.b16 %v297
    %v1771 = vunpack.c.l.b16 %v298
    %v1772 = vunpack.c.h.b16 %v298
    %v1773 = vunpack.c.l.b16 %v299
    %v1774 = vunpack.c.h.b16 %v299
    %v1775 = vunpack.c.l.b16 %v300
    %v1776 = vunpack.c.h.b16 %v300
    %v1777 = vunpack.c.l.b16 %v301
    %v1778 = vunpack.c.h.b16 %v301
    %v1779 = vunpack.c.l.b16 %v302
    %v1780 = vunpack.c.h.b16 %v302
    %v1781 = vunpack.c.l.b16 %v303
    %v1782 = vunpack.c.h.b16 %v303
    %v1783 = vunpack.c.l.b16 %v304
    %v1784 = vunpack.c.h.b16 %v304
    %v1785 = vunpack.c.l.b16 %v305
    %v1786 = vunpack.c.h.b16 %v305
    %v1787 = vunpack.c.l.b16 %v306
    %v1788 = vunpack.c.h.b16 %v306
    %v1789 = vunpack.c.l.b16 %v307
    %v1790 = vunpack.c.h.b16 %v307
    %v1791 = vunpack.c.l.b16 %v308
    %v1792 = vunpack.c.h.b16 %v308
    %v1793 = vunpack.c.l.b16 %v309
    %v1794 = vunpack.c.h.b16 %v309
    %v1795 = vunpack.c.l.b16 %v310
    %v1796 = vunpack.c.h.b16 %v310
    %v1797 = vunpack.c.l.b16 %v311
    %v1798 = vunpack.c.h.b16 %v311
    %v1799 = vunpack.c.l.b16 %v312
    %v1800 = vunpack.c.h.b16 %v312
    %v1801 = vunpack.c.l.b16 %v313
    %v1802 = vunpack.c.h.b16 %v313
    %v1803 = vunpack.c.l.b16 %v314
    %v1804 = vunpack.c.h.b16 %v314
    %v1805 = vunpack.c.l.b16 %v315
    %v1806 = vunpack.c.h.b16 %v315
    %v1807 = vunpack.c.l.b16 %v316
    %v1808 = vunpack.c.h.b16 %v316
    %v1809 = vunpack.c.l.b16 %v317
    %v1810 = vunpack.c.h.b16 %v317
    %v1811 = vunpack.c.l.b16 %v318
    %v1812 = vunpack.c.h.b16 %v318
    %v1813 = vunpack.c.l.b16 %v319
    %v1814 = vunpack.c.h.b16 %v319
    %v1815 = vunpack.c.l.b16 %v320
    %v1816 = vunpack.c.h.b16 %v320
    %v1817 = vunpack.c.l.b16 %v321
    %v1818 = vunpack.c.h.b16 %v321
    %v1819 = vunpack.c.l.b16 %v322
    %v1820 = vunpack.c.h.b16 %v322
    %v1821 = vunpack.c.l.b16 %v323
    %v1822 = vunpack.c.h.b16 %v323
    %v1823 = vunpack.c.l.b16 %v324
    %v1824 = vunpack.c.h.b16 %v324
    %v1825 = vunpack.c.l.b16 %v325
    %v1826 = vunpack.c.h.b16 %v325
    %v1827 = vunpack.c.l.b16 %v326
    %v1828 = vunpack.c.h.b16 %v326
    %v1829 = vunpack.c.l.b16 %v327
    %v1830 = vunpack.c.h.b16 %v327
    %v1831 = vunpack.c.l.b16 %v328
    %v1832 = vunpack.c.h.b16 %v328
    %v1833 = vunpack.c.l.b16 %v329
    %v1834 = vunpack.c.h.b16 %v329
    %v1835 = vunpack.c.l.b16 %v330
    %v1836 = vunpack.c.h.b16 %v330
    %v1837 = vunpack.c.l.b16 %v331
    %v1838 = vunpack.c.h.b16 %v331
    %v1839 = vunpack.c.l.b16 %v332
    %v1840 = vunpack.c.h.b16 %v332
    %v1841 = vunpack.c.l.b16 %v333
    %v1842 = vunpack.c.h.b16 %v333
    %v1843 = vunpack.c.l.b16 %v334
    %v1844 = vunpack.c.h.b16 %v334
    %v1845 = vunpack.c.l.b16 %v335
    %v1846 = vunpack.c.h.b16 %v335
    %v1847 = vunpack.c.l.b16 %v336
    %v1848 = vunpack.c.h.b16 %v336
    %v1849 = vunpack.c.l.b16 %v337
    %v1850 = vunpack.c.h.b16 %v337
    %v1851 = vunpack.c.l.b16 %v338
    %v1852 = vunpack.c.h.b16 %v338
    %v1853 = vunpack.c.l.b16 %v339
    %v1854 = vunpack.c.h.b16 %v339
    %v1855 = vunpack.c.l.b16 %v340
    %v1856 = vunpack.c.h.b16 %v340
    %v1857 = vunpack.c.l.b16 %v341
    %v1858 = vunpack.c.h.b16 %v341
    %v1859 = vunpack.c.l.b16 %v342
    %v1860 = vunpack.c.h.b16 %v342
    %v1861 = vunpack.c.l.b16 %v343
    %v1862 = vunpack.c.h.b16 %v343
    %v1863 = vunpack.c.l.b16 %v344
    %v1864 = vunpack.c.h.b16 %v344
    %v1865 = vunpack.c.l.b16 %v345
    %v1866 = vunpack.c.h.b16 %v345
    %v1867 = vunpack.c.l.b16 %v346
    %v1868 = vunpack.c.h.b16 %v346
    %v1869 = vunpack.c.l.b16 %v347
    %v1870 = vunpack.c.h.b16 %v347
    %v1871 = vunpack.c.l.b16 %v348
    %v1872 = vunpack.c.h.b16 %v348
    %v1873 = vunpack.c.l.b16 %v349
    %v1874 = vunpack.c.h.b16 %v349
    %v1875 = vunpack.c.l.b16 %v350
    %v1876 = vunpack.c.h.b16 %v350
    %v1877 = vunpack.c.l.b16 %v351
    %v1878 = vunpack.c.h.b16 %v351
    %v1879 = vunpack.c.l.b16 %v352
    %v1880 = vunpack.c.h.b16 %v352
    %v1881 = vunpack.c.l.b16 %v353
    %v1882 = vunpack.c.h.b16 %v353
    %v1883 = vunpack.c.l.b16 %v354
    %v1884 = vunpack.c.h.b16 %v354
    %v1885 = vunpack.c.l.b16 %v355
    %v1886 = vunpack.c.h.b16 %v355
    %v1887 = vunpack.c.l.b16 %v356
    %v1888 = vunpack.c.h.b16 %v356
    %v1889 = vunpack.c.l.b16 %v357
    %v1890 = vunpack.c.h.b16 %v357
    %v1891 = vunpack.c.l.b16 %v358
    %v1892 = vunpack.c.h.b16 %v358
    %v1893 = vunpack.c.l.b16 %v359
    %v1894 = vunpack.c.h.b16 %v359
    %v1895 = vunpack.c.l.b16 %v360
    %v1896 = vunpack.c.h.b16 %v360
    %v1897 = vunpack.c.l.b16 %v361
    %v1898 = vunpack.c.h.b16 %v361
    %v1899 = vunpack.c.l.b16 %v362
    %v1900 = vunpack.c.h.b16 %v362
    %v1901 = vunpack.c.l.b16 %v363
    %v1902 = vunpack.c.h.b16 %v363
    %v1903 = vunpack.c.l.b16 %v364
    %v1904 = vunpack.c.h.b16 %v364
    %v1905 = vunpack.c.l.b16 %v365
    %v1906 = vunpack.c.h.b16 %v365
    %v1907 = vunpack.c.l.b16 %v366
    %v1908 = vunpack.c.h.b16 %v366
    %v1909 = vunpack.c.l.b16 %v367
    %v1910 = vunpack.c.h.b16 %v367
    %v1911 = vunpack.c.l.b16 %v368
    %v1912 = vunpack.c.h.b16 %v368
    %v1913 = vunpack.c.l.b16 %v369
    %v1914 = vunpack.c.h.b16 %v369
    %v1915 = vunpack.c.l.b16 %v370
    %v1916 = vunpack.c.h.b16 %v370
    %v1917 = vunpack.c.l.b16 %v371
    %v1918 = vunpack.c.h.b16 %v371
    %v1919 = vunpack.c.l.b16 %v372
    %v1920 = vunpack.c.h.b16 %v372
    %v1921 = vunpack.c.l.b16 %v373
    %v1922 = vunpack.c.h.b16 %v373
    %v1923 = vunpack.c.l.b16 %v374
    %v1924 = vunpack.c.h.b16 %v374
    %v1925 = vunpack.c.l.b16 %v375
    %v1926 = vunpack.c.h.b16 %v375
    %v1927 = vunpack.c.l.b16 %v376
    %v1928 = vunpack.c.h.b16 %v376
    %v1929 = vunpack.c.l.b16 %v377
    %v1930 = vunpack.c.h.b16 %v377
    %v1931 = vunpack.c.l.b16 %v378
    %v1932 = vunpack.c.h.b16 %v378
    %v1933 = vunpack.c.l.b16 %v379
    %v1934 = vunpack.c.h.b16 %v379
    %v1935 = vunpack.c.l.b16 %v380
    %v1936 = vunpack.c.h.b16 %v380
    %v1937 = vunpack.c.l.b16 %v381
    %v1938 = vunpack.c.h.b16 %v381
    %v1939 = vunpack.c.l.b16 %v382
    %v1940 = vunpack.c.h.b16 %v382
    %v1941 = vunpack.c.l.b16 %v383
    %v1942 = vunpack.c.h.b16 %v383
    %v1943 = vunpack.c.l.b16 %v384
    %v1944 = vunpack.c.h.b16 %v384
    %v1945 = vunpack.c.l.b16 %v385
    %v1946 = vunpack.c.h.b16 %v385
    %v1947 = vunpack.c.l.b16 %v386
    %v1948 = vunpack.c.h.b16 %v386
    %v1949 = vunpack.c.l.b16 %v387
    %v1950 = vunpack.c.h.b16 %v387
    %v1951 = vunpack.c.l.b16 %v388
    %v1952 = vunpack.c.h.b16 %v388
    %v1953 = vunpack.c.l.b16 %v389
    %v1954 = vunpack.c.h.b16 %v389
    %v1955 = vunpack.c.l.b16 %v390
    %v1956 = vunpack.c.h.b16 %v390
    %v1957 = vunpack.c.l.b16 %v391
    %v1958 = vunpack.c.h.b16 %v391
    %v1959 = vunpack.c.l.b16 %v392
    %v1960 = vunpack.c.h.b16 %v392
    %v1961 = vunpack.c.l.b16 %v393
    %v1962 = vunpack.c.h.b16 %v393
    %v1963 = vunpack.c.l.b16 %v394
    %v1964 = vunpack.c.h.b16 %v394
    %v1965 = vunpack.c.l.b16 %v395
    %v1966 = vunpack.c.h.b16 %v395
    %v1967 = vunpack.c.l.b16 %v396
    %v1968 = vunpack.c.h.b16 %v396
    %v1969 = vunpack.c.l.b16 %v397
    %v1970 = vunpack.c.h.b16 %v397
    %v1971 = vunpack.c.l.b16 %v398
    %v1972 = vunpack.c.h.b16 %v398
    %v1973 = vunpack.c.l.b16 %v399
    %v1974 = vunpack.c.h.b16 %v399
    %v1975 = vunpack.c.l.b16 %v400
    %v1976 = vunpack.c.h.b16 %v400
    %v1977 = vunpack.c.l.b16 %v401
    %v1978 = vunpack.c.h.b16 %v401
    %v1979 = vunpack.c.l.b16 %v402
    %v1980 = vunpack.c.h.b16 %v402
    %v1981 = vunpack.c.l.b16 %v403
    %v1982 = vunpack.c.h.b16 %v403
    %v1983 = vunpack.c.l.b16 %v404
    %v1984 = vunpack.c.h.b16 %v404
    %v1985 = vunpack.c.l.b16 %v405
    %v1986 = vunpack.c.h.b16 %v405
    %v1987 = vunpack.c.l.b16 %v406
    %v1988 = vunpack.c.h.b16 %v406
    %v1989 = vunpack.c.l.b16 %v407
    %v1990 = vunpack.c.h.b16 %v407
    %v1991 = vunpack.c.l.b16 %v408
    %v1992 = vunpack.c.h.b16 %v408
    %v1993 = vunpack.c.l.b16 %v409
    %v1994 = vunpack.c.h.b16 %v409
    %v1995 = vunpack.c.l.b16 %v410
    %v1996 = vunpack.c.h.b16 %v410
    %v1997 = vunpack.c.l.b16 %v411
    %v1998 = vunpack.c.h.b16 %v411
    %v1999 = vunpack.c.l.b16 %v412
    %v2000 = vunpack.c.h.b16 %v412
    %v2001 = vunpack.c.l.b16 %v413
    %v2002 = vunpack.c.h.b16 %v413
    %v2003 = vunpack.c.l.b16 %v414
    %v2004 = vunpack.c.h.b16 %v414
    %v2005 = vunpack.c.l.b16 %v415
    %v2006 = vunpack.c.h.b16 %v415
    %v2007 = vunpack.c.l.b16 %v416
    %v2008 = vunpack.c.h.b16 %v416
    %v2009 = vunpack.c.l.b16 %v417
    %v2010 = vunpack.c.h.b16 %v417
    %v2011 = vunpack.c.l.b16 %v418
    %v2012 = vunpack.c.h.b16 %v418
    %v2013 = vunpack.c.l.b16 %v419
    %v2014 = vunpack.c.h.b16 %v419
    %v2015 = vunpack.c.l.b16 %v420
    %v2016 = vunpack.c.h.b16 %v420
    %v2017 = vunpack.c.l.b16 %v421
    %v2018 = vunpack.c.h.b16 %v421
    %v2019 = vunpack.c.l.b16 %v422
    %v2020 = vunpack.c.h.b16 %v422
    %v2021 = vunpack.c.l.b16 %v423
    %v2022 = vunpack.c.h.b16 %v423
    %v2023 = vunpack.c.l.b16 %v424
    %v2024 = vunpack.c.h.b16 %v424
    %v2025 = vunpack.c.l.b16 %v425
    %v2026 = vunpack.c.h.b16 %v425
    %v2027 = vunpack.c.l.b16 %v426
    %v2028 = vunpack.c.h.b16 %v426
    %v2029 = vunpack.c.l.b16 %v427
    %v2030 = vunpack.c.h.b16 %v427
    %v2031 = vunpack.c.l.b16 %v428
    %v2032 = vunpack.c.h.b16 %v428
    %v2033 = vunpack.c.l.b16 %v429
    %v2034 = vunpack.c.h.b16 %v429
    %v2035 = vunpack.c.l.b16 %v430
    %v2036 = vunpack.c.h.b16 %v430
    %v2037 = vunpack.c.l.b16 %v431
    %v2038 = vunpack.c.h.b16 %v431
    %v2039 = vunpack.c.l.b16 %v432
    %v2040 = vunpack.c.h.b16 %v432
    %v2041 = vunpack.c.l.b16 %v433
    %v2042 = vunpack.c.h.b16 %v433
    %v2043 = vunpack.c.l.b16 %v434
    %v2044 = vunpack.c.h.b16 %v434
    %v2045 = vunpack.c.l.b16 %v435
    %v2046 = vunpack.c.h.b16 %v435
    %v2047 = vunpack.c.l.b16 %v436
    %v2048 = vunpack.c.h.b16 %v436
    %v2049 = vunpack.c.l.b16 %v437
    %v2050 = vunpack.c.h.b16 %v437
    %v2051 = vunpack.c.l.b16 %v438
    %v2052 = vunpack.c.h.b16 %v438
    %v2053 = vunpack.c.l.b16 %v439
    %v2054 = vunpack.c.h.b16 %v439
    %v2055 = vunpack.c.l.b16 %v440
    %v2056 = vunpack.c.h.b16 %v440
    %v2057 = vunpack.c.l.b16 %v441
    %v2058 = vunpack.c.h.b16 %v441
    %v2059 = vunpack.c.l.b16 %v442
    %v2060 = vunpack.c.h.b16 %v442
    %v2061 = vunpack.c.l.b16 %v443
    %v2062 = vunpack.c.h.b16 %v443
    %v2063 = vunpack.c.l.b16 %v444
    %v2064 = vunpack.c.h.b16 %v444
    %v2065 = vunpack.c.l.b16 %v445
    %v2066 = vunpack.c.h.b16 %v445
    %v2067 = vunpack.c.l.b16 %v446
    %v2068 = vunpack.c.h.b16 %v446
    %v2069 = vunpack.c.l.b16 %v447
    %v2070 = vunpack.c.h.b16 %v447
    %v2071 = vunpack.c.l.b16 %v448
    %v2072 = vunpack.c.h.b16 %v448
    %v2073 = vunpack.c.l.b16 %v449
    %v2074 = vunpack.c.h.b16 %v449
    %v2075 = vunpack.c.l.b16 %v450
    %v2076 = vunpack.c.h.b16 %v450
    %v2077 = vunpack.c.l.b16 %v451
    %v2078 = vunpack.c.h.b16 %v451
    %v2079 = vunpack.c.l.b16 %v452
    %v2080 = vunpack.c.h.b16 %v452
    %v2081 = vunpack.c.l.b16 %v453
    %v2082 = vunpack.c.h.b16 %v453
    %v2083 = vunpack.c.l.b16 %v454
    %v2084 = vunpack.c.h.b16 %v454
    %v2085 = vunpack.c.l.b16 %v455
    %v2086 = vunpack.c.h.b16 %v455
    %v2087 = vunpack.c.l.b16 %v456
    %v2088 = vunpack.c.h.b16 %v456
    %v2089 = vunpack.c.l.b16 %v457
    %v2090 = vunpack.c.h.b16 %v457
    %v2091 = vunpack.c.l.b16 %v458
    %v2092 = vunpack.c.h.b16 %v458
    %v2093 = vunpack.c.l.b16 %v459
    %v2094 = vunpack.c.h.b16 %v459
    %v2095 = vunpack.c.l.b16 %v460
    %v2096 = vunpack.c.h.b16 %v460
    %v2097 = vunpack.c.l.b16 %v461
    %v2098 = vunpack.c.h.b16 %v461
    %v2099 = vunpack.c.l.b16 %v462
    %v2100 = vunpack.c.h.b16 %v462
    %v2101 = vunpack.c.l.b16 %v463
    %v2102 = vunpack.c.h.b16 %v463
    %v2103 = vunpack.c.l.b16 %v464
    %v2104 = vunpack.c.h.b16 %v464
    %v2105 = vunpack.c.l.b16 %v465
    %v2106 = vunpack.c.h.b16 %v465
    %v2107 = vunpack.c.l.b16 %v466
    %v2108 = vunpack.c.h.b16 %v466
    %v2109 = vunpack.c.l.b16 %v467
    %v2110 = vunpack.c.h.b16 %v467
    %v2111 = vunpack.c.l.b16 %v468
    %v2112 = vunpack.c.h.b16 %v468
    %v2113 = vunpack.c.l.b16 %v469
    %v2114 = vunpack.c.h.b16 %v469
    %v2115 = vunpack.c.l.b16 %v470
    %v2116 = vunpack.c.h.b16 %v470
    %v2117 = vunpack.c.l.b16 %v471
    %v2118 = vunpack.c.h.b16 %v471
    %v2119 = vunpack.c.l.b16 %v472
    %v2120 = vunpack.c.h.b16 %v472
    %v2121 = vunpack.c.l.b16 %v473
    %v2122 = vunpack.c.h.b16 %v473
    %v2123 = vunpack.c.l.b16 %v474
    %v2124 = vunpack.c.h.b16 %v474
    %v2125 = vunpack.c.l.b16 %v475
    %v2126 = vunpack.c.h.b16 %v475
    %v2127 = vunpack.c.l.b16 %v476
    %v2128 = vunpack.c.h.b16 %v476
    %v2129 = vunpack.c.l.b16 %v477
    %v2130 = vunpack.c.h.b16 %v477
    %v2131 = vunpack.c.l.b16 %v478
    %v2132 = vunpack.c.h.b16 %v478
    %v2133 = vunpack.c.l.b16 %v479
    %v2134 = vunpack.c.h.b16 %v479
    %v2135 = vunpack.c.l.b16 %v480
    %v2136 = vunpack.c.h.b16 %v480
    %v2137 = vunpack.c.l.b16 %v481
    %v2138 = vunpack.c.h.b16 %v481
    %v2139 = vunpack.c.l.b16 %v482
    %v2140 = vunpack.c.h.b16 %v482
    %v2141 = vunpack.c.l.b16 %v483
    %v2142 = vunpack.c.h.b16 %v483
    %v2143 = vunpack.c.l.b16 %v484
    %v2144 = vunpack.c.h.b16 %v484
    %v2145 = vunpack.c.l.b16 %v485
    %v2146 = vunpack.c.h.b16 %v485
    %v2147 = vunpack.c.l.b16 %v486
    %v2148 = vunpack.c.h.b16 %v486
    %v2149 = vunpack.c.l.b16 %v487
    %v2150 = vunpack.c.h.b16 %v487
    %v2151 = vunpack.c.l.b16 %v488
    %v2152 = vunpack.c.h.b16 %v488
    %v2153 = vunpack.c.l.b16 %v489
    %v2154 = vunpack.c.h.b16 %v489
    %v2155 = vunpack.c.l.b16 %v490
    %v2156 = vunpack.c.h.b16 %v490
    %v2157 = vunpack.c.l.b16 %v491
    %v2158 = vunpack.c.h.b16 %v491
    %v2159 = vunpack.c.l.b16 %v492
    %v2160 = vunpack.c.h.b16 %v492
    %v2161 = vunpack.c.l.b16 %v493
    %v2162 = vunpack.c.h.b16 %v493
    %v2163 = vunpack.c.l.b16 %v494
    %v2164 = vunpack.c.h.b16 %v494
    %v2165 = vunpack.c.l.b16 %v495
    %v2166 = vunpack.c.h.b16 %v495
    %v2167 = vunpack.c.l.b16 %v496
    %v2168 = vunpack.c.h.b16 %v496
    %v2169 = vunpack.c.l.b16 %v497
    %v2170 = vunpack.c.h.b16 %v497
    %v2171 = vunpack.c.l.b16 %v498
    %v2172 = vunpack.c.h.b16 %v498
    %v2173 = vunpack.c.l.b16 %v499
    %v2174 = vunpack.c.h.b16 %v499
    %v2175 = vunpack.c.l.b16 %v500
    %v2176 = vunpack.c.h.b16 %v500
    %v2177 = vunpack.c.l.b16 %v501
    %v2178 = vunpack.c.h.b16 %v501
    %v2179 = vunpack.c.l.b16 %v502
    %v2180 = vunpack.c.h.b16 %v502
    %v2181 = vunpack.c.l.b16 %v503
    %v2182 = vunpack.c.h.b16 %v503
    %v2183 = vunpack.c.l.b16 %v504
    %v2184 = vunpack.c.h.b16 %v504
    %v2185 = vunpack.c.l.b16 %v505
    %v2186 = vunpack.c.h.b16 %v505
    %v2187 = vunpack.c.l.b16 %v506
    %v2188 = vunpack.c.h.b16 %v506
    %v2189 = vunpack.c.l.b16 %v507
    %v2190 = vunpack.c.h.b16 %v507
    %v2191 = vunpack.c.l.b16 %v508
    %v2192 = vunpack.c.h.b16 %v508
    %v2193 = vunpack.c.l.b16 %v509
    %v2194 = vunpack.c.h.b16 %v509
    %v2195 = vunpack.c.l.b16 %v510
    %v2196 = vunpack.c.h.b16 %v510
    %v2197 = vunpack.c.l.b16 %v511
    %v2198 = vunpack.c.h.b16 %v511
    %v2199 = vunpack.c.l.b16 %v512
    %v2200 = vunpack.c.h.b16 %v512
    %v2201 = vunpack.c.l.b16 %v513
    %v2202 = vunpack.c.h.b16 %v513
    %v2203 = vunpack.c.l.b16 %v514
    %v2204 = vunpack.c.h.b16 %v514
    %v2205 = vunpack.c.l.b16 %v515
    %v2206 = vunpack.c.h.b16 %v515
    %v2207 = vunpack.c.l.b16 %v516
    %v2208 = vunpack.c.h.b16 %v516
    %v2209 = vunpack.c.l.b16 %v517
    %v2210 = vunpack.c.h.b16 %v517
    %v2211 = vunpack.c.l.b16 %v518
    %v2212 = vunpack.c.h.b16 %v518
    %v2213 = vunpack.c.l.b16 %v519
    %v2214 = vunpack.c.h.b16 %v519
    %v2215 = vunpack.c.l.b16 %v520
    %v2216 = vunpack.c.h.b16 %v520
    %v2217 = vunpack.c.l.b16 %v521
    %v2218 = vunpack.c.h.b16 %v521
    %v2219 = vunpack.c.l.b16 %v522
    %v2220 = vunpack.c.h.b16 %v522
    %v2221 = vunpack.c.l.b16 %v523
    %v2222 = vunpack.c.h.b16 %v523
    %v2223 = vunpack.c.l.b16 %v524
    %v2224 = vunpack.c.h.b16 %v524
    %v2225 = vunpack.c.l.b16 %v525
    %v2226 = vunpack.c.h.b16 %v525
    %v2227 = vunpack.c.l.b16 %v526
    %v2228 = vunpack.c.h.b16 %v526
    %v2229 = vunpack.c.l.b16 %v527
    %v2230 = vunpack.c.h.b16 %v527
    %v2231 = vunpack.c.l.b16 %v528
    %v2232 = vunpack.c.h.b16 %v528
    %v2233 = vunpack.c.l.b16 %v529
    %v2234 = vunpack.c.h.b16 %v529
    %v2235 = vunpack.c.l.b16 %v530
    %v2236 = vunpack.c.h.b16 %v530
    %v2237 = vunpack.c.l.b16 %v531
    %v2238 = vunpack.c.h.b16 %v531
    %v2239 = vunpack.c.l.b16 %v532
    %v2240 = vunpack.c.h.b16 %v532
    %v2241 = vunpack.c.l.b16 %v533
    %v2242 = vunpack.c.h.b16 %v533
    %v2243 = vunpack.c.l.b16 %v534
    %v2244 = vunpack.c.h.b16 %v534
    %v2245 = vunpack.c.l.b16 %v535
    %v2246 = vunpack.c.h.b16 %v535
    %v2247 = vunpack.c.l.b16 %v536
    %v2248 = vunpack.c.h.b16 %v536
    %v2249 = vunpack.c.l.b16 %v537
    %v2250 = vunpack.c.h.b16 %v537
    %v2251 = vunpack.c.l.b16 %v538
    %v2252 = vunpack.c.h.b16 %v538
    %v2253 = vunpack.c.l.b16 %v539
    %v2254 = vunpack.c.h.b16 %v539
    %v2255 = vunpack.c.l.b16 %v540
    %v2256 = vunpack.c.h.b16 %v540
    %v2257 = vunpack.c.l.b16 %v541
    %v2258 = vunpack.c.h.b16 %v541
    %v2259 = vunpack.c.l.b16 %v542
    %v2260 = vunpack.c.h.b16 %v542
    %v2261 = vunpack.c.l.b16 %v543
    %v2262 = vunpack.c.h.b16 %v543
    %v2263 = vunpack.c.l.b16 %v544
    %v2264 = vunpack.c.h.b16 %v544
    %v2265 = vunpack.c.l.b16 %v545
    %v2266 = vunpack.c.h.b16 %v545
    %v2267 = vunpack.c.l.b16 %v546
    %v2268 = vunpack.c.h.b16 %v546
    %v2269 = vunpack.c.l.b16 %v547
    %v2270 = vunpack.c.h.b16 %v547
    %v2271 = vunpack.c.l.b16 %v548
    %v2272 = vunpack.c.h.b16 %v548
    %v2273 = vunpack.c.l.b16 %v549
    %v2274 = vunpack.c.h.b16 %v549
    %v2275 = vunpack.c.l.b16 %v550
    %v2276 = vunpack.c.h.b16 %v550
    %v2277 = vunpack.c.l.b16 %v551
    %v2278 = vunpack.c.h.b16 %v551
    %v2279 = vunpack.c.l.b16 %v552
    %v2280 = vunpack.c.h.b16 %v552
    %v2281 = vunpack.c.l.b16 %v553
    %v2282 = vunpack.c.h.b16 %v553
    %v2283 = vunpack.c.l.b16 %v554
    %v2284 = vunpack.c.h.b16 %v554
    %v2285 = vunpack.c.l.b16 %v555
    %v2286 = vunpack.c.h.b16 %v555
    %v2287 = vunpack.c.l.b16 %v556
    %v2288 = vunpack.c.h.b16 %v556
    %v2289 = vunpack.c.l.b16 %v557
    %v2290 = vunpack.c.h.b16 %v557
    %v2291 = vunpack.c.l.b16 %v558
    %v2292 = vunpack.c.h.b16 %v558
    %v2293 = vunpack.c.l.b16 %v559
    %v2294 = vunpack.c.h.b16 %v559
    %v2295 = vunpack.c.l.b16 %v560
    %v2296 = vunpack.c.h.b16 %v560
    %v2297 = vunpack.c.l.b16 %v561
    %v2298 = vunpack.c.h.b16 %v561
    %v2299 = vunpack.c.l.b16 %v562
    %v2300 = vunpack.c.h.b16 %v562
    %v2301 = vunpack.c.l.b16 %v563
    %v2302 = vunpack.c.h.b16 %v563
    %v2303 = vunpack.c.l.b16 %v564
    %v2304 = vunpack.c.h.b16 %v564
    %v2305 = vunpack.c.l.b16 %v565
    %v2306 = vunpack.c.h.b16 %v565
    %v2307 = vunpack.c.l.b16 %v566
    %v2308 = vunpack.c.h.b16 %v566
    %v2309 = vunpack.c.l.b16 %v567
    %v2310 = vunpack.c.h.b16 %v567
    %v2311 = vunpack.c.l.b16 %v568
    %v2312 = vunpack.c.h.b16 %v568
    %v2313 = vunpack.c.l.b16 %v569
    %v2314 = vunpack.c.h.b16 %v569
    %v2315 = vunpack.c.l.b16 %v570
    %v2316 = vunpack.c.h.b16 %v570
    %v2317 = vunpack.c.l.b16 %v571
    %v2318 = vunpack.c.h.b16 %v571
    %v2319 = vunpack.c.l.b16 %v572
    %v2320 = vunpack.c.h.b16 %v572
    %v2321 = vunpack.c.l.b16 %v573
    %v2322 = vunpack.c.h.b16 %v573
    %v2323 = vunpack.c.l.b16 %v574
    %v2324 = vunpack.c.h.b16 %v574
    %v2325 = vunpack.c.l.b16 %v575
    %v2326 = vunpack.c.h.b16 %v575
    %v2327 = vunpack.c.l.b16 %v576
    %v2328 = vunpack.c.h.b16 %v576
    %v2329 = vunpack.c.l.b16 %v577
    %v2330 = vunpack.c.h.b16 %v577
    %v2331 = vunpack.c.l.b16 %v578
    %v2332 = vunpack.c.h.b16 %v578
    %v2333 = vunpack.c.l.b16 %v579
    %v2334 = vunpack.c.h.b16 %v579
    %v2335 = vunpack.c.l.b16 %v580
    %v2336 = vunpack.c.h.b16 %v580
    %v2337 = vunpack.c.l.b16 %v581
    %v2338 = vunpack.c.h.b16 %v581
    %v2339 = vunpack.c.l.b16 %v582
    %v2340 = vunpack.c.h.b16 %v582
    %v2341 = vunpack.c.l.b16 %v583
    %v2342 = vunpack.c.h.b16 %v583
    %v2343 = vunpack.c.l.b16 %v584
    %v2344 = vunpack.c.h.b16 %v584
    %v2345 = vunpack.c.l.b16 %v585
    %v2346 = vunpack.c.h.b16 %v585
    %v2347 = vunpack.c.l.b16 %v586
    %v2348 = vunpack.c.h.b16 %v586
    %v2349 = vunpack.c.l.b16 %v587
    %v2350 = vunpack.c.h.b16 %v587
    %v2351 = vunpack.c.l.b16 %v588
    %v2352 = vunpack.c.h.b16 %v588
    %v2353 = vunpack.c.l.b16 %v589
    %v2354 = vunpack.c.h.b16 %v589
    %v2355 = vunpack.c.l.b16 %v590
    %v2356 = vunpack.c.h.b16 %v590
    %v2357 = vunpack.c.l.b16 %v591
    %v2358 = vunpack.c.h.b16 %v591
    %v2359 = vunpack.c.l.b16 %v592
    %v2360 = vunpack.c.h.b16 %v592
    %v2361 = vunpack.c.l.b16 %v593
    %v2362 = vunpack.c.h.b16 %v593
    %v2363 = vunpack.c.l.b16 %v594
    %v2364 = vunpack.c.h.b16 %v594
    %v2365 = vunpack.c.l.b16 %v595
    %v2366 = vunpack.c.h.b16 %v595
    %v2367 = vunpack.c.l.b16 %v596
    %v2368 = vunpack.c.h.b16 %v596
    %v2369 = vunpack.c.l.b16 %v597
    %v2370 = vunpack.c.h.b16 %v597
    %v2371 = vunpack.c.l.b16 %v598
    %v2372 = vunpack.c.h.b16 %v598
    %v2373 = vunpack.c.l.b16 %v599
    %v2374 = vunpack.c.h.b16 %v599
    %v2375 = vunpack.c.l.b16 %v600
    %v2376 = vunpack.c.h.b16 %v600
    %v2377 = vunpack.c.l.b16 %v601
    %v2378 = vunpack.c.h.b16 %v601
    %v2379 = vunpack.c.l.b16 %v602
    %v2380 = vunpack.c.h.b16 %v602
    %v2381 = vunpack.c.l.b16 %v603
    %v2382 = vunpack.c.h.b16 %v603
    %v2383 = vunpack.c.l.b16 %v604
    %v2384 = vunpack.c.h.b16 %v604
    %v2385 = vunpack.c.l.b16 %v605
    %v2386 = vunpack.c.h.b16 %v605
    %v2387 = vunpack.c.l.b16 %v606
    %v2388 = vunpack.c.h.b16 %v606
    %v2389 = vunpack.c.l.b16 %v607
    %v2390 = vunpack.c.h.b16 %v607
    %v2391 = vunpack.c.l.b16 %v608
    %v2392 = vunpack.c.h.b16 %v608
    %v2393 = vunpack.c.l.b16 %v609
    %v2394 = vunpack.c.h.b16 %v609
    %v2395 = vunpack.c.l.b16 %v610
    %v2396 = vunpack.c.h.b16 %v610
    %v2397 = vunpack.c.l.b16 %v611
    %v2398 = vunpack.c.h.b16 %v611
    %v2399 = vunpack.c.l.b16 %v612
    %v2400 = vunpack.c.h.b16 %v612
    %v2401 = vunpack.c.l.b16 %v613
    %v2402 = vunpack.c.h.b16 %v613
    %v2403 = vunpack.c.l.b16 %v614
    %v2404 = vunpack.c.h.b16 %v614
    %v2405 = vunpack.c.l.b16 %v615
    %v2406 = vunpack.c.h.b16 %v615
    %v2407 = vunpack.c.l.b16 %v616
    %v2408 = vunpack.c.h.b16 %v616
    %v2409 = vunpack.c.l.b16 %v617
    %v2410 = vunpack.c.h.b16 %v617
    %v2411 = vunpack.c.l.b16 %v618
    %v2412 = vunpack.c.h.b16 %v618
    %v2413 = vunpack.c.l.b16 %v619
    %v2414 = vunpack.c.h.b16 %v619
    %v2415 = vunpack.c.l.b16 %v620
    %v2416 = vunpack.c.h.b16 %v620
    %v2417 = vunpack.c.l.b16 %v621
    %v2418 = vunpack.c.h.b16 %v621
    %v2419 = vunpack.c.l.b16 %v622
    %v2420 = vunpack.c.h.b16 %v622
    %v2421 = vunpack.c.l.b16 %v623
    %v2422 = vunpack.c.h.b16 %v623
    %v2423 = vunpack.c.l.b16 %v624
    %v2424 = vunpack.c.h.b16 %v624
    %v2425 = vunpack.c.l.b16 %v625
    %v2426 = vunpack.c.h.b16 %v625
    %v2427 = vunpack.c.l.b16 %v626
    %v2428 = vunpack.c.h.b16 %v626
    %v2429 = vunpack.c.l.b16 %v627
    %v2430 = vunpack.c.h.b16 %v627
    %v2431 = vunpack.c.l.b16 %v628
    %v2432 = vunpack.c.h.b16 %v628
    %v2433 = vunpack.c.l.b16 %v629
    %v2434 = vunpack.c.h.b16 %v629
    %v2435 = vunpack.c.l.b16 %v630
    %v2436 = vunpack.c.h.b16 %v630
    %v2437 = vunpack.c.l.b16 %v631
    %v2438 = vunpack.c.h.b16 %v631
    %v2439 = vunpack.c.l.b16 %v632
    %v2440 = vunpack.c.h.b16 %v632
    %v2441 = vunpack.c.l.b16 %v633
    %v2442 = vunpack.c.h.b16 %v633
    %v2443 = vunpack.c.l.b16 %v634
    %v2444 = vunpack.c.h.b16 %v634
    %v2445 = vpack.c.b16 %v1281, %v1269
    %v2446 = vpack.c.b16 %v1282, %v1270
    %v2447 = vpack.c.b16 %v1283, %v1271
    %v2448 = vpack.c.b16 %v1284, %v1272
    %v2449 = vpack.c.b16 %v1285, %v1273
    %v2450 = vpack.c.b16 %v1286, %v1274
    %v2451 = vpack.c.b16 %v1287, %v1275
    %v2452 = vpack.c.b16 %v1288, %v1276
    %v2453 = vpack.c.b16 %v1289, %v1277
    %v2454 = vpack.c.b16 %v1290, %v1278
    %v2455 = vpack.c.b16 %v1291, %v1279
    %v2456 = vpack.c.b16 %v1292, %v1280
    %v2457 = vpack.c.b16 %v1305, %v1293
    %v2458 = vpack.c.b16 %v1306, %v1294
    %v2459 = vpack.c.b16 %v1307, %v1295
    %v2460 = vpack.c.b16 %v1308, %v1296
    %v2461 = vpack.c.b16 %v1309, %v1297
    %v2462 = vpack.c.b16 %v1310, %v1298
    %v2463 = vpack.c.b16 %v1311, %v1299
    %v2464 = vpack.c.b16 %v1312, %v1300
    %v2465 = vpack.c.b16 %v1313, %v1301
    %v2466 = vpack.c.b16 %v1314, %v1302
    %v2467 = vpack.c.b16 %v1315, %v1303
    %v2468 = vpack.c.b16 %v1316, %v1304
    %v2469 = vpack.c.b16 %v1329, %v1317
    %v2470 = vpack.c.b16 %v1330, %v1318
    %v2471 = vpack.c.b16 %v1331, %v1319
    %v2472 = vpack.c.b16 %v1332, %v1320
    %v2473 = vpack.c.b16 %v1333, %v1321
    %v2474 = vpack.c.b16 %v1334, %v1322
    %v2475 = vpack.c.b16 %v1335, %v1323
    %v2476 = vpack.c.b16 %v1336, %v1324
    %v2477 = vpack.c.b16 %v1337, %v1325
    %v2478 = vpack.c.b16 %v1338, %v1326
    %v2479 = vpack.c.b16 %v1339, %v1327
    %v2480 = vpack.c.b16 %v1340, %v1328
    %v2481 = vpack.c.b16 %v1353, %v1341
    %v2482 = vpack.c.b16 %v1354, %v1342
    %v2483 = vpack.c.b16 %v1355, %v1343
    %v2484 = vpack.c.b16 %v1356, %v1344
    %v2485 = vpack.c.b16 %v1357, %v1345
    %v2486 = vpack.c.b16 %v1358, %v1346
    %v2487 = vpack.c.b16 %v1359, %v1347
    %v2488 = vpack.c.b16 %v1360, %v1348
    %v2489 = vpack.c.b16 %v1361, %v1349
    %v2490 = vpack.c.b16 %v1362, %v1350
    %v2491 = vpack.c.b16 %v1363, %v1351
    %v2492 = vpack.c.b16 %v1364, %v1352
    %v2493 = vpack.c.b16 %v1377, %v1365
    %v2494 = vpack.c.b16 %v1378, %v1366
    %v2495 = vpack.c.b16 %v1379, %v1367
    %v2496 = vpack.c.b16 %v1380, %v1368
    %v2497 = vpack.c.b16 %v1381, %v1369
    %v2498 = vpack.c.b16 %v1382, %v1370
    %v2499 = vpack.c.b16 %v1383, %v1371
    %v2500 = vpack.c.b16 %v1384, %v1372
    %v2501 = vpack.c.b16 %v1385, %v1373
    %v2502 = vpack.c.b16 %v1386, %v1374
    %v2503 = vpack.c.b16 %v1387, %v1375
    %v2504 = vpack.c.b16 %v1388, %v1376
    %v2505 = vpack.c.b16 %v1401, %v1389
    %v2506 = vpack.c.b16 %v1402, %v1390
    %v2507 = vpack.c.b16 %v1403, %v1391
    %v2508 = vpack.c.b16 %v1404, %v1392
    %v2509 = vpack.c.b16 %v1405, %v1393
    %v2510 = vpack.c.b16 %v1406, %v1394
    %v2511 = vpack.c.b16 %v1407, %v1395
    %v2512 = vpack.c.b16 %v1408, %v1396
    %v2513 = vpack.c.b16 %v1409, %v1397
    %v2514 = vpack.c.b16 %v1410, %v1398
    %v2515 = vpack.c.b16 %v1411, %v1399
    %v2516 = vpack.c.b16 %v1412, %v1400
    %v2517 = vpack.c.b16 %v1425, %v1413
    %v2518 = vpack.c.b16 %v1426, %v1414
    %v2519 = vpack.c.b16 %v1427, %v1415
    %v2520 = vpack.c.b16 %v1428, %v1416
    %v2521 = vpack.c.b16 %v1429, %v1417
    %v2522 = vpack.c.b16 %v1430, %v1418
    %v2523 = vpack.c.b16 %v1431, %v1419
    %v2524 = vpack.c.b16 %v1432, %v1420
    %v2525 = vpack.c.b16 %v1433, %v1421
    %v2526 = vpack.c.b16 %v1434, %v1422
    %v2527 = vpack.c.b16 %v1435, %v1423
    %v2528 = vpack.c.b16 %v1436, %v1424
    %v2529 = vpack.c.b16 %v1449, %v1437
    %v2530 = vpack.c.b16 %v1450, %v1438
    %v2531 = vpack.c.b16 %v1451, %v1439
    %v2532 = vpack.c.b16 %v1452, %v1440
    %v2533 = vpack.c.b16 %v1453, %v1441
    %v2534 = vpack.c.b16 %v1454, %v1442
    %v2535 = vpack.c.b16 %v1455, %v1443
    %v2536 = vpack.c.b16 %v1456, %v1444
    %v2537 = vpack.c.b16 %v1457, %v1445
    %v2538 = vpack.c.b16 %v1458, %v1446
    %v2539 = vpack.c.b16 %v1459, %v1447
    %v2540 = vpack.c.b16 %v1460, %v1448
    %v2541 = vpack.c.b16 %v1473, %v1461
    %v2542 = vpack.c.b16 %v1474, %v1462
    %v2543 = vpack.c.b16 %v1475, %v1463
    %v2544 = vpack.c.b16 %v1476, %v1464
    %v2545 = vpack.c.b16 %v1477, %v1465
    %v2546 = vpack.c.b16 %v1478, %v1466
    %v2547 = vpack.c.b16 %v1479, %v1467
    %v2548 = vpack.c.b16 %v1480, %v1468
    %v2549 = vpack.c.b16 %v1481, %v1469
    %v2550 = vpack.c.b16 %v1482, %v1470
    %v2551 = vpack.c.b16 %v1483, %v1471
    %v2552 = vpack.c.b16 %v1484, %v1472
    %v2553 = vpack.c.b16 %v1497, %v1485
    %v2554 = vpack.c.b16 %v1498, %v1486
    %v2555 = vpack.c.b16 %v1499, %v1487
    %v2556 = vpack.c.b16 %v1500, %v1488
    %v2557 = vpack.c.b16 %v1501, %v1489
    %v2558 = vpack.c.b16 %v1502, %v1490
    %v2559 = vpack.c.b16 %v1503, %v1491
    %v2560 = vpack.c.b16 %v1504, %v1492
    %v2561 = vpack.c.b16 %v1505, %v1493
    %v2562 = vpack.c.b16 %v1506, %v1494
    %v2563 = vpack.c.b16 %v1507, %v1495
    %v2564 = vpack.c.b16 %v1508, %v1496
    %v2565 = vpack.c.b16 %v1521, %v1509
    %v2566 = vpack.c.b16 %v1522, %v1510
    %v2567 = vpack.c.b16 %v1523, %v1511
    %v2568 = vpack.c.b16 %v1524, %v1512
    %v2569 = vpack.c.b16 %v1525, %v1513
    %v2570 = vpack.c.b16 %v1526, %v1514
    %v2571 = vpack.c.b16 %v1527, %v1515
    %v2572 = vpack.c.b16 %v1528, %v1516
    %v2573 = vpack.c.b16 %v1529, %v1517
    %v2574 = vpack.c.b16 %v1530, %v1518
    %v2575 = vpack.c.b16 %v1531, %v1519
    %v2576 = vpack.c.b16 %v1532, %v1520
    %v2577 = vpack.c.b16 %v1545, %v1533
    %v2578 = vpack.c.b16 %v1546, %v1534
    %v2579 = vpack.c.b16 %v1547, %v1535
    %v2580 = vpack.c.b16 %v1548, %v1536
    %v2581 = vpack.c.b16 %v1549, %v1537
    %v2582 = vpack.c.b16 %v1550, %v1538
    %v2583 = vpack.c.b16 %v1551, %v1539
    %v2584 = vpack.c.b16 %v1552, %v1540
    %v2585 = vpack.c.b16 %v1553, %v1541
    %v2586 = vpack.c.b16 %v1554, %v1542
    %v2587 = vpack.c.b16 %v1555, %v1543
    %v2588 = vpack.c.b16 %v1556, %v1544
    %v2589 = vpack.c.b16 %v1569, %v1557
    %v2590 = vpack.c.b16 %v1570, %v1558
    %v2591 = vpack.c.b16 %v1571, %v1559
    %v2592 = vpack.c.b16 %v1572, %v1560
    %v2593 = vpack.c.b16 %v1573, %v1561
    %v2594 = vpack.c.b16 %v1574, %v1562
    %v2595 = vpack.c.b16 %v1575, %v1563
    %v2596 = vpack.c.b16 %v1576, %v1564
    %v2597 = vpack.c.b16 %v1577, %v1565
    %v2598 = vpack.c.b16 %v1578, %v1566
    %v2599 = vpack.c.b16 %v1579, %v1567
    %v2600 = vpack.c.b16 %v1580, %v1568
    %v2601 = vpack.c.b16 %v1593, %v1581
    %v2602 = vpack.c.b16 %v1594, %v1582
    %v2603 = vpack.c.b16 %v1595, %v1583
    %v2604 = vpack.c.b16 %v1596, %v1584
    %v2605 = vpack.c.b16 %v1597, %v1585
    %v2606 = vpack.c.b16 %v1598, %v1586
    %v2607 = vpack.c.b16 %v1599, %v1587
    %v2608 = vpack.c.b16 %v1600, %v1588
    %v2609 = vpack.c.b16 %v1601, %v1589
    %v2610 = vpack.c.b16 %v1602, %v1590
    %v2611 = vpack.c.b16 %v1603, %v1591
    %v2612 = vpack.c.b16 %v1604, %v1592
    %v2613 = vpack.c.b16 %v1617, %v1605
    %v2614 = vpack.c.b16 %v1618, %v1606
    %v2615 = vpack.c.b16 %v1619, %v1607
    %v2616 = vpack.c.b16 %v1620, %v1608
    %v2617 = vpack.c.b16 %v1621, %v1609
    %v2618 = vpack.c.b16 %v1622, %v1610
    %v2619 = vpack.c.b16 %v1623, %v1611
    %v2620 = vpack.c.b16 %v1624, %v1612
    %v2621 = vpack.c.b16 %v1625, %v1613
    %v2622 = vpack.c.b16 %v1626, %v1614
    %v2623 = vpack.c.b16 %v1627, %v1615
    %v2624 = vpack.c.b16 %v1628, %v1616
    %v2625 = vpack.c.b16 %v1641, %v1629
    %v2626 = vpack.c.b16 %v1642, %v1630
    %v2627 = vpack.c.b16 %v1643, %v1631
    %v2628 = vpack.c.b16 %v1644, %v1632
    %v2629 = vpack.c.b16 %v1645, %v1633
    %v2630 = vpack.c.b16 %v1646, %v1634
    %v2631 = vpack.c.b16 %v1647, %v1635
    %v2632 = vpack.c.b16 %v1648, %v1636
    %v2633 = vpack.c.b16 %v1649, %v1637
    %v2634 = vpack.c.b16 %v1650, %v1638
    %v2635 = vpack.c.b16 %v1651, %v1639
    %v2636 = vpack.c.b16 %v1652, %v1640
    %v2637 = vpack.c.b16 %v1665, %v1653
    %v2638 = vpack.c.b16 %v1666, %v1654
    %v2639 = vpack.c.b16 %v1667, %v1655
    %v2640 = vpack.c.b16 %v1668, %v1656
    %v2641 = vpack.c.b16 %v1669, %v1657
    %v2642 = vpack.c.b16 %v1670, %v1658
    %v2643 = vpack.c.b16 %v1671, %v1659
    %v2644 = vpack.c.b16 %v1672, %v1660
    %v2645 = vpack.c.b16 %v1673, %v1661
    %v2646 = vpack.c.b16 %v1674, %v1662
    %v2647 = vpack.c.b16 %v1675, %v1663
    %v2648 = vpack.c.b16 %v1676, %v1664
    %v2649 = vpack.c.b16 %v1689, %v1677
    %v2650 = vpack.c.b16 %v1690, %v1678
    %v2651 = vpack.c.b16 %v1691, %v1679
    %v2652 = vpack.c.b16 %v1692, %v1680
    %v2653 = vpack.c.b16 %v1693, %v1681
    %v2654 = vpack.c.b16 %v1694, %v1682
    %v2655 = vpack.c.b16 %v1695, %v1683
    %v2656 = vpack.c.b16 %v1696, %v1684
    %v2657 = vpack.c.b16 %v1697, %v1685
    %v2658 = vpack.c.b16 %v1698, %v1686
    %v2659 = vpack.c.b16 %v1699, %v1687
    %v2660 = vpack.c.b16 %v1700, %v1688
    %v2661 = vpack.c.b16 %v1713, %v1701
    %v2662 = vpack.c.b16 %v1714, %v1702
    %v2663 = vpack.c.b16 %v1715, %v1703
    %v2664 = vpack.c.b16 %v1716, %v1704
    %v2665 = vpack.c.b16 %v1717, %v1705
    %v2666 = vpack.c.b16 %v1718, %v1706
    %v2667 = vpack.c.b16 %v1719, %v1707
    %v2668 = vpack.c.b16 %v1720, %v1708
    %v2669 = vpack.c.b16 %v1721, %v1709
    %v2670 = vpack.c.b16 %v1722, %v1710
    %v2671 = vpack.c.b16 %v1723, %v1711
    %v2672 = vpack.c.b16 %v1724, %v1712
    %v2673 = vpack.c.b16 %v1737, %v1725
    %v2674 = vpack.c.b16 %v1738, %v1726
    %v2675 = vpack.c.b16 %v1739, %v1727
    %v2676 = vpack.c.b16 %v1740, %v1728
    %v2677 = vpack.c.b16 %v1741, %v1729
    %v2678 = vpack.c.b16 %v1742, %v1730
    %v2679 = vpack.c.b16 %v1743, %v1731
    %v2680 = vpack.c.b16 %v1744, %v1732
    %v2681 = vpack.c.b16 %v1745, %v1733
    %v2682 = vpack.c.b16 %v1746, %v1734
    %v2683 = vpack.c.b16 %v1747, %v1735
    %v2684 = vpack.c.b16 %v1748, %v1736
    %v2685 = vpack.c.b16 %v1761, %v1749
    %v2686 = vpack.c.b16 %v1762, %v1750
    %v2687 = vpack.c.b16 %v1763, %v1751
    %v2688 = vpack.c.b16 %v1764, %v1752
    %v2689 = vpack.c.b16 %v1765, %v1753
    %v2690 = vpack.c.b16 %v1766, %v1754
    %v2691 = vpack.c.b16 %v1767, %v1755
    %v2692 = vpack.c.b16 %v1768, %v1756
    %v2693 = vpack.c.b16 %v1769, %v1757
    %v2694 = vpack.c.b16 %v1770, %v1758
    %v2695 = vpack.c.b16 %v1771, %v1759
    %v2696 = vpack.c.b16 %v1772, %v1760
    %v2697 = vpack.c.b16 %v1785, %v1773
    %v2698 = vpack.c.b16 %v1786, %v1774
    %v2699 = vpack.c.b16 %v1787, %v1775
    %v2700 = vpack.c.b16 %v1788, %v1776
    %v2701 = vpack.c.b16 %v1789, %v1777
    %v2702 = vpack.c.b16 %v1790, %v1778
    %v2703 = vpack.c.b16 %v1791, %v1779
    %v2704 = vpack.c.b16 %v1792, %v1780
    %v2705 = vpack.c.b16 %v1793, %v1781
    %v2706 = vpack.c.b16 %v1794, %v1782
    %v2707 = vpack.c.b16 %v1795, %v1783
    %v2708 = vpack.c.b16 %v1796, %v1784
    %v2709 = vpack.c.b16 %v1809, %v1797
    %v2710 = vpack.c.b16 %v1810, %v1798
    %v2711 = vpack.c.b16 %v1811, %v1799
    %v2712 = vpack.c.b16 %v1812, %v1800
    %v2713 = vpack.c.b16 %v1813, %v1801
    %v2714 = vpack.c.b16 %v1814, %v1802
    %v2715 = vpack.c.b16 %v1815, %v1803
    %v2716 = vpack.c.b16 %v1816, %v1804
    %v2717 = vpack.c.b16 %v1817, %v1805
    %v2718 = vpack.c.b16 %v1818, %v1806
    %v2719 = vpack.c.b16 %v1819, %v1807
    %v2720 = vpack.c.b16 %v1820, %v1808
    %v2721 = vpack.c.b16 %v1833, %v1821
    %v2722 = vpack.c.b16 %v1834, %v1822
    %v2723 = vpack.c.b16 %v1835, %v1823
    %v2724 = vpack.c.b16 %v1836, %v1824
    %v2725 = vpack.c.b16 %v1837, %v1825
    %v2726 = vpack.c.b16 %v1838, %v1826
    %v2727 = vpack.c.b16 %v1839, %v1827
    %v2728 = vpack.c.b16 %v1840, %v1828
    %v2729 = vpack.c.b16 %v1841, %v1829
    %v2730 = vpack.c.b16 %v1842, %v1830
    %v2731 = vpack.c.b16 %v1843, %v1831
    %v2732 = vpack.c.b16 %v1844, %v1832
    %v2733 = vpack.c.b16 %v1857, %v1845
    %v2734 = vpack.c.b16 %v1858, %v1846
    %v2735 = vpack.c.b16 %v1859, %v1847
    %v2736 = vpack.c.b16 %v1860, %v1848
    %v2737 = vpack.c.b16 %v1861, %v1849
    %v2738 = vpack.c.b16 %v1862, %v1850
    %v2739 = vpack.c.b16 %v1863, %v1851
    %v2740 = vpack.c.b16 %v1864, %v1852
    %v2741 = vpack.c.b16 %v1865, %v1853
    %v2742 = vpack.c.b16 %v1866, %v1854
    %v2743 = vpack.c.b16 %v1867, %v1855
    %v2744 = vpack.c.b16 %v1868, %v1856
    %v2745 = vpack.c.b16 %v1881, %v1869
    %v2746 = vpack.c.b16 %v1882, %v1870
    %v2747 = vpack.c.b16 %v1883, %v1871
    %v2748 = vpack.c.b16 %v1884, %v1872
    %v2749 = vpack.c.b16 %v1885, %v1873
    %v2750 = vpack.c.b16 %v1886, %v1874
    %v2751 = vpack.c.b16 %v1887, %v1875
    %v2752 = vpack.c.b16 %v1888, %v1876
    %v2753 = vpack.c.b16 %v1889, %v1877
    %v2754 = vpack.c.b16 %v1890, %v1878
    %v2755 = vpack.c.b16 %v1891, %v1879
    %v2756 = vpack.c.b16 %v1892, %v1880
    %v2757 = vpack.c.b16 %v1905, %v1893
    %v2758 = vpack.c.b16 %v1906, %v1894
    %v2759 = vpack.c.b16 %v1907, %v1895
    %v2760 = vpack.c.b16 %v1908, %v1896
    %v2761 = vpack.c.b16 %v1909, %v1897
    %v2762 = vpack.c.b16 %v1910, %v1898
    %v2763 = vpack.c.b16 %v1911, %v1899
    %v2764 = vpack.c.b16 %v1912, %v1900
    %v2765 = vpack.c.b16 %v1913, %v1901
    %v2766 = vpack.c.b16 %v1914, %v1902
    %v2767 = vpack.c.b16 %v1915, %v1903
    %v2768 = vpack.c.b16 %v1916, %v1904
    %v2769 = vpack.c.b16 %v1929, %v1917
    %v2770 = vpack.c.b16 %v1930, %v1918
    %v2771 = vpack.c.b16 %v1931, %v1919
    %v2772 = vpack.c.b16 %v1932, %v1920
    %v2773 = vpack.c.b16 %v1933, %v1921
    %v2774 = vpack.c.b16 %v1934, %v1922
    %v2775 = vpack.c.b16 %v1935, %v1923
    %v2776 = vpack.c.b16 %v1936, %v1924
    %v2777 = vpack.c.b16 %v1937, %v1925
    %v2778 = vpack.c.b16 %v1938, %v1926
    %v2779 = vpack.c.b16 %v1939, %v1927
    %v2780 = vpack.c.b16 %v1940, %v1928
    %v2781 = vpack.c.b16 %v1953, %v1941
    %v2782 = vpack.c.b16 %v1954, %v1942
    %v2783 = vpack.c.b16 %v1955, %v1943
    %v2784 = vpack.c.b16 %v1956, %v1944
    %v2785 = vpack.c.b16 %v1957, %v1945
    %v2786 = vpack.c.b16 %v1958, %v1946
    %v2787 = vpack.c.b16 %v1959, %v1947
    %v2788 = vpack.c.b16 %v1960, %v1948
    %v2789 = vpack.c.b16 %v1961, %v1949
    %v2790 = vpack.c.b16 %v1962, %v1950
    %v2791 = vpack.c.b16 %v1963, %v1951
    %v2792 = vpack.c.b16 %v1964, %v1952
    %v2793 = vpack.c.b16 %v1977, %v1965
    %v2794 = vpack.c.b16 %v1978, %v1966
    %v2795 = vpack.c.b16 %v1979, %v1967
    %v2796 = vpack.c.b16 %v1980, %v1968
    %v2797 = vpack.c.b16 %v1981, %v1969
    %v2798 = vpack.c.b16 %v1982, %v1970
    %v2799 = vpack.c.b16 %v1983, %v1971
    %v2800 = vpack.c.b16 %v1984, %v1972
    %v2801 = vpack.c.b16 %v1985, %v1973
    %v2802 = vpack.c.b16 %v1986, %v1974
    %v2803 = vpack.c.b16 %v1987, %v1975
    %v2804 = vpack.c.b16 %v1988, %v1976
    %v2805 = vpack.c.b16 %v2001, %v1989
    %v2806 = vpack.c.b16 %v2002, %v1990
    %v2807 = vpack.c.b16 %v2003, %v1991
    %v2808 = vpack.c.b16 %v2004, %v1992
    %v2809 = vpack.c.b16 %v2005, %v1993
    %v2810 = vpack.c.b16 %v2006, %v1994
    %v2811 = vpack.c.b16 %v2007, %v1995
    %v2812 = vpack.c.b16 %v2008, %v1996
    %v2813 = vpack.c.b16 %v2009, %v1997
    %v2814 = vpack.c.b16 %v2010, %v1998
    %v2815 = vpack.c.b16 %v2011, %v1999
    %v2816 = vpack.c.b16 %v2012, %v2000
    %v2817 = vpack.c.b16 %v2025, %v2013
    %v2818 = vpack.c.b16 %v2026, %v2014
    %v2819 = vpack.c.b16 %v2027, %v2015
    %v2820 = vpack.c.b16 %v2028, %v2016
    %v2821 = vpack.c.b16 %v2029, %v2017
    %v2822 = vpack.c.b16 %v2030, %v2018
    %v2823 = vpack.c.b16 %v2031, %v2019
    %v2824 = vpack.c.b16 %v2032, %v2020
    %v2825 = vpack.c.b16 %v2033, %v2021
    %v2826 = vpack.c.b16 %v2034, %v2022
    %v2827 = vpack.c.b16 %v2035, %v2023
    %v2828 = vpack.c.b16 %v2036, %v2024
    %v2829 = vpack.c.b16 %v2049, %v2037
    %v2830 = vpack.c.b16 %v2050, %v2038
    %v2831 = vpack.c.b16 %v2051, %v2039
    %v2832 = vpack.c.b16 %v2052, %v2040
    %v2833 = vpack.c.b16 %v2053, %v2041
    %v2834 = vpack.c.b16 %v2054, %v2042
    %v2835 = vpack.c.b16 %v2055, %v2043
    %v2836 = vpack.c.b16 %v2056, %v2044
    %v2837 = vpack.c.b16 %v2057, %v2045
    %v2838 = vpack.c.b16 %v2058, %v2046
    %v2839 = vpack.c.b16 %v2059, %v2047
    %v2840 = vpack.c.b16 %v2060, %v2048
    %v2841 = vpack.c.b16 %v2073, %v2061
    %v2842 = vpack.c.b16 %v2074, %v2062
    %v2843 = vpack.c.b16 %v2075, %v2063
    %v2844 = vpack.c.b16 %v2076, %v2064
    %v2845 = vpack.c.b16 %v2077, %v2065
    %v2846 = vpack.c.b16 %v2078, %v2066
    %v2847 = vpack.c.b16 %v2079, %v2067
    %v2848 = vpack.c.b16 %v2080, %v2068
    %v2849 = vpack.c.b16 %v2081, %v2069
    %v2850 = vpack.c.b16 %v2082, %v2070
    %v2851 = vpack.c.b16 %v2083, %v2071
    %v2852 = vpack.c.b16 %v2084, %v2072
    %v2853 = vpack.c.b16 %v2097, %v2085
    %v2854 = vpack.c.b16 %v2098, %v2086
    %v2855 = vpack.c.b16 %v2099, %v2087
    %v2856 = vpack.c.b16 %v2100, %v2088
    %v2857 = vpack.c.b16 %v2101, %v2089
    %v2858 = vpack.c.b16 %v2102, %v2090
    %v2859 = vpack.c.b16 %v2103, %v2091
    %v2860 = vpack.c.b16 %v2104, %v2092
    %v2861 = vpack.c.b16 %v2105, %v2093
    %v2862 = vpack.c.b16 %v2106, %v2094
    %v2863 = vpack.c.b16 %v2107, %v2095
    %v2864 = vpack.c.b16 %v2108, %v2096
    %v2865 = vpack.c.b16 %v2121, %v2109
    %v2866 = vpack.c.b16 %v2122, %v2110
    %v2867 = vpack.c.b16 %v2123, %v2111
    %v2868 = vpack.c.b16 %v2124, %v2112
    %v2869 = vpack.c.b16 %v2125, %v2113
    %v2870 = vpack.c.b16 %v2126, %v2114
    %v2871 = vpack.c.b16 %v2127, %v2115
    %v2872 = vpack.c.b16 %v2128, %v2116
    %v2873 = vpack.c.b16 %v2129, %v2117
    %v2874 = vpack.c.b16 %v2130, %v2118
    %v2875 = vpack.c.b16 %v2131, %v2119
    %v2876 = vpack.c.b16 %v2132, %v2120
    %v2877 = vpack.c.b16 %v2145, %v2133
    %v2878 = vpack.c.b16 %v2146, %v2134
    %v2879 = vpack.c.b16 %v2147, %v2135
    %v2880 = vpack.c.b16 %v2148, %v2136
    %v2881 = vpack.c.b16 %v2149, %v2137
    %v2882 = vpack.c.b16 %v2150, %v2138
    %v2883 = vpack.c.b16 %v2151, %v2139
    %v2884 = vpack.c.b16 %v2152, %v2140
    %v2885 = vpack.c.b16 %v2153, %v2141
    %v2886 = vpack.c.b16 %v2154, %v2142
    %v2887 = vpack.c.b16 %v2155, %v2143
    %v2888 = vpack.c.b16 %v2156, %v2144
    %v2889 = vpack.c.b16 %v2169, %v2157
    %v2890 = vpack.c.b16 %v2170, %v2158
    %v2891 = vpack.c.b16 %v2171, %v2159
    %v2892 = vpack.c.b16 %v2172, %v2160
    %v2893 = vpack.c.b16 %v2173, %v2161
    %v2894 = vpack.c.b16 %v2174, %v2162
    %v2895 = vpack.c.b16 %v2175, %v2163
    %v2896 = vpack.c.b16 %v2176, %v2164
    %v2897 = vpack.c.b16 %v2177, %v2165
    %v2898 = vpack.c.b16 %v2178, %v2166
    %v2899 = vpack.c.b16 %v2179, %v2167
    %v2900 = vpack.c.b16 %v2180, %v2168
    %v2901 = vpack.c.b16 %v2193, %v2181
    %v2902 = vpack.c.b16 %v2194, %v2182
    %v2903 = vpack.c.b16 %v2195, %v2183
    %v2904 = vpack.c.b16 %v2196, %v2184
    %v2905 = vpack.c.b16 %v2197, %v2185
    %v2906 = vpack.c.b16 %v2198, %v2186
    %v2907 = vpack.c.b16 %v2199, %v2187
    %v2908 = vpack.c.b16 %v2200, %v2188
    %v2909 = vpack.c.b16 %v2201, %v2189
    %v2910 = vpack.c.b16 %v2202, %v2190
    %v2911 = vpack.c.b16 %v2203, %v2191
    %v2912 = vpack.c.b16 %v2204, %v2192
    %v2913 = vpack.c.b16 %v2217, %v2205
    %v2914 = vpack.c.b16 %v2218, %v2206
    %v2915 = vpack.c.b16 %v2219, %v2207
    %v2916 = vpack.c.b16 %v2220, %v2208
    %v2917 = vpack.c.b16 %v2221, %v2209
    %v2918 = vpack.c.b16 %v2222, %v2210
    %v2919 = vpack.c.b16 %v2223, %v2211
    %v2920 = vpack.c.b16 %v2224, %v2212
    %v2921 = vpack.c.b16 %v2225, %v2213
    %v2922 = vpack.c.b16 %v2226, %v2214
    %v2923 = vpack.c.b16 %v2227, %v2215
    %v2924 = vpack.c.b16 %v2228, %v2216
    %v2925 = vpack.c.b16 %v2241, %v2229
    %v2926 = vpack.c.b16 %v2242, %v2230
    %v2927 = vpack.c.b16 %v2243, %v2231
    %v2928 = vpack.c.b16 %v2244, %v2232
    %v2929 = vpack.c.b16 %v2245, %v2233
    %v2930 = vpack.c.b16 %v2246, %v2234
    %v2931 = vpack.c.b16 %v2247, %v2235
    %v2932 = vpack.c.b16 %v2248, %v2236
    %v2933 = vpack.c.b16 %v2249, %v2237
    %v2934 = vpack.c.b16 %v2250, %v2238
    %v2935 = vpack.c.b16 %v2251, %v2239
    %v2936 = vpack.c.b16 %v2252, %v2240
    %v2937 = vpack.c.b16 %v2265, %v2253
    %v2938 = vpack.c.b16 %v2266, %v2254
    %v2939 = vpack.c.b16 %v2267, %v2255
    %v2940 = vpack.c.b16 %v2268, %v2256
    %v2941 = vpack.c.b16 %v2269, %v2257
    %v2942 = vpack.c.b16 %v2270, %v2258
    %v2943 = vpack.c.b16 %v2271, %v2259
    %v2944 = vpack.c.b16 %v2272, %v2260
    %v2945 = vpack.c.b16 %v2273, %v2261
    %v2946 = vpack.c.b16 %v2274, %v2262
    %v2947 = vpack.c.b16 %v2275, %v2263
    %v2948 = vpack.c.b16 %v2276, %v2264
    %v2949 = vpack.c.b16 %v2289, %v2277
    %v2950 = vpack.c.b16 %v2290, %v2278
    %v2951 = vpack.c.b16 %v2291, %v2279
    %v2952 = vpack.c.b16 %v2292, %v2280
    %v2953 = vpack.c.b16 %v2293, %v2281
    %v2954 = vpack.c.b16 %v2294, %v2282
    %v2955 = vpack.c.b16 %v2295, %v2283
    %v2956 = vpack.c.b16 %v2296, %v2284
    %v2957 = vpack.c.b16 %v2297, %v2285
    %v2958 = vpack.c.b16 %v2298, %v2286
    %v2959 = vpack.c.b16 %v2299, %v2287
    %v2960 = vpack.c.b16 %v2300, %v2288
    %v2961 = vpack.c.b16 %v2313, %v2301
    %v2962 = vpack.c.b16 %v2314, %v2302
    %v2963 = vpack.c.b16 %v2315, %v2303
    %v2964 = vpack.c.b16 %v2316, %v2304
    %v2965 = vpack.c.b16 %v2317, %v2305
    %v2966 = vpack.c.b16 %v2318, %v2306
    %v2967 = vpack.c.b16 %v2319, %v2307
    %v2968 = vpack.c.b16 %v2320, %v2308
    %v2969 = vpack.c.b16 %v2321, %v2309
    %v2970 = vpack.c.b16 %v2322, %v2310
    %v2971 = vpack.c.b16 %v2323, %v2311
    %v2972 = vpack.c.b16 %v2324, %v2312
    %v2973 = vpack.c.b16 %v2337, %v2325
    %v2974 = vpack.c.b16 %v2338, %v2326
    %v2975 = vpack.c.b16 %v2339, %v2327
    %v2976 = vpack.c.b16 %v2340, %v2328
    %v2977 = vpack.c.b16 %v2341, %v2329
    %v2978 = vpack.c.b16 %v2342, %v2330
    %v2979 = vpack.c.b16 %v2343, %v2331
    %v2980 = vpack.c.b16 %v2344, %v2332
    %v2981 = vpack.c.b16 %v2345, %v2333
    %v2982 = vpack.c.b16 %v2346, %v2334
    %v2983 = vpack.c.b16 %v2347, %v2335
    %v2984 = vpack.c.b16 %v2348, %v2336
    %v2985 = vpack.c.b16 %v2361, %v2349
    %v2986 = vpack.c.b16 %v2362, %v2350
    %v2987 = vpack.c.b16 %v2363, %v2351
    %v2988 = vpack.c.b16 %v2364, %v2352
    %v2989 = vpack.c.b16 %v2365, %v2353
    %v2990 = vpack.c.b16 %v2366, %v2354
    %v2991 = vpack.c.b16 %v2367, %v2355
    %v2992 = vpack.c.b16 %v2368, %v2356
    %v2993 = vpack.c.b16 %v2369, %v2357
    %v2994 = vpack.c.b16 %v2370, %v2358
    %v2995 = vpack.c.b16 %v2371, %v2359
    %v2996 = vpack.c.b16 %v2372, %v2360
    %v2997 = vpack.c.b16 %v2385, %v2373
    %v2998 = vpack.c.b16 %v2386, %v2374
    %v2999 = vpack.c.b16 %v2387, %v2375
    %v3000 = vpack.c.b16 %v2388, %v2376
    %v3001 = vpack.c.b16 %v2389, %v2377
    %v3002 = vpack.c.b16 %v2390, %v2378
    %v3003 = vpack.c.b16 %v2391, %v2379
    %v3004 = vpack.c.b16 %v2392, %v2380
    %v3005 = vpack.c.b16 %v2393, %v2381
    %v3006 = vpack.c.b16 %v2394, %v2382
    %v3007 = vpack.c.b16 %v2395, %v2383
    %v3008 = vpack.c.b16 %v2396, %v2384
    %v3009 = vpack.c.b16 %v2409, %v2397
    %v3010 = vpack.c.b16 %v2410, %v2398
    %v3011 = vpack.c.b16 %v2411, %v2399
    %v3012 = vpack.c.b16 %v2412, %v2400
    %v3013 = vpack.c.b16 %v2413, %v2401
    %v3014 = vpack.c.b16 %v2414, %v2402
    %v3015 = vpack.c.b16 %v2415, %v2403
    %v3016 = vpack.c.b16 %v2416, %v2404
    %v3017 = vpack.c.b16 %v2417, %v2405
    %v3018 = vpack.c.b16 %v2418, %v2406
    %v3019 = vpack.c.b16 %v2419, %v2407
    %v3020 = vpack.c.b16 %v2420, %v2408
    %v3021 = vpack.c.b16 %v2433, %v2421
    %v3022 = vpack.c.b16 %v2434, %v2422
    %v3023 = vpack.c.b16 %v2435, %v2423
    %v3024 = vpack.c.b16 %v2436, %v2424
    %v3025 = vpack.c.b16 %v2437, %v2425
    %v3026 = vpack.c.b16 %v2438, %v2426
    %v3027 = vpack.c.b16 %v2439, %v2427
    %v3028 = vpack.c.b16 %v2440, %v2428
    %v3029 = vpack.c.b16 %v2441, %v2429
    %v3030 = vpack.c.b16 %v2442, %v2430
    %v3031 = vpack.c.b16 %v2443, %v2431
    %v3032 = vpack.c.b16 %v2444, %v2432
    %vm3621 = vcmask 130048
    %v3622 = vsel %vm3621, %v674, 0
    %3624 = vmatpush.bf16.msra.mxu0 %v2529
    %3625 = vmatpush.bf16.msra.mxu0 %v2517
    %3626 = vmatpush.bf16.msra.mxu0 %v2505
    %3627 = vmatpush.bf16.msra.mxu0 %v2493
    %3628 = vmatpush.bf16.msra.mxu0 %v2481
    %3629 = vmatpush.bf16.msra.mxu0 %v2469
    %3630 = vmatpush.bf16.msra.mxu0 %v2457
    %3631 = vmatpush.bf16.msra.mxu0 %v2445
    %3632 = vmatmul.bf16.gmra.mxu0 %v668
    %v3633 = vpop.f32.mrf.mxu0
    %v3634 = vadd.f32 %v639, %v3633
    %v3635 = vpop.f32.mrf.mxu0
    %3636 = vdwg.mxu0
    %3637 = vmatpush.bf16.msra.mxu0 %v2625
    %3638 = vmatpush.bf16.msra.mxu0 %v2613
    %3639 = vmatpush.bf16.msra.mxu0 %v2601
    %3640 = vmatpush.bf16.msra.mxu0 %v2589
    %3641 = vmatpush.bf16.msra.mxu0 %v2577
    %3642 = vmatpush.bf16.msra.mxu0 %v2565
    %3643 = vmatpush.bf16.msra.mxu0 %v2553
    %3644 = vmatpush.bf16.msra.mxu0 %v2541
    %3645 = vmatmul.bf16.gmra.mxu0 %v669
    %v3646 = vpop.f32.mrf.mxu0
    %v3647 = vadd.f32 %v3634, %v3646
    %v3648 = vpop.f32.mrf.mxu0
    %3649 = vdwg.mxu0
    %3650 = vmatpush.bf16.msra.mxu0 %v2721
    %3651 = vmatpush.bf16.msra.mxu0 %v2709
    %3652 = vmatpush.bf16.msra.mxu0 %v2697
    %3653 = vmatpush.bf16.msra.mxu0 %v2685
    %3654 = vmatpush.bf16.msra.mxu0 %v2673
    %3655 = vmatpush.bf16.msra.mxu0 %v2661
    %3656 = vmatpush.bf16.msra.mxu0 %v2649
    %3657 = vmatpush.bf16.msra.mxu0 %v2637
    %3658 = vmatmul.bf16.gmra.mxu0 %v670
    %v3659 = vpop.f32.mrf.mxu0
    %v3660 = vadd.f32 %v3647, %v3659
    %v3661 = vpop.f32.mrf.mxu0
    %3662 = vdwg.mxu0
    %3663 = vmatpush.bf16.msra.mxu0 %v2817
    %3664 = vmatpush.bf16.msra.mxu0 %v2805
    %3665 = vmatpush.bf16.msra.mxu0 %v2793
    %3666 = vmatpush.bf16.msra.mxu0 %v2781
    %3667 = vmatpush.bf16.msra.mxu0 %v2769
    %3668 = vmatpush.bf16.msra.mxu0 %v2757
    %3669 = vmatpush.bf16.msra.mxu0 %v2745
    %3670 = vmatpush.bf16.msra.mxu0 %v2733
    %3671 = vmatmul.bf16.gmra.mxu0 %v671
    %v3672 = vpop.f32.mrf.mxu0
    %v3673 = vadd.f32 %v3660, %v3672
    %v3674 = vpop.f32.mrf.mxu0
    %3675 = vdwg.mxu0
    %3676 = vmatpush.bf16.msra.mxu0 %v2913
    %3677 = vmatpush.bf16.msra.mxu0 %v2901
    %3678 = vmatpush.bf16.msra.mxu0 %v2889
    %3679 = vmatpush.bf16.msra.mxu0 %v2877
    %3680 = vmatpush.bf16.msra.mxu0 %v2865
    %3681 = vmatpush.bf16.msra.mxu0 %v2853
    %3682 = vmatpush.bf16.msra.mxu0 %v2841
    %3683 = vmatpush.bf16.msra.mxu0 %v2829
    %3684 = vmatmul.bf16.gmra.mxu0 %v672
    %v3685 = vpop.f32.mrf.mxu0
    %v3686 = vadd.f32 %v3673, %v3685
    %v3687 = vpop.f32.mrf.mxu0
    %3688 = vdwg.mxu0
    %3689 = vmatpush.bf16.msra.mxu0 %v3009
    %3690 = vmatpush.bf16.msra.mxu0 %v2997
    %3691 = vmatpush.bf16.msra.mxu0 %v2985
    %3692 = vmatpush.bf16.msra.mxu0 %v2973
    %3693 = vmatpush.bf16.msra.mxu0 %v2961
    %3694 = vmatpush.bf16.msra.mxu0 %v2949
    %3695 = vmatpush.bf16.msra.mxu0 %v2937
    %3696 = vmatpush.bf16.msra.mxu0 %v2925
    %3697 = vmatmul.bf16.gmra.mxu0 %v673
    %v3698 = vpop.f32.mrf.mxu0
    %v3699 = vadd.f32 %v3686, %v3698
    %v3700 = vpop.f32.mrf.mxu0
    %3701 = vdwg.mxu0
    %3702 = vmatpush.bf16.msra.mxu0 0
    %3703 = vmatpush.bf16.msra.mxu0 0
    %3704 = vmatpush.bf16.msra.mxu0 0
    %3705 = vmatpush.bf16.msra.mxu0 0
    %3706 = vmatpush.bf16.msra.mxu0 0
    %3707 = vmatpush.bf16.msra.mxu0 0
    %3708 = vmatpush.bf16.msra.mxu0 0
    %3709 = vmatpush.bf16.msra.mxu0 %v3021
    %3710 = vmatmul.bf16.gmra.mxu0 %v3622
    %v3711 = vpop.f32.mrf.mxu0
    %v3712 = vadd.f32 %v3699, %v3711
    %v3713 = vpop.f32.mrf.mxu0
    %3714 = vdwg.mxu0
    %3715 = vmatpush.bf16.msra.mxu0 %v2530
    %3716 = vmatpush.bf16.msra.mxu0 %v2518
    %3717 = vmatpush.bf16.msra.mxu0 %v2506
    %3718 = vmatpush.bf16.msra.mxu0 %v2494
    %3719 = vmatpush.bf16.msra.mxu0 %v2482
    %3720 = vmatpush.bf16.msra.mxu0 %v2470
    %3721 = vmatpush.bf16.msra.mxu0 %v2458
    %3722 = vmatpush.bf16.msra.mxu0 %v2446
    %3723 = vmatmul.bf16.gmra.mxu0 %v668
    %v3724 = vpop.f32.mrf.mxu0
    %v3725 = vadd.f32 %v640, %v3724
    %v3726 = vpop.f32.mrf.mxu0
    %3727 = vdwg.mxu0
    %3728 = vmatpush.bf16.msra.mxu0 %v2626
    %3729 = vmatpush.bf16.msra.mxu0 %v2614
    %3730 = vmatpush.bf16.msra.mxu0 %v2602
    %3731 = vmatpush.bf16.msra.mxu0 %v2590
    %3732 = vmatpush.bf16.msra.mxu0 %v2578
    %3733 = vmatpush.bf16.msra.mxu0 %v2566
    %3734 = vmatpush.bf16.msra.mxu0 %v2554
    %3735 = vmatpush.bf16.msra.mxu0 %v2542
    %3736 = vmatmul.bf16.gmra.mxu0 %v669
    %v3737 = vpop.f32.mrf.mxu0
    %v3738 = vadd.f32 %v3725, %v3737
    %v3739 = vpop.f32.mrf.mxu0
    %3740 = vdwg.mxu0
    %3741 = vmatpush.bf16.msra.mxu0 %v2722
    %3742 = vmatpush.bf16.msra.mxu0 %v2710
    %3743 = vmatpush.bf16.msra.mxu0 %v2698
    %3744 = vmatpush.bf16.msra.mxu0 %v2686
    %3745 = vmatpush.bf16.msra.mxu0 %v2674
    %3746 = vmatpush.bf16.msra.mxu0 %v2662
    %3747 = vmatpush.bf16.msra.mxu0 %v2650
    %3748 = vmatpush.bf16.msra.mxu0 %v2638
    %3749 = vmatmul.bf16.gmra.mxu0 %v670
    %v3750 = vpop.f32.mrf.mxu0
    %v3751 = vadd.f32 %v3738, %v3750
    %v3752 = vpop.f32.mrf.mxu0
    %3753 = vdwg.mxu0
    %3754 = vmatpush.bf16.msra.mxu0 %v2818
    %3755 = vmatpush.bf16.msra.mxu0 %v2806
    %3756 = vmatpush.bf16.msra.mxu0 %v2794
    %3757 = vmatpush.bf16.msra.mxu0 %v2782
    %3758 = vmatpush.bf16.msra.mxu0 %v2770
    %3759 = vmatpush.bf16.msra.mxu0 %v2758
    %3760 = vmatpush.bf16.msra.mxu0 %v2746
    %3761 = vmatpush.bf16.msra.mxu0 %v2734
    %3762 = vmatmul.bf16.gmra.mxu0 %v671
    %v3763 = vpop.f32.mrf.mxu0
    %v3764 = vadd.f32 %v3751, %v3763
    %v3765 = vpop.f32.mrf.mxu0
    %3766 = vdwg.mxu0
    %3767 = vmatpush.bf16.msra.mxu0 %v2914
    %3768 = vmatpush.bf16.msra.mxu0 %v2902
    %3769 = vmatpush.bf16.msra.mxu0 %v2890
    %3770 = vmatpush.bf16.msra.mxu0 %v2878
    %3771 = vmatpush.bf16.msra.mxu0 %v2866
    %3772 = vmatpush.bf16.msra.mxu0 %v2854
    %3773 = vmatpush.bf16.msra.mxu0 %v2842
    %3774 = vmatpush.bf16.msra.mxu0 %v2830
    %3775 = vmatmul.bf16.gmra.mxu0 %v672
    %v3776 = vpop.f32.mrf.mxu0
    %v3777 = vadd.f32 %v3764, %v3776
    %v3778 = vpop.f32.mrf.mxu0
    %3779 = vdwg.mxu0
    %3780 = vmatpush.bf16.msra.mxu0 %v3010
    %3781 = vmatpush.bf16.msra.mxu0 %v2998
    %3782 = vmatpush.bf16.msra.mxu0 %v2986
    %3783 = vmatpush.bf16.msra.mxu0 %v2974
    %3784 = vmatpush.bf16.msra.mxu0 %v2962
    %3785 = vmatpush.bf16.msra.mxu0 %v2950
    %3786 = vmatpush.bf16.msra.mxu0 %v2938
    %3787 = vmatpush.bf16.msra.mxu0 %v2926
    %3788 = vmatmul.bf16.gmra.mxu0 %v673
    %v3789 = vpop.f32.mrf.mxu0
    %v3790 = vadd.f32 %v3777, %v3789
    %v3791 = vpop.f32.mrf.mxu0
    %3792 = vdwg.mxu0
    %3793 = vmatpush.bf16.msra.mxu0 0
    %3794 = vmatpush.bf16.msra.mxu0 0
    %3795 = vmatpush.bf16.msra.mxu0 0
    %3796 = vmatpush.bf16.msra.mxu0 0
    %3797 = vmatpush.bf16.msra.mxu0 0
    %3798 = vmatpush.bf16.msra.mxu0 0
    %3799 = vmatpush.bf16.msra.mxu0 0
    %3800 = vmatpush.bf16.msra.mxu0 %v3022
    %3801 = vmatmul.bf16.gmra.mxu0 %v3622
    %v3802 = vpop.f32.mrf.mxu0
    %v3803 = vadd.f32 %v3790, %v3802
    %v3804 = vpop.f32.mrf.mxu0
    %3805 = vdwg.mxu0
    %3806 = vmatpush.bf16.msra.mxu0 %v2531
    %3807 = vmatpush.bf16.msra.mxu0 %v2519
    %3808 = vmatpush.bf16.msra.mxu0 %v2507
    %3809 = vmatpush.bf16.msra.mxu0 %v2495
    %3810 = vmatpush.bf16.msra.mxu0 %v2483
    %3811 = vmatpush.bf16.msra.mxu0 %v2471
    %3812 = vmatpush.bf16.msra.mxu0 %v2459
    %3813 = vmatpush.bf16.msra.mxu0 %v2447
    %3814 = vmatmul.bf16.gmra.mxu0 %v668
    %v3815 = vpop.f32.mrf.mxu0
    %v3816 = vadd.f32 %v641, %v3815
    %v3817 = vpop.f32.mrf.mxu0
    %3818 = vdwg.mxu0
    %3819 = vmatpush.bf16.msra.mxu0 %v2627
    %3820 = vmatpush.bf16.msra.mxu0 %v2615
    %3821 = vmatpush.bf16.msra.mxu0 %v2603
    %3822 = vmatpush.bf16.msra.mxu0 %v2591
    %3823 = vmatpush.bf16.msra.mxu0 %v2579
    %3824 = vmatpush.bf16.msra.mxu0 %v2567
    %3825 = vmatpush.bf16.msra.mxu0 %v2555
    %3826 = vmatpush.bf16.msra.mxu0 %v2543
    %3827 = vmatmul.bf16.gmra.mxu0 %v669
    %v3828 = vpop.f32.mrf.mxu0
    %v3829 = vadd.f32 %v3816, %v3828
    %v3830 = vpop.f32.mrf.mxu0
    %3831 = vdwg.mxu0
    %3832 = vmatpush.bf16.msra.mxu0 %v2723
    %3833 = vmatpush.bf16.msra.mxu0 %v2711
    %3834 = vmatpush.bf16.msra.mxu0 %v2699
    %3835 = vmatpush.bf16.msra.mxu0 %v2687
    %3836 = vmatpush.bf16.msra.mxu0 %v2675
    %3837 = vmatpush.bf16.msra.mxu0 %v2663
    %3838 = vmatpush.bf16.msra.mxu0 %v2651
    %3839 = vmatpush.bf16.msra.mxu0 %v2639
    %3840 = vmatmul.bf16.gmra.mxu0 %v670
    %v3841 = vpop.f32.mrf.mxu0
    %v3842 = vadd.f32 %v3829, %v3841
    %v3843 = vpop.f32.mrf.mxu0
    %3844 = vdwg.mxu0
    %3845 = vmatpush.bf16.msra.mxu0 %v2819
    %3846 = vmatpush.bf16.msra.mxu0 %v2807
    %3847 = vmatpush.bf16.msra.mxu0 %v2795
    %3848 = vmatpush.bf16.msra.mxu0 %v2783
    %3849 = vmatpush.bf16.msra.mxu0 %v2771
    %3850 = vmatpush.bf16.msra.mxu0 %v2759
    %3851 = vmatpush.bf16.msra.mxu0 %v2747
    %3852 = vmatpush.bf16.msra.mxu0 %v2735
    %3853 = vmatmul.bf16.gmra.mxu0 %v671
    %v3854 = vpop.f32.mrf.mxu0
    %v3855 = vadd.f32 %v3842, %v3854
    %v3856 = vpop.f32.mrf.mxu0
    %3857 = vdwg.mxu0
    %3858 = vmatpush.bf16.msra.mxu0 %v2915
    %3859 = vmatpush.bf16.msra.mxu0 %v2903
    %3860 = vmatpush.bf16.msra.mxu0 %v2891
    %3861 = vmatpush.bf16.msra.mxu0 %v2879
    %3862 = vmatpush.bf16.msra.mxu0 %v2867
    %3863 = vmatpush.bf16.msra.mxu0 %v2855
    %3864 = vmatpush.bf16.msra.mxu0 %v2843
    %3865 = vmatpush.bf16.msra.mxu0 %v2831
    %3866 = vmatmul.bf16.gmra.mxu0 %v672
    %v3867 = vpop.f32.mrf.mxu0
    %v3868 = vadd.f32 %v3855, %v3867
    %v3869 = vpop.f32.mrf.mxu0
    %3870 = vdwg.mxu0
    %3871 = vmatpush.bf16.msra.mxu0 %v3011
    %3872 = vmatpush.bf16.msra.mxu0 %v2999
    %3873 = vmatpush.bf16.msra.mxu0 %v2987
    %3874 = vmatpush.bf16.msra.mxu0 %v2975
    %3875 = vmatpush.bf16.msra.mxu0 %v2963
    %3876 = vmatpush.bf16.msra.mxu0 %v2951
    %3877 = vmatpush.bf16.msra.mxu0 %v2939
    %3878 = vmatpush.bf16.msra.mxu0 %v2927
    %3879 = vmatmul.bf16.gmra.mxu0 %v673
    %v3880 = vpop.f32.mrf.mxu0
    %v3881 = vadd.f32 %v3868, %v3880
    %v3882 = vpop.f32.mrf.mxu0
    %3883 = vdwg.mxu0
    %3884 = vmatpush.bf16.msra.mxu0 0
    %3885 = vmatpush.bf16.msra.mxu0 0
    %3886 = vmatpush.bf16.msra.mxu0 0
    %3887 = vmatpush.bf16.msra.mxu0 0
    %3888 = vmatpush.bf16.msra.mxu0 0
    %3889 = vmatpush.bf16.msra.mxu0 0
    %3890 = vmatpush.bf16.msra.mxu0 0
    %3891 = vmatpush.bf16.msra.mxu0 %v3023
    %3892 = vmatmul.bf16.gmra.mxu0 %v3622
    %v3893 = vpop.f32.mrf.mxu0
    %v3894 = vadd.f32 %v3881, %v3893
    %v3895 = vpop.f32.mrf.mxu0
    %3896 = vdwg.mxu0
    %3897 = vmatpush.bf16.msra.mxu0 %v2532
    %3898 = vmatpush.bf16.msra.mxu0 %v2520
    %3899 = vmatpush.bf16.msra.mxu0 %v2508
    %3900 = vmatpush.bf16.msra.mxu0 %v2496
    %3901 = vmatpush.bf16.msra.mxu0 %v2484
    %3902 = vmatpush.bf16.msra.mxu0 %v2472
    %3903 = vmatpush.bf16.msra.mxu0 %v2460
    %3904 = vmatpush.bf16.msra.mxu0 %v2448
    %3905 = vmatmul.bf16.gmra.mxu0 %v668
    %v3906 = vpop.f32.mrf.mxu0
    %v3907 = vadd.f32 %v642, %v3906
    %v3908 = vpop.f32.mrf.mxu0
    %3909 = vdwg.mxu0
    %3910 = vmatpush.bf16.msra.mxu0 %v2628
    %3911 = vmatpush.bf16.msra.mxu0 %v2616
    %3912 = vmatpush.bf16.msra.mxu0 %v2604
    %3913 = vmatpush.bf16.msra.mxu0 %v2592
    %3914 = vmatpush.bf16.msra.mxu0 %v2580
    %3915 = vmatpush.bf16.msra.mxu0 %v2568
    %3916 = vmatpush.bf16.msra.mxu0 %v2556
    %3917 = vmatpush.bf16.msra.mxu0 %v2544
    %3918 = vmatmul.bf16.gmra.mxu0 %v669
    %v3919 = vpop.f32.mrf.mxu0
    %v3920 = vadd.f32 %v3907, %v3919
    %v3921 = vpop.f32.mrf.mxu0
    %3922 = vdwg.mxu0
    %3923 = vmatpush.bf16.msra.mxu0 %v2724
    %3924 = vmatpush.bf16.msra.mxu0 %v2712
    %3925 = vmatpush.bf16.msra.mxu0 %v2700
    %3926 = vmatpush.bf16.msra.mxu0 %v2688
    %3927 = vmatpush.bf16.msra.mxu0 %v2676
    %3928 = vmatpush.bf16.msra.mxu0 %v2664
    %3929 = vmatpush.bf16.msra.mxu0 %v2652
    %3930 = vmatpush.bf16.msra.mxu0 %v2640
    %3931 = vmatmul.bf16.gmra.mxu0 %v670
    %v3932 = vpop.f32.mrf.mxu0
    %v3933 = vadd.f32 %v3920, %v3932
    %v3934 = vpop.f32.mrf.mxu0
    %3935 = vdwg.mxu0
    %3936 = vmatpush.bf16.msra.mxu0 %v2820
    %3937 = vmatpush.bf16.msra.mxu0 %v2808
    %3938 = vmatpush.bf16.msra.mxu0 %v2796
    %3939 = vmatpush.bf16.msra.mxu0 %v2784
    %3940 = vmatpush.bf16.msra.mxu0 %v2772
    %3941 = vmatpush.bf16.msra.mxu0 %v2760
    %3942 = vmatpush.bf16.msra.mxu0 %v2748
    %3943 = vmatpush.bf16.msra.mxu0 %v2736
    %3944 = vmatmul.bf16.gmra.mxu0 %v671
    %v3945 = vpop.f32.mrf.mxu0
    %v3946 = vadd.f32 %v3933, %v3945
    %v3947 = vpop.f32.mrf.mxu0
    %3948 = vdwg.mxu0
    %3949 = vmatpush.bf16.msra.mxu0 %v2916
    %3950 = vmatpush.bf16.msra.mxu0 %v2904
    %3951 = vmatpush.bf16.msra.mxu0 %v2892
    %3952 = vmatpush.bf16.msra.mxu0 %v2880
    %3953 = vmatpush.bf16.msra.mxu0 %v2868
    %3954 = vmatpush.bf16.msra.mxu0 %v2856
    %3955 = vmatpush.bf16.msra.mxu0 %v2844
    %3956 = vmatpush.bf16.msra.mxu0 %v2832
    %3957 = vmatmul.bf16.gmra.mxu0 %v672
    %v3958 = vpop.f32.mrf.mxu0
    %v3959 = vadd.f32 %v3946, %v3958
    %v3960 = vpop.f32.mrf.mxu0
    %3961 = vdwg.mxu0
    %3962 = vmatpush.bf16.msra.mxu0 %v3012
    %3963 = vmatpush.bf16.msra.mxu0 %v3000
    %3964 = vmatpush.bf16.msra.mxu0 %v2988
    %3965 = vmatpush.bf16.msra.mxu0 %v2976
    %3966 = vmatpush.bf16.msra.mxu0 %v2964
    %3967 = vmatpush.bf16.msra.mxu0 %v2952
    %3968 = vmatpush.bf16.msra.mxu0 %v2940
    %3969 = vmatpush.bf16.msra.mxu0 %v2928
    %3970 = vmatmul.bf16.gmra.mxu0 %v673
    %v3971 = vpop.f32.mrf.mxu0
    %v3972 = vadd.f32 %v3959, %v3971
    %v3973 = vpop.f32.mrf.mxu0
    %3974 = vdwg.mxu0
    %3975 = vmatpush.bf16.msra.mxu0 0
    %3976 = vmatpush.bf16.msra.mxu0 0
    %3977 = vmatpush.bf16.msra.mxu0 0
    %3978 = vmatpush.bf16.msra.mxu0 0
    %3979 = vmatpush.bf16.msra.mxu0 0
    %3980 = vmatpush.bf16.msra.mxu0 0
    %3981 = vmatpush.bf16.msra.mxu0 0
    %3982 = vmatpush.bf16.msra.mxu0 %v3024
    %3983 = vmatmul.bf16.gmra.mxu0 %v3622
    %v3984 = vpop.f32.mrf.mxu0
    %v3985 = vadd.f32 %v3972, %v3984
    %v3986 = vpop.f32.mrf.mxu0
    %3987 = vdwg.mxu0
    %3988 = vmatpush.bf16.msra.mxu0 %v2533
    %3989 = vmatpush.bf16.msra.mxu0 %v2521
    %3990 = vmatpush.bf16.msra.mxu0 %v2509
    %3991 = vmatpush.bf16.msra.mxu0 %v2497
    %3992 = vmatpush.bf16.msra.mxu0 %v2485
    %3993 = vmatpush.bf16.msra.mxu0 %v2473
    %3994 = vmatpush.bf16.msra.mxu0 %v2461
    %3995 = vmatpush.bf16.msra.mxu0 %v2449
    %3996 = vmatmul.bf16.gmra.mxu0 %v668
    %v3997 = vpop.f32.mrf.mxu0
    %v3998 = vadd.f32 %v643, %v3997
    %v3999 = vpop.f32.mrf.mxu0
    %4000 = vdwg.mxu0
    %4001 = vmatpush.bf16.msra.mxu0 %v2629
    %4002 = vmatpush.bf16.msra.mxu0 %v2617
    %4003 = vmatpush.bf16.msra.mxu0 %v2605
    %4004 = vmatpush.bf16.msra.mxu0 %v2593
    %4005 = vmatpush.bf16.msra.mxu0 %v2581
    %4006 = vmatpush.bf16.msra.mxu0 %v2569
    %4007 = vmatpush.bf16.msra.mxu0 %v2557
    %4008 = vmatpush.bf16.msra.mxu0 %v2545
    %4009 = vmatmul.bf16.gmra.mxu0 %v669
    %v4010 = vpop.f32.mrf.mxu0
    %v4011 = vadd.f32 %v3998, %v4010
    %v4012 = vpop.f32.mrf.mxu0
    %4013 = vdwg.mxu0
    %4014 = vmatpush.bf16.msra.mxu0 %v2725
    %4015 = vmatpush.bf16.msra.mxu0 %v2713
    %4016 = vmatpush.bf16.msra.mxu0 %v2701
    %4017 = vmatpush.bf16.msra.mxu0 %v2689
    %4018 = vmatpush.bf16.msra.mxu0 %v2677
    %4019 = vmatpush.bf16.msra.mxu0 %v2665
    %4020 = vmatpush.bf16.msra.mxu0 %v2653
    %4021 = vmatpush.bf16.msra.mxu0 %v2641
    %4022 = vmatmul.bf16.gmra.mxu0 %v670
    %v4023 = vpop.f32.mrf.mxu0
    %v4024 = vadd.f32 %v4011, %v4023
    %v4025 = vpop.f32.mrf.mxu0
    %4026 = vdwg.mxu0
    %4027 = vmatpush.bf16.msra.mxu0 %v2821
    %4028 = vmatpush.bf16.msra.mxu0 %v2809
    %4029 = vmatpush.bf16.msra.mxu0 %v2797
    %4030 = vmatpush.bf16.msra.mxu0 %v2785
    %4031 = vmatpush.bf16.msra.mxu0 %v2773
    %4032 = vmatpush.bf16.msra.mxu0 %v2761
    %4033 = vmatpush.bf16.msra.mxu0 %v2749
    %4034 = vmatpush.bf16.msra.mxu0 %v2737
    %4035 = vmatmul.bf16.gmra.mxu0 %v671
    %v4036 = vpop.f32.mrf.mxu0
    %v4037 = vadd.f32 %v4024, %v4036
    %v4038 = vpop.f32.mrf.mxu0
    %4039 = vdwg.mxu0
    %4040 = vmatpush.bf16.msra.mxu0 %v2917
    %4041 = vmatpush.bf16.msra.mxu0 %v2905
    %4042 = vmatpush.bf16.msra.mxu0 %v2893
    %4043 = vmatpush.bf16.msra.mxu0 %v2881
    %4044 = vmatpush.bf16.msra.mxu0 %v2869
    %4045 = vmatpush.bf16.msra.mxu0 %v2857
    %4046 = vmatpush.bf16.msra.mxu0 %v2845
    %4047 = vmatpush.bf16.msra.mxu0 %v2833
    %4048 = vmatmul.bf16.gmra.mxu0 %v672
    %v4049 = vpop.f32.mrf.mxu0
    %v4050 = vadd.f32 %v4037, %v4049
    %v4051 = vpop.f32.mrf.mxu0
    %4052 = vdwg.mxu0
    %4053 = vmatpush.bf16.msra.mxu0 %v3013
    %4054 = vmatpush.bf16.msra.mxu0 %v3001
    %4055 = vmatpush.bf16.msra.mxu0 %v2989
    %4056 = vmatpush.bf16.msra.mxu0 %v2977
    %4057 = vmatpush.bf16.msra.mxu0 %v2965
    %4058 = vmatpush.bf16.msra.mxu0 %v2953
    %4059 = vmatpush.bf16.msra.mxu0 %v2941
    %4060 = vmatpush.bf16.msra.mxu0 %v2929
    %4061 = vmatmul.bf16.gmra.mxu0 %v673
    %v4062 = vpop.f32.mrf.mxu0
    %v4063 = vadd.f32 %v4050, %v4062
    %v4064 = vpop.f32.mrf.mxu0
    %4065 = vdwg.mxu0
    %4066 = vmatpush.bf16.msra.mxu0 0
    %4067 = vmatpush.bf16.msra.mxu0 0
    %4068 = vmatpush.bf16.msra.mxu0 0
    %4069 = vmatpush.bf16.msra.mxu0 0
    %4070 = vmatpush.bf16.msra.mxu0 0
    %4071 = vmatpush.bf16.msra.mxu0 0
    %4072 = vmatpush.bf16.msra.mxu0 0
    %4073 = vmatpush.bf16.msra.mxu0 %v3025
    %4074 = vmatmul.bf16.gmra.mxu0 %v3622
    %v4075 = vpop.f32.mrf.mxu0
    %v4076 = vadd.f32 %v4063, %v4075
    %v4077 = vpop.f32.mrf.mxu0
    %4078 = vdwg.mxu0
    %4079 = vmatpush.bf16.msra.mxu0 %v2534
    %4080 = vmatpush.bf16.msra.mxu0 %v2522
    %4081 = vmatpush.bf16.msra.mxu0 %v2510
    %4082 = vmatpush.bf16.msra.mxu0 %v2498
    %4083 = vmatpush.bf16.msra.mxu0 %v2486
    %4084 = vmatpush.bf16.msra.mxu0 %v2474
    %4085 = vmatpush.bf16.msra.mxu0 %v2462
    %4086 = vmatpush.bf16.msra.mxu0 %v2450
    %4087 = vmatmul.bf16.gmra.mxu0 %v668
    %v4088 = vpop.f32.mrf.mxu0
    %v4089 = vadd.f32 %v644, %v4088
    %v4090 = vpop.f32.mrf.mxu0
    %4091 = vdwg.mxu0
    %4092 = vmatpush.bf16.msra.mxu0 %v2630
    %4093 = vmatpush.bf16.msra.mxu0 %v2618
    %4094 = vmatpush.bf16.msra.mxu0 %v2606
    %4095 = vmatpush.bf16.msra.mxu0 %v2594
    %4096 = vmatpush.bf16.msra.mxu0 %v2582
    %4097 = vmatpush.bf16.msra.mxu0 %v2570
    %4098 = vmatpush.bf16.msra.mxu0 %v2558
    %4099 = vmatpush.bf16.msra.mxu0 %v2546
    %4100 = vmatmul.bf16.gmra.mxu0 %v669
    %v4101 = vpop.f32.mrf.mxu0
    %v4102 = vadd.f32 %v4089, %v4101
    %v4103 = vpop.f32.mrf.mxu0
    %4104 = vdwg.mxu0
    %4105 = vmatpush.bf16.msra.mxu0 %v2726
    %4106 = vmatpush.bf16.msra.mxu0 %v2714
    %4107 = vmatpush.bf16.msra.mxu0 %v2702
    %4108 = vmatpush.bf16.msra.mxu0 %v2690
    %4109 = vmatpush.bf16.msra.mxu0 %v2678
    %4110 = vmatpush.bf16.msra.mxu0 %v2666
    %4111 = vmatpush.bf16.msra.mxu0 %v2654
    %4112 = vmatpush.bf16.msra.mxu0 %v2642
    %4113 = vmatmul.bf16.gmra.mxu0 %v670
    %v4114 = vpop.f32.mrf.mxu0
    %v4115 = vadd.f32 %v4102, %v4114
    %v4116 = vpop.f32.mrf.mxu0
    %4117 = vdwg.mxu0
    %4118 = vmatpush.bf16.msra.mxu0 %v2822
    %4119 = vmatpush.bf16.msra.mxu0 %v2810
    %4120 = vmatpush.bf16.msra.mxu0 %v2798
    %4121 = vmatpush.bf16.msra.mxu0 %v2786
    %4122 = vmatpush.bf16.msra.mxu0 %v2774
    %4123 = vmatpush.bf16.msra.mxu0 %v2762
    %4124 = vmatpush.bf16.msra.mxu0 %v2750
    %4125 = vmatpush.bf16.msra.mxu0 %v2738
    %4126 = vmatmul.bf16.gmra.mxu0 %v671
    %v4127 = vpop.f32.mrf.mxu0
    %v4128 = vadd.f32 %v4115, %v4127
    %v4129 = vpop.f32.mrf.mxu0
    %4130 = vdwg.mxu0
    %4131 = vmatpush.bf16.msra.mxu0 %v2918
    %4132 = vmatpush.bf16.msra.mxu0 %v2906
    %4133 = vmatpush.bf16.msra.mxu0 %v2894
    %4134 = vmatpush.bf16.msra.mxu0 %v2882
    %4135 = vmatpush.bf16.msra.mxu0 %v2870
    %4136 = vmatpush.bf16.msra.mxu0 %v2858
    %4137 = vmatpush.bf16.msra.mxu0 %v2846
    %4138 = vmatpush.bf16.msra.mxu0 %v2834
    %4139 = vmatmul.bf16.gmra.mxu0 %v672
    %v4140 = vpop.f32.mrf.mxu0
    %v4141 = vadd.f32 %v4128, %v4140
    %v4142 = vpop.f32.mrf.mxu0
    %4143 = vdwg.mxu0
    %4144 = vmatpush.bf16.msra.mxu0 %v3014
    %4145 = vmatpush.bf16.msra.mxu0 %v3002
    %4146 = vmatpush.bf16.msra.mxu0 %v2990
    %4147 = vmatpush.bf16.msra.mxu0 %v2978
    %4148 = vmatpush.bf16.msra.mxu0 %v2966
    %4149 = vmatpush.bf16.msra.mxu0 %v2954
    %4150 = vmatpush.bf16.msra.mxu0 %v2942
    %4151 = vmatpush.bf16.msra.mxu0 %v2930
    %4152 = vmatmul.bf16.gmra.mxu0 %v673
    %v4153 = vpop.f32.mrf.mxu0
    %v4154 = vadd.f32 %v4141, %v4153
    %v4155 = vpop.f32.mrf.mxu0
    %4156 = vdwg.mxu0
    %4157 = vmatpush.bf16.msra.mxu0 0
    %4158 = vmatpush.bf16.msra.mxu0 0
    %4159 = vmatpush.bf16.msra.mxu0 0
    %4160 = vmatpush.bf16.msra.mxu0 0
    %4161 = vmatpush.bf16.msra.mxu0 0
    %4162 = vmatpush.bf16.msra.mxu0 0
    %4163 = vmatpush.bf16.msra.mxu0 0
    %4164 = vmatpush.bf16.msra.mxu0 %v3026
    %4165 = vmatmul.bf16.gmra.mxu0 %v3622
    %v4166 = vpop.f32.mrf.mxu0
    %v4167 = vadd.f32 %v4154, %v4166
    %v4168 = vpop.f32.mrf.mxu0
    %4169 = vdwg.mxu0
    %4170 = vmatpush.bf16.msra.mxu0 %v2535
    %4171 = vmatpush.bf16.msra.mxu0 %v2523
    %4172 = vmatpush.bf16.msra.mxu0 %v2511
    %4173 = vmatpush.bf16.msra.mxu0 %v2499
    %4174 = vmatpush.bf16.msra.mxu0 %v2487
    %4175 = vmatpush.bf16.msra.mxu0 %v2475
    %4176 = vmatpush.bf16.msra.mxu0 %v2463
    %4177 = vmatpush.bf16.msra.mxu0 %v2451
    %4178 = vmatmul.bf16.gmra.mxu0 %v668
    %v4179 = vpop.f32.mrf.mxu0
    %v4180 = vadd.f32 %v645, %v4179
    %v4181 = vpop.f32.mrf.mxu0
    %4182 = vdwg.mxu0
    %4183 = vmatpush.bf16.msra.mxu0 %v2631
    %4184 = vmatpush.bf16.msra.mxu0 %v2619
    %4185 = vmatpush.bf16.msra.mxu0 %v2607
    %4186 = vmatpush.bf16.msra.mxu0 %v2595
    %4187 = vmatpush.bf16.msra.mxu0 %v2583
    %4188 = vmatpush.bf16.msra.mxu0 %v2571
    %4189 = vmatpush.bf16.msra.mxu0 %v2559
    %4190 = vmatpush.bf16.msra.mxu0 %v2547
    %4191 = vmatmul.bf16.gmra.mxu0 %v669
    %v4192 = vpop.f32.mrf.mxu0
    %v4193 = vadd.f32 %v4180, %v4192
    %v4194 = vpop.f32.mrf.mxu0
    %4195 = vdwg.mxu0
    %4196 = vmatpush.bf16.msra.mxu0 %v2727
    %4197 = vmatpush.bf16.msra.mxu0 %v2715
    %4198 = vmatpush.bf16.msra.mxu0 %v2703
    %4199 = vmatpush.bf16.msra.mxu0 %v2691
    %4200 = vmatpush.bf16.msra.mxu0 %v2679
    %4201 = vmatpush.bf16.msra.mxu0 %v2667
    %4202 = vmatpush.bf16.msra.mxu0 %v2655
    %4203 = vmatpush.bf16.msra.mxu0 %v2643
    %4204 = vmatmul.bf16.gmra.mxu0 %v670
    %v4205 = vpop.f32.mrf.mxu0
    %v4206 = vadd.f32 %v4193, %v4205
    %v4207 = vpop.f32.mrf.mxu0
    %4208 = vdwg.mxu0
    %4209 = vmatpush.bf16.msra.mxu0 %v2823
    %4210 = vmatpush.bf16.msra.mxu0 %v2811
    %4211 = vmatpush.bf16.msra.mxu0 %v2799
    %4212 = vmatpush.bf16.msra.mxu0 %v2787
    %4213 = vmatpush.bf16.msra.mxu0 %v2775
    %4214 = vmatpush.bf16.msra.mxu0 %v2763
    %4215 = vmatpush.bf16.msra.mxu0 %v2751
    %4216 = vmatpush.bf16.msra.mxu0 %v2739
    %4217 = vmatmul.bf16.gmra.mxu0 %v671
    %v4218 = vpop.f32.mrf.mxu0
    %v4219 = vadd.f32 %v4206, %v4218
    %v4220 = vpop.f32.mrf.mxu0
    %4221 = vdwg.mxu0
    %4222 = vmatpush.bf16.msra.mxu0 %v2919
    %4223 = vmatpush.bf16.msra.mxu0 %v2907
    %4224 = vmatpush.bf16.msra.mxu0 %v2895
    %4225 = vmatpush.bf16.msra.mxu0 %v2883
    %4226 = vmatpush.bf16.msra.mxu0 %v2871
    %4227 = vmatpush.bf16.msra.mxu0 %v2859
    %4228 = vmatpush.bf16.msra.mxu0 %v2847
    %4229 = vmatpush.bf16.msra.mxu0 %v2835
    %4230 = vmatmul.bf16.gmra.mxu0 %v672
    %v4231 = vpop.f32.mrf.mxu0
    %v4232 = vadd.f32 %v4219, %v4231
    %v4233 = vpop.f32.mrf.mxu0
    %4234 = vdwg.mxu0
    %4235 = vmatpush.bf16.msra.mxu0 %v3015
    %4236 = vmatpush.bf16.msra.mxu0 %v3003
    %4237 = vmatpush.bf16.msra.mxu0 %v2991
    %4238 = vmatpush.bf16.msra.mxu0 %v2979
    %4239 = vmatpush.bf16.msra.mxu0 %v2967
    %4240 = vmatpush.bf16.msra.mxu0 %v2955
    %4241 = vmatpush.bf16.msra.mxu0 %v2943
    %4242 = vmatpush.bf16.msra.mxu0 %v2931
    %4243 = vmatmul.bf16.gmra.mxu0 %v673
    %v4244 = vpop.f32.mrf.mxu0
    %v4245 = vadd.f32 %v4232, %v4244
    %v4246 = vpop.f32.mrf.mxu0
    %4247 = vdwg.mxu0
    %4248 = vmatpush.bf16.msra.mxu0 0
    %4249 = vmatpush.bf16.msra.mxu0 0
    %4250 = vmatpush.bf16.msra.mxu0 0
    %4251 = vmatpush.bf16.msra.mxu0 0
    %4252 = vmatpush.bf16.msra.mxu0 0
    %4253 = vmatpush.bf16.msra.mxu0 0
    %4254 = vmatpush.bf16.msra.mxu0 0
    %4255 = vmatpush.bf16.msra.mxu0 %v3027
    %4256 = vmatmul.bf16.gmra.mxu0 %v3622
    %v4257 = vpop.f32.mrf.mxu0
    %v4258 = vadd.f32 %v4245, %v4257
    %v4259 = vpop.f32.mrf.mxu0
    %4260 = vdwg.mxu0
    %4261 = vmatpush.bf16.msra.mxu0 %v2536
    %4262 = vmatpush.bf16.msra.mxu0 %v2524
    %4263 = vmatpush.bf16.msra.mxu0 %v2512
    %4264 = vmatpush.bf16.msra.mxu0 %v2500
    %4265 = vmatpush.bf16.msra.mxu0 %v2488
    %4266 = vmatpush.bf16.msra.mxu0 %v2476
    %4267 = vmatpush.bf16.msra.mxu0 %v2464
    %4268 = vmatpush.bf16.msra.mxu0 %v2452
    %4269 = vmatmul.bf16.gmra.mxu0 %v668
    %v4270 = vpop.f32.mrf.mxu0
    %v4271 = vadd.f32 %v646, %v4270
    %v4272 = vpop.f32.mrf.mxu0
    %4273 = vdwg.mxu0
    %4274 = vmatpush.bf16.msra.mxu0 %v2632
    %4275 = vmatpush.bf16.msra.mxu0 %v2620
    %4276 = vmatpush.bf16.msra.mxu0 %v2608
    %4277 = vmatpush.bf16.msra.mxu0 %v2596
    %4278 = vmatpush.bf16.msra.mxu0 %v2584
    %4279 = vmatpush.bf16.msra.mxu0 %v2572
    %4280 = vmatpush.bf16.msra.mxu0 %v2560
    %4281 = vmatpush.bf16.msra.mxu0 %v2548
    %4282 = vmatmul.bf16.gmra.mxu0 %v669
    %v4283 = vpop.f32.mrf.mxu0
    %v4284 = vadd.f32 %v4271, %v4283
    %v4285 = vpop.f32.mrf.mxu0
    %4286 = vdwg.mxu0
    %4287 = vmatpush.bf16.msra.mxu0 %v2728
    %4288 = vmatpush.bf16.msra.mxu0 %v2716
    %4289 = vmatpush.bf16.msra.mxu0 %v2704
    %4290 = vmatpush.bf16.msra.mxu0 %v2692
    %4291 = vmatpush.bf16.msra.mxu0 %v2680
    %4292 = vmatpush.bf16.msra.mxu0 %v2668
    %4293 = vmatpush.bf16.msra.mxu0 %v2656
    %4294 = vmatpush.bf16.msra.mxu0 %v2644
    %4295 = vmatmul.bf16.gmra.mxu0 %v670
    %v4296 = vpop.f32.mrf.mxu0
    %v4297 = vadd.f32 %v4284, %v4296
    %v4298 = vpop.f32.mrf.mxu0
    %4299 = vdwg.mxu0
    %4300 = vmatpush.bf16.msra.mxu0 %v2824
    %4301 = vmatpush.bf16.msra.mxu0 %v2812
    %4302 = vmatpush.bf16.msra.mxu0 %v2800
    %4303 = vmatpush.bf16.msra.mxu0 %v2788
    %4304 = vmatpush.bf16.msra.mxu0 %v2776
    %4305 = vmatpush.bf16.msra.mxu0 %v2764
    %4306 = vmatpush.bf16.msra.mxu0 %v2752
    %4307 = vmatpush.bf16.msra.mxu0 %v2740
    %4308 = vmatmul.bf16.gmra.mxu0 %v671
    %v4309 = vpop.f32.mrf.mxu0
    %v4310 = vadd.f32 %v4297, %v4309
    %v4311 = vpop.f32.mrf.mxu0
    %4312 = vdwg.mxu0
    %4313 = vmatpush.bf16.msra.mxu0 %v2920
    %4314 = vmatpush.bf16.msra.mxu0 %v2908
    %4315 = vmatpush.bf16.msra.mxu0 %v2896
    %4316 = vmatpush.bf16.msra.mxu0 %v2884
    %4317 = vmatpush.bf16.msra.mxu0 %v2872
    %4318 = vmatpush.bf16.msra.mxu0 %v2860
    %4319 = vmatpush.bf16.msra.mxu0 %v2848
    %4320 = vmatpush.bf16.msra.mxu0 %v2836
    %4321 = vmatmul.bf16.gmra.mxu0 %v672
    %v4322 = vpop.f32.mrf.mxu0
    %v4323 = vadd.f32 %v4310, %v4322
    %v4324 = vpop.f32.mrf.mxu0
    %4325 = vdwg.mxu0
    %4326 = vmatpush.bf16.msra.mxu0 %v3016
    %4327 = vmatpush.bf16.msra.mxu0 %v3004
    %4328 = vmatpush.bf16.msra.mxu0 %v2992
    %4329 = vmatpush.bf16.msra.mxu0 %v2980
    %4330 = vmatpush.bf16.msra.mxu0 %v2968
    %4331 = vmatpush.bf16.msra.mxu0 %v2956
    %4332 = vmatpush.bf16.msra.mxu0 %v2944
    %4333 = vmatpush.bf16.msra.mxu0 %v2932
    %4334 = vmatmul.bf16.gmra.mxu0 %v673
    %v4335 = vpop.f32.mrf.mxu0
    %v4336 = vadd.f32 %v4323, %v4335
    %v4337 = vpop.f32.mrf.mxu0
    %4338 = vdwg.mxu0
    %4339 = vmatpush.bf16.msra.mxu0 0
    %4340 = vmatpush.bf16.msra.mxu0 0
    %4341 = vmatpush.bf16.msra.mxu0 0
    %4342 = vmatpush.bf16.msra.mxu0 0
    %4343 = vmatpush.bf16.msra.mxu0 0
    %4344 = vmatpush.bf16.msra.mxu0 0
    %4345 = vmatpush.bf16.msra.mxu0 0
    %4346 = vmatpush.bf16.msra.mxu0 %v3028
    %4347 = vmatmul.bf16.gmra.mxu0 %v3622
    %v4348 = vpop.f32.mrf.mxu0
    %v4349 = vadd.f32 %v4336, %v4348
    %v4350 = vpop.f32.mrf.mxu0
    %4351 = vdwg.mxu0
    %4352 = vmatpush.bf16.msra.mxu0 %v2537
    %4353 = vmatpush.bf16.msra.mxu0 %v2525
    %4354 = vmatpush.bf16.msra.mxu0 %v2513
    %4355 = vmatpush.bf16.msra.mxu0 %v2501
    %4356 = vmatpush.bf16.msra.mxu0 %v2489
    %4357 = vmatpush.bf16.msra.mxu0 %v2477
    %4358 = vmatpush.bf16.msra.mxu0 %v2465
    %4359 = vmatpush.bf16.msra.mxu0 %v2453
    %4360 = vmatmul.bf16.gmra.mxu0 %v668
    %v4361 = vpop.f32.mrf.mxu0
    %v4362 = vadd.f32 %v647, %v4361
    %v4363 = vpop.f32.mrf.mxu0
    %4364 = vdwg.mxu0
    %4365 = vmatpush.bf16.msra.mxu0 %v2633
    %4366 = vmatpush.bf16.msra.mxu0 %v2621
    %4367 = vmatpush.bf16.msra.mxu0 %v2609
    %4368 = vmatpush.bf16.msra.mxu0 %v2597
    %4369 = vmatpush.bf16.msra.mxu0 %v2585
    %4370 = vmatpush.bf16.msra.mxu0 %v2573
    %4371 = vmatpush.bf16.msra.mxu0 %v2561
    %4372 = vmatpush.bf16.msra.mxu0 %v2549
    %4373 = vmatmul.bf16.gmra.mxu0 %v669
    %v4374 = vpop.f32.mrf.mxu0
    %v4375 = vadd.f32 %v4362, %v4374
    %v4376 = vpop.f32.mrf.mxu0
    %4377 = vdwg.mxu0
    %4378 = vmatpush.bf16.msra.mxu0 %v2729
    %4379 = vmatpush.bf16.msra.mxu0 %v2717
    %4380 = vmatpush.bf16.msra.mxu0 %v2705
    %4381 = vmatpush.bf16.msra.mxu0 %v2693
    %4382 = vmatpush.bf16.msra.mxu0 %v2681
    %4383 = vmatpush.bf16.msra.mxu0 %v2669
    %4384 = vmatpush.bf16.msra.mxu0 %v2657
    %4385 = vmatpush.bf16.msra.mxu0 %v2645
    %4386 = vmatmul.bf16.gmra.mxu0 %v670
    %v4387 = vpop.f32.mrf.mxu0
    %v4388 = vadd.f32 %v4375, %v4387
    %v4389 = vpop.f32.mrf.mxu0
    %4390 = vdwg.mxu0
    %4391 = vmatpush.bf16.msra.mxu0 %v2825
    %4392 = vmatpush.bf16.msra.mxu0 %v2813
    %4393 = vmatpush.bf16.msra.mxu0 %v2801
    %4394 = vmatpush.bf16.msra.mxu0 %v2789
    %4395 = vmatpush.bf16.msra.mxu0 %v2777
    %4396 = vmatpush.bf16.msra.mxu0 %v2765
    %4397 = vmatpush.bf16.msra.mxu0 %v2753
    %4398 = vmatpush.bf16.msra.mxu0 %v2741
    %4399 = vmatmul.bf16.gmra.mxu0 %v671
    %v4400 = vpop.f32.mrf.mxu0
    %v4401 = vadd.f32 %v4388, %v4400
    %v4402 = vpop.f32.mrf.mxu0
    %4403 = vdwg.mxu0
    %4404 = vmatpush.bf16.msra.mxu0 %v2921
    %4405 = vmatpush.bf16.msra.mxu0 %v2909
    %4406 = vmatpush.bf16.msra.mxu0 %v2897
    %4407 = vmatpush.bf16.msra.mxu0 %v2885
    %4408 = vmatpush.bf16.msra.mxu0 %v2873
    %4409 = vmatpush.bf16.msra.mxu0 %v2861
    %4410 = vmatpush.bf16.msra.mxu0 %v2849
    %4411 = vmatpush.bf16.msra.mxu0 %v2837
    %4412 = vmatmul.bf16.gmra.mxu0 %v672
    %v4413 = vpop.f32.mrf.mxu0
    %v4414 = vadd.f32 %v4401, %v4413
    %v4415 = vpop.f32.mrf.mxu0
    %4416 = vdwg.mxu0
    %4417 = vmatpush.bf16.msra.mxu0 %v3017
    %4418 = vmatpush.bf16.msra.mxu0 %v3005
    %4419 = vmatpush.bf16.msra.mxu0 %v2993
    %4420 = vmatpush.bf16.msra.mxu0 %v2981
    %4421 = vmatpush.bf16.msra.mxu0 %v2969
    %4422 = vmatpush.bf16.msra.mxu0 %v2957
    %4423 = vmatpush.bf16.msra.mxu0 %v2945
    %4424 = vmatpush.bf16.msra.mxu0 %v2933
    %4425 = vmatmul.bf16.gmra.mxu0 %v673
    %v4426 = vpop.f32.mrf.mxu0
    %v4427 = vadd.f32 %v4414, %v4426
    %v4428 = vpop.f32.mrf.mxu0
    %4429 = vdwg.mxu0
    %4430 = vmatpush.bf16.msra.mxu0 0
    %4431 = vmatpush.bf16.msra.mxu0 0
    %4432 = vmatpush.bf16.msra.mxu0 0
    %4433 = vmatpush.bf16.msra.mxu0 0
    %4434 = vmatpush.bf16.msra.mxu0 0
    %4435 = vmatpush.bf16.msra.mxu0 0
    %4436 = vmatpush.bf16.msra.mxu0 0
    %4437 = vmatpush.bf16.msra.mxu0 %v3029
    %4438 = vmatmul.bf16.gmra.mxu0 %v3622
    %v4439 = vpop.f32.mrf.mxu0
    %v4440 = vadd.f32 %v4427, %v4439
    %v4441 = vpop.f32.mrf.mxu0
    %4442 = vdwg.mxu0
    %4443 = vmatpush.bf16.msra.mxu0 %v2538
    %4444 = vmatpush.bf16.msra.mxu0 %v2526
    %4445 = vmatpush.bf16.msra.mxu0 %v2514
    %4446 = vmatpush.bf16.msra.mxu0 %v2502
    %4447 = vmatpush.bf16.msra.mxu0 %v2490
    %4448 = vmatpush.bf16.msra.mxu0 %v2478
    %4449 = vmatpush.bf16.msra.mxu0 %v2466
    %4450 = vmatpush.bf16.msra.mxu0 %v2454
    %4451 = vmatmul.bf16.gmra.mxu0 %v668
    %v4452 = vpop.f32.mrf.mxu0
    %v4453 = vadd.f32 %v648, %v4452
    %v4454 = vpop.f32.mrf.mxu0
    %4455 = vdwg.mxu0
    %4456 = vmatpush.bf16.msra.mxu0 %v2634
    %4457 = vmatpush.bf16.msra.mxu0 %v2622
    %4458 = vmatpush.bf16.msra.mxu0 %v2610
    %4459 = vmatpush.bf16.msra.mxu0 %v2598
    %4460 = vmatpush.bf16.msra.mxu0 %v2586
    %4461 = vmatpush.bf16.msra.mxu0 %v2574
    %4462 = vmatpush.bf16.msra.mxu0 %v2562
    %4463 = vmatpush.bf16.msra.mxu0 %v2550
    %4464 = vmatmul.bf16.gmra.mxu0 %v669
    %v4465 = vpop.f32.mrf.mxu0
    %v4466 = vadd.f32 %v4453, %v4465
    %v4467 = vpop.f32.mrf.mxu0
    %4468 = vdwg.mxu0
    %4469 = vmatpush.bf16.msra.mxu0 %v2730
    %4470 = vmatpush.bf16.msra.mxu0 %v2718
    %4471 = vmatpush.bf16.msra.mxu0 %v2706
    %4472 = vmatpush.bf16.msra.mxu0 %v2694
    %4473 = vmatpush.bf16.msra.mxu0 %v2682
    %4474 = vmatpush.bf16.msra.mxu0 %v2670
    %4475 = vmatpush.bf16.msra.mxu0 %v2658
    %4476 = vmatpush.bf16.msra.mxu0 %v2646
    %4477 = vmatmul.bf16.gmra.mxu0 %v670
    %v4478 = vpop.f32.mrf.mxu0
    %v4479 = vadd.f32 %v4466, %v4478
    %v4480 = vpop.f32.mrf.mxu0
    %4481 = vdwg.mxu0
    %4482 = vmatpush.bf16.msra.mxu0 %v2826
    %4483 = vmatpush.bf16.msra.mxu0 %v2814
    %4484 = vmatpush.bf16.msra.mxu0 %v2802
    %4485 = vmatpush.bf16.msra.mxu0 %v2790
    %4486 = vmatpush.bf16.msra.mxu0 %v2778
    %4487 = vmatpush.bf16.msra.mxu0 %v2766
    %4488 = vmatpush.bf16.msra.mxu0 %v2754
    %4489 = vmatpush.bf16.msra.mxu0 %v2742
    %4490 = vmatmul.bf16.gmra.mxu0 %v671
    %v4491 = vpop.f32.mrf.mxu0
    %v4492 = vadd.f32 %v4479, %v4491
    %v4493 = vpop.f32.mrf.mxu0
    %4494 = vdwg.mxu0
    %4495 = vmatpush.bf16.msra.mxu0 %v2922
    %4496 = vmatpush.bf16.msra.mxu0 %v2910
    %4497 = vmatpush.bf16.msra.mxu0 %v2898
    %4498 = vmatpush.bf16.msra.mxu0 %v2886
    %4499 = vmatpush.bf16.msra.mxu0 %v2874
    %4500 = vmatpush.bf16.msra.mxu0 %v2862
    %4501 = vmatpush.bf16.msra.mxu0 %v2850
    %4502 = vmatpush.bf16.msra.mxu0 %v2838
    %4503 = vmatmul.bf16.gmra.mxu0 %v672
    %v4504 = vpop.f32.mrf.mxu0
    %v4505 = vadd.f32 %v4492, %v4504
    %v4506 = vpop.f32.mrf.mxu0
    %4507 = vdwg.mxu0
    %4508 = vmatpush.bf16.msra.mxu0 %v3018
    %4509 = vmatpush.bf16.msra.mxu0 %v3006
    %4510 = vmatpush.bf16.msra.mxu0 %v2994
    %4511 = vmatpush.bf16.msra.mxu0 %v2982
    %4512 = vmatpush.bf16.msra.mxu0 %v2970
    %4513 = vmatpush.bf16.msra.mxu0 %v2958
    %4514 = vmatpush.bf16.msra.mxu0 %v2946
    %4515 = vmatpush.bf16.msra.mxu0 %v2934
    %4516 = vmatmul.bf16.gmra.mxu0 %v673
    %v4517 = vpop.f32.mrf.mxu0
    %v4518 = vadd.f32 %v4505, %v4517
    %v4519 = vpop.f32.mrf.mxu0
    %4520 = vdwg.mxu0
    %4521 = vmatpush.bf16.msra.mxu0 0
    %4522 = vmatpush.bf16.msra.mxu0 0
    %4523 = vmatpush.bf16.msra.mxu0 0
    %4524 = vmatpush.bf16.msra.mxu0 0
    %4525 = vmatpush.bf16.msra.mxu0 0
    %4526 = vmatpush.bf16.msra.mxu0 0
    %4527 = vmatpush.bf16.msra.mxu0 0
    %4528 = vmatpush.bf16.msra.mxu0 %v3030
    %4529 = vmatmul.bf16.gmra.mxu0 %v3622
    %v4530 = vpop.f32.mrf.mxu0
    %v4531 = vadd.f32 %v4518, %v4530
    %v4532 = vpop.f32.mrf.mxu0
    %4533 = vdwg.mxu0
    %4534 = vmatpush.bf16.msra.mxu0 %v2539
    %4535 = vmatpush.bf16.msra.mxu0 %v2527
    %4536 = vmatpush.bf16.msra.mxu0 %v2515
    %4537 = vmatpush.bf16.msra.mxu0 %v2503
    %4538 = vmatpush.bf16.msra.mxu0 %v2491
    %4539 = vmatpush.bf16.msra.mxu0 %v2479
    %4540 = vmatpush.bf16.msra.mxu0 %v2467
    %4541 = vmatpush.bf16.msra.mxu0 %v2455
    %4542 = vmatmul.bf16.gmra.mxu0 %v668
    %v4543 = vpop.f32.mrf.mxu0
    %v4544 = vadd.f32 %v649, %v4543
    %v4545 = vpop.f32.mrf.mxu0
    %4546 = vdwg.mxu0
    %4547 = vmatpush.bf16.msra.mxu0 %v2635
    %4548 = vmatpush.bf16.msra.mxu0 %v2623
    %4549 = vmatpush.bf16.msra.mxu0 %v2611
    %4550 = vmatpush.bf16.msra.mxu0 %v2599
    %4551 = vmatpush.bf16.msra.mxu0 %v2587
    %4552 = vmatpush.bf16.msra.mxu0 %v2575
    %4553 = vmatpush.bf16.msra.mxu0 %v2563
    %4554 = vmatpush.bf16.msra.mxu0 %v2551
    %4555 = vmatmul.bf16.gmra.mxu0 %v669
    %v4556 = vpop.f32.mrf.mxu0
    %v4557 = vadd.f32 %v4544, %v4556
    %v4558 = vpop.f32.mrf.mxu0
    %4559 = vdwg.mxu0
    %4560 = vmatpush.bf16.msra.mxu0 %v2731
    %4561 = vmatpush.bf16.msra.mxu0 %v2719
    %4562 = vmatpush.bf16.msra.mxu0 %v2707
    %4563 = vmatpush.bf16.msra.mxu0 %v2695
    %4564 = vmatpush.bf16.msra.mxu0 %v2683
    %4565 = vmatpush.bf16.msra.mxu0 %v2671
    %4566 = vmatpush.bf16.msra.mxu0 %v2659
    %4567 = vmatpush.bf16.msra.mxu0 %v2647
    %4568 = vmatmul.bf16.gmra.mxu0 %v670
    %v4569 = vpop.f32.mrf.mxu0
    %v4570 = vadd.f32 %v4557, %v4569
    %v4571 = vpop.f32.mrf.mxu0
    %4572 = vdwg.mxu0
    %4573 = vmatpush.bf16.msra.mxu0 %v2827
    %4574 = vmatpush.bf16.msra.mxu0 %v2815
    %4575 = vmatpush.bf16.msra.mxu0 %v2803
    %4576 = vmatpush.bf16.msra.mxu0 %v2791
    %4577 = vmatpush.bf16.msra.mxu0 %v2779
    %4578 = vmatpush.bf16.msra.mxu0 %v2767
    %4579 = vmatpush.bf16.msra.mxu0 %v2755
    %4580 = vmatpush.bf16.msra.mxu0 %v2743
    %4581 = vmatmul.bf16.gmra.mxu0 %v671
    %v4582 = vpop.f32.mrf.mxu0
    %v4583 = vadd.f32 %v4570, %v4582
    %v4584 = vpop.f32.mrf.mxu0
    %4585 = vdwg.mxu0
    %4586 = vmatpush.bf16.msra.mxu0 %v2923
    %4587 = vmatpush.bf16.msra.mxu0 %v2911
    %4588 = vmatpush.bf16.msra.mxu0 %v2899
    %4589 = vmatpush.bf16.msra.mxu0 %v2887
    %4590 = vmatpush.bf16.msra.mxu0 %v2875
    %4591 = vmatpush.bf16.msra.mxu0 %v2863
    %4592 = vmatpush.bf16.msra.mxu0 %v2851
    %4593 = vmatpush.bf16.msra.mxu0 %v2839
    %4594 = vmatmul.bf16.gmra.mxu0 %v672
    %v4595 = vpop.f32.mrf.mxu0
    %v4596 = vadd.f32 %v4583, %v4595
    %v4597 = vpop.f32.mrf.mxu0
    %4598 = vdwg.mxu0
    %4599 = vmatpush.bf16.msra.mxu0 %v3019
    %4600 = vmatpush.bf16.msra.mxu0 %v3007
    %4601 = vmatpush.bf16.msra.mxu0 %v2995
    %4602 = vmatpush.bf16.msra.mxu0 %v2983
    %4603 = vmatpush.bf16.msra.mxu0 %v2971
    %4604 = vmatpush.bf16.msra.mxu0 %v2959
    %4605 = vmatpush.bf16.msra.mxu0 %v2947
    %4606 = vmatpush.bf16.msra.mxu0 %v2935
    %4607 = vmatmul.bf16.gmra.mxu0 %v673
    %v4608 = vpop.f32.mrf.mxu0
    %v4609 = vadd.f32 %v4596, %v4608
    %v4610 = vpop.f32.mrf.mxu0
    %4611 = vdwg.mxu0
    %4612 = vmatpush.bf16.msra.mxu0 0
    %4613 = vmatpush.bf16.msra.mxu0 0
    %4614 = vmatpush.bf16.msra.mxu0 0
    %4615 = vmatpush.bf16.msra.mxu0 0
    %4616 = vmatpush.bf16.msra.mxu0 0
    %4617 = vmatpush.bf16.msra.mxu0 0
    %4618 = vmatpush.bf16.msra.mxu0 0
    %4619 = vmatpush.bf16.msra.mxu0 %v3031
    %4620 = vmatmul.bf16.gmra.mxu0 %v3622
    %v4621 = vpop.f32.mrf.mxu0
    %v4622 = vadd.f32 %v4609, %v4621
    %v4623 = vpop.f32.mrf.mxu0
    %4624 = vdwg.mxu0
    %4625 = vmatpush.bf16.msra.mxu0 %v2540
    %4626 = vmatpush.bf16.msra.mxu0 %v2528
    %4627 = vmatpush.bf16.msra.mxu0 %v2516
    %4628 = vmatpush.bf16.msra.mxu0 %v2504
    %4629 = vmatpush.bf16.msra.mxu0 %v2492
    %4630 = vmatpush.bf16.msra.mxu0 %v2480
    %4631 = vmatpush.bf16.msra.mxu0 %v2468
    %4632 = vmatpush.bf16.msra.mxu0 %v2456
    %4633 = vmatmul.bf16.gmra.mxu0 %v668
    %v4634 = vpop.f32.mrf.mxu0
    %v4635 = vadd.f32 %v650, %v4634
    %v4636 = vpop.f32.mrf.mxu0
    %4637 = vdwg.mxu0
    %4638 = vmatpush.bf16.msra.mxu0 %v2636
    %4639 = vmatpush.bf16.msra.mxu0 %v2624
    %4640 = vmatpush.bf16.msra.mxu0 %v2612
    %4641 = vmatpush.bf16.msra.mxu0 %v2600
    %4642 = vmatpush.bf16.msra.mxu0 %v2588
    %4643 = vmatpush.bf16.msra.mxu0 %v2576
    %4644 = vmatpush.bf16.msra.mxu0 %v2564
    %4645 = vmatpush.bf16.msra.mxu0 %v2552
    %4646 = vmatmul.bf16.gmra.mxu0 %v669
    %v4647 = vpop.f32.mrf.mxu0
    %v4648 = vadd.f32 %v4635, %v4647
    %v4649 = vpop.f32.mrf.mxu0
    %4650 = vdwg.mxu0
    %4651 = vmatpush.bf16.msra.mxu0 %v2732
    %4652 = vmatpush.bf16.msra.mxu0 %v2720
    %4653 = vmatpush.bf16.msra.mxu0 %v2708
    %4654 = vmatpush.bf16.msra.mxu0 %v2696
    %4655 = vmatpush.bf16.msra.mxu0 %v2684
    %4656 = vmatpush.bf16.msra.mxu0 %v2672
    %4657 = vmatpush.bf16.msra.mxu0 %v2660
    %4658 = vmatpush.bf16.msra.mxu0 %v2648
    %4659 = vmatmul.bf16.gmra.mxu0 %v670
    %v4660 = vpop.f32.mrf.mxu0
    %v4661 = vadd.f32 %v4648, %v4660
    %v4662 = vpop.f32.mrf.mxu0
    %4663 = vdwg.mxu0
    %4664 = vmatpush.bf16.msra.mxu0 %v2828
    %4665 = vmatpush.bf16.msra.mxu0 %v2816
    %4666 = vmatpush.bf16.msra.mxu0 %v2804
    %4667 = vmatpush.bf16.msra.mxu0 %v2792
    %4668 = vmatpush.bf16.msra.mxu0 %v2780
    %4669 = vmatpush.bf16.msra.mxu0 %v2768
    %4670 = vmatpush.bf16.msra.mxu0 %v2756
    %4671 = vmatpush.bf16.msra.mxu0 %v2744
    %4672 = vmatmul.bf16.gmra.mxu0 %v671
    %v4673 = vpop.f32.mrf.mxu0
    %v4674 = vadd.f32 %v4661, %v4673
    %v4675 = vpop.f32.mrf.mxu0
    %4676 = vdwg.mxu0
    %4677 = vmatpush.bf16.msra.mxu0 %v2924
    %4678 = vmatpush.bf16.msra.mxu0 %v2912
    %4679 = vmatpush.bf16.msra.mxu0 %v2900
    %4680 = vmatpush.bf16.msra.mxu0 %v2888
    %4681 = vmatpush.bf16.msra.mxu0 %v2876
    %4682 = vmatpush.bf16.msra.mxu0 %v2864
    %4683 = vmatpush.bf16.msra.mxu0 %v2852
    %4684 = vmatpush.bf16.msra.mxu0 %v2840
    %4685 = vmatmul.bf16.gmra.mxu0 %v672
    %v4686 = vpop.f32.mrf.mxu0
    %v4687 = vadd.f32 %v4674, %v4686
    %v4688 = vpop.f32.mrf.mxu0
    %4689 = vdwg.mxu0
    %4690 = vmatpush.bf16.msra.mxu0 %v3020
    %4691 = vmatpush.bf16.msra.mxu0 %v3008
    %4692 = vmatpush.bf16.msra.mxu0 %v2996
    %4693 = vmatpush.bf16.msra.mxu0 %v2984
    %4694 = vmatpush.bf16.msra.mxu0 %v2972
    %4695 = vmatpush.bf16.msra.mxu0 %v2960
    %4696 = vmatpush.bf16.msra.mxu0 %v2948
    %4697 = vmatpush.bf16.msra.mxu0 %v2936
    %4698 = vmatmul.bf16.gmra.mxu0 %v673
    %v4699 = vpop.f32.mrf.mxu0
    %v4700 = vadd.f32 %v4687, %v4699
    %v4701 = vpop.f32.mrf.mxu0
    %4702 = vdwg.mxu0
    %4703 = vmatpush.bf16.msra.mxu0 0
    %4704 = vmatpush.bf16.msra.mxu0 0
    %4705 = vmatpush.bf16.msra.mxu0 0
    %4706 = vmatpush.bf16.msra.mxu0 0
    %4707 = vmatpush.bf16.msra.mxu0 0
    %4708 = vmatpush.bf16.msra.mxu0 0
    %4709 = vmatpush.bf16.msra.mxu0 0
    %4710 = vmatpush.bf16.msra.mxu0 %v3032
    %4711 = vmatmul.bf16.gmra.mxu0 %v3622
    %v4712 = vpop.f32.mrf.mxu0
    %v4713 = vadd.f32 %v4700, %v4712
    %v4714 = vpop.f32.mrf.mxu0
    %4715 = vdwg.mxu0
    %v4716 = vmax.f32 %v3712, 0.0
    %v4717 = vmax.f32 %v3803, 0.0
    %v4718 = vmax.f32 %v3894, 0.0
    %v4719 = vmax.f32 %v3985, 0.0
    %v4720 = vmax.f32 %v4076, 0.0
    %v4721 = vmax.f32 %v4167, 0.0
    %v4722 = vmax.f32 %v4258, 0.0
    %v4723 = vmax.f32 %v4349, 0.0
    %v4724 = vmax.f32 %v4440, 0.0
    %v4725 = vmax.f32 %v4531, 0.0
    %v4726 = vmax.f32 %v4622, 0.0
    %v4727 = vmax.f32 %v4713, 0.0
    %v4728 = vpack.c.bf16 %v4717, %v4716
    %v4729 = vpack.c.bf16 %v4719, %v4718
    %v4730 = vpack.c.bf16 %v4721, %v4720
    %v4731 = vpack.c.bf16 %v4723, %v4722
    %v4732 = vpack.c.bf16 %v4725, %v4724
    %v4733 = vpack.c.bf16 %v4727, %v4726
    %v4734 = vld [vmem:[%s4] sm:$0xff]
    %v4735 = vld [vmem:[%s4 + $0x8] sm:$0xff]
    %v4736 = vld [vmem:[%s4 + $0x10] sm:$0xff]
    %v4737 = vld [vmem:[%s4 + $0x18] sm:$0xff]
    %v4738 = vld [vmem:[%s4 + $0x20] sm:$0xff]
    %v4739 = vld [vmem:[%s4 + $0x28] sm:$0xff]
    %v4740 = vld [vmem:[%s4 + $0x30] sm:$0xff]
    %v4741 = vld [vmem:[%s4 + $0x38] sm:$0xff]
    %v4742 = vld [vmem:[%s4 + $0x40] sm:$0xff]
    %v4743 = vld [vmem:[%s4 + $0x48] sm:$0xff]
    %v4744 = vld [vmem:[%s4 + $0x50] sm:$0xff]
    %v4745 = vld [vmem:[%s4 + $0x58] sm:$0xff]
    %v4746 = vld [vmem:[%s4 + $0x60] sm:$0xff]
    %v4747 = vld [vmem:[%s4 + $0x68] sm:$0xff]
    %v4748 = vld [vmem:[%s4 + $0x70] sm:$0xff]
    %v4749 = vld [vmem:[%s4 + $0x78] sm:$0xff]
    %v4750 = vld [vmem:[%s4 + $0x80] sm:$0xff]
    %v4751 = vld [vmem:[%s4 + $0x88] sm:$0xff]
    %v4752 = vld [vmem:[%s4 + $0x90] sm:$0xff]
    %v4753 = vld [vmem:[%s4 + $0x98] sm:$0xff]
    %v4754 = vld [vmem:[%s4 + $0xa0] sm:$0xff]
    %v4755 = vld [vmem:[%s4 + $0xa8] sm:$0xff]
    %v4756 = vld [vmem:[%s4 + $0xb0] sm:$0xff]
    %v4757 = vld [vmem:[%s4 + $0xb8] sm:$0xff]
    %v4758 = vld [vmem:[%s4 + $0xc0] sm:$0xff]
    %v4759 = vld [vmem:[%s4 + $0xc8] sm:$0xff]
    %v4760 = vld [vmem:[%s4 + $0xd0] sm:$0xff]
    %v4761 = vld [vmem:[%s4 + $0xd8] sm:$0xff]
    %v4762 = vld [vmem:[%s4 + $0xe0] sm:$0xff]
    %v4763 = vld [vmem:[%s4 + $0xe8] sm:$0xff]
    %v4764 = vld [vmem:[%s4 + $0xf0] sm:$0xff]
    %v4765 = vld [vmem:[%s4 + $0xf8] sm:$0xff]
    %v4766 = vld [vmem:[%s4 + $0x100] sm:$0xff]
    %v4767 = vld [vmem:[%s4 + $0x108] sm:$0xff]
    %v4768 = vld [vmem:[%s4 + $0x110] sm:$0xff]
    %v4769 = vld [vmem:[%s4 + $0x118] sm:$0xff]
    %v4770 = vld [vmem:[%s4 + $0x120] sm:$0xff]
    %v4771 = vld [vmem:[%s4 + $0x128] sm:$0xff]
    %v4772 = vld [vmem:[%s4 + $0x130] sm:$0xff]
    %v4773 = vld [vmem:[%s4 + $0x138] sm:$0xff]
    %v4774 = vld [vmem:[%s4 + $0x140] sm:$0xff]
    %v4775 = vld [vmem:[%s4 + $0x148] sm:$0xff]
    %v4776 = vld [vmem:[%s4 + $0x150] sm:$0xff]
    %v4777 = vld [vmem:[%s4 + $0x158] sm:$0xff]
    %v4778 = vld [vmem:[%s4 + $0x160] sm:$0xff]
    %v4779 = vld [vmem:[%s4 + $0x168] sm:$0xff]
    %v4780 = vld [vmem:[%s4 + $0x170] sm:$0xff]
    %v4781 = vld [vmem:[%s4 + $0x178] sm:$0xff]
    %v4782 = vld [vmem:[%s4 + $0x180] sm:$0xff]
    %v4783 = vld [vmem:[%s4 + $0x188] sm:$0xff]
    %v4784 = vld [vmem:[%s4 + $0x190] sm:$0xff]
    %v4785 = vld [vmem:[%s4 + $0x198] sm:$0xff]
    %v4786 = vld [vmem:[%s4 + $0x1a0] sm:$0xff]
    %v4787 = vld [vmem:[%s4 + $0x1a8] sm:$0xff]
    %v4788 = vld [vmem:[%s4 + $0x1b0] sm:$0xff]
    %v4789 = vld [vmem:[%s4 + $0x1b8] sm:$0xff]
    %v4790 = vld [vmem:[%s4 + $0x1c0] sm:$0xff]
    %v4791 = vld [vmem:[%s4 + $0x1c8] sm:$0xff]
    %v4792 = vld [vmem:[%s4 + $0x1d0] sm:$0xff]
    %v4793 = vld [vmem:[%s4 + $0x1d8] sm:$0xff]
    %v4794 = vld [vmem:[%s4 + $0x1e0] sm:$0xff]
    %v4795 = vld [vmem:[%s4 + $0x1e8] sm:$0xff]
    %v4796 = vld [vmem:[%s4 + $0x1f0] sm:$0xff]
    %v4797 = vld [vmem:[%s4 + $0x1f8] sm:$0xff]
    %v4798 = vld [vmem:[%s5] sm:$0x3]
    %v4800 = vperm.slane %v4798, 0
    %v4801 = vperm.slane %v4798, 1
    %v4806 = vunpack.c.l.b16 %v4728
    %v4807 = vunpack.c.h.b16 %v4728
    %v4808 = vunpack.c.l.b16 %v4729
    %v4809 = vunpack.c.h.b16 %v4729
    %v4810 = vpack.c.b16 %v4806, %v4806
    %v4811 = vpack.c.b16 %v4807, %v4807
    %v4812 = vpack.c.b16 %v4808, %v4808
    %v4813 = vpack.c.b16 %v4809, %v4809
    %v4882 = vunpack.c.l.b16 %v4734
    %v4883 = vunpack.c.h.b16 %v4734
    %v4884 = vunpack.c.l.b16 %v4735
    %v4885 = vunpack.c.h.b16 %v4735
    %v4886 = vunpack.c.l.b16 %v4736
    %v4887 = vunpack.c.h.b16 %v4736
    %v4888 = vunpack.c.l.b16 %v4737
    %v4889 = vunpack.c.h.b16 %v4737
    %v4890 = vunpack.c.l.b16 %v4738
    %v4891 = vunpack.c.h.b16 %v4738
    %v4892 = vunpack.c.l.b16 %v4739
    %v4893 = vunpack.c.h.b16 %v4739
    %v4894 = vunpack.c.l.b16 %v4740
    %v4895 = vunpack.c.h.b16 %v4740
    %v4896 = vunpack.c.l.b16 %v4741
    %v4897 = vunpack.c.h.b16 %v4741
    %v4898 = vunpack.c.l.b16 %v4742
    %v4899 = vunpack.c.h.b16 %v4742
    %v4900 = vunpack.c.l.b16 %v4743
    %v4901 = vunpack.c.h.b16 %v4743
    %v4902 = vunpack.c.l.b16 %v4744
    %v4903 = vunpack.c.h.b16 %v4744
    %v4904 = vunpack.c.l.b16 %v4745
    %v4905 = vunpack.c.h.b16 %v4745
    %v4906 = vunpack.c.l.b16 %v4746
    %v4907 = vunpack.c.h.b16 %v4746
    %v4908 = vunpack.c.l.b16 %v4747
    %v4909 = vunpack.c.h.b16 %v4747
    %v4910 = vunpack.c.l.b16 %v4748
    %v4911 = vunpack.c.h.b16 %v4748
    %v4912 = vunpack.c.l.b16 %v4749
    %v4913 = vunpack.c.h.b16 %v4749
    %v4914 = vunpack.c.l.b16 %v4750
    %v4915 = vunpack.c.h.b16 %v4750
    %v4916 = vunpack.c.l.b16 %v4751
    %v4917 = vunpack.c.h.b16 %v4751
    %v4918 = vunpack.c.l.b16 %v4752
    %v4919 = vunpack.c.h.b16 %v4752
    %v4920 = vunpack.c.l.b16 %v4753
    %v4921 = vunpack.c.h.b16 %v4753
    %v4922 = vunpack.c.l.b16 %v4754
    %v4923 = vunpack.c.h.b16 %v4754
    %v4924 = vunpack.c.l.b16 %v4755
    %v4925 = vunpack.c.h.b16 %v4755
    %v4926 = vunpack.c.l.b16 %v4756
    %v4927 = vunpack.c.h.b16 %v4756
    %v4928 = vunpack.c.l.b16 %v4757
    %v4929 = vunpack.c.h.b16 %v4757
    %v4930 = vunpack.c.l.b16 %v4758
    %v4931 = vunpack.c.h.b16 %v4758
    %v4932 = vunpack.c.l.b16 %v4759
    %v4933 = vunpack.c.h.b16 %v4759
    %v4934 = vunpack.c.l.b16 %v4760
    %v4935 = vunpack.c.h.b16 %v4760
    %v4936 = vunpack.c.l.b16 %v4761
    %v4937 = vunpack.c.h.b16 %v4761
    %v4938 = vunpack.c.l.b16 %v4762
    %v4939 = vunpack.c.h.b16 %v4762
    %v4940 = vunpack.c.l.b16 %v4763
    %v4941 = vunpack.c.h.b16 %v4763
    %v4942 = vunpack.c.l.b16 %v4764
    %v4943 = vunpack.c.h.b16 %v4764
    %v4944 = vunpack.c.l.b16 %v4765
    %v4945 = vunpack.c.h.b16 %v4765
    %v4946 = vunpack.c.l.b16 %v4766
    %v4947 = vunpack.c.h.b16 %v4766
    %v4948 = vunpack.c.l.b16 %v4767
    %v4949 = vunpack.c.h.b16 %v4767
    %v4950 = vunpack.c.l.b16 %v4768
    %v4951 = vunpack.c.h.b16 %v4768
    %v4952 = vunpack.c.l.b16 %v4769
    %v4953 = vunpack.c.h.b16 %v4769
    %v4954 = vunpack.c.l.b16 %v4770
    %v4955 = vunpack.c.h.b16 %v4770
    %v4956 = vunpack.c.l.b16 %v4771
    %v4957 = vunpack.c.h.b16 %v4771
    %v4958 = vunpack.c.l.b16 %v4772
    %v4959 = vunpack.c.h.b16 %v4772
    %v4960 = vunpack.c.l.b16 %v4773
    %v4961 = vunpack.c.h.b16 %v4773
    %v4962 = vunpack.c.l.b16 %v4774
    %v4963 = vunpack.c.h.b16 %v4774
    %v4964 = vunpack.c.l.b16 %v4775
    %v4965 = vunpack.c.h.b16 %v4775
    %v4966 = vunpack.c.l.b16 %v4776
    %v4967 = vunpack.c.h.b16 %v4776
    %v4968 = vunpack.c.l.b16 %v4777
    %v4969 = vunpack.c.h.b16 %v4777
    %v4970 = vunpack.c.l.b16 %v4778
    %v4971 = vunpack.c.h.b16 %v4778
    %v4972 = vunpack.c.l.b16 %v4779
    %v4973 = vunpack.c.h.b16 %v4779
    %v4974 = vunpack.c.l.b16 %v4780
    %v4975 = vunpack.c.h.b16 %v4780
    %v4976 = vunpack.c.l.b16 %v4781
    %v4977 = vunpack.c.h.b16 %v4781
    %v4978 = vunpack.c.l.b16 %v4782
    %v4979 = vunpack.c.h.b16 %v4782
    %v4980 = vunpack.c.l.b16 %v4783
    %v4981 = vunpack.c.h.b16 %v4783
    %v4982 = vunpack.c.l.b16 %v4784
    %v4983 = vunpack.c.h.b16 %v4784
    %v4984 = vunpack.c.l.b16 %v4785
    %v4985 = vunpack.c.h.b16 %v4785
    %v4986 = vunpack.c.l.b16 %v4786
    %v4987 = vunpack.c.h.b16 %v4786
    %v4988 = vunpack.c.l.b16 %v4787
    %v4989 = vunpack.c.h.b16 %v4787
    %v4990 = vunpack.c.l.b16 %v4788
    %v4991 = vunpack.c.h.b16 %v4788
    %v4992 = vunpack.c.l.b16 %v4789
    %v4993 = vunpack.c.h.b16 %v4789
    %v4994 = vunpack.c.l.b16 %v4790
    %v4995 = vunpack.c.h.b16 %v4790
    %v4996 = vunpack.c.l.b16 %v4791
    %v4997 = vunpack.c.h.b16 %v4791
    %v4998 = vunpack.c.l.b16 %v4792
    %v4999 = vunpack.c.h.b16 %v4792
    %v5000 = vunpack.c.l.b16 %v4793
    %v5001 = vunpack.c.h.b16 %v4793
    %v5002 = vunpack.c.l.b16 %v4794
    %v5003 = vunpack.c.h.b16 %v4794
    %v5004 = vunpack.c.l.b16 %v4795
    %v5005 = vunpack.c.h.b16 %v4795
    %v5006 = vunpack.c.l.b16 %v4796
    %v5007 = vunpack.c.h.b16 %v4796
    %v5008 = vunpack.c.l.b16 %v4797
    %v5009 = vunpack.c.h.b16 %v4797
    %v5010 = vpack.c.b16 %v4884, %v4882
    %v5011 = vpack.c.b16 %v4885, %v4883
    %v5012 = vpack.c.b16 %v4888, %v4886
    %v5013 = vpack.c.b16 %v4889, %v4887
    %v5014 = vpack.c.b16 %v4892, %v4890
    %v5015 = vpack.c.b16 %v4893, %v4891
    %v5016 = vpack.c.b16 %v4896, %v4894
    %v5017 = vpack.c.b16 %v4897, %v4895
    %v5018 = vpack.c.b16 %v4900, %v4898
    %v5019 = vpack.c.b16 %v4901, %v4899
    %v5020 = vpack.c.b16 %v4904, %v4902
    %v5021 = vpack.c.b16 %v4905, %v4903
    %v5022 = vpack.c.b16 %v4908, %v4906
    %v5023 = vpack.c.b16 %v4909, %v4907
    %v5024 = vpack.c.b16 %v4912, %v4910
    %v5025 = vpack.c.b16 %v4913, %v4911
    %v5026 = vpack.c.b16 %v4916, %v4914
    %v5027 = vpack.c.b16 %v4917, %v4915
    %v5028 = vpack.c.b16 %v4920, %v4918
    %v5029 = vpack.c.b16 %v4921, %v4919
    %v5030 = vpack.c.b16 %v4924, %v4922
    %v5031 = vpack.c.b16 %v4925, %v4923
    %v5032 = vpack.c.b16 %v4928, %v4926
    %v5033 = vpack.c.b16 %v4929, %v4927
    %v5034 = vpack.c.b16 %v4932, %v4930
    %v5035 = vpack.c.b16 %v4933, %v4931
    %v5036 = vpack.c.b16 %v4936, %v4934
    %v5037 = vpack.c.b16 %v4937, %v4935
    %v5038 = vpack.c.b16 %v4940, %v4938
    %v5039 = vpack.c.b16 %v4941, %v4939
    %v5040 = vpack.c.b16 %v4944, %v4942
    %v5041 = vpack.c.b16 %v4945, %v4943
    %v5042 = vpack.c.b16 %v4948, %v4946
    %v5043 = vpack.c.b16 %v4949, %v4947
    %v5044 = vpack.c.b16 %v4952, %v4950
    %v5045 = vpack.c.b16 %v4953, %v4951
    %v5046 = vpack.c.b16 %v4956, %v4954
    %v5047 = vpack.c.b16 %v4957, %v4955
    %v5048 = vpack.c.b16 %v4960, %v4958
    %v5049 = vpack.c.b16 %v4961, %v4959
    %v5050 = vpack.c.b16 %v4964, %v4962
    %v5051 = vpack.c.b16 %v4965, %v4963
    %v5052 = vpack.c.b16 %v4968, %v4966
    %v5053 = vpack.c.b16 %v4969, %v4967
    %v5054 = vpack.c.b16 %v4972, %v4970
    %v5055 = vpack.c.b16 %v4973, %v4971
    %v5056 = vpack.c.b16 %v4976, %v4974
    %v5057 = vpack.c.b16 %v4977, %v4975
    %v5058 = vpack.c.b16 %v4980, %v4978
    %v5059 = vpack.c.b16 %v4981, %v4979
    %v5060 = vpack.c.b16 %v4984, %v4982
    %v5061 = vpack.c.b16 %v4985, %v4983
    %v5062 = vpack.c.b16 %v4988, %v4986
    %v5063 = vpack.c.b16 %v4989, %v4987
    %v5064 = vpack.c.b16 %v4992, %v4990
    %v5065 = vpack.c.b16 %v4993, %v4991
    %v5066 = vpack.c.b16 %v4996, %v4994
    %v5067 = vpack.c.b16 %v4997, %v4995
    %v5068 = vpack.c.b16 %v5000, %v4998
    %v5069 = vpack.c.b16 %v5001, %v4999
    %v5070 = vpack.c.b16 %v5004, %v5002
    %v5071 = vpack.c.b16 %v5005, %v5003
    %v5072 = vpack.c.b16 %v5008, %v5006
    %v5073 = vpack.c.b16 %v5009, %v5007
    %5138 = vmatpush.bf16.msra.mxu0 %v5024
    %5139 = vmatpush.bf16.msra.mxu0 %v5022
    %5140 = vmatpush.bf16.msra.mxu0 %v5020
    %5141 = vmatpush.bf16.msra.mxu0 %v5018
    %5142 = vmatpush.bf16.msra.mxu0 %v5016
    %5143 = vmatpush.bf16.msra.mxu0 %v5014
    %5144 = vmatpush.bf16.msra.mxu0 %v5012
    %5145 = vmatpush.bf16.msra.mxu0 %v5010
    %5146 = vmatmul.bf16.gmra.mxu0 %v4810
    %v5147 = vpop.f32.mrf.mxu0
    %v5148 = vadd.f32 %v4800, %v5147
    %v5149 = vpop.f32.mrf.mxu0
    %5150 = vdwg.mxu0
    %5151 = vmatpush.bf16.msra.mxu0 %v5040
    %5152 = vmatpush.bf16.msra.mxu0 %v5038
    %5153 = vmatpush.bf16.msra.mxu0 %v5036
    %5154 = vmatpush.bf16.msra.mxu0 %v5034
    %5155 = vmatpush.bf16.msra.mxu0 %v5032
    %5156 = vmatpush.bf16.msra.mxu0 %v5030
    %5157 = vmatpush.bf16.msra.mxu0 %v5028
    %5158 = vmatpush.bf16.msra.mxu0 %v5026
    %5159 = vmatmul.bf16.gmra.mxu0 %v4811
    %v5160 = vpop.f32.mrf.mxu0
    %v5161 = vadd.f32 %v5148, %v5160
    %v5162 = vpop.f32.mrf.mxu0
    %5163 = vdwg.mxu0
    %5164 = vmatpush.bf16.msra.mxu0 %v5056
    %5165 = vmatpush.bf16.msra.mxu0 %v5054
    %5166 = vmatpush.bf16.msra.mxu0 %v5052
    %5167 = vmatpush.bf16.msra.mxu0 %v5050
    %5168 = vmatpush.bf16.msra.mxu0 %v5048
    %5169 = vmatpush.bf16.msra.mxu0 %v5046
    %5170 = vmatpush.bf16.msra.mxu0 %v5044
    %5171 = vmatpush.bf16.msra.mxu0 %v5042
    %5172 = vmatmul.bf16.gmra.mxu0 %v4812
    %v5173 = vpop.f32.mrf.mxu0
    %v5174 = vadd.f32 %v5161, %v5173
    %v5175 = vpop.f32.mrf.mxu0
    %5176 = vdwg.mxu0
    %5177 = vmatpush.bf16.msra.mxu0 %v5072
    %5178 = vmatpush.bf16.msra.mxu0 %v5070
    %5179 = vmatpush.bf16.msra.mxu0 %v5068
    %5180 = vmatpush.bf16.msra.mxu0 %v5066
    %5181 = vmatpush.bf16.msra.mxu0 %v5064
    %5182 = vmatpush.bf16.msra.mxu0 %v5062
    %5183 = vmatpush.bf16.msra.mxu0 %v5060
    %5184 = vmatpush.bf16.msra.mxu0 %v5058
    %5185 = vmatmul.bf16.gmra.mxu0 %v4813
    %v5186 = vpop.f32.mrf.mxu0
    %v5187 = vadd.f32 %v5174, %v5186
    %v5188 = vpop.f32.mrf.mxu0
    %5189 = vdwg.mxu0
    %5190 = vmatpush.bf16.msra.mxu0 %v5025
    %5191 = vmatpush.bf16.msra.mxu0 %v5023
    %5192 = vmatpush.bf16.msra.mxu0 %v5021
    %5193 = vmatpush.bf16.msra.mxu0 %v5019
    %5194 = vmatpush.bf16.msra.mxu0 %v5017
    %5195 = vmatpush.bf16.msra.mxu0 %v5015
    %5196 = vmatpush.bf16.msra.mxu0 %v5013
    %5197 = vmatpush.bf16.msra.mxu0 %v5011
    %5198 = vmatmul.bf16.gmra.mxu0 %v4810
    %v5199 = vpop.f32.mrf.mxu0
    %v5200 = vadd.f32 %v4801, %v5199
    %v5201 = vpop.f32.mrf.mxu0
    %5202 = vdwg.mxu0
    %5203 = vmatpush.bf16.msra.mxu0 %v5041
    %5204 = vmatpush.bf16.msra.mxu0 %v5039
    %5205 = vmatpush.bf16.msra.mxu0 %v5037
    %5206 = vmatpush.bf16.msra.mxu0 %v5035
    %5207 = vmatpush.bf16.msra.mxu0 %v5033
    %5208 = vmatpush.bf16.msra.mxu0 %v5031
    %5209 = vmatpush.bf16.msra.mxu0 %v5029
    %5210 = vmatpush.bf16.msra.mxu0 %v5027
    %5211 = vmatmul.bf16.gmra.mxu0 %v4811
    %v5212 = vpop.f32.mrf.mxu0
    %v5213 = vadd.f32 %v5200, %v5212
    %v5214 = vpop.f32.mrf.mxu0
    %5215 = vdwg.mxu0
    %5216 = vmatpush.bf16.msra.mxu0 %v5057
    %5217 = vmatpush.bf16.msra.mxu0 %v5055
    %5218 = vmatpush.bf16.msra.mxu0 %v5053
    %5219 = vmatpush.bf16.msra.mxu0 %v5051
    %5220 = vmatpush.bf16.msra.mxu0 %v5049
    %5221 = vmatpush.bf16.msra.mxu0 %v5047
    %5222 = vmatpush.bf16.msra.mxu0 %v5045
    %5223 = vmatpush.bf16.msra.mxu0 %v5043
    %5224 = vmatmul.bf16.gmra.mxu0 %v4812
    %v5225 = vpop.f32.mrf.mxu0
    %v5226 = vadd.f32 %v5213, %v5225
    %v5227 = vpop.f32.mrf.mxu0
    %5228 = vdwg.mxu0
    %5229 = vmatpush.bf16.msra.mxu0 %v5073
    %5230 = vmatpush.bf16.msra.mxu0 %v5071
    %5231 = vmatpush.bf16.msra.mxu0 %v5069
    %5232 = vmatpush.bf16.msra.mxu0 %v5067
    %5233 = vmatpush.bf16.msra.mxu0 %v5065
    %5234 = vmatpush.bf16.msra.mxu0 %v5063
    %5235 = vmatpush.bf16.msra.mxu0 %v5061
    %5236 = vmatpush.bf16.msra.mxu0 %v5059
    %5237 = vmatmul.bf16.gmra.mxu0 %v4813
    %v5238 = vpop.f32.mrf.mxu0
    %v5239 = vadd.f32 %v5226, %v5238
    %v5240 = vpop.f32.mrf.mxu0
    %5241 = vdwg.mxu0
    %v5242 = vmax.f32 %v5187, 0.0
    %v5243 = vxor.u32 %v5239, 2147483648
    %v5244 = vmul.f32 %v5243, 1.442695
    %v5245 = vpow.pop %v5244
    %v5246 = vadd.f32 %v5245, 1.0
    %v5247 = vrcp.pop %v5246
    %v5248 = vmul.f32 %v5246, %v5247
    %v5249 = vsub.f32 1.0, %v5248
    %v5250 = vmul.f32 %v5247, %v5249
    %v5251 = vadd.f32 %v5247, %v5250
    %vm5252 = vweird.f32 %v5246
    %vm5253 = vweird.f32 %v5247
    %vm5254 = vmor %vm5252, %vm5253
    %v5255 = vsel %vm5254, %v5247, %v5251
    %v5256 = vand.u32 2147483647, %v5246
    %vm5257 = vcmp.eq.f32.partialorder %v5256, 8.507059e+37
    %v5258 = vand.u32 %v5246, 2147483648
    %v5259 = vor.u32 1.1754944e-38, %v5258
    %v5260 = vsel %vm5257, %v5259, %v5255
    %v5261 = vmul.f32 1.0, %v5260
    %v5262 = vmul.f32 %v5242, %v5261
    %v5263 = vmul.f32 %v5262, %v5262
    %vm5264 = vcmask 1043456
    %v5265 = vsel %vm5264, %v5263, 0.0
    %5266 = vadd.xlane.f32.xlu0 %v5265
    %v5267 = vpop.xlane.xlu0 %5266
    %v5268 = vmax.f32 %v5267, 1e-24
    %v5269 = vrsqrt.pop %v5268
    %v5270 = vmul.f32 %v5269, %v5268
    %v5271 = vmul.f32 %v5270, %v5269
    %v5272 = vmul.f32 0.5, %v5271
    %v5273 = vsub.f32 1.5, %v5272
    %v5274 = vmul.f32 %v5269, %v5273
    %vm5275 = vweird.f32 %v5268
    %vm5276 = vweird.f32 %v5269
    %vm5277 = vmor %vm5275, %vm5276
    %v5278 = vsel %vm5277, %v5269, %v5274
    %v5279 = vmul.f32 %v5262, %v5278
    %5280 = vst [vmem:[%s14] sm:$0xf] %v5279
    %v5281 = vpack.c.bf16 %v5279, %v5279
    %s5282 = scalar_lea.vmem %s4, 512
    %v5283 = vld [vmem:[%s5282] sm:$0xff]
    %v5284 = vld [vmem:[%s5282 + $0x8] sm:$0xff]
    %v5285 = vld [vmem:[%s5282 + $0x10] sm:$0xff]
    %v5286 = vld [vmem:[%s5282 + $0x18] sm:$0xff]
    %v5287 = vld [vmem:[%s5282 + $0x20] sm:$0xff]
    %v5288 = vld [vmem:[%s5282 + $0x28] sm:$0xff]
    %v5289 = vld [vmem:[%s5282 + $0x30] sm:$0xff]
    %v5290 = vld [vmem:[%s5282 + $0x38] sm:$0xff]
    %v5291 = vld [vmem:[%s5282 + $0x40] sm:$0xff]
    %v5292 = vld [vmem:[%s5282 + $0x48] sm:$0xff]
    %v5293 = vld [vmem:[%s5282 + $0x50] sm:$0xff]
    %v5294 = vld [vmem:[%s5282 + $0x58] sm:$0xff]
    %v5295 = vld [vmem:[%s5282 + $0x60] sm:$0xff]
    %v5296 = vld [vmem:[%s5282 + $0x68] sm:$0xff]
    %v5297 = vld [vmem:[%s5282 + $0x70] sm:$0xff]
    %v5298 = vld [vmem:[%s5282 + $0x78] sm:$0xff]
    %v5299 = vld [vmem:[%s5282 + $0x80] sm:$0xff]
    %v5300 = vld [vmem:[%s5282 + $0x88] sm:$0xff]
    %v5301 = vld [vmem:[%s5282 + $0x90] sm:$0xff]
    %v5302 = vld [vmem:[%s5282 + $0x98] sm:$0xff]
    %v5303 = vld [vmem:[%s5282 + $0xa0] sm:$0xff]
    %v5304 = vld [vmem:[%s5282 + $0xa8] sm:$0xff]
    %v5305 = vld [vmem:[%s5282 + $0xb0] sm:$0xff]
    %v5306 = vld [vmem:[%s5282 + $0xb8] sm:$0xff]
    %v5307 = vld [vmem:[%s5282 + $0xc0] sm:$0xff]
    %v5308 = vld [vmem:[%s5282 + $0xc8] sm:$0xff]
    %v5309 = vld [vmem:[%s5282 + $0xd0] sm:$0xff]
    %v5310 = vld [vmem:[%s5282 + $0xd8] sm:$0xff]
    %v5311 = vld [vmem:[%s5282 + $0xe0] sm:$0xff]
    %v5312 = vld [vmem:[%s5282 + $0xe8] sm:$0xff]
    %v5313 = vld [vmem:[%s5282 + $0xf0] sm:$0xff]
    %v5314 = vld [vmem:[%s5282 + $0xf8] sm:$0xff]
    %v5315 = vld [vmem:[%s5282 + $0x100] sm:$0xff]
    %v5316 = vld [vmem:[%s5282 + $0x108] sm:$0xff]
    %v5317 = vld [vmem:[%s5282 + $0x110] sm:$0xff]
    %v5318 = vld [vmem:[%s5282 + $0x118] sm:$0xff]
    %v5319 = vld [vmem:[%s5282 + $0x120] sm:$0xff]
    %v5320 = vld [vmem:[%s5282 + $0x128] sm:$0xff]
    %v5321 = vld [vmem:[%s5282 + $0x130] sm:$0xff]
    %v5322 = vld [vmem:[%s5282 + $0x138] sm:$0xff]
    %v5323 = vld [vmem:[%s5282 + $0x140] sm:$0xff]
    %v5324 = vld [vmem:[%s5282 + $0x148] sm:$0xff]
    %v5325 = vld [vmem:[%s5282 + $0x150] sm:$0xff]
    %v5326 = vld [vmem:[%s5282 + $0x158] sm:$0xff]
    %v5327 = vld [vmem:[%s5282 + $0x160] sm:$0xff]
    %v5328 = vld [vmem:[%s5282 + $0x168] sm:$0xff]
    %v5329 = vld [vmem:[%s5282 + $0x170] sm:$0xff]
    %v5330 = vld [vmem:[%s5282 + $0x178] sm:$0xff]
    %v5331 = vld [vmem:[%s5282 + $0x180] sm:$0xff]
    %v5332 = vld [vmem:[%s5282 + $0x188] sm:$0xff]
    %v5333 = vld [vmem:[%s5282 + $0x190] sm:$0xff]
    %v5334 = vld [vmem:[%s5282 + $0x198] sm:$0xff]
    %v5335 = vld [vmem:[%s5282 + $0x1a0] sm:$0xff]
    %v5336 = vld [vmem:[%s5282 + $0x1a8] sm:$0xff]
    %v5337 = vld [vmem:[%s5282 + $0x1b0] sm:$0xff]
    %v5338 = vld [vmem:[%s5282 + $0x1b8] sm:$0xff]
    %v5339 = vld [vmem:[%s5282 + $0x1c0] sm:$0xff]
    %v5340 = vld [vmem:[%s5282 + $0x1c8] sm:$0xff]
    %v5341 = vld [vmem:[%s5282 + $0x1d0] sm:$0xff]
    %v5342 = vld [vmem:[%s5282 + $0x1d8] sm:$0xff]
    %v5343 = vld [vmem:[%s5282 + $0x1e0] sm:$0xff]
    %v5344 = vld [vmem:[%s5282 + $0x1e8] sm:$0xff]
    %v5345 = vld [vmem:[%s5282 + $0x1f0] sm:$0xff]
    %v5346 = vld [vmem:[%s5282 + $0x1f8] sm:$0xff]
    %s5347 = scalar_lea.vmem %s5, 2
    %v5348 = vld [vmem:[%s5347] sm:$0x3]
    %v5350 = vperm.slane %v5348, 0
    %v5351 = vperm.slane %v5348, 1
    %v5356 = vunpack.c.l.b16 %v4730
    %v5357 = vunpack.c.h.b16 %v4730
    %v5358 = vunpack.c.l.b16 %v4731
    %v5359 = vunpack.c.h.b16 %v4731
    %v5360 = vpack.c.b16 %v5356, %v5356
    %v5361 = vpack.c.b16 %v5357, %v5357
    %v5362 = vpack.c.b16 %v5358, %v5358
    %v5363 = vpack.c.b16 %v5359, %v5359
    %v5432 = vunpack.c.l.b16 %v5283
    %v5433 = vunpack.c.h.b16 %v5283
    %v5434 = vunpack.c.l.b16 %v5284
    %v5435 = vunpack.c.h.b16 %v5284
    %v5436 = vunpack.c.l.b16 %v5285
    %v5437 = vunpack.c.h.b16 %v5285
    %v5438 = vunpack.c.l.b16 %v5286
    %v5439 = vunpack.c.h.b16 %v5286
    %v5440 = vunpack.c.l.b16 %v5287
    %v5441 = vunpack.c.h.b16 %v5287
    %v5442 = vunpack.c.l.b16 %v5288
    %v5443 = vunpack.c.h.b16 %v5288
    %v5444 = vunpack.c.l.b16 %v5289
    %v5445 = vunpack.c.h.b16 %v5289
    %v5446 = vunpack.c.l.b16 %v5290
    %v5447 = vunpack.c.h.b16 %v5290
    %v5448 = vunpack.c.l.b16 %v5291
    %v5449 = vunpack.c.h.b16 %v5291
    %v5450 = vunpack.c.l.b16 %v5292
    %v5451 = vunpack.c.h.b16 %v5292
    %v5452 = vunpack.c.l.b16 %v5293
    %v5453 = vunpack.c.h.b16 %v5293
    %v5454 = vunpack.c.l.b16 %v5294
    %v5455 = vunpack.c.h.b16 %v5294
    %v5456 = vunpack.c.l.b16 %v5295
    %v5457 = vunpack.c.h.b16 %v5295
    %v5458 = vunpack.c.l.b16 %v5296
    %v5459 = vunpack.c.h.b16 %v5296
    %v5460 = vunpack.c.l.b16 %v5297
    %v5461 = vunpack.c.h.b16 %v5297
    %v5462 = vunpack.c.l.b16 %v5298
    %v5463 = vunpack.c.h.b16 %v5298
    %v5464 = vunpack.c.l.b16 %v5299
    %v5465 = vunpack.c.h.b16 %v5299
    %v5466 = vunpack.c.l.b16 %v5300
    %v5467 = vunpack.c.h.b16 %v5300
    %v5468 = vunpack.c.l.b16 %v5301
    %v5469 = vunpack.c.h.b16 %v5301
    %v5470 = vunpack.c.l.b16 %v5302
    %v5471 = vunpack.c.h.b16 %v5302
    %v5472 = vunpack.c.l.b16 %v5303
    %v5473 = vunpack.c.h.b16 %v5303
    %v5474 = vunpack.c.l.b16 %v5304
    %v5475 = vunpack.c.h.b16 %v5304
    %v5476 = vunpack.c.l.b16 %v5305
    %v5477 = vunpack.c.h.b16 %v5305
    %v5478 = vunpack.c.l.b16 %v5306
    %v5479 = vunpack.c.h.b16 %v5306
    %v5480 = vunpack.c.l.b16 %v5307
    %v5481 = vunpack.c.h.b16 %v5307
    %v5482 = vunpack.c.l.b16 %v5308
    %v5483 = vunpack.c.h.b16 %v5308
    %v5484 = vunpack.c.l.b16 %v5309
    %v5485 = vunpack.c.h.b16 %v5309
    %v5486 = vunpack.c.l.b16 %v5310
    %v5487 = vunpack.c.h.b16 %v5310
    %v5488 = vunpack.c.l.b16 %v5311
    %v5489 = vunpack.c.h.b16 %v5311
    %v5490 = vunpack.c.l.b16 %v5312
    %v5491 = vunpack.c.h.b16 %v5312
    %v5492 = vunpack.c.l.b16 %v5313
    %v5493 = vunpack.c.h.b16 %v5313
    %v5494 = vunpack.c.l.b16 %v5314
    %v5495 = vunpack.c.h.b16 %v5314
    %v5496 = vunpack.c.l.b16 %v5315
    %v5497 = vunpack.c.h.b16 %v5315
    %v5498 = vunpack.c.l.b16 %v5316
    %v5499 = vunpack.c.h.b16 %v5316
    %v5500 = vunpack.c.l.b16 %v5317
    %v5501 = vunpack.c.h.b16 %v5317
    %v5502 = vunpack.c.l.b16 %v5318
    %v5503 = vunpack.c.h.b16 %v5318
    %v5504 = vunpack.c.l.b16 %v5319
    %v5505 = vunpack.c.h.b16 %v5319
    %v5506 = vunpack.c.l.b16 %v5320
    %v5507 = vunpack.c.h.b16 %v5320
    %v5508 = vunpack.c.l.b16 %v5321
    %v5509 = vunpack.c.h.b16 %v5321
    %v5510 = vunpack.c.l.b16 %v5322
    %v5511 = vunpack.c.h.b16 %v5322
    %v5512 = vunpack.c.l.b16 %v5323
    %v5513 = vunpack.c.h.b16 %v5323
    %v5514 = vunpack.c.l.b16 %v5324
    %v5515 = vunpack.c.h.b16 %v5324
    %v5516 = vunpack.c.l.b16 %v5325
    %v5517 = vunpack.c.h.b16 %v5325
    %v5518 = vunpack.c.l.b16 %v5326
    %v5519 = vunpack.c.h.b16 %v5326
    %v5520 = vunpack.c.l.b16 %v5327
    %v5521 = vunpack.c.h.b16 %v5327
    %v5522 = vunpack.c.l.b16 %v5328
    %v5523 = vunpack.c.h.b16 %v5328
    %v5524 = vunpack.c.l.b16 %v5329
    %v5525 = vunpack.c.h.b16 %v5329
    %v5526 = vunpack.c.l.b16 %v5330
    %v5527 = vunpack.c.h.b16 %v5330
    %v5528 = vunpack.c.l.b16 %v5331
    %v5529 = vunpack.c.h.b16 %v5331
    %v5530 = vunpack.c.l.b16 %v5332
    %v5531 = vunpack.c.h.b16 %v5332
    %v5532 = vunpack.c.l.b16 %v5333
    %v5533 = vunpack.c.h.b16 %v5333
    %v5534 = vunpack.c.l.b16 %v5334
    %v5535 = vunpack.c.h.b16 %v5334
    %v5536 = vunpack.c.l.b16 %v5335
    %v5537 = vunpack.c.h.b16 %v5335
    %v5538 = vunpack.c.l.b16 %v5336
    %v5539 = vunpack.c.h.b16 %v5336
    %v5540 = vunpack.c.l.b16 %v5337
    %v5541 = vunpack.c.h.b16 %v5337
    %v5542 = vunpack.c.l.b16 %v5338
    %v5543 = vunpack.c.h.b16 %v5338
    %v5544 = vunpack.c.l.b16 %v5339
    %v5545 = vunpack.c.h.b16 %v5339
    %v5546 = vunpack.c.l.b16 %v5340
    %v5547 = vunpack.c.h.b16 %v5340
    %v5548 = vunpack.c.l.b16 %v5341
    %v5549 = vunpack.c.h.b16 %v5341
    %v5550 = vunpack.c.l.b16 %v5342
    %v5551 = vunpack.c.h.b16 %v5342
    %v5552 = vunpack.c.l.b16 %v5343
    %v5553 = vunpack.c.h.b16 %v5343
    %v5554 = vunpack.c.l.b16 %v5344
    %v5555 = vunpack.c.h.b16 %v5344
    %v5556 = vunpack.c.l.b16 %v5345
    %v5557 = vunpack.c.h.b16 %v5345
    %v5558 = vunpack.c.l.b16 %v5346
    %v5559 = vunpack.c.h.b16 %v5346
    %v5560 = vpack.c.b16 %v5434, %v5432
    %v5561 = vpack.c.b16 %v5435, %v5433
    %v5562 = vpack.c.b16 %v5438, %v5436
    %v5563 = vpack.c.b16 %v5439, %v5437
    %v5564 = vpack.c.b16 %v5442, %v5440
    %v5565 = vpack.c.b16 %v5443, %v5441
    %v5566 = vpack.c.b16 %v5446, %v5444
    %v5567 = vpack.c.b16 %v5447, %v5445
    %v5568 = vpack.c.b16 %v5450, %v5448
    %v5569 = vpack.c.b16 %v5451, %v5449
    %v5570 = vpack.c.b16 %v5454, %v5452
    %v5571 = vpack.c.b16 %v5455, %v5453
    %v5572 = vpack.c.b16 %v5458, %v5456
    %v5573 = vpack.c.b16 %v5459, %v5457
    %v5574 = vpack.c.b16 %v5462, %v5460
    %v5575 = vpack.c.b16 %v5463, %v5461
    %v5576 = vpack.c.b16 %v5466, %v5464
    %v5577 = vpack.c.b16 %v5467, %v5465
    %v5578 = vpack.c.b16 %v5470, %v5468
    %v5579 = vpack.c.b16 %v5471, %v5469
    %v5580 = vpack.c.b16 %v5474, %v5472
    %v5581 = vpack.c.b16 %v5475, %v5473
    %v5582 = vpack.c.b16 %v5478, %v5476
    %v5583 = vpack.c.b16 %v5479, %v5477
    %v5584 = vpack.c.b16 %v5482, %v5480
    %v5585 = vpack.c.b16 %v5483, %v5481
    %v5586 = vpack.c.b16 %v5486, %v5484
    %v5587 = vpack.c.b16 %v5487, %v5485
    %v5588 = vpack.c.b16 %v5490, %v5488
    %v5589 = vpack.c.b16 %v5491, %v5489
    %v5590 = vpack.c.b16 %v5494, %v5492
    %v5591 = vpack.c.b16 %v5495, %v5493
    %v5592 = vpack.c.b16 %v5498, %v5496
    %v5593 = vpack.c.b16 %v5499, %v5497
    %v5594 = vpack.c.b16 %v5502, %v5500
    %v5595 = vpack.c.b16 %v5503, %v5501
    %v5596 = vpack.c.b16 %v5506, %v5504
    %v5597 = vpack.c.b16 %v5507, %v5505
    %v5598 = vpack.c.b16 %v5510, %v5508
    %v5599 = vpack.c.b16 %v5511, %v5509
    %v5600 = vpack.c.b16 %v5514, %v5512
    %v5601 = vpack.c.b16 %v5515, %v5513
    %v5602 = vpack.c.b16 %v5518, %v5516
    %v5603 = vpack.c.b16 %v5519, %v5517
    %v5604 = vpack.c.b16 %v5522, %v5520
    %v5605 = vpack.c.b16 %v5523, %v5521
    %v5606 = vpack.c.b16 %v5526, %v5524
    %v5607 = vpack.c.b16 %v5527, %v5525
    %v5608 = vpack.c.b16 %v5530, %v5528
    %v5609 = vpack.c.b16 %v5531, %v5529
    %v5610 = vpack.c.b16 %v5534, %v5532
    %v5611 = vpack.c.b16 %v5535, %v5533
    %v5612 = vpack.c.b16 %v5538, %v5536
    %v5613 = vpack.c.b16 %v5539, %v5537
    %v5614 = vpack.c.b16 %v5542, %v5540
    %v5615 = vpack.c.b16 %v5543, %v5541
    %v5616 = vpack.c.b16 %v5546, %v5544
    %v5617 = vpack.c.b16 %v5547, %v5545
    %v5618 = vpack.c.b16 %v5550, %v5548
    %v5619 = vpack.c.b16 %v5551, %v5549
    %v5620 = vpack.c.b16 %v5554, %v5552
    %v5621 = vpack.c.b16 %v5555, %v5553
    %v5622 = vpack.c.b16 %v5558, %v5556
    %v5623 = vpack.c.b16 %v5559, %v5557
    %5688 = vmatpush.bf16.msra.mxu0 %v5574
    %5689 = vmatpush.bf16.msra.mxu0 %v5572
    %5690 = vmatpush.bf16.msra.mxu0 %v5570
    %5691 = vmatpush.bf16.msra.mxu0 %v5568
    %5692 = vmatpush.bf16.msra.mxu0 %v5566
    %5693 = vmatpush.bf16.msra.mxu0 %v5564
    %5694 = vmatpush.bf16.msra.mxu0 %v5562
    %5695 = vmatpush.bf16.msra.mxu0 %v5560
    %5696 = vmatmul.bf16.gmra.mxu0 %v5360
    %v5697 = vpop.f32.mrf.mxu0
    %v5698 = vadd.f32 %v5350, %v5697
    %v5699 = vpop.f32.mrf.mxu0
    %5700 = vdwg.mxu0
    %5701 = vmatpush.bf16.msra.mxu0 %v5590
    %5702 = vmatpush.bf16.msra.mxu0 %v5588
    %5703 = vmatpush.bf16.msra.mxu0 %v5586
    %5704 = vmatpush.bf16.msra.mxu0 %v5584
    %5705 = vmatpush.bf16.msra.mxu0 %v5582
    %5706 = vmatpush.bf16.msra.mxu0 %v5580
    %5707 = vmatpush.bf16.msra.mxu0 %v5578
    %5708 = vmatpush.bf16.msra.mxu0 %v5576
    %5709 = vmatmul.bf16.gmra.mxu0 %v5361
    %v5710 = vpop.f32.mrf.mxu0
    %v5711 = vadd.f32 %v5698, %v5710
    %v5712 = vpop.f32.mrf.mxu0
    %5713 = vdwg.mxu0
    %5714 = vmatpush.bf16.msra.mxu0 %v5606
    %5715 = vmatpush.bf16.msra.mxu0 %v5604
    %5716 = vmatpush.bf16.msra.mxu0 %v5602
    %5717 = vmatpush.bf16.msra.mxu0 %v5600
    %5718 = vmatpush.bf16.msra.mxu0 %v5598
    %5719 = vmatpush.bf16.msra.mxu0 %v5596
    %5720 = vmatpush.bf16.msra.mxu0 %v5594
    %5721 = vmatpush.bf16.msra.mxu0 %v5592
    %5722 = vmatmul.bf16.gmra.mxu0 %v5362
    %v5723 = vpop.f32.mrf.mxu0
    %v5724 = vadd.f32 %v5711, %v5723
    %v5725 = vpop.f32.mrf.mxu0
    %5726 = vdwg.mxu0
    %5727 = vmatpush.bf16.msra.mxu0 %v5622
    %5728 = vmatpush.bf16.msra.mxu0 %v5620
    %5729 = vmatpush.bf16.msra.mxu0 %v5618
    %5730 = vmatpush.bf16.msra.mxu0 %v5616
    %5731 = vmatpush.bf16.msra.mxu0 %v5614
    %5732 = vmatpush.bf16.msra.mxu0 %v5612
    %5733 = vmatpush.bf16.msra.mxu0 %v5610
    %5734 = vmatpush.bf16.msra.mxu0 %v5608
    %5735 = vmatmul.bf16.gmra.mxu0 %v5363
    %v5736 = vpop.f32.mrf.mxu0
    %v5737 = vadd.f32 %v5724, %v5736
    %v5738 = vpop.f32.mrf.mxu0
    %5739 = vdwg.mxu0
    %5740 = vmatpush.bf16.msra.mxu0 %v5575
    %5741 = vmatpush.bf16.msra.mxu0 %v5573
    %5742 = vmatpush.bf16.msra.mxu0 %v5571
    %5743 = vmatpush.bf16.msra.mxu0 %v5569
    %5744 = vmatpush.bf16.msra.mxu0 %v5567
    %5745 = vmatpush.bf16.msra.mxu0 %v5565
    %5746 = vmatpush.bf16.msra.mxu0 %v5563
    %5747 = vmatpush.bf16.msra.mxu0 %v5561
    %5748 = vmatmul.bf16.gmra.mxu0 %v5360
    %v5749 = vpop.f32.mrf.mxu0
    %v5750 = vadd.f32 %v5351, %v5749
    %v5751 = vpop.f32.mrf.mxu0
    %5752 = vdwg.mxu0
    %5753 = vmatpush.bf16.msra.mxu0 %v5591
    %5754 = vmatpush.bf16.msra.mxu0 %v5589
    %5755 = vmatpush.bf16.msra.mxu0 %v5587
    %5756 = vmatpush.bf16.msra.mxu0 %v5585
    %5757 = vmatpush.bf16.msra.mxu0 %v5583
    %5758 = vmatpush.bf16.msra.mxu0 %v5581
    %5759 = vmatpush.bf16.msra.mxu0 %v5579
    %5760 = vmatpush.bf16.msra.mxu0 %v5577
    %5761 = vmatmul.bf16.gmra.mxu0 %v5361
    %v5762 = vpop.f32.mrf.mxu0
    %v5763 = vadd.f32 %v5750, %v5762
    %v5764 = vpop.f32.mrf.mxu0
    %5765 = vdwg.mxu0
    %5766 = vmatpush.bf16.msra.mxu0 %v5607
    %5767 = vmatpush.bf16.msra.mxu0 %v5605
    %5768 = vmatpush.bf16.msra.mxu0 %v5603
    %5769 = vmatpush.bf16.msra.mxu0 %v5601
    %5770 = vmatpush.bf16.msra.mxu0 %v5599
    %5771 = vmatpush.bf16.msra.mxu0 %v5597
    %5772 = vmatpush.bf16.msra.mxu0 %v5595
    %5773 = vmatpush.bf16.msra.mxu0 %v5593
    %5774 = vmatmul.bf16.gmra.mxu0 %v5362
    %v5775 = vpop.f32.mrf.mxu0
    %v5776 = vadd.f32 %v5763, %v5775
    %v5777 = vpop.f32.mrf.mxu0
    %5778 = vdwg.mxu0
    %5779 = vmatpush.bf16.msra.mxu0 %v5623
    %5780 = vmatpush.bf16.msra.mxu0 %v5621
    %5781 = vmatpush.bf16.msra.mxu0 %v5619
    %5782 = vmatpush.bf16.msra.mxu0 %v5617
    %5783 = vmatpush.bf16.msra.mxu0 %v5615
    %5784 = vmatpush.bf16.msra.mxu0 %v5613
    %5785 = vmatpush.bf16.msra.mxu0 %v5611
    %5786 = vmatpush.bf16.msra.mxu0 %v5609
    %5787 = vmatmul.bf16.gmra.mxu0 %v5363
    %v5788 = vpop.f32.mrf.mxu0
    %v5789 = vadd.f32 %v5776, %v5788
    %v5790 = vpop.f32.mrf.mxu0
    %5791 = vdwg.mxu0
    %v5792 = vmax.f32 %v5737, 0.0
    %v5793 = vxor.u32 %v5789, 2147483648
    %v5794 = vmul.f32 %v5793, 1.442695
    %v5795 = vpow.pop %v5794
    %v5796 = vadd.f32 %v5795, 1.0
    %v5797 = vrcp.pop %v5796
    %v5798 = vmul.f32 %v5796, %v5797
    %v5799 = vsub.f32 1.0, %v5798
    %v5800 = vmul.f32 %v5797, %v5799
    %v5801 = vadd.f32 %v5797, %v5800
    %vm5802 = vweird.f32 %v5796
    %vm5803 = vweird.f32 %v5797
    %vm5804 = vmor %vm5802, %vm5803
    %v5805 = vsel %vm5804, %v5797, %v5801
    %v5806 = vand.u32 2147483647, %v5796
    %vm5807 = vcmp.eq.f32.partialorder %v5806, 8.507059e+37
    %v5808 = vand.u32 %v5796, 2147483648
    %v5809 = vor.u32 1.1754944e-38, %v5808
    %v5810 = vsel %vm5807, %v5809, %v5805
    %v5811 = vmul.f32 1.0, %v5810
    %v5812 = vmul.f32 %v5792, %v5811
    %v5813 = vmul.f32 %v5812, %v5812
    %v5814 = vsel %vm5264, %v5813, 0.0
    %5815 = vadd.xlane.f32.xlu0 %v5814
    %v5816 = vpop.xlane.xlu0 %5815
    %v5817 = vmax.f32 %v5816, 1e-24
    %v5818 = vrsqrt.pop %v5817
    %v5819 = vmul.f32 %v5818, %v5817
    %v5820 = vmul.f32 %v5819, %v5818
    %v5821 = vmul.f32 0.5, %v5820
    %v5822 = vsub.f32 1.5, %v5821
    %v5823 = vmul.f32 %v5818, %v5822
    %vm5824 = vweird.f32 %v5817
    %vm5825 = vweird.f32 %v5818
    %vm5826 = vmor %vm5824, %vm5825
    %v5827 = vsel %vm5826, %v5818, %v5823
    %v5828 = vmul.f32 %v5812, %v5827
    %s5829 = scalar_lea.vmem %s14, 4
    %5830 = vst [vmem:[%s5829] sm:$0xf] %v5828
    %v5831 = vpack.c.bf16 %v5828, %v5828
    %s5832 = scalar_lea.vmem %s4, 1024
    %v5833 = vld [vmem:[%s5832] sm:$0xff]
    %v5834 = vld [vmem:[%s5832 + $0x8] sm:$0xff]
    %v5835 = vld [vmem:[%s5832 + $0x10] sm:$0xff]
    %v5836 = vld [vmem:[%s5832 + $0x18] sm:$0xff]
    %v5837 = vld [vmem:[%s5832 + $0x20] sm:$0xff]
    %v5838 = vld [vmem:[%s5832 + $0x28] sm:$0xff]
    %v5839 = vld [vmem:[%s5832 + $0x30] sm:$0xff]
    %v5840 = vld [vmem:[%s5832 + $0x38] sm:$0xff]
    %v5841 = vld [vmem:[%s5832 + $0x40] sm:$0xff]
    %v5842 = vld [vmem:[%s5832 + $0x48] sm:$0xff]
    %v5843 = vld [vmem:[%s5832 + $0x50] sm:$0xff]
    %v5844 = vld [vmem:[%s5832 + $0x58] sm:$0xff]
    %v5845 = vld [vmem:[%s5832 + $0x60] sm:$0xff]
    %v5846 = vld [vmem:[%s5832 + $0x68] sm:$0xff]
    %v5847 = vld [vmem:[%s5832 + $0x70] sm:$0xff]
    %v5848 = vld [vmem:[%s5832 + $0x78] sm:$0xff]
    %v5849 = vld [vmem:[%s5832 + $0x80] sm:$0xff]
    %v5850 = vld [vmem:[%s5832 + $0x88] sm:$0xff]
    %v5851 = vld [vmem:[%s5832 + $0x90] sm:$0xff]
    %v5852 = vld [vmem:[%s5832 + $0x98] sm:$0xff]
    %v5853 = vld [vmem:[%s5832 + $0xa0] sm:$0xff]
    %v5854 = vld [vmem:[%s5832 + $0xa8] sm:$0xff]
    %v5855 = vld [vmem:[%s5832 + $0xb0] sm:$0xff]
    %v5856 = vld [vmem:[%s5832 + $0xb8] sm:$0xff]
    %v5857 = vld [vmem:[%s5832 + $0xc0] sm:$0xff]
    %v5858 = vld [vmem:[%s5832 + $0xc8] sm:$0xff]
    %v5859 = vld [vmem:[%s5832 + $0xd0] sm:$0xff]
    %v5860 = vld [vmem:[%s5832 + $0xd8] sm:$0xff]
    %v5861 = vld [vmem:[%s5832 + $0xe0] sm:$0xff]
    %v5862 = vld [vmem:[%s5832 + $0xe8] sm:$0xff]
    %v5863 = vld [vmem:[%s5832 + $0xf0] sm:$0xff]
    %v5864 = vld [vmem:[%s5832 + $0xf8] sm:$0xff]
    %v5865 = vld [vmem:[%s5832 + $0x100] sm:$0xff]
    %v5866 = vld [vmem:[%s5832 + $0x108] sm:$0xff]
    %v5867 = vld [vmem:[%s5832 + $0x110] sm:$0xff]
    %v5868 = vld [vmem:[%s5832 + $0x118] sm:$0xff]
    %v5869 = vld [vmem:[%s5832 + $0x120] sm:$0xff]
    %v5870 = vld [vmem:[%s5832 + $0x128] sm:$0xff]
    %v5871 = vld [vmem:[%s5832 + $0x130] sm:$0xff]
    %v5872 = vld [vmem:[%s5832 + $0x138] sm:$0xff]
    %v5873 = vld [vmem:[%s5832 + $0x140] sm:$0xff]
    %v5874 = vld [vmem:[%s5832 + $0x148] sm:$0xff]
    %v5875 = vld [vmem:[%s5832 + $0x150] sm:$0xff]
    %v5876 = vld [vmem:[%s5832 + $0x158] sm:$0xff]
    %v5877 = vld [vmem:[%s5832 + $0x160] sm:$0xff]
    %v5878 = vld [vmem:[%s5832 + $0x168] sm:$0xff]
    %v5879 = vld [vmem:[%s5832 + $0x170] sm:$0xff]
    %v5880 = vld [vmem:[%s5832 + $0x178] sm:$0xff]
    %v5881 = vld [vmem:[%s5832 + $0x180] sm:$0xff]
    %v5882 = vld [vmem:[%s5832 + $0x188] sm:$0xff]
    %v5883 = vld [vmem:[%s5832 + $0x190] sm:$0xff]
    %v5884 = vld [vmem:[%s5832 + $0x198] sm:$0xff]
    %v5885 = vld [vmem:[%s5832 + $0x1a0] sm:$0xff]
    %v5886 = vld [vmem:[%s5832 + $0x1a8] sm:$0xff]
    %v5887 = vld [vmem:[%s5832 + $0x1b0] sm:$0xff]
    %v5888 = vld [vmem:[%s5832 + $0x1b8] sm:$0xff]
    %v5889 = vld [vmem:[%s5832 + $0x1c0] sm:$0xff]
    %v5890 = vld [vmem:[%s5832 + $0x1c8] sm:$0xff]
    %v5891 = vld [vmem:[%s5832 + $0x1d0] sm:$0xff]
    %v5892 = vld [vmem:[%s5832 + $0x1d8] sm:$0xff]
    %v5893 = vld [vmem:[%s5832 + $0x1e0] sm:$0xff]
    %v5894 = vld [vmem:[%s5832 + $0x1e8] sm:$0xff]
    %v5895 = vld [vmem:[%s5832 + $0x1f0] sm:$0xff]
    %v5896 = vld [vmem:[%s5832 + $0x1f8] sm:$0xff]
    %s5897 = scalar_lea.vmem %s5, 4
    %v5898 = vld [vmem:[%s5897] sm:$0x3]
    %v5900 = vperm.slane %v5898, 0
    %v5901 = vperm.slane %v5898, 1
    %v5906 = vunpack.c.l.b16 %v4732
    %v5907 = vunpack.c.h.b16 %v4732
    %v5908 = vunpack.c.l.b16 %v4733
    %v5909 = vunpack.c.h.b16 %v4733
    %v5910 = vpack.c.b16 %v5906, %v5906
    %v5911 = vpack.c.b16 %v5907, %v5907
    %v5912 = vpack.c.b16 %v5908, %v5908
    %v5913 = vpack.c.b16 %v5909, %v5909
    %v5982 = vunpack.c.l.b16 %v5833
    %v5983 = vunpack.c.h.b16 %v5833
    %v5984 = vunpack.c.l.b16 %v5834
    %v5985 = vunpack.c.h.b16 %v5834
    %v5986 = vunpack.c.l.b16 %v5835
    %v5987 = vunpack.c.h.b16 %v5835
    %v5988 = vunpack.c.l.b16 %v5836
    %v5989 = vunpack.c.h.b16 %v5836
    %v5990 = vunpack.c.l.b16 %v5837
    %v5991 = vunpack.c.h.b16 %v5837
    %v5992 = vunpack.c.l.b16 %v5838
    %v5993 = vunpack.c.h.b16 %v5838
    %v5994 = vunpack.c.l.b16 %v5839
    %v5995 = vunpack.c.h.b16 %v5839
    %v5996 = vunpack.c.l.b16 %v5840
    %v5997 = vunpack.c.h.b16 %v5840
    %v5998 = vunpack.c.l.b16 %v5841
    %v5999 = vunpack.c.h.b16 %v5841
    %v6000 = vunpack.c.l.b16 %v5842
    %v6001 = vunpack.c.h.b16 %v5842
    %v6002 = vunpack.c.l.b16 %v5843
    %v6003 = vunpack.c.h.b16 %v5843
    %v6004 = vunpack.c.l.b16 %v5844
    %v6005 = vunpack.c.h.b16 %v5844
    %v6006 = vunpack.c.l.b16 %v5845
    %v6007 = vunpack.c.h.b16 %v5845
    %v6008 = vunpack.c.l.b16 %v5846
    %v6009 = vunpack.c.h.b16 %v5846
    %v6010 = vunpack.c.l.b16 %v5847
    %v6011 = vunpack.c.h.b16 %v5847
    %v6012 = vunpack.c.l.b16 %v5848
    %v6013 = vunpack.c.h.b16 %v5848
    %v6014 = vunpack.c.l.b16 %v5849
    %v6015 = vunpack.c.h.b16 %v5849
    %v6016 = vunpack.c.l.b16 %v5850
    %v6017 = vunpack.c.h.b16 %v5850
    %v6018 = vunpack.c.l.b16 %v5851
    %v6019 = vunpack.c.h.b16 %v5851
    %v6020 = vunpack.c.l.b16 %v5852
    %v6021 = vunpack.c.h.b16 %v5852
    %v6022 = vunpack.c.l.b16 %v5853
    %v6023 = vunpack.c.h.b16 %v5853
    %v6024 = vunpack.c.l.b16 %v5854
    %v6025 = vunpack.c.h.b16 %v5854
    %v6026 = vunpack.c.l.b16 %v5855
    %v6027 = vunpack.c.h.b16 %v5855
    %v6028 = vunpack.c.l.b16 %v5856
    %v6029 = vunpack.c.h.b16 %v5856
    %v6030 = vunpack.c.l.b16 %v5857
    %v6031 = vunpack.c.h.b16 %v5857
    %v6032 = vunpack.c.l.b16 %v5858
    %v6033 = vunpack.c.h.b16 %v5858
    %v6034 = vunpack.c.l.b16 %v5859
    %v6035 = vunpack.c.h.b16 %v5859
    %v6036 = vunpack.c.l.b16 %v5860
    %v6037 = vunpack.c.h.b16 %v5860
    %v6038 = vunpack.c.l.b16 %v5861
    %v6039 = vunpack.c.h.b16 %v5861
    %v6040 = vunpack.c.l.b16 %v5862
    %v6041 = vunpack.c.h.b16 %v5862
    %v6042 = vunpack.c.l.b16 %v5863
    %v6043 = vunpack.c.h.b16 %v5863
    %v6044 = vunpack.c.l.b16 %v5864
    %v6045 = vunpack.c.h.b16 %v5864
    %v6046 = vunpack.c.l.b16 %v5865
    %v6047 = vunpack.c.h.b16 %v5865
    %v6048 = vunpack.c.l.b16 %v5866
    %v6049 = vunpack.c.h.b16 %v5866
    %v6050 = vunpack.c.l.b16 %v5867
    %v6051 = vunpack.c.h.b16 %v5867
    %v6052 = vunpack.c.l.b16 %v5868
    %v6053 = vunpack.c.h.b16 %v5868
    %v6054 = vunpack.c.l.b16 %v5869
    %v6055 = vunpack.c.h.b16 %v5869
    %v6056 = vunpack.c.l.b16 %v5870
    %v6057 = vunpack.c.h.b16 %v5870
    %v6058 = vunpack.c.l.b16 %v5871
    %v6059 = vunpack.c.h.b16 %v5871
    %v6060 = vunpack.c.l.b16 %v5872
    %v6061 = vunpack.c.h.b16 %v5872
    %v6062 = vunpack.c.l.b16 %v5873
    %v6063 = vunpack.c.h.b16 %v5873
    %v6064 = vunpack.c.l.b16 %v5874
    %v6065 = vunpack.c.h.b16 %v5874
    %v6066 = vunpack.c.l.b16 %v5875
    %v6067 = vunpack.c.h.b16 %v5875
    %v6068 = vunpack.c.l.b16 %v5876
    %v6069 = vunpack.c.h.b16 %v5876
    %v6070 = vunpack.c.l.b16 %v5877
    %v6071 = vunpack.c.h.b16 %v5877
    %v6072 = vunpack.c.l.b16 %v5878
    %v6073 = vunpack.c.h.b16 %v5878
    %v6074 = vunpack.c.l.b16 %v5879
    %v6075 = vunpack.c.h.b16 %v5879
    %v6076 = vunpack.c.l.b16 %v5880
    %v6077 = vunpack.c.h.b16 %v5880
    %v6078 = vunpack.c.l.b16 %v5881
    %v6079 = vunpack.c.h.b16 %v5881
    %v6080 = vunpack.c.l.b16 %v5882
    %v6081 = vunpack.c.h.b16 %v5882
    %v6082 = vunpack.c.l.b16 %v5883
    %v6083 = vunpack.c.h.b16 %v5883
    %v6084 = vunpack.c.l.b16 %v5884
    %v6085 = vunpack.c.h.b16 %v5884
    %v6086 = vunpack.c.l.b16 %v5885
    %v6087 = vunpack.c.h.b16 %v5885
    %v6088 = vunpack.c.l.b16 %v5886
    %v6089 = vunpack.c.h.b16 %v5886
    %v6090 = vunpack.c.l.b16 %v5887
    %v6091 = vunpack.c.h.b16 %v5887
    %v6092 = vunpack.c.l.b16 %v5888
    %v6093 = vunpack.c.h.b16 %v5888
    %v6094 = vunpack.c.l.b16 %v5889
    %v6095 = vunpack.c.h.b16 %v5889
    %v6096 = vunpack.c.l.b16 %v5890
    %v6097 = vunpack.c.h.b16 %v5890
    %v6098 = vunpack.c.l.b16 %v5891
    %v6099 = vunpack.c.h.b16 %v5891
    %v6100 = vunpack.c.l.b16 %v5892
    %v6101 = vunpack.c.h.b16 %v5892
    %v6102 = vunpack.c.l.b16 %v5893
    %v6103 = vunpack.c.h.b16 %v5893
    %v6104 = vunpack.c.l.b16 %v5894
    %v6105 = vunpack.c.h.b16 %v5894
    %v6106 = vunpack.c.l.b16 %v5895
    %v6107 = vunpack.c.h.b16 %v5895
    %v6108 = vunpack.c.l.b16 %v5896
    %v6109 = vunpack.c.h.b16 %v5896
    %v6110 = vpack.c.b16 %v5984, %v5982
    %v6111 = vpack.c.b16 %v5985, %v5983
    %v6112 = vpack.c.b16 %v5988, %v5986
    %v6113 = vpack.c.b16 %v5989, %v5987
    %v6114 = vpack.c.b16 %v5992, %v5990
    %v6115 = vpack.c.b16 %v5993, %v5991
    %v6116 = vpack.c.b16 %v5996, %v5994
    %v6117 = vpack.c.b16 %v5997, %v5995
    %v6118 = vpack.c.b16 %v6000, %v5998
    %v6119 = vpack.c.b16 %v6001, %v5999
    %v6120 = vpack.c.b16 %v6004, %v6002
    %v6121 = vpack.c.b16 %v6005, %v6003
    %v6122 = vpack.c.b16 %v6008, %v6006
    %v6123 = vpack.c.b16 %v6009, %v6007
    %v6124 = vpack.c.b16 %v6012, %v6010
    %v6125 = vpack.c.b16 %v6013, %v6011
    %v6126 = vpack.c.b16 %v6016, %v6014
    %v6127 = vpack.c.b16 %v6017, %v6015
    %v6128 = vpack.c.b16 %v6020, %v6018
    %v6129 = vpack.c.b16 %v6021, %v6019
    %v6130 = vpack.c.b16 %v6024, %v6022
    %v6131 = vpack.c.b16 %v6025, %v6023
    %v6132 = vpack.c.b16 %v6028, %v6026
    %v6133 = vpack.c.b16 %v6029, %v6027
    %v6134 = vpack.c.b16 %v6032, %v6030
    %v6135 = vpack.c.b16 %v6033, %v6031
    %v6136 = vpack.c.b16 %v6036, %v6034
    %v6137 = vpack.c.b16 %v6037, %v6035
    %v6138 = vpack.c.b16 %v6040, %v6038
    %v6139 = vpack.c.b16 %v6041, %v6039
    %v6140 = vpack.c.b16 %v6044, %v6042
    %v6141 = vpack.c.b16 %v6045, %v6043
    %v6142 = vpack.c.b16 %v6048, %v6046
    %v6143 = vpack.c.b16 %v6049, %v6047
    %v6144 = vpack.c.b16 %v6052, %v6050
    %v6145 = vpack.c.b16 %v6053, %v6051
    %v6146 = vpack.c.b16 %v6056, %v6054
    %v6147 = vpack.c.b16 %v6057, %v6055
    %v6148 = vpack.c.b16 %v6060, %v6058
    %v6149 = vpack.c.b16 %v6061, %v6059
    %v6150 = vpack.c.b16 %v6064, %v6062
    %v6151 = vpack.c.b16 %v6065, %v6063
    %v6152 = vpack.c.b16 %v6068, %v6066
    %v6153 = vpack.c.b16 %v6069, %v6067
    %v6154 = vpack.c.b16 %v6072, %v6070
    %v6155 = vpack.c.b16 %v6073, %v6071
    %v6156 = vpack.c.b16 %v6076, %v6074
    %v6157 = vpack.c.b16 %v6077, %v6075
    %v6158 = vpack.c.b16 %v6080, %v6078
    %v6159 = vpack.c.b16 %v6081, %v6079
    %v6160 = vpack.c.b16 %v6084, %v6082
    %v6161 = vpack.c.b16 %v6085, %v6083
    %v6162 = vpack.c.b16 %v6088, %v6086
    %v6163 = vpack.c.b16 %v6089, %v6087
    %v6164 = vpack.c.b16 %v6092, %v6090
    %v6165 = vpack.c.b16 %v6093, %v6091
    %v6166 = vpack.c.b16 %v6096, %v6094
    %v6167 = vpack.c.b16 %v6097, %v6095
    %v6168 = vpack.c.b16 %v6100, %v6098
    %v6169 = vpack.c.b16 %v6101, %v6099
    %v6170 = vpack.c.b16 %v6104, %v6102
    %v6171 = vpack.c.b16 %v6105, %v6103
    %v6172 = vpack.c.b16 %v6108, %v6106
    %v6173 = vpack.c.b16 %v6109, %v6107
    %6238 = vmatpush.bf16.msra.mxu0 %v6124
    %6239 = vmatpush.bf16.msra.mxu0 %v6122
    %6240 = vmatpush.bf16.msra.mxu0 %v6120
    %6241 = vmatpush.bf16.msra.mxu0 %v6118
    %6242 = vmatpush.bf16.msra.mxu0 %v6116
    %6243 = vmatpush.bf16.msra.mxu0 %v6114
    %6244 = vmatpush.bf16.msra.mxu0 %v6112
    %6245 = vmatpush.bf16.msra.mxu0 %v6110
    %6246 = vmatmul.bf16.gmra.mxu0 %v5910
    %v6247 = vpop.f32.mrf.mxu0
    %v6248 = vadd.f32 %v5900, %v6247
    %v6249 = vpop.f32.mrf.mxu0
    %6250 = vdwg.mxu0
    %6251 = vmatpush.bf16.msra.mxu0 %v6140
    %6252 = vmatpush.bf16.msra.mxu0 %v6138
    %6253 = vmatpush.bf16.msra.mxu0 %v6136
    %6254 = vmatpush.bf16.msra.mxu0 %v6134
    %6255 = vmatpush.bf16.msra.mxu0 %v6132
    %6256 = vmatpush.bf16.msra.mxu0 %v6130
    %6257 = vmatpush.bf16.msra.mxu0 %v6128
    %6258 = vmatpush.bf16.msra.mxu0 %v6126
    %6259 = vmatmul.bf16.gmra.mxu0 %v5911
    %v6260 = vpop.f32.mrf.mxu0
    %v6261 = vadd.f32 %v6248, %v6260
    %v6262 = vpop.f32.mrf.mxu0
    %6263 = vdwg.mxu0
    %6264 = vmatpush.bf16.msra.mxu0 %v6156
    %6265 = vmatpush.bf16.msra.mxu0 %v6154
    %6266 = vmatpush.bf16.msra.mxu0 %v6152
    %6267 = vmatpush.bf16.msra.mxu0 %v6150
    %6268 = vmatpush.bf16.msra.mxu0 %v6148
    %6269 = vmatpush.bf16.msra.mxu0 %v6146
    %6270 = vmatpush.bf16.msra.mxu0 %v6144
    %6271 = vmatpush.bf16.msra.mxu0 %v6142
    %6272 = vmatmul.bf16.gmra.mxu0 %v5912
    %v6273 = vpop.f32.mrf.mxu0
    %v6274 = vadd.f32 %v6261, %v6273
    %v6275 = vpop.f32.mrf.mxu0
    %6276 = vdwg.mxu0
    %6277 = vmatpush.bf16.msra.mxu0 %v6172
    %6278 = vmatpush.bf16.msra.mxu0 %v6170
    %6279 = vmatpush.bf16.msra.mxu0 %v6168
    %6280 = vmatpush.bf16.msra.mxu0 %v6166
    %6281 = vmatpush.bf16.msra.mxu0 %v6164
    %6282 = vmatpush.bf16.msra.mxu0 %v6162
    %6283 = vmatpush.bf16.msra.mxu0 %v6160
    %6284 = vmatpush.bf16.msra.mxu0 %v6158
    %6285 = vmatmul.bf16.gmra.mxu0 %v5913
    %v6286 = vpop.f32.mrf.mxu0
    %v6287 = vadd.f32 %v6274, %v6286
    %v6288 = vpop.f32.mrf.mxu0
    %6289 = vdwg.mxu0
    %6290 = vmatpush.bf16.msra.mxu0 %v6125
    %6291 = vmatpush.bf16.msra.mxu0 %v6123
    %6292 = vmatpush.bf16.msra.mxu0 %v6121
    %6293 = vmatpush.bf16.msra.mxu0 %v6119
    %6294 = vmatpush.bf16.msra.mxu0 %v6117
    %6295 = vmatpush.bf16.msra.mxu0 %v6115
    %6296 = vmatpush.bf16.msra.mxu0 %v6113
    %6297 = vmatpush.bf16.msra.mxu0 %v6111
    %6298 = vmatmul.bf16.gmra.mxu0 %v5910
    %v6299 = vpop.f32.mrf.mxu0
    %v6300 = vadd.f32 %v5901, %v6299
    %v6301 = vpop.f32.mrf.mxu0
    %6302 = vdwg.mxu0
    %6303 = vmatpush.bf16.msra.mxu0 %v6141
    %6304 = vmatpush.bf16.msra.mxu0 %v6139
    %6305 = vmatpush.bf16.msra.mxu0 %v6137
    %6306 = vmatpush.bf16.msra.mxu0 %v6135
    %6307 = vmatpush.bf16.msra.mxu0 %v6133
    %6308 = vmatpush.bf16.msra.mxu0 %v6131
    %6309 = vmatpush.bf16.msra.mxu0 %v6129
    %6310 = vmatpush.bf16.msra.mxu0 %v6127
    %6311 = vmatmul.bf16.gmra.mxu0 %v5911
    %v6312 = vpop.f32.mrf.mxu0
    %v6313 = vadd.f32 %v6300, %v6312
    %v6314 = vpop.f32.mrf.mxu0
    %6315 = vdwg.mxu0
    %6316 = vmatpush.bf16.msra.mxu0 %v6157
    %6317 = vmatpush.bf16.msra.mxu0 %v6155
    %6318 = vmatpush.bf16.msra.mxu0 %v6153
    %6319 = vmatpush.bf16.msra.mxu0 %v6151
    %6320 = vmatpush.bf16.msra.mxu0 %v6149
    %6321 = vmatpush.bf16.msra.mxu0 %v6147
    %6322 = vmatpush.bf16.msra.mxu0 %v6145
    %6323 = vmatpush.bf16.msra.mxu0 %v6143
    %6324 = vmatmul.bf16.gmra.mxu0 %v5912
    %v6325 = vpop.f32.mrf.mxu0
    %v6326 = vadd.f32 %v6313, %v6325
    %v6327 = vpop.f32.mrf.mxu0
    %6328 = vdwg.mxu0
    %6329 = vmatpush.bf16.msra.mxu0 %v6173
    %6330 = vmatpush.bf16.msra.mxu0 %v6171
    %6331 = vmatpush.bf16.msra.mxu0 %v6169
    %6332 = vmatpush.bf16.msra.mxu0 %v6167
    %6333 = vmatpush.bf16.msra.mxu0 %v6165
    %6334 = vmatpush.bf16.msra.mxu0 %v6163
    %6335 = vmatpush.bf16.msra.mxu0 %v6161
    %6336 = vmatpush.bf16.msra.mxu0 %v6159
    %6337 = vmatmul.bf16.gmra.mxu0 %v5913
    %v6338 = vpop.f32.mrf.mxu0
    %v6339 = vadd.f32 %v6326, %v6338
    %v6340 = vpop.f32.mrf.mxu0
    %6341 = vdwg.mxu0
    %v6342 = vmax.f32 %v6287, 0.0
    %v6343 = vxor.u32 %v6339, 2147483648
    %v6344 = vmul.f32 %v6343, 1.442695
    %v6345 = vpow.pop %v6344
    %v6346 = vadd.f32 %v6345, 1.0
    %v6347 = vrcp.pop %v6346
    %v6348 = vmul.f32 %v6346, %v6347
    %v6349 = vsub.f32 1.0, %v6348
    %v6350 = vmul.f32 %v6347, %v6349
    %v6351 = vadd.f32 %v6347, %v6350
    %vm6352 = vweird.f32 %v6346
    %vm6353 = vweird.f32 %v6347
    %vm6354 = vmor %vm6352, %vm6353
    %v6355 = vsel %vm6354, %v6347, %v6351
    %v6356 = vand.u32 2147483647, %v6346
    %vm6357 = vcmp.eq.f32.partialorder %v6356, 8.507059e+37
    %v6358 = vand.u32 %v6346, 2147483648
    %v6359 = vor.u32 1.1754944e-38, %v6358
    %v6360 = vsel %vm6357, %v6359, %v6355
    %v6361 = vmul.f32 1.0, %v6360
    %v6362 = vmul.f32 %v6342, %v6361
    %v6363 = vmul.f32 %v6362, %v6362
    %v6364 = vsel %vm5264, %v6363, 0.0
    %6365 = vadd.xlane.f32.xlu0 %v6364
    %v6366 = vpop.xlane.xlu0 %6365
    %v6367 = vmax.f32 %v6366, 1e-24
    %v6368 = vrsqrt.pop %v6367
    %v6369 = vmul.f32 %v6368, %v6367
    %v6370 = vmul.f32 %v6369, %v6368
    %v6371 = vmul.f32 0.5, %v6370
    %v6372 = vsub.f32 1.5, %v6371
    %v6373 = vmul.f32 %v6368, %v6372
    %vm6374 = vweird.f32 %v6367
    %vm6375 = vweird.f32 %v6368
    %vm6376 = vmor %vm6374, %vm6375
    %v6377 = vsel %vm6376, %v6368, %v6373
    %v6378 = vmul.f32 %v6362, %v6377
    %s6379 = scalar_lea.vmem %s14, 8
    %6380 = vst [vmem:[%s6379] sm:$0xf] %v6378
    %v6381 = vpack.c.bf16 %v6378, %v6378
    %v6382 = vld [vmem:[%s1] sm:$0x3]
    %v6383 = vld [vmem:[%s6] sm:$0xff]
    %v6384 = vld [vmem:[%s6 + $0x8] sm:$0xff]
    %v6385 = vld [vmem:[%s6 + $0x10] sm:$0xff]
    %v6386 = vld [vmem:[%s6 + $0x18] sm:$0xff]
    %v6387 = vld [vmem:[%s6 + $0x20] sm:$0xff]
    %v6388 = vld [vmem:[%s6 + $0x28] sm:$0xff]
    %v6389 = vld [vmem:[%s6 + $0x30] sm:$0x11]
    %v6390 = vld [vmem:[%s6 + $0x38] sm:$0x11]
    %v6391 = vld [vmem:[%s6 + $0x40] sm:$0x11]
    %v6392 = vld [vmem:[%s6 + $0x48] sm:$0x11]
    %v6393 = vld [vmem:[%s6 + $0x50] sm:$0x11]
    %v6394 = vld [vmem:[%s6 + $0x58] sm:$0x11]
    %v6395 = vld [vmem:[%s7] sm:$0xff]
    %v6396 = vld [vmem:[%s7 + $0x8] sm:$0xff]
    %v6397 = vld [vmem:[%s7 + $0x10] sm:$0xff]
    %6399 = vst [vmem:[#allocation1] ss:$4 sm:$0xff] %v6395
    %s6401 = scalar_lea.vmem [#allocation1], 32
    %6402 = vst [vmem:[%s6401] ss:$4 sm:$0xff] %v6396
    %v6403 = vld.sshfl [vmem:[#allocation1] sm:$0xff pattern:$0x73625140]
    %v6404 = vld.sshfl [vmem:[#allocation1 + $0x8] sm:$0xff pattern:$0x73625140]
    %v6405 = vld.sshfl [vmem:[#allocation1 + $0x10] sm:$0xff pattern:$0x73625140]
    %v6406 = vld.sshfl [vmem:[#allocation1 + $0x18] sm:$0xff pattern:$0x73625140]
    %v6407 = vld.sshfl [vmem:[#allocation1 + $0x20] sm:$0xff pattern:$0x73625140]
    %v6408 = vld.sshfl [vmem:[#allocation1 + $0x28] sm:$0xff pattern:$0x73625140]
    %v6409 = vld.sshfl [vmem:[#allocation1 + $0x30] sm:$0xff pattern:$0x73625140]
    %v6410 = vld.sshfl [vmem:[#allocation1 + $0x38] sm:$0xff pattern:$0x73625140]
    %6412 = vst [vmem:[#allocation1] ss:$4 sm:$0xff] %v6397
    %v6413 = vld.sshfl [vmem:[#allocation1] sm:$0xff pattern:$0x73625140]
    %v6414 = vld.sshfl [vmem:[#allocation1 + $0x8] sm:$0xff pattern:$0x73625140]
    %v6415 = vld.sshfl [vmem:[#allocation1 + $0x10] sm:$0xff pattern:$0x73625140]
    %v6416 = vld.sshfl [vmem:[#allocation1 + $0x18] sm:$0xff pattern:$0x73625140]
    %vm6417 = vcmask 23552
    %v6419 = vsel %vm6417, %v5281, 0
    %vm6421 = vcmask 1040384
    %vm6422 = vcmask 1041408
    %v6423 = vsel %vm6421, 4294967295, 65535
    %v6424 = vsel %vm6422, %v6423, 0
    %v6425 = vand.u32 %v6403, %v6424
    %v6427 = vand.u32 %v6404, %v6424
    %v6429 = vand.u32 %v6405, %v6424
    %v6431 = vand.u32 %v6406, %v6424
    %v6433 = vand.u32 %v6407, %v6424
    %v6435 = vand.u32 %v6408, %v6424
    %v6437 = vand.u32 %v6409, %v6424
    %v6439 = vand.u32 %v6410, %v6424
    %v6441 = vand.u32 %v6413, %v6424
    %v6443 = vand.u32 %v6414, %v6424
    %v6445 = vand.u32 %v6415, %v6424
    %v6447 = vand.u32 %v6416, %v6424
    %6449 = vmatpush.bf16.msra.mxu0 0
    %6450 = vmatpush.bf16.msra.mxu0 0
    %6451 = vmatpush.bf16.msra.mxu0 0
    %6452 = vmatpush.bf16.msra.mxu0 0
    %6453 = vmatpush.bf16.msra.mxu0 0
    %6454 = vmatpush.bf16.msra.mxu0 0
    %6455 = vmatpush.bf16.msra.mxu0 0
    %6456 = vmatpush.bf16.msra.mxu0 %v6425
    %6457 = vmatmul.bf16.gmra.mxu0 %v6419
    %v6458 = vpop.f32.mrf.mxu0
    %v6459 = vadd.f32 0.0, %v6458
    %v6460 = vpop.f32.mrf.mxu0
    %6461 = vdwg.mxu0
    %6462 = vmatpush.bf16.msra.mxu0 0
    %6463 = vmatpush.bf16.msra.mxu0 0
    %6464 = vmatpush.bf16.msra.mxu0 0
    %6465 = vmatpush.bf16.msra.mxu0 0
    %6466 = vmatpush.bf16.msra.mxu0 0
    %6467 = vmatpush.bf16.msra.mxu0 0
    %6468 = vmatpush.bf16.msra.mxu0 0
    %6469 = vmatpush.bf16.msra.mxu0 %v6427
    %6470 = vmatmul.bf16.gmra.mxu0 %v6419
    %v6471 = vpop.f32.mrf.mxu0
    %v6472 = vadd.f32 0.0, %v6471
    %v6473 = vpop.f32.mrf.mxu0
    %6474 = vdwg.mxu0
    %6475 = vmatpush.bf16.msra.mxu0 0
    %6476 = vmatpush.bf16.msra.mxu0 0
    %6477 = vmatpush.bf16.msra.mxu0 0
    %6478 = vmatpush.bf16.msra.mxu0 0
    %6479 = vmatpush.bf16.msra.mxu0 0
    %6480 = vmatpush.bf16.msra.mxu0 0
    %6481 = vmatpush.bf16.msra.mxu0 0
    %6482 = vmatpush.bf16.msra.mxu0 %v6429
    %6483 = vmatmul.bf16.gmra.mxu0 %v6419
    %v6484 = vpop.f32.mrf.mxu0
    %v6485 = vadd.f32 0.0, %v6484
    %v6486 = vpop.f32.mrf.mxu0
    %6487 = vdwg.mxu0
    %6488 = vmatpush.bf16.msra.mxu0 0
    %6489 = vmatpush.bf16.msra.mxu0 0
    %6490 = vmatpush.bf16.msra.mxu0 0
    %6491 = vmatpush.bf16.msra.mxu0 0
    %6492 = vmatpush.bf16.msra.mxu0 0
    %6493 = vmatpush.bf16.msra.mxu0 0
    %6494 = vmatpush.bf16.msra.mxu0 0
    %6495 = vmatpush.bf16.msra.mxu0 %v6431
    %6496 = vmatmul.bf16.gmra.mxu0 %v6419
    %v6497 = vpop.f32.mrf.mxu0
    %v6498 = vadd.f32 0.0, %v6497
    %v6499 = vpop.f32.mrf.mxu0
    %6500 = vdwg.mxu0
    %6501 = vmatpush.bf16.msra.mxu0 0
    %6502 = vmatpush.bf16.msra.mxu0 0
    %6503 = vmatpush.bf16.msra.mxu0 0
    %6504 = vmatpush.bf16.msra.mxu0 0
    %6505 = vmatpush.bf16.msra.mxu0 0
    %6506 = vmatpush.bf16.msra.mxu0 0
    %6507 = vmatpush.bf16.msra.mxu0 0
    %6508 = vmatpush.bf16.msra.mxu0 %v6433
    %6509 = vmatmul.bf16.gmra.mxu0 %v6419
    %v6510 = vpop.f32.mrf.mxu0
    %v6511 = vadd.f32 0.0, %v6510
    %v6512 = vpop.f32.mrf.mxu0
    %6513 = vdwg.mxu0
    %6514 = vmatpush.bf16.msra.mxu0 0
    %6515 = vmatpush.bf16.msra.mxu0 0
    %6516 = vmatpush.bf16.msra.mxu0 0
    %6517 = vmatpush.bf16.msra.mxu0 0
    %6518 = vmatpush.bf16.msra.mxu0 0
    %6519 = vmatpush.bf16.msra.mxu0 0
    %6520 = vmatpush.bf16.msra.mxu0 0
    %6521 = vmatpush.bf16.msra.mxu0 %v6435
    %6522 = vmatmul.bf16.gmra.mxu0 %v6419
    %v6523 = vpop.f32.mrf.mxu0
    %v6524 = vadd.f32 0.0, %v6523
    %v6525 = vpop.f32.mrf.mxu0
    %6526 = vdwg.mxu0
    %6527 = vmatpush.bf16.msra.mxu0 0
    %6528 = vmatpush.bf16.msra.mxu0 0
    %6529 = vmatpush.bf16.msra.mxu0 0
    %6530 = vmatpush.bf16.msra.mxu0 0
    %6531 = vmatpush.bf16.msra.mxu0 0
    %6532 = vmatpush.bf16.msra.mxu0 0
    %6533 = vmatpush.bf16.msra.mxu0 0
    %6534 = vmatpush.bf16.msra.mxu0 %v6437
    %6535 = vmatmul.bf16.gmra.mxu0 %v6419
    %v6536 = vpop.f32.mrf.mxu0
    %v6537 = vadd.f32 0.0, %v6536
    %v6538 = vpop.f32.mrf.mxu0
    %6539 = vdwg.mxu0
    %6540 = vmatpush.bf16.msra.mxu0 0
    %6541 = vmatpush.bf16.msra.mxu0 0
    %6542 = vmatpush.bf16.msra.mxu0 0
    %6543 = vmatpush.bf16.msra.mxu0 0
    %6544 = vmatpush.bf16.msra.mxu0 0
    %6545 = vmatpush.bf16.msra.mxu0 0
    %6546 = vmatpush.bf16.msra.mxu0 0
    %6547 = vmatpush.bf16.msra.mxu0 %v6439
    %6548 = vmatmul.bf16.gmra.mxu0 %v6419
    %v6549 = vpop.f32.mrf.mxu0
    %v6550 = vadd.f32 0.0, %v6549
    %v6551 = vpop.f32.mrf.mxu0
    %6552 = vdwg.mxu0
    %6553 = vmatpush.bf16.msra.mxu0 0
    %6554 = vmatpush.bf16.msra.mxu0 0
    %6555 = vmatpush.bf16.msra.mxu0 0
    %6556 = vmatpush.bf16.msra.mxu0 0
    %6557 = vmatpush.bf16.msra.mxu0 0
    %6558 = vmatpush.bf16.msra.mxu0 0
    %6559 = vmatpush.bf16.msra.mxu0 0
    %6560 = vmatpush.bf16.msra.mxu0 %v6441
    %6561 = vmatmul.bf16.gmra.mxu0 %v6419
    %v6562 = vpop.f32.mrf.mxu0
    %v6563 = vadd.f32 0.0, %v6562
    %v6564 = vpop.f32.mrf.mxu0
    %6565 = vdwg.mxu0
    %6566 = vmatpush.bf16.msra.mxu0 0
    %6567 = vmatpush.bf16.msra.mxu0 0
    %6568 = vmatpush.bf16.msra.mxu0 0
    %6569 = vmatpush.bf16.msra.mxu0 0
    %6570 = vmatpush.bf16.msra.mxu0 0
    %6571 = vmatpush.bf16.msra.mxu0 0
    %6572 = vmatpush.bf16.msra.mxu0 0
    %6573 = vmatpush.bf16.msra.mxu0 %v6443
    %6574 = vmatmul.bf16.gmra.mxu0 %v6419
    %v6575 = vpop.f32.mrf.mxu0
    %v6576 = vadd.f32 0.0, %v6575
    %v6577 = vpop.f32.mrf.mxu0
    %6578 = vdwg.mxu0
    %6579 = vmatpush.bf16.msra.mxu0 0
    %6580 = vmatpush.bf16.msra.mxu0 0
    %6581 = vmatpush.bf16.msra.mxu0 0
    %6582 = vmatpush.bf16.msra.mxu0 0
    %6583 = vmatpush.bf16.msra.mxu0 0
    %6584 = vmatpush.bf16.msra.mxu0 0
    %6585 = vmatpush.bf16.msra.mxu0 0
    %6586 = vmatpush.bf16.msra.mxu0 %v6445
    %6587 = vmatmul.bf16.gmra.mxu0 %v6419
    %v6588 = vpop.f32.mrf.mxu0
    %v6589 = vadd.f32 0.0, %v6588
    %v6590 = vpop.f32.mrf.mxu0
    %6591 = vdwg.mxu0
    %6592 = vmatpush.bf16.msra.mxu0 0
    %6593 = vmatpush.bf16.msra.mxu0 0
    %6594 = vmatpush.bf16.msra.mxu0 0
    %6595 = vmatpush.bf16.msra.mxu0 0
    %6596 = vmatpush.bf16.msra.mxu0 0
    %6597 = vmatpush.bf16.msra.mxu0 0
    %6598 = vmatpush.bf16.msra.mxu0 0
    %6599 = vmatpush.bf16.msra.mxu0 %v6447
    %6600 = vmatmul.bf16.gmra.mxu0 %v6419
    %v6601 = vpop.f32.mrf.mxu0
    %v6602 = vadd.f32 0.0, %v6601
    %v6603 = vpop.f32.mrf.mxu0
    %6604 = vdwg.mxu0
    %v6617 = vunpack.c.l.b16 %v6383
    %v6618 = vunpack.c.h.b16 %v6383
    %v6619 = vunpack.c.l.b16 %v6384
    %v6620 = vunpack.c.h.b16 %v6384
    %v6621 = vunpack.c.l.b16 %v6385
    %v6622 = vunpack.c.h.b16 %v6385
    %v6623 = vunpack.c.l.b16 %v6386
    %v6624 = vunpack.c.h.b16 %v6386
    %v6625 = vunpack.c.l.b16 %v6387
    %v6626 = vunpack.c.h.b16 %v6387
    %v6627 = vunpack.c.l.b16 %v6388
    %v6628 = vunpack.c.h.b16 %v6388
    %v6629 = vunpack.c.l.b16 %v6389
    %v6630 = vunpack.c.h.b16 %v6389
    %v6631 = vunpack.c.l.b16 %v6390
    %v6632 = vunpack.c.h.b16 %v6390
    %v6633 = vunpack.c.l.b16 %v6391
    %v6634 = vunpack.c.h.b16 %v6391
    %v6635 = vunpack.c.l.b16 %v6392
    %v6636 = vunpack.c.h.b16 %v6392
    %v6637 = vunpack.c.l.b16 %v6393
    %v6638 = vunpack.c.h.b16 %v6393
    %v6639 = vunpack.c.l.b16 %v6394
    %v6640 = vunpack.c.h.b16 %v6394
    %v6641 = vpack.c.b16 %v6629, %v6617
    %v6642 = vpack.c.b16 %v6630, %v6618
    %v6643 = vpack.c.b16 %v6631, %v6619
    %v6644 = vpack.c.b16 %v6632, %v6620
    %v6645 = vpack.c.b16 %v6633, %v6621
    %v6646 = vpack.c.b16 %v6634, %v6622
    %v6647 = vpack.c.b16 %v6635, %v6623
    %v6648 = vpack.c.b16 %v6636, %v6624
    %v6649 = vpack.c.b16 %v6637, %v6625
    %v6650 = vpack.c.b16 %v6638, %v6626
    %v6651 = vpack.c.b16 %v6639, %v6627
    %v6652 = vpack.c.b16 %v6640, %v6628
    %vm6653 = vcmask 80896
    %v6655 = vsel %vm6653, %v6382, 0
    %vm6657 = vcmask 1044480
    %v6659 = vsel %vm6657, %v6641, 0
    %v6662 = vsel %vm6657, %v6642, 0
    %v6665 = vsel %vm6657, %v6643, 0
    %v6668 = vsel %vm6657, %v6644, 0
    %v6671 = vsel %vm6657, %v6645, 0
    %v6674 = vsel %vm6657, %v6646, 0
    %v6677 = vsel %vm6657, %v6647, 0
    %v6680 = vsel %vm6657, %v6648, 0
    %v6683 = vsel %vm6657, %v6649, 0
    %v6686 = vsel %vm6657, %v6650, 0
    %v6689 = vsel %vm6657, %v6651, 0
    %v6692 = vsel %vm6657, %v6652, 0
    %6694 = vmatpush.bf16.msra.mxu0 0
    %6695 = vmatpush.bf16.msra.mxu0 0
    %6696 = vmatpush.bf16.msra.mxu0 0
    %6697 = vmatpush.bf16.msra.mxu0 0
    %6698 = vmatpush.bf16.msra.mxu0 0
    %6699 = vmatpush.bf16.msra.mxu0 0
    %6700 = vmatpush.bf16.msra.mxu0 0
    %6701 = vmatpush.bf16.msra.mxu0 %v6659
    %6702 = vmatmul.bf16.gmra.mxu0 %v6655
    %v6703 = vpop.f32.mrf.mxu0
    %v6704 = vadd.f32 %v6459, %v6703
    %v6705 = vpop.f32.mrf.mxu0
    %6706 = vdwg.mxu0
    %6707 = vmatpush.bf16.msra.mxu0 0
    %6708 = vmatpush.bf16.msra.mxu0 0
    %6709 = vmatpush.bf16.msra.mxu0 0
    %6710 = vmatpush.bf16.msra.mxu0 0
    %6711 = vmatpush.bf16.msra.mxu0 0
    %6712 = vmatpush.bf16.msra.mxu0 0
    %6713 = vmatpush.bf16.msra.mxu0 0
    %6714 = vmatpush.bf16.msra.mxu0 %v6662
    %6715 = vmatmul.bf16.gmra.mxu0 %v6655
    %v6716 = vpop.f32.mrf.mxu0
    %v6717 = vadd.f32 %v6472, %v6716
    %v6718 = vpop.f32.mrf.mxu0
    %6719 = vdwg.mxu0
    %6720 = vmatpush.bf16.msra.mxu0 0
    %6721 = vmatpush.bf16.msra.mxu0 0
    %6722 = vmatpush.bf16.msra.mxu0 0
    %6723 = vmatpush.bf16.msra.mxu0 0
    %6724 = vmatpush.bf16.msra.mxu0 0
    %6725 = vmatpush.bf16.msra.mxu0 0
    %6726 = vmatpush.bf16.msra.mxu0 0
    %6727 = vmatpush.bf16.msra.mxu0 %v6665
    %6728 = vmatmul.bf16.gmra.mxu0 %v6655
    %v6729 = vpop.f32.mrf.mxu0
    %v6730 = vadd.f32 %v6485, %v6729
    %v6731 = vpop.f32.mrf.mxu0
    %6732 = vdwg.mxu0
    %6733 = vmatpush.bf16.msra.mxu0 0
    %6734 = vmatpush.bf16.msra.mxu0 0
    %6735 = vmatpush.bf16.msra.mxu0 0
    %6736 = vmatpush.bf16.msra.mxu0 0
    %6737 = vmatpush.bf16.msra.mxu0 0
    %6738 = vmatpush.bf16.msra.mxu0 0
    %6739 = vmatpush.bf16.msra.mxu0 0
    %6740 = vmatpush.bf16.msra.mxu0 %v6668
    %6741 = vmatmul.bf16.gmra.mxu0 %v6655
    %v6742 = vpop.f32.mrf.mxu0
    %v6743 = vadd.f32 %v6498, %v6742
    %v6744 = vpop.f32.mrf.mxu0
    %6745 = vdwg.mxu0
    %6746 = vmatpush.bf16.msra.mxu0 0
    %6747 = vmatpush.bf16.msra.mxu0 0
    %6748 = vmatpush.bf16.msra.mxu0 0
    %6749 = vmatpush.bf16.msra.mxu0 0
    %6750 = vmatpush.bf16.msra.mxu0 0
    %6751 = vmatpush.bf16.msra.mxu0 0
    %6752 = vmatpush.bf16.msra.mxu0 0
    %6753 = vmatpush.bf16.msra.mxu0 %v6671
    %6754 = vmatmul.bf16.gmra.mxu0 %v6655
    %v6755 = vpop.f32.mrf.mxu0
    %v6756 = vadd.f32 %v6511, %v6755
    %v6757 = vpop.f32.mrf.mxu0
    %6758 = vdwg.mxu0
    %6759 = vmatpush.bf16.msra.mxu0 0
    %6760 = vmatpush.bf16.msra.mxu0 0
    %6761 = vmatpush.bf16.msra.mxu0 0
    %6762 = vmatpush.bf16.msra.mxu0 0
    %6763 = vmatpush.bf16.msra.mxu0 0
    %6764 = vmatpush.bf16.msra.mxu0 0
    %6765 = vmatpush.bf16.msra.mxu0 0
    %6766 = vmatpush.bf16.msra.mxu0 %v6674
    %6767 = vmatmul.bf16.gmra.mxu0 %v6655
    %v6768 = vpop.f32.mrf.mxu0
    %v6769 = vadd.f32 %v6524, %v6768
    %v6770 = vpop.f32.mrf.mxu0
    %6771 = vdwg.mxu0
    %6772 = vmatpush.bf16.msra.mxu0 0
    %6773 = vmatpush.bf16.msra.mxu0 0
    %6774 = vmatpush.bf16.msra.mxu0 0
    %6775 = vmatpush.bf16.msra.mxu0 0
    %6776 = vmatpush.bf16.msra.mxu0 0
    %6777 = vmatpush.bf16.msra.mxu0 0
    %6778 = vmatpush.bf16.msra.mxu0 0
    %6779 = vmatpush.bf16.msra.mxu0 %v6677
    %6780 = vmatmul.bf16.gmra.mxu0 %v6655
    %v6781 = vpop.f32.mrf.mxu0
    %v6782 = vadd.f32 %v6537, %v6781
    %v6783 = vpop.f32.mrf.mxu0
    %6784 = vdwg.mxu0
    %6785 = vmatpush.bf16.msra.mxu0 0
    %6786 = vmatpush.bf16.msra.mxu0 0
    %6787 = vmatpush.bf16.msra.mxu0 0
    %6788 = vmatpush.bf16.msra.mxu0 0
    %6789 = vmatpush.bf16.msra.mxu0 0
    %6790 = vmatpush.bf16.msra.mxu0 0
    %6791 = vmatpush.bf16.msra.mxu0 0
    %6792 = vmatpush.bf16.msra.mxu0 %v6680
    %6793 = vmatmul.bf16.gmra.mxu0 %v6655
    %v6794 = vpop.f32.mrf.mxu0
    %v6795 = vadd.f32 %v6550, %v6794
    %v6796 = vpop.f32.mrf.mxu0
    %6797 = vdwg.mxu0
    %6798 = vmatpush.bf16.msra.mxu0 0
    %6799 = vmatpush.bf16.msra.mxu0 0
    %6800 = vmatpush.bf16.msra.mxu0 0
    %6801 = vmatpush.bf16.msra.mxu0 0
    %6802 = vmatpush.bf16.msra.mxu0 0
    %6803 = vmatpush.bf16.msra.mxu0 0
    %6804 = vmatpush.bf16.msra.mxu0 0
    %6805 = vmatpush.bf16.msra.mxu0 %v6683
    %6806 = vmatmul.bf16.gmra.mxu0 %v6655
    %v6807 = vpop.f32.mrf.mxu0
    %v6808 = vadd.f32 %v6563, %v6807
    %v6809 = vpop.f32.mrf.mxu0
    %6810 = vdwg.mxu0
    %6811 = vmatpush.bf16.msra.mxu0 0
    %6812 = vmatpush.bf16.msra.mxu0 0
    %6813 = vmatpush.bf16.msra.mxu0 0
    %6814 = vmatpush.bf16.msra.mxu0 0
    %6815 = vmatpush.bf16.msra.mxu0 0
    %6816 = vmatpush.bf16.msra.mxu0 0
    %6817 = vmatpush.bf16.msra.mxu0 0
    %6818 = vmatpush.bf16.msra.mxu0 %v6686
    %6819 = vmatmul.bf16.gmra.mxu0 %v6655
    %v6820 = vpop.f32.mrf.mxu0
    %v6821 = vadd.f32 %v6576, %v6820
    %v6822 = vpop.f32.mrf.mxu0
    %6823 = vdwg.mxu0
    %6824 = vmatpush.bf16.msra.mxu0 0
    %6825 = vmatpush.bf16.msra.mxu0 0
    %6826 = vmatpush.bf16.msra.mxu0 0
    %6827 = vmatpush.bf16.msra.mxu0 0
    %6828 = vmatpush.bf16.msra.mxu0 0
    %6829 = vmatpush.bf16.msra.mxu0 0
    %6830 = vmatpush.bf16.msra.mxu0 0
    %6831 = vmatpush.bf16.msra.mxu0 %v6689
    %6832 = vmatmul.bf16.gmra.mxu0 %v6655
    %v6833 = vpop.f32.mrf.mxu0
    %v6834 = vadd.f32 %v6589, %v6833
    %v6835 = vpop.f32.mrf.mxu0
    %6836 = vdwg.mxu0
    %6837 = vmatpush.bf16.msra.mxu0 0
    %6838 = vmatpush.bf16.msra.mxu0 0
    %6839 = vmatpush.bf16.msra.mxu0 0
    %6840 = vmatpush.bf16.msra.mxu0 0
    %6841 = vmatpush.bf16.msra.mxu0 0
    %6842 = vmatpush.bf16.msra.mxu0 0
    %6843 = vmatpush.bf16.msra.mxu0 0
    %6844 = vmatpush.bf16.msra.mxu0 %v6692
    %6845 = vmatmul.bf16.gmra.mxu0 %v6655
    %v6846 = vpop.f32.mrf.mxu0
    %v6847 = vadd.f32 %v6602, %v6846
    %v6848 = vpop.f32.mrf.mxu0
    %6849 = vdwg.mxu0
    %s6850 = scalar_lea.vmem %s7, 24
    %v6851 = vld [vmem:[%s6850] sm:$0xff]
    %v6852 = vld [vmem:[%s6850 + $0x8] sm:$0xff]
    %v6853 = vld [vmem:[%s6850 + $0x10] sm:$0xff]
    %6855 = vst [vmem:[#allocation1] ss:$4 sm:$0xff] %v6851
    %s6857 = scalar_lea.vmem [#allocation1], 32
    %6858 = vst [vmem:[%s6857] ss:$4 sm:$0xff] %v6852
    %v6859 = vld.sshfl [vmem:[#allocation1] sm:$0xff pattern:$0x73625140]
    %v6860 = vld.sshfl [vmem:[#allocation1 + $0x8] sm:$0xff pattern:$0x73625140]
    %v6861 = vld.sshfl [vmem:[#allocation1 + $0x10] sm:$0xff pattern:$0x73625140]
    %v6862 = vld.sshfl [vmem:[#allocation1 + $0x18] sm:$0xff pattern:$0x73625140]
    %v6863 = vld.sshfl [vmem:[#allocation1 + $0x20] sm:$0xff pattern:$0x73625140]
    %v6864 = vld.sshfl [vmem:[#allocation1 + $0x28] sm:$0xff pattern:$0x73625140]
    %v6865 = vld.sshfl [vmem:[#allocation1 + $0x30] sm:$0xff pattern:$0x73625140]
    %v6866 = vld.sshfl [vmem:[#allocation1 + $0x38] sm:$0xff pattern:$0x73625140]
    %6868 = vst [vmem:[#allocation1] ss:$4 sm:$0xff] %v6853
    %v6869 = vld.sshfl [vmem:[#allocation1] sm:$0xff pattern:$0x73625140]
    %v6870 = vld.sshfl [vmem:[#allocation1 + $0x8] sm:$0xff pattern:$0x73625140]
    %v6871 = vld.sshfl [vmem:[#allocation1 + $0x10] sm:$0xff pattern:$0x73625140]
    %v6872 = vld.sshfl [vmem:[#allocation1 + $0x18] sm:$0xff pattern:$0x73625140]
    %v6874 = vsel %vm6417, %v5831, 0
    %v6876 = vand.u32 %v6859, %v6424
    %v6878 = vand.u32 %v6860, %v6424
    %v6880 = vand.u32 %v6861, %v6424
    %v6882 = vand.u32 %v6862, %v6424
    %v6884 = vand.u32 %v6863, %v6424
    %v6886 = vand.u32 %v6864, %v6424
    %v6888 = vand.u32 %v6865, %v6424
    %v6890 = vand.u32 %v6866, %v6424
    %v6892 = vand.u32 %v6869, %v6424
    %v6894 = vand.u32 %v6870, %v6424
    %v6896 = vand.u32 %v6871, %v6424
    %v6898 = vand.u32 %v6872, %v6424
    %6900 = vmatpush.bf16.msra.mxu0 0
    %6901 = vmatpush.bf16.msra.mxu0 0
    %6902 = vmatpush.bf16.msra.mxu0 0
    %6903 = vmatpush.bf16.msra.mxu0 0
    %6904 = vmatpush.bf16.msra.mxu0 0
    %6905 = vmatpush.bf16.msra.mxu0 0
    %6906 = vmatpush.bf16.msra.mxu0 0
    %6907 = vmatpush.bf16.msra.mxu0 %v6876
    %6908 = vmatmul.bf16.gmra.mxu0 %v6874
    %v6909 = vpop.f32.mrf.mxu0
    %v6910 = vadd.f32 0.0, %v6909
    %v6911 = vpop.f32.mrf.mxu0
    %6912 = vdwg.mxu0
    %6913 = vmatpush.bf16.msra.mxu0 0
    %6914 = vmatpush.bf16.msra.mxu0 0
    %6915 = vmatpush.bf16.msra.mxu0 0
    %6916 = vmatpush.bf16.msra.mxu0 0
    %6917 = vmatpush.bf16.msra.mxu0 0
    %6918 = vmatpush.bf16.msra.mxu0 0
    %6919 = vmatpush.bf16.msra.mxu0 0
    %6920 = vmatpush.bf16.msra.mxu0 %v6878
    %6921 = vmatmul.bf16.gmra.mxu0 %v6874
    %v6922 = vpop.f32.mrf.mxu0
    %v6923 = vadd.f32 0.0, %v6922
    %v6924 = vpop.f32.mrf.mxu0
    %6925 = vdwg.mxu0
    %6926 = vmatpush.bf16.msra.mxu0 0
    %6927 = vmatpush.bf16.msra.mxu0 0
    %6928 = vmatpush.bf16.msra.mxu0 0
    %6929 = vmatpush.bf16.msra.mxu0 0
    %6930 = vmatpush.bf16.msra.mxu0 0
    %6931 = vmatpush.bf16.msra.mxu0 0
    %6932 = vmatpush.bf16.msra.mxu0 0
    %6933 = vmatpush.bf16.msra.mxu0 %v6880
    %6934 = vmatmul.bf16.gmra.mxu0 %v6874
    %v6935 = vpop.f32.mrf.mxu0
    %v6936 = vadd.f32 0.0, %v6935
    %v6937 = vpop.f32.mrf.mxu0
    %6938 = vdwg.mxu0
    %6939 = vmatpush.bf16.msra.mxu0 0
    %6940 = vmatpush.bf16.msra.mxu0 0
    %6941 = vmatpush.bf16.msra.mxu0 0
    %6942 = vmatpush.bf16.msra.mxu0 0
    %6943 = vmatpush.bf16.msra.mxu0 0
    %6944 = vmatpush.bf16.msra.mxu0 0
    %6945 = vmatpush.bf16.msra.mxu0 0
    %6946 = vmatpush.bf16.msra.mxu0 %v6882
    %6947 = vmatmul.bf16.gmra.mxu0 %v6874
    %v6948 = vpop.f32.mrf.mxu0
    %v6949 = vadd.f32 0.0, %v6948
    %v6950 = vpop.f32.mrf.mxu0
    %6951 = vdwg.mxu0
    %6952 = vmatpush.bf16.msra.mxu0 0
    %6953 = vmatpush.bf16.msra.mxu0 0
    %6954 = vmatpush.bf16.msra.mxu0 0
    %6955 = vmatpush.bf16.msra.mxu0 0
    %6956 = vmatpush.bf16.msra.mxu0 0
    %6957 = vmatpush.bf16.msra.mxu0 0
    %6958 = vmatpush.bf16.msra.mxu0 0
    %6959 = vmatpush.bf16.msra.mxu0 %v6884
    %6960 = vmatmul.bf16.gmra.mxu0 %v6874
    %v6961 = vpop.f32.mrf.mxu0
    %v6962 = vadd.f32 0.0, %v6961
    %v6963 = vpop.f32.mrf.mxu0
    %6964 = vdwg.mxu0
    %6965 = vmatpush.bf16.msra.mxu0 0
    %6966 = vmatpush.bf16.msra.mxu0 0
    %6967 = vmatpush.bf16.msra.mxu0 0
    %6968 = vmatpush.bf16.msra.mxu0 0
    %6969 = vmatpush.bf16.msra.mxu0 0
    %6970 = vmatpush.bf16.msra.mxu0 0
    %6971 = vmatpush.bf16.msra.mxu0 0
    %6972 = vmatpush.bf16.msra.mxu0 %v6886
    %6973 = vmatmul.bf16.gmra.mxu0 %v6874
    %v6974 = vpop.f32.mrf.mxu0
    %v6975 = vadd.f32 0.0, %v6974
    %v6976 = vpop.f32.mrf.mxu0
    %6977 = vdwg.mxu0
    %6978 = vmatpush.bf16.msra.mxu0 0
    %6979 = vmatpush.bf16.msra.mxu0 0
    %6980 = vmatpush.bf16.msra.mxu0 0
    %6981 = vmatpush.bf16.msra.mxu0 0
    %6982 = vmatpush.bf16.msra.mxu0 0
    %6983 = vmatpush.bf16.msra.mxu0 0
    %6984 = vmatpush.bf16.msra.mxu0 0
    %6985 = vmatpush.bf16.msra.mxu0 %v6888
    %6986 = vmatmul.bf16.gmra.mxu0 %v6874
    %v6987 = vpop.f32.mrf.mxu0
    %v6988 = vadd.f32 0.0, %v6987
    %v6989 = vpop.f32.mrf.mxu0
    %6990 = vdwg.mxu0
    %6991 = vmatpush.bf16.msra.mxu0 0
    %6992 = vmatpush.bf16.msra.mxu0 0
    %6993 = vmatpush.bf16.msra.mxu0 0
    %6994 = vmatpush.bf16.msra.mxu0 0
    %6995 = vmatpush.bf16.msra.mxu0 0
    %6996 = vmatpush.bf16.msra.mxu0 0
    %6997 = vmatpush.bf16.msra.mxu0 0
    %6998 = vmatpush.bf16.msra.mxu0 %v6890
    %6999 = vmatmul.bf16.gmra.mxu0 %v6874
    %v7000 = vpop.f32.mrf.mxu0
    %v7001 = vadd.f32 0.0, %v7000
    %v7002 = vpop.f32.mrf.mxu0
    %7003 = vdwg.mxu0
    %7004 = vmatpush.bf16.msra.mxu0 0
    %7005 = vmatpush.bf16.msra.mxu0 0
    %7006 = vmatpush.bf16.msra.mxu0 0
    %7007 = vmatpush.bf16.msra.mxu0 0
    %7008 = vmatpush.bf16.msra.mxu0 0
    %7009 = vmatpush.bf16.msra.mxu0 0
    %7010 = vmatpush.bf16.msra.mxu0 0
    %7011 = vmatpush.bf16.msra.mxu0 %v6892
    %7012 = vmatmul.bf16.gmra.mxu0 %v6874
    %v7013 = vpop.f32.mrf.mxu0
    %v7014 = vadd.f32 0.0, %v7013
    %v7015 = vpop.f32.mrf.mxu0
    %7016 = vdwg.mxu0
    %7017 = vmatpush.bf16.msra.mxu0 0
    %7018 = vmatpush.bf16.msra.mxu0 0
    %7019 = vmatpush.bf16.msra.mxu0 0
    %7020 = vmatpush.bf16.msra.mxu0 0
    %7021 = vmatpush.bf16.msra.mxu0 0
    %7022 = vmatpush.bf16.msra.mxu0 0
    %7023 = vmatpush.bf16.msra.mxu0 0
    %7024 = vmatpush.bf16.msra.mxu0 %v6894
    %7025 = vmatmul.bf16.gmra.mxu0 %v6874
    %v7026 = vpop.f32.mrf.mxu0
    %v7027 = vadd.f32 0.0, %v7026
    %v7028 = vpop.f32.mrf.mxu0
    %7029 = vdwg.mxu0
    %7030 = vmatpush.bf16.msra.mxu0 0
    %7031 = vmatpush.bf16.msra.mxu0 0
    %7032 = vmatpush.bf16.msra.mxu0 0
    %7033 = vmatpush.bf16.msra.mxu0 0
    %7034 = vmatpush.bf16.msra.mxu0 0
    %7035 = vmatpush.bf16.msra.mxu0 0
    %7036 = vmatpush.bf16.msra.mxu0 0
    %7037 = vmatpush.bf16.msra.mxu0 %v6896
    %7038 = vmatmul.bf16.gmra.mxu0 %v6874
    %v7039 = vpop.f32.mrf.mxu0
    %v7040 = vadd.f32 0.0, %v7039
    %v7041 = vpop.f32.mrf.mxu0
    %7042 = vdwg.mxu0
    %7043 = vmatpush.bf16.msra.mxu0 0
    %7044 = vmatpush.bf16.msra.mxu0 0
    %7045 = vmatpush.bf16.msra.mxu0 0
    %7046 = vmatpush.bf16.msra.mxu0 0
    %7047 = vmatpush.bf16.msra.mxu0 0
    %7048 = vmatpush.bf16.msra.mxu0 0
    %7049 = vmatpush.bf16.msra.mxu0 0
    %7050 = vmatpush.bf16.msra.mxu0 %v6898
    %7051 = vmatmul.bf16.gmra.mxu0 %v6874
    %v7052 = vpop.f32.mrf.mxu0
    %v7053 = vadd.f32 0.0, %v7052
    %v7054 = vpop.f32.mrf.mxu0
    %7055 = vdwg.mxu0
    %v7056 = vadd.f32 %v6704, %v6910
    %v7057 = vadd.f32 %v6717, %v6923
    %v7058 = vadd.f32 %v6730, %v6936
    %v7059 = vadd.f32 %v6743, %v6949
    %v7060 = vadd.f32 %v6756, %v6962
    %v7061 = vadd.f32 %v6769, %v6975
    %v7062 = vadd.f32 %v6782, %v6988
    %v7063 = vadd.f32 %v6795, %v7001
    %v7064 = vadd.f32 %v6808, %v7014
    %v7065 = vadd.f32 %v6821, %v7027
    %v7066 = vadd.f32 %v6834, %v7040
    %v7067 = vadd.f32 %v6847, %v7053
    %s7068 = scalar_lea.vmem %s7, 48
    %v7069 = vld [vmem:[%s7068] sm:$0xff]
    %v7070 = vld [vmem:[%s7068 + $0x8] sm:$0xff]
    %v7071 = vld [vmem:[%s7068 + $0x10] sm:$0xff]
    %7073 = vst [vmem:[#allocation1] ss:$4 sm:$0xff] %v7069
    %s7075 = scalar_lea.vmem [#allocation1], 32
    %7076 = vst [vmem:[%s7075] ss:$4 sm:$0xff] %v7070
    %v7077 = vld.sshfl [vmem:[#allocation1] sm:$0xff pattern:$0x73625140]
    %v7078 = vld.sshfl [vmem:[#allocation1 + $0x8] sm:$0xff pattern:$0x73625140]
    %v7079 = vld.sshfl [vmem:[#allocation1 + $0x10] sm:$0xff pattern:$0x73625140]
    %v7080 = vld.sshfl [vmem:[#allocation1 + $0x18] sm:$0xff pattern:$0x73625140]
    %v7081 = vld.sshfl [vmem:[#allocation1 + $0x20] sm:$0xff pattern:$0x73625140]
    %v7082 = vld.sshfl [vmem:[#allocation1 + $0x28] sm:$0xff pattern:$0x73625140]
    %v7083 = vld.sshfl [vmem:[#allocation1 + $0x30] sm:$0xff pattern:$0x73625140]
    %v7084 = vld.sshfl [vmem:[#allocation1 + $0x38] sm:$0xff pattern:$0x73625140]
    %7086 = vst [vmem:[#allocation1] ss:$4 sm:$0xff] %v7071
    %v7087 = vld.sshfl [vmem:[#allocation1] sm:$0xff pattern:$0x73625140]
    %v7088 = vld.sshfl [vmem:[#allocation1 + $0x8] sm:$0xff pattern:$0x73625140]
    %v7089 = vld.sshfl [vmem:[#allocation1 + $0x10] sm:$0xff pattern:$0x73625140]
    %v7090 = vld.sshfl [vmem:[#allocation1 + $0x18] sm:$0xff pattern:$0x73625140]
    %v7092 = vsel %vm6417, %v6381, 0
    %v7094 = vand.u32 %v7077, %v6424
    %v7096 = vand.u32 %v7078, %v6424
    %v7098 = vand.u32 %v7079, %v6424
    %v7100 = vand.u32 %v7080, %v6424
    %v7102 = vand.u32 %v7081, %v6424
    %v7104 = vand.u32 %v7082, %v6424
    %v7106 = vand.u32 %v7083, %v6424
    %v7108 = vand.u32 %v7084, %v6424
    %v7110 = vand.u32 %v7087, %v6424
    %v7112 = vand.u32 %v7088, %v6424
    %v7114 = vand.u32 %v7089, %v6424
    %v7116 = vand.u32 %v7090, %v6424
    %7118 = vmatpush.bf16.msra.mxu0 0
    %7119 = vmatpush.bf16.msra.mxu0 0
    %7120 = vmatpush.bf16.msra.mxu0 0
    %7121 = vmatpush.bf16.msra.mxu0 0
    %7122 = vmatpush.bf16.msra.mxu0 0
    %7123 = vmatpush.bf16.msra.mxu0 0
    %7124 = vmatpush.bf16.msra.mxu0 0
    %7125 = vmatpush.bf16.msra.mxu0 %v7094
    %7126 = vmatmul.bf16.gmra.mxu0 %v7092
    %v7127 = vpop.f32.mrf.mxu0
    %v7128 = vadd.f32 0.0, %v7127
    %v7129 = vpop.f32.mrf.mxu0
    %7130 = vdwg.mxu0
    %7131 = vmatpush.bf16.msra.mxu0 0
    %7132 = vmatpush.bf16.msra.mxu0 0
    %7133 = vmatpush.bf16.msra.mxu0 0
    %7134 = vmatpush.bf16.msra.mxu0 0
    %7135 = vmatpush.bf16.msra.mxu0 0
    %7136 = vmatpush.bf16.msra.mxu0 0
    %7137 = vmatpush.bf16.msra.mxu0 0
    %7138 = vmatpush.bf16.msra.mxu0 %v7096
    %7139 = vmatmul.bf16.gmra.mxu0 %v7092
    %v7140 = vpop.f32.mrf.mxu0
    %v7141 = vadd.f32 0.0, %v7140
    %v7142 = vpop.f32.mrf.mxu0
    %7143 = vdwg.mxu0
    %7144 = vmatpush.bf16.msra.mxu0 0
    %7145 = vmatpush.bf16.msra.mxu0 0
    %7146 = vmatpush.bf16.msra.mxu0 0
    %7147 = vmatpush.bf16.msra.mxu0 0
    %7148 = vmatpush.bf16.msra.mxu0 0
    %7149 = vmatpush.bf16.msra.mxu0 0
    %7150 = vmatpush.bf16.msra.mxu0 0
    %7151 = vmatpush.bf16.msra.mxu0 %v7098
    %7152 = vmatmul.bf16.gmra.mxu0 %v7092
    %v7153 = vpop.f32.mrf.mxu0
    %v7154 = vadd.f32 0.0, %v7153
    %v7155 = vpop.f32.mrf.mxu0
    %7156 = vdwg.mxu0
    %7157 = vmatpush.bf16.msra.mxu0 0
    %7158 = vmatpush.bf16.msra.mxu0 0
    %7159 = vmatpush.bf16.msra.mxu0 0
    %7160 = vmatpush.bf16.msra.mxu0 0
    %7161 = vmatpush.bf16.msra.mxu0 0
    %7162 = vmatpush.bf16.msra.mxu0 0
    %7163 = vmatpush.bf16.msra.mxu0 0
    %7164 = vmatpush.bf16.msra.mxu0 %v7100
    %7165 = vmatmul.bf16.gmra.mxu0 %v7092
    %v7166 = vpop.f32.mrf.mxu0
    %v7167 = vadd.f32 0.0, %v7166
    %v7168 = vpop.f32.mrf.mxu0
    %7169 = vdwg.mxu0
    %7170 = vmatpush.bf16.msra.mxu0 0
    %7171 = vmatpush.bf16.msra.mxu0 0
    %7172 = vmatpush.bf16.msra.mxu0 0
    %7173 = vmatpush.bf16.msra.mxu0 0
    %7174 = vmatpush.bf16.msra.mxu0 0
    %7175 = vmatpush.bf16.msra.mxu0 0
    %7176 = vmatpush.bf16.msra.mxu0 0
    %7177 = vmatpush.bf16.msra.mxu0 %v7102
    %7178 = vmatmul.bf16.gmra.mxu0 %v7092
    %v7179 = vpop.f32.mrf.mxu0
    %v7180 = vadd.f32 0.0, %v7179
    %v7181 = vpop.f32.mrf.mxu0
    %7182 = vdwg.mxu0
    %7183 = vmatpush.bf16.msra.mxu0 0
    %7184 = vmatpush.bf16.msra.mxu0 0
    %7185 = vmatpush.bf16.msra.mxu0 0
    %7186 = vmatpush.bf16.msra.mxu0 0
    %7187 = vmatpush.bf16.msra.mxu0 0
    %7188 = vmatpush.bf16.msra.mxu0 0
    %7189 = vmatpush.bf16.msra.mxu0 0
    %7190 = vmatpush.bf16.msra.mxu0 %v7104
    %7191 = vmatmul.bf16.gmra.mxu0 %v7092
    %v7192 = vpop.f32.mrf.mxu0
    %v7193 = vadd.f32 0.0, %v7192
    %v7194 = vpop.f32.mrf.mxu0
    %7195 = vdwg.mxu0
    %7196 = vmatpush.bf16.msra.mxu0 0
    %7197 = vmatpush.bf16.msra.mxu0 0
    %7198 = vmatpush.bf16.msra.mxu0 0
    %7199 = vmatpush.bf16.msra.mxu0 0
    %7200 = vmatpush.bf16.msra.mxu0 0
    %7201 = vmatpush.bf16.msra.mxu0 0
    %7202 = vmatpush.bf16.msra.mxu0 0
    %7203 = vmatpush.bf16.msra.mxu0 %v7106
    %7204 = vmatmul.bf16.gmra.mxu0 %v7092
    %v7205 = vpop.f32.mrf.mxu0
    %v7206 = vadd.f32 0.0, %v7205
    %v7207 = vpop.f32.mrf.mxu0
    %7208 = vdwg.mxu0
    %7209 = vmatpush.bf16.msra.mxu0 0
    %7210 = vmatpush.bf16.msra.mxu0 0
    %7211 = vmatpush.bf16.msra.mxu0 0
    %7212 = vmatpush.bf16.msra.mxu0 0
    %7213 = vmatpush.bf16.msra.mxu0 0
    %7214 = vmatpush.bf16.msra.mxu0 0
    %7215 = vmatpush.bf16.msra.mxu0 0
    %7216 = vmatpush.bf16.msra.mxu0 %v7108
    %7217 = vmatmul.bf16.gmra.mxu0 %v7092
    %v7218 = vpop.f32.mrf.mxu0
    %v7219 = vadd.f32 0.0, %v7218
    %v7220 = vpop.f32.mrf.mxu0
    %7221 = vdwg.mxu0
    %7222 = vmatpush.bf16.msra.mxu0 0
    %7223 = vmatpush.bf16.msra.mxu0 0
    %7224 = vmatpush.bf16.msra.mxu0 0
    %7225 = vmatpush.bf16.msra.mxu0 0
    %7226 = vmatpush.bf16.msra.mxu0 0
    %7227 = vmatpush.bf16.msra.mxu0 0
    %7228 = vmatpush.bf16.msra.mxu0 0
    %7229 = vmatpush.bf16.msra.mxu0 %v7110
    %7230 = vmatmul.bf16.gmra.mxu0 %v7092
    %v7231 = vpop.f32.mrf.mxu0
    %v7232 = vadd.f32 0.0, %v7231
    %v7233 = vpop.f32.mrf.mxu0
    %7234 = vdwg.mxu0
    %7235 = vmatpush.bf16.msra.mxu0 0
    %7236 = vmatpush.bf16.msra.mxu0 0
    %7237 = vmatpush.bf16.msra.mxu0 0
    %7238 = vmatpush.bf16.msra.mxu0 0
    %7239 = vmatpush.bf16.msra.mxu0 0
    %7240 = vmatpush.bf16.msra.mxu0 0
    %7241 = vmatpush.bf16.msra.mxu0 0
    %7242 = vmatpush.bf16.msra.mxu0 %v7112
    %7243 = vmatmul.bf16.gmra.mxu0 %v7092
    %v7244 = vpop.f32.mrf.mxu0
    %v7245 = vadd.f32 0.0, %v7244
    %v7246 = vpop.f32.mrf.mxu0
    %7247 = vdwg.mxu0
    %7248 = vmatpush.bf16.msra.mxu0 0
    %7249 = vmatpush.bf16.msra.mxu0 0
    %7250 = vmatpush.bf16.msra.mxu0 0
    %7251 = vmatpush.bf16.msra.mxu0 0
    %7252 = vmatpush.bf16.msra.mxu0 0
    %7253 = vmatpush.bf16.msra.mxu0 0
    %7254 = vmatpush.bf16.msra.mxu0 0
    %7255 = vmatpush.bf16.msra.mxu0 %v7114
    %7256 = vmatmul.bf16.gmra.mxu0 %v7092
    %v7257 = vpop.f32.mrf.mxu0
    %v7258 = vadd.f32 0.0, %v7257
    %v7259 = vpop.f32.mrf.mxu0
    %7260 = vdwg.mxu0
    %7261 = vmatpush.bf16.msra.mxu0 0
    %7262 = vmatpush.bf16.msra.mxu0 0
    %7263 = vmatpush.bf16.msra.mxu0 0
    %7264 = vmatpush.bf16.msra.mxu0 0
    %7265 = vmatpush.bf16.msra.mxu0 0
    %7266 = vmatpush.bf16.msra.mxu0 0
    %7267 = vmatpush.bf16.msra.mxu0 0
    %7268 = vmatpush.bf16.msra.mxu0 %v7116
    %7269 = vmatmul.bf16.gmra.mxu0 %v7092
    %v7270 = vpop.f32.mrf.mxu0
    %v7271 = vadd.f32 0.0, %v7270
    %v7272 = vpop.f32.mrf.mxu0
    %7273 = vdwg.mxu0
    %v7274 = vadd.f32 %v7056, %v7128
    %v7275 = vadd.f32 %v7057, %v7141
    %v7276 = vadd.f32 %v7058, %v7154
    %v7277 = vadd.f32 %v7059, %v7167
    %v7278 = vadd.f32 %v7060, %v7180
    %v7279 = vadd.f32 %v7061, %v7193
    %v7280 = vadd.f32 %v7062, %v7206
    %v7281 = vadd.f32 %v7063, %v7219
    %v7282 = vadd.f32 %v7064, %v7232
    %v7283 = vadd.f32 %v7065, %v7245
    %v7284 = vadd.f32 %v7066, %v7258
    %v7285 = vadd.f32 %v7067, %v7271
    %v7286 = vld [vmem:[%s8] sm:$0xff]
    %v7287 = vld [vmem:[%s8 + $0x8] sm:$0xf]
    %v7290 = vperm.slane %v7286, 0
    %v7291 = vperm.slane %v7286, 1
    %v7292 = vperm.slane %v7286, 2
    %v7293 = vperm.slane %v7286, 3
    %v7294 = vperm.slane %v7286, 4
    %v7295 = vperm.slane %v7286, 5
    %v7296 = vperm.slane %v7286, 6
    %v7297 = vperm.slane %v7286, 7
    %v7298 = vperm.slane %v7287, 0
    %v7299 = vperm.slane %v7287, 1
    %v7300 = vperm.slane %v7287, 2
    %v7301 = vperm.slane %v7287, 3
    %v7314 = vadd.f32 %v7274, %v7290
    %v7315 = vadd.f32 %v7275, %v7291
    %v7316 = vadd.f32 %v7276, %v7292
    %v7317 = vadd.f32 %v7277, %v7293
    %v7318 = vadd.f32 %v7278, %v7294
    %v7319 = vadd.f32 %v7279, %v7295
    %v7320 = vadd.f32 %v7280, %v7296
    %v7321 = vadd.f32 %v7281, %v7297
    %v7322 = vadd.f32 %v7282, %v7298
    %v7323 = vadd.f32 %v7283, %v7299
    %v7324 = vadd.f32 %v7284, %v7300
    %v7325 = vadd.f32 %v7285, %v7301
    %v7326 = vmax.f32 %v7314, 0.0
    %v7327 = vmax.f32 %v7315, 0.0
    %v7328 = vmax.f32 %v7316, 0.0
    %v7329 = vmax.f32 %v7317, 0.0
    %v7330 = vmax.f32 %v7318, 0.0
    %v7331 = vmax.f32 %v7319, 0.0
    %v7332 = vmax.f32 %v7320, 0.0
    %v7333 = vmax.f32 %v7321, 0.0
    %v7334 = vmax.f32 %v7322, 0.0
    %v7335 = vmax.f32 %v7323, 0.0
    %v7336 = vmax.f32 %v7324, 0.0
    %v7337 = vmax.f32 %v7325, 0.0
    %v7338 = vpack.c.bf16 %v7327, %v7326
    %v7339 = vpack.c.bf16 %v7329, %v7328
    %v7340 = vpack.c.bf16 %v7331, %v7330
    %v7341 = vpack.c.bf16 %v7333, %v7332
    %v7342 = vpack.c.bf16 %v7335, %v7334
    %v7343 = vpack.c.bf16 %v7337, %v7336
    %v7344 = vld [vmem:[%s9] sm:$0xff]
    %v7345 = vld [vmem:[%s9 + $0x8] sm:$0xff]
    %v7346 = vld [vmem:[%s9 + $0x10] sm:$0xff]
    %v7347 = vld [vmem:[%s9 + $0x18] sm:$0xf]
    %v7348 = vld [vmem:[%s9 + $0x1c] sm:$0xff]
    %v7349 = vld [vmem:[%s9 + $0x24] sm:$0xff]
    %v7350 = vld [vmem:[%s9 + $0x2c] sm:$0xff]
    %v7351 = vld [vmem:[%s9 + $0x34] sm:$0xf]
    %v7352 = vld [vmem:[%s9 + $0x38] sm:$0xff]
    %v7353 = vld [vmem:[%s9 + $0x40] sm:$0xff]
    %v7354 = vld [vmem:[%s9 + $0x48] sm:$0xff]
    %v7355 = vld [vmem:[%s9 + $0x50] sm:$0xf]
    %v7356 = vld [vmem:[%s9 + $0x54] sm:$0xff]
    %v7357 = vld [vmem:[%s9 + $0x5c] sm:$0xff]
    %v7358 = vld [vmem:[%s9 + $0x64] sm:$0xff]
    %v7359 = vld [vmem:[%s9 + $0x6c] sm:$0xf]
    %v7360 = vld [vmem:[%s9 + $0x70] sm:$0xff]
    %v7361 = vld [vmem:[%s9 + $0x78] sm:$0xff]
    %v7362 = vld [vmem:[%s9 + $0x80] sm:$0xff]
    %v7363 = vld [vmem:[%s9 + $0x88] sm:$0xf]
    %v7364 = vld [vmem:[%s9 + $0x8c] sm:$0xff]
    %v7365 = vld [vmem:[%s9 + $0x94] sm:$0xff]
    %v7366 = vld [vmem:[%s9 + $0x9c] sm:$0xff]
    %v7367 = vld [vmem:[%s9 + $0xa4] sm:$0xf]
    %v7368 = vld [vmem:[%s9 + $0xa8] sm:$0xff]
    %v7369 = vld [vmem:[%s9 + $0xb0] sm:$0xff]
    %v7370 = vld [vmem:[%s9 + $0xb8] sm:$0xff]
    %v7371 = vld [vmem:[%s9 + $0xc0] sm:$0xf]
    %v7372 = vld [vmem:[%s9 + $0xc4] sm:$0xff]
    %v7373 = vld [vmem:[%s9 + $0xcc] sm:$0xff]
    %v7374 = vld [vmem:[%s9 + $0xd4] sm:$0xff]
    %v7375 = vld [vmem:[%s9 + $0xdc] sm:$0xf]
    %v7376 = vld [vmem:[%s9 + $0xe0] sm:$0xff]
    %v7377 = vld [vmem:[%s9 + $0xe8] sm:$0xff]
    %v7378 = vld [vmem:[%s9 + $0xf0] sm:$0xff]
    %v7379 = vld [vmem:[%s9 + $0xf8] sm:$0xf]
    %v7380 = vld [vmem:[%s9 + $0xfc] sm:$0xff]
    %v7381 = vld [vmem:[%s9 + $0x104] sm:$0xff]
    %v7382 = vld [vmem:[%s9 + $0x10c] sm:$0xff]
    %v7383 = vld [vmem:[%s9 + $0x114] sm:$0xf]
    %v7384 = vld [vmem:[%s9 + $0x118] sm:$0xff]
    %v7385 = vld [vmem:[%s9 + $0x120] sm:$0xff]
    %v7386 = vld [vmem:[%s9 + $0x128] sm:$0xff]
    %v7387 = vld [vmem:[%s9 + $0x130] sm:$0xf]
    %v7388 = vld [vmem:[%s9 + $0x134] sm:$0xff]
    %v7389 = vld [vmem:[%s9 + $0x13c] sm:$0xff]
    %v7390 = vld [vmem:[%s9 + $0x144] sm:$0xff]
    %v7391 = vld [vmem:[%s9 + $0x14c] sm:$0xf]
    %v7392 = vld [vmem:[%s9 + $0x150] sm:$0xff]
    %v7393 = vld [vmem:[%s9 + $0x158] sm:$0xff]
    %v7394 = vld [vmem:[%s9 + $0x160] sm:$0xff]
    %v7395 = vld [vmem:[%s9 + $0x168] sm:$0xf]
    %v7396 = vld [vmem:[%s9 + $0x16c] sm:$0xff]
    %v7397 = vld [vmem:[%s9 + $0x174] sm:$0xff]
    %v7398 = vld [vmem:[%s9 + $0x17c] sm:$0xff]
    %v7399 = vld [vmem:[%s9 + $0x184] sm:$0xf]
    %v7400 = vld [vmem:[%s9 + $0x188] sm:$0xff]
    %v7401 = vld [vmem:[%s9 + $0x190] sm:$0xff]
    %v7402 = vld [vmem:[%s9 + $0x198] sm:$0xff]
    %v7403 = vld [vmem:[%s9 + $0x1a0] sm:$0xf]
    %v7404 = vld [vmem:[%s9 + $0x1a4] sm:$0xff]
    %v7405 = vld [vmem:[%s9 + $0x1ac] sm:$0xff]
    %v7406 = vld [vmem:[%s9 + $0x1b4] sm:$0xff]
    %v7407 = vld [vmem:[%s9 + $0x1bc] sm:$0xf]
    %v7408 = vld [vmem:[%s9 + $0x1c0] sm:$0xff]
    %v7409 = vld [vmem:[%s9 + $0x1c8] sm:$0xff]
    %v7410 = vld [vmem:[%s9 + $0x1d0] sm:$0xff]
    %v7411 = vld [vmem:[%s9 + $0x1d8] sm:$0xf]
    %v7412 = vld [vmem:[%s9 + $0x1dc] sm:$0xff]
    %v7413 = vld [vmem:[%s9 + $0x1e4] sm:$0xff]
    %v7414 = vld [vmem:[%s9 + $0x1ec] sm:$0xff]
    %v7415 = vld [vmem:[%s9 + $0x1f4] sm:$0xf]
    %v7416 = vld [vmem:[%s9 + $0x1f8] sm:$0xff]
    %v7417 = vld [vmem:[%s9 + $0x200] sm:$0xff]
    %v7418 = vld [vmem:[%s9 + $0x208] sm:$0xff]
    %v7419 = vld [vmem:[%s9 + $0x210] sm:$0xf]
    %v7420 = vld [vmem:[%s9 + $0x214] sm:$0xff]
    %v7421 = vld [vmem:[%s9 + $0x21c] sm:$0xff]
    %v7422 = vld [vmem:[%s9 + $0x224] sm:$0xff]
    %v7423 = vld [vmem:[%s9 + $0x22c] sm:$0xf]
    %v7424 = vld [vmem:[%s9 + $0x230] sm:$0xff]
    %v7425 = vld [vmem:[%s9 + $0x238] sm:$0xff]
    %v7426 = vld [vmem:[%s9 + $0x240] sm:$0xff]
    %v7427 = vld [vmem:[%s9 + $0x248] sm:$0xf]
    %v7428 = vld [vmem:[%s9 + $0x24c] sm:$0xff]
    %v7429 = vld [vmem:[%s9 + $0x254] sm:$0xff]
    %v7430 = vld [vmem:[%s9 + $0x25c] sm:$0xff]
    %v7431 = vld [vmem:[%s9 + $0x264] sm:$0xf]
    %v7432 = vld [vmem:[%s9 + $0x268] sm:$0xff]
    %v7433 = vld [vmem:[%s9 + $0x270] sm:$0xff]
    %v7434 = vld [vmem:[%s9 + $0x278] sm:$0xff]
    %v7435 = vld [vmem:[%s9 + $0x280] sm:$0xf]
    %v7436 = vld [vmem:[%s9 + $0x284] sm:$0xff]
    %v7437 = vld [vmem:[%s9 + $0x28c] sm:$0xff]
    %v7438 = vld [vmem:[%s9 + $0x294] sm:$0xff]
    %v7439 = vld [vmem:[%s9 + $0x29c] sm:$0xf]
    %v7440 = vld [vmem:[%s9 + $0x2a0] sm:$0xff]
    %v7441 = vld [vmem:[%s9 + $0x2a8] sm:$0xff]
    %v7442 = vld [vmem:[%s9 + $0x2b0] sm:$0xff]
    %v7443 = vld [vmem:[%s9 + $0x2b8] sm:$0xf]
    %v7444 = vld [vmem:[%s9 + $0x2bc] sm:$0xff]
    %v7445 = vld [vmem:[%s9 + $0x2c4] sm:$0xff]
    %v7446 = vld [vmem:[%s9 + $0x2cc] sm:$0xff]
    %v7447 = vld [vmem:[%s9 + $0x2d4] sm:$0xf]
    %v7448 = vld [vmem:[%s9 + $0x2d8] sm:$0xff]
    %v7449 = vld [vmem:[%s9 + $0x2e0] sm:$0xff]
    %v7450 = vld [vmem:[%s9 + $0x2e8] sm:$0xff]
    %v7451 = vld [vmem:[%s9 + $0x2f0] sm:$0xf]
    %v7452 = vld [vmem:[%s9 + $0x2f4] sm:$0xff]
    %v7453 = vld [vmem:[%s9 + $0x2fc] sm:$0xff]
    %v7454 = vld [vmem:[%s9 + $0x304] sm:$0xff]
    %v7455 = vld [vmem:[%s9 + $0x30c] sm:$0xf]
    %v7456 = vld [vmem:[%s9 + $0x310] sm:$0xff]
    %v7457 = vld [vmem:[%s9 + $0x318] sm:$0xff]
    %v7458 = vld [vmem:[%s9 + $0x320] sm:$0xff]
    %v7459 = vld [vmem:[%s9 + $0x328] sm:$0xf]
    %v7460 = vld [vmem:[%s9 + $0x32c] sm:$0xff]
    %v7461 = vld [vmem:[%s9 + $0x334] sm:$0xff]
    %v7462 = vld [vmem:[%s9 + $0x33c] sm:$0xff]
    %v7463 = vld [vmem:[%s9 + $0x344] sm:$0xf]
    %v7464 = vld [vmem:[%s9 + $0x348] sm:$0xff]
    %v7465 = vld [vmem:[%s9 + $0x350] sm:$0xff]
    %v7466 = vld [vmem:[%s9 + $0x358] sm:$0xff]
    %v7467 = vld [vmem:[%s9 + $0x360] sm:$0xf]
    %v7468 = vld [vmem:[%s9 + $0x364] sm:$0xff]
    %v7469 = vld [vmem:[%s9 + $0x36c] sm:$0xff]
    %v7470 = vld [vmem:[%s9 + $0x374] sm:$0xff]
    %v7471 = vld [vmem:[%s9 + $0x37c] sm:$0xf]
    %v7472 = vld [vmem:[%s9 + $0x380] sm:$0xff]
    %v7473 = vld [vmem:[%s9 + $0x388] sm:$0xff]
    %v7474 = vld [vmem:[%s9 + $0x390] sm:$0xff]
    %v7475 = vld [vmem:[%s9 + $0x398] sm:$0xf]
    %v7476 = vld [vmem:[%s9 + $0x39c] sm:$0xff]
    %v7477 = vld [vmem:[%s9 + $0x3a4] sm:$0xff]
    %v7478 = vld [vmem:[%s9 + $0x3ac] sm:$0xff]
    %v7479 = vld [vmem:[%s9 + $0x3b4] sm:$0xf]
    %v7480 = vld [vmem:[%s9 + $0x3b8] sm:$0xff]
    %v7481 = vld [vmem:[%s9 + $0x3c0] sm:$0xff]
    %v7482 = vld [vmem:[%s9 + $0x3c8] sm:$0xff]
    %v7483 = vld [vmem:[%s9 + $0x3d0] sm:$0xf]
    %v7484 = vld [vmem:[%s9 + $0x3d4] sm:$0xff]
    %v7485 = vld [vmem:[%s9 + $0x3dc] sm:$0xff]
    %v7486 = vld [vmem:[%s9 + $0x3e4] sm:$0xff]
    %v7487 = vld [vmem:[%s9 + $0x3ec] sm:$0xf]
    %v7488 = vld [vmem:[%s9 + $0x3f0] sm:$0xff]
    %v7489 = vld [vmem:[%s9 + $0x3f8] sm:$0xff]
    %v7490 = vld [vmem:[%s9 + $0x400] sm:$0xff]
    %v7491 = vld [vmem:[%s9 + $0x408] sm:$0xf]
    %v7492 = vld [vmem:[%s9 + $0x40c] sm:$0xff]
    %v7493 = vld [vmem:[%s9 + $0x414] sm:$0xff]
    %v7494 = vld [vmem:[%s9 + $0x41c] sm:$0xff]
    %v7495 = vld [vmem:[%s9 + $0x424] sm:$0xf]
    %v7496 = vld [vmem:[%s9 + $0x428] sm:$0xff]
    %v7497 = vld [vmem:[%s9 + $0x430] sm:$0xff]
    %v7498 = vld [vmem:[%s9 + $0x438] sm:$0xff]
    %v7499 = vld [vmem:[%s9 + $0x440] sm:$0xf]
    %v7500 = vld [vmem:[%s9 + $0x444] sm:$0xff]
    %v7501 = vld [vmem:[%s9 + $0x44c] sm:$0xff]
    %v7502 = vld [vmem:[%s9 + $0x454] sm:$0xff]
    %v7503 = vld [vmem:[%s9 + $0x45c] sm:$0xf]
    %v7504 = vld [vmem:[%s9 + $0x460] sm:$0xff]
    %v7505 = vld [vmem:[%s9 + $0x468] sm:$0xff]
    %v7506 = vld [vmem:[%s9 + $0x470] sm:$0xff]
    %v7507 = vld [vmem:[%s9 + $0x478] sm:$0xf]
    %v7508 = vld [vmem:[%s9 + $0x47c] sm:$0xff]
    %v7509 = vld [vmem:[%s9 + $0x484] sm:$0xff]
    %v7510 = vld [vmem:[%s9 + $0x48c] sm:$0xff]
    %v7511 = vld [vmem:[%s9 + $0x494] sm:$0xf]
    %v7512 = vld [vmem:[%s9 + $0x498] sm:$0xff]
    %v7513 = vld [vmem:[%s9 + $0x4a0] sm:$0xff]
    %v7514 = vld [vmem:[%s9 + $0x4a8] sm:$0xff]
    %v7515 = vld [vmem:[%s9 + $0x4b0] sm:$0xf]
    %v7516 = vld [vmem:[%s9 + $0x4b4] sm:$0xff]
    %v7517 = vld [vmem:[%s9 + $0x4bc] sm:$0xff]
    %v7518 = vld [vmem:[%s9 + $0x4c4] sm:$0xff]
    %v7519 = vld [vmem:[%s9 + $0x4cc] sm:$0xf]
    %v7520 = vld [vmem:[%s9 + $0x4d0] sm:$0xff]
    %v7521 = vld [vmem:[%s9 + $0x4d8] sm:$0xff]
    %v7522 = vld [vmem:[%s9 + $0x4e0] sm:$0xff]
    %v7523 = vld [vmem:[%s9 + $0x4e8] sm:$0xf]
    %v7524 = vld [vmem:[%s9 + $0x4ec] sm:$0xff]
    %v7525 = vld [vmem:[%s9 + $0x4f4] sm:$0xff]
    %v7526 = vld [vmem:[%s9 + $0x4fc] sm:$0xff]
    %v7527 = vld [vmem:[%s9 + $0x504] sm:$0xf]
    %v7528 = vld [vmem:[%s9 + $0x508] sm:$0xff]
    %v7529 = vld [vmem:[%s9 + $0x510] sm:$0xff]
    %v7530 = vld [vmem:[%s9 + $0x518] sm:$0xff]
    %v7531 = vld [vmem:[%s9 + $0x520] sm:$0xf]
    %v7532 = vld [vmem:[%s9 + $0x524] sm:$0xff]
    %v7533 = vld [vmem:[%s9 + $0x52c] sm:$0xff]
    %v7534 = vld [vmem:[%s9 + $0x534] sm:$0xff]
    %v7535 = vld [vmem:[%s9 + $0x53c] sm:$0xf]
    %v7536 = vld [vmem:[%s9 + $0x540] sm:$0xff]
    %v7537 = vld [vmem:[%s9 + $0x548] sm:$0xff]
    %v7538 = vld [vmem:[%s9 + $0x550] sm:$0xff]
    %v7539 = vld [vmem:[%s9 + $0x558] sm:$0xf]
    %v7540 = vld [vmem:[%s9 + $0x55c] sm:$0xff]
    %v7541 = vld [vmem:[%s9 + $0x564] sm:$0xff]
    %v7542 = vld [vmem:[%s9 + $0x56c] sm:$0xff]
    %v7543 = vld [vmem:[%s9 + $0x574] sm:$0xf]
    %v7544 = vld [vmem:[%s9 + $0x578] sm:$0xff]
    %v7545 = vld [vmem:[%s9 + $0x580] sm:$0xff]
    %v7546 = vld [vmem:[%s9 + $0x588] sm:$0xff]
    %v7547 = vld [vmem:[%s9 + $0x590] sm:$0xf]
    %v7548 = vld [vmem:[%s9 + $0x594] sm:$0xff]
    %v7549 = vld [vmem:[%s9 + $0x59c] sm:$0xff]
    %v7550 = vld [vmem:[%s9 + $0x5a4] sm:$0xff]
    %v7551 = vld [vmem:[%s9 + $0x5ac] sm:$0xf]
    %v7552 = vld [vmem:[%s9 + $0x5b0] sm:$0xff]
    %v7553 = vld [vmem:[%s9 + $0x5b8] sm:$0xff]
    %v7554 = vld [vmem:[%s9 + $0x5c0] sm:$0xff]
    %v7555 = vld [vmem:[%s9 + $0x5c8] sm:$0xf]
    %v7556 = vld [vmem:[%s9 + $0x5cc] sm:$0xff]
    %v7557 = vld [vmem:[%s9 + $0x5d4] sm:$0xff]
    %v7558 = vld [vmem:[%s9 + $0x5dc] sm:$0xff]
    %v7559 = vld [vmem:[%s9 + $0x5e4] sm:$0xf]
    %v7560 = vld [vmem:[%s9 + $0x5e8] sm:$0xff]
    %v7561 = vld [vmem:[%s9 + $0x5f0] sm:$0xff]
    %v7562 = vld [vmem:[%s9 + $0x5f8] sm:$0xff]
    %v7563 = vld [vmem:[%s9 + $0x600] sm:$0xf]
    %v7564 = vld [vmem:[%s9 + $0x604] sm:$0xff]
    %v7565 = vld [vmem:[%s9 + $0x60c] sm:$0xff]
    %v7566 = vld [vmem:[%s9 + $0x614] sm:$0xff]
    %v7567 = vld [vmem:[%s9 + $0x61c] sm:$0xf]
    %v7568 = vld [vmem:[%s9 + $0x620] sm:$0xff]
    %v7569 = vld [vmem:[%s9 + $0x628] sm:$0xff]
    %v7570 = vld [vmem:[%s9 + $0x630] sm:$0xff]
    %v7571 = vld [vmem:[%s9 + $0x638] sm:$0xf]
    %v7572 = vld [vmem:[%s9 + $0x63c] sm:$0xff]
    %v7573 = vld [vmem:[%s9 + $0x644] sm:$0xff]
    %v7574 = vld [vmem:[%s9 + $0x64c] sm:$0xff]
    %v7575 = vld [vmem:[%s9 + $0x654] sm:$0xf]
    %v7576 = vld [vmem:[%s9 + $0x658] sm:$0xff]
    %v7577 = vld [vmem:[%s9 + $0x660] sm:$0xff]
    %v7578 = vld [vmem:[%s9 + $0x668] sm:$0xff]
    %v7579 = vld [vmem:[%s9 + $0x670] sm:$0xf]
    %v7580 = vld [vmem:[%s9 + $0x674] sm:$0xff]
    %v7581 = vld [vmem:[%s9 + $0x67c] sm:$0xff]
    %v7582 = vld [vmem:[%s9 + $0x684] sm:$0xff]
    %v7583 = vld [vmem:[%s9 + $0x68c] sm:$0xf]
    %v7584 = vld [vmem:[%s9 + $0x690] sm:$0xff]
    %v7585 = vld [vmem:[%s9 + $0x698] sm:$0xff]
    %v7586 = vld [vmem:[%s9 + $0x6a0] sm:$0xff]
    %v7587 = vld [vmem:[%s9 + $0x6a8] sm:$0xf]
    %v7588 = vld [vmem:[%s9 + $0x6ac] sm:$0xff]
    %v7589 = vld [vmem:[%s9 + $0x6b4] sm:$0xff]
    %v7590 = vld [vmem:[%s9 + $0x6bc] sm:$0xff]
    %v7591 = vld [vmem:[%s9 + $0x6c4] sm:$0xf]
    %v7592 = vld [vmem:[%s9 + $0x6c8] sm:$0xff]
    %v7593 = vld [vmem:[%s9 + $0x6d0] sm:$0xff]
    %v7594 = vld [vmem:[%s9 + $0x6d8] sm:$0xff]
    %v7595 = vld [vmem:[%s9 + $0x6e0] sm:$0xf]
    %v7596 = vld [vmem:[%s9 + $0x6e4] sm:$0xff]
    %v7597 = vld [vmem:[%s9 + $0x6ec] sm:$0xff]
    %v7598 = vld [vmem:[%s9 + $0x6f4] sm:$0xff]
    %v7599 = vld [vmem:[%s9 + $0x6fc] sm:$0xf]
    %v7600 = vld [vmem:[%s10] sm:$0x7f]
    %v7602 = vperm.slane %v7600, 0
    %v7603 = vperm.slane %v7600, 1
    %v7604 = vperm.slane %v7600, 2
    %v7605 = vperm.slane %v7600, 3
    %v7606 = vperm.slane %v7600, 4
    %v7607 = vperm.slane %v7600, 5
    %v7608 = vperm.slane %v7600, 6
    %v7618 = vunpack.c.l.b16 %v7338
    %v7619 = vunpack.c.h.b16 %v7338
    %v7620 = vunpack.c.l.b16 %v7339
    %v7621 = vunpack.c.h.b16 %v7339
    %v7622 = vpack.c.b16 %v7618, %v7618
    %v7623 = vpack.c.b16 %v7619, %v7619
    %v7624 = vpack.c.b16 %v7620, %v7620
    %v7625 = vpack.c.b16 %v7621, %v7621
    %v7886 = vunpack.c.l.b16 %v7344
    %v7887 = vunpack.c.h.b16 %v7344
    %v7888 = vunpack.c.l.b16 %v7345
    %v7889 = vunpack.c.h.b16 %v7345
    %v7890 = vunpack.c.l.b16 %v7346
    %v7891 = vunpack.c.h.b16 %v7346
    %v7892 = vunpack.c.l.b16 %v7347
    %v7893 = vunpack.c.l.b16 %v7348
    %v7894 = vunpack.c.h.b16 %v7348
    %v7895 = vunpack.c.l.b16 %v7349
    %v7896 = vunpack.c.h.b16 %v7349
    %v7897 = vunpack.c.l.b16 %v7350
    %v7898 = vunpack.c.h.b16 %v7350
    %v7899 = vunpack.c.l.b16 %v7351
    %v7900 = vunpack.c.l.b16 %v7352
    %v7901 = vunpack.c.h.b16 %v7352
    %v7902 = vunpack.c.l.b16 %v7353
    %v7903 = vunpack.c.h.b16 %v7353
    %v7904 = vunpack.c.l.b16 %v7354
    %v7905 = vunpack.c.h.b16 %v7354
    %v7906 = vunpack.c.l.b16 %v7355
    %v7907 = vunpack.c.l.b16 %v7356
    %v7908 = vunpack.c.h.b16 %v7356
    %v7909 = vunpack.c.l.b16 %v7357
    %v7910 = vunpack.c.h.b16 %v7357
    %v7911 = vunpack.c.l.b16 %v7358
    %v7912 = vunpack.c.h.b16 %v7358
    %v7913 = vunpack.c.l.b16 %v7359
    %v7914 = vunpack.c.l.b16 %v7360
    %v7915 = vunpack.c.h.b16 %v7360
    %v7916 = vunpack.c.l.b16 %v7361
    %v7917 = vunpack.c.h.b16 %v7361
    %v7918 = vunpack.c.l.b16 %v7362
    %v7919 = vunpack.c.h.b16 %v7362
    %v7920 = vunpack.c.l.b16 %v7363
    %v7921 = vunpack.c.l.b16 %v7364
    %v7922 = vunpack.c.h.b16 %v7364
    %v7923 = vunpack.c.l.b16 %v7365
    %v7924 = vunpack.c.h.b16 %v7365
    %v7925 = vunpack.c.l.b16 %v7366
    %v7926 = vunpack.c.h.b16 %v7366
    %v7927 = vunpack.c.l.b16 %v7367
    %v7928 = vunpack.c.l.b16 %v7368
    %v7929 = vunpack.c.h.b16 %v7368
    %v7930 = vunpack.c.l.b16 %v7369
    %v7931 = vunpack.c.h.b16 %v7369
    %v7932 = vunpack.c.l.b16 %v7370
    %v7933 = vunpack.c.h.b16 %v7370
    %v7934 = vunpack.c.l.b16 %v7371
    %v7935 = vunpack.c.l.b16 %v7372
    %v7936 = vunpack.c.h.b16 %v7372
    %v7937 = vunpack.c.l.b16 %v7373
    %v7938 = vunpack.c.h.b16 %v7373
    %v7939 = vunpack.c.l.b16 %v7374
    %v7940 = vunpack.c.h.b16 %v7374
    %v7941 = vunpack.c.l.b16 %v7375
    %v7942 = vunpack.c.l.b16 %v7376
    %v7943 = vunpack.c.h.b16 %v7376
    %v7944 = vunpack.c.l.b16 %v7377
    %v7945 = vunpack.c.h.b16 %v7377
    %v7946 = vunpack.c.l.b16 %v7378
    %v7947 = vunpack.c.h.b16 %v7378
    %v7948 = vunpack.c.l.b16 %v7379
    %v7949 = vunpack.c.l.b16 %v7380
    %v7950 = vunpack.c.h.b16 %v7380
    %v7951 = vunpack.c.l.b16 %v7381
    %v7952 = vunpack.c.h.b16 %v7381
    %v7953 = vunpack.c.l.b16 %v7382
    %v7954 = vunpack.c.h.b16 %v7382
    %v7955 = vunpack.c.l.b16 %v7383
    %v7956 = vunpack.c.l.b16 %v7384
    %v7957 = vunpack.c.h.b16 %v7384
    %v7958 = vunpack.c.l.b16 %v7385
    %v7959 = vunpack.c.h.b16 %v7385
    %v7960 = vunpack.c.l.b16 %v7386
    %v7961 = vunpack.c.h.b16 %v7386
    %v7962 = vunpack.c.l.b16 %v7387
    %v7963 = vunpack.c.l.b16 %v7388
    %v7964 = vunpack.c.h.b16 %v7388
    %v7965 = vunpack.c.l.b16 %v7389
    %v7966 = vunpack.c.h.b16 %v7389
    %v7967 = vunpack.c.l.b16 %v7390
    %v7968 = vunpack.c.h.b16 %v7390
    %v7969 = vunpack.c.l.b16 %v7391
    %v7970 = vunpack.c.l.b16 %v7392
    %v7971 = vunpack.c.h.b16 %v7392
    %v7972 = vunpack.c.l.b16 %v7393
    %v7973 = vunpack.c.h.b16 %v7393
    %v7974 = vunpack.c.l.b16 %v7394
    %v7975 = vunpack.c.h.b16 %v7394
    %v7976 = vunpack.c.l.b16 %v7395
    %v7977 = vunpack.c.l.b16 %v7396
    %v7978 = vunpack.c.h.b16 %v7396
    %v7979 = vunpack.c.l.b16 %v7397
    %v7980 = vunpack.c.h.b16 %v7397
    %v7981 = vunpack.c.l.b16 %v7398
    %v7982 = vunpack.c.h.b16 %v7398
    %v7983 = vunpack.c.l.b16 %v7399
    %v7984 = vunpack.c.l.b16 %v7400
    %v7985 = vunpack.c.h.b16 %v7400
    %v7986 = vunpack.c.l.b16 %v7401
    %v7987 = vunpack.c.h.b16 %v7401
    %v7988 = vunpack.c.l.b16 %v7402
    %v7989 = vunpack.c.h.b16 %v7402
    %v7990 = vunpack.c.l.b16 %v7403
    %v7991 = vunpack.c.l.b16 %v7404
    %v7992 = vunpack.c.h.b16 %v7404
    %v7993 = vunpack.c.l.b16 %v7405
    %v7994 = vunpack.c.h.b16 %v7405
    %v7995 = vunpack.c.l.b16 %v7406
    %v7996 = vunpack.c.h.b16 %v7406
    %v7997 = vunpack.c.l.b16 %v7407
    %v7998 = vunpack.c.l.b16 %v7408
    %v7999 = vunpack.c.h.b16 %v7408
    %v8000 = vunpack.c.l.b16 %v7409
    %v8001 = vunpack.c.h.b16 %v7409
    %v8002 = vunpack.c.l.b16 %v7410
    %v8003 = vunpack.c.h.b16 %v7410
    %v8004 = vunpack.c.l.b16 %v7411
    %v8005 = vunpack.c.l.b16 %v7412
    %v8006 = vunpack.c.h.b16 %v7412
    %v8007 = vunpack.c.l.b16 %v7413
    %v8008 = vunpack.c.h.b16 %v7413
    %v8009 = vunpack.c.l.b16 %v7414
    %v8010 = vunpack.c.h.b16 %v7414
    %v8011 = vunpack.c.l.b16 %v7415
    %v8012 = vunpack.c.l.b16 %v7416
    %v8013 = vunpack.c.h.b16 %v7416
    %v8014 = vunpack.c.l.b16 %v7417
    %v8015 = vunpack.c.h.b16 %v7417
    %v8016 = vunpack.c.l.b16 %v7418
    %v8017 = vunpack.c.h.b16 %v7418
    %v8018 = vunpack.c.l.b16 %v7419
    %v8019 = vunpack.c.l.b16 %v7420
    %v8020 = vunpack.c.h.b16 %v7420
    %v8021 = vunpack.c.l.b16 %v7421
    %v8022 = vunpack.c.h.b16 %v7421
    %v8023 = vunpack.c.l.b16 %v7422
    %v8024 = vunpack.c.h.b16 %v7422
    %v8025 = vunpack.c.l.b16 %v7423
    %v8026 = vunpack.c.l.b16 %v7424
    %v8027 = vunpack.c.h.b16 %v7424
    %v8028 = vunpack.c.l.b16 %v7425
    %v8029 = vunpack.c.h.b16 %v7425
    %v8030 = vunpack.c.l.b16 %v7426
    %v8031 = vunpack.c.h.b16 %v7426
    %v8032 = vunpack.c.l.b16 %v7427
    %v8033 = vunpack.c.l.b16 %v7428
    %v8034 = vunpack.c.h.b16 %v7428
    %v8035 = vunpack.c.l.b16 %v7429
    %v8036 = vunpack.c.h.b16 %v7429
    %v8037 = vunpack.c.l.b16 %v7430
    %v8038 = vunpack.c.h.b16 %v7430
    %v8039 = vunpack.c.l.b16 %v7431
    %v8040 = vunpack.c.l.b16 %v7432
    %v8041 = vunpack.c.h.b16 %v7432
    %v8042 = vunpack.c.l.b16 %v7433
    %v8043 = vunpack.c.h.b16 %v7433
    %v8044 = vunpack.c.l.b16 %v7434
    %v8045 = vunpack.c.h.b16 %v7434
    %v8046 = vunpack.c.l.b16 %v7435
    %v8047 = vunpack.c.l.b16 %v7436
    %v8048 = vunpack.c.h.b16 %v7436
    %v8049 = vunpack.c.l.b16 %v7437
    %v8050 = vunpack.c.h.b16 %v7437
    %v8051 = vunpack.c.l.b16 %v7438
    %v8052 = vunpack.c.h.b16 %v7438
    %v8053 = vunpack.c.l.b16 %v7439
    %v8054 = vunpack.c.l.b16 %v7440
    %v8055 = vunpack.c.h.b16 %v7440
    %v8056 = vunpack.c.l.b16 %v7441
    %v8057 = vunpack.c.h.b16 %v7441
    %v8058 = vunpack.c.l.b16 %v7442
    %v8059 = vunpack.c.h.b16 %v7442
    %v8060 = vunpack.c.l.b16 %v7443
    %v8061 = vunpack.c.l.b16 %v7444
    %v8062 = vunpack.c.h.b16 %v7444
    %v8063 = vunpack.c.l.b16 %v7445
    %v8064 = vunpack.c.h.b16 %v7445
    %v8065 = vunpack.c.l.b16 %v7446
    %v8066 = vunpack.c.h.b16 %v7446
    %v8067 = vunpack.c.l.b16 %v7447
    %v8068 = vunpack.c.l.b16 %v7448
    %v8069 = vunpack.c.h.b16 %v7448
    %v8070 = vunpack.c.l.b16 %v7449
    %v8071 = vunpack.c.h.b16 %v7449
    %v8072 = vunpack.c.l.b16 %v7450
    %v8073 = vunpack.c.h.b16 %v7450
    %v8074 = vunpack.c.l.b16 %v7451
    %v8075 = vunpack.c.l.b16 %v7452
    %v8076 = vunpack.c.h.b16 %v7452
    %v8077 = vunpack.c.l.b16 %v7453
    %v8078 = vunpack.c.h.b16 %v7453
    %v8079 = vunpack.c.l.b16 %v7454
    %v8080 = vunpack.c.h.b16 %v7454
    %v8081 = vunpack.c.l.b16 %v7455
    %v8082 = vunpack.c.l.b16 %v7456
    %v8083 = vunpack.c.h.b16 %v7456
    %v8084 = vunpack.c.l.b16 %v7457
    %v8085 = vunpack.c.h.b16 %v7457
    %v8086 = vunpack.c.l.b16 %v7458
    %v8087 = vunpack.c.h.b16 %v7458
    %v8088 = vunpack.c.l.b16 %v7459
    %v8089 = vunpack.c.l.b16 %v7460
    %v8090 = vunpack.c.h.b16 %v7460
    %v8091 = vunpack.c.l.b16 %v7461
    %v8092 = vunpack.c.h.b16 %v7461
    %v8093 = vunpack.c.l.b16 %v7462
    %v8094 = vunpack.c.h.b16 %v7462
    %v8095 = vunpack.c.l.b16 %v7463
    %v8096 = vunpack.c.l.b16 %v7464
    %v8097 = vunpack.c.h.b16 %v7464
    %v8098 = vunpack.c.l.b16 %v7465
    %v8099 = vunpack.c.h.b16 %v7465
    %v8100 = vunpack.c.l.b16 %v7466
    %v8101 = vunpack.c.h.b16 %v7466
    %v8102 = vunpack.c.l.b16 %v7467
    %v8103 = vunpack.c.l.b16 %v7468
    %v8104 = vunpack.c.h.b16 %v7468
    %v8105 = vunpack.c.l.b16 %v7469
    %v8106 = vunpack.c.h.b16 %v7469
    %v8107 = vunpack.c.l.b16 %v7470
    %v8108 = vunpack.c.h.b16 %v7470
    %v8109 = vunpack.c.l.b16 %v7471
    %v8110 = vunpack.c.l.b16 %v7472
    %v8111 = vunpack.c.h.b16 %v7472
    %v8112 = vunpack.c.l.b16 %v7473
    %v8113 = vunpack.c.h.b16 %v7473
    %v8114 = vunpack.c.l.b16 %v7474
    %v8115 = vunpack.c.h.b16 %v7474
    %v8116 = vunpack.c.l.b16 %v7475
    %v8117 = vunpack.c.l.b16 %v7476
    %v8118 = vunpack.c.h.b16 %v7476
    %v8119 = vunpack.c.l.b16 %v7477
    %v8120 = vunpack.c.h.b16 %v7477
    %v8121 = vunpack.c.l.b16 %v7478
    %v8122 = vunpack.c.h.b16 %v7478
    %v8123 = vunpack.c.l.b16 %v7479
    %v8124 = vunpack.c.l.b16 %v7480
    %v8125 = vunpack.c.h.b16 %v7480
    %v8126 = vunpack.c.l.b16 %v7481
    %v8127 = vunpack.c.h.b16 %v7481
    %v8128 = vunpack.c.l.b16 %v7482
    %v8129 = vunpack.c.h.b16 %v7482
    %v8130 = vunpack.c.l.b16 %v7483
    %v8131 = vunpack.c.l.b16 %v7484
    %v8132 = vunpack.c.h.b16 %v7484
    %v8133 = vunpack.c.l.b16 %v7485
    %v8134 = vunpack.c.h.b16 %v7485
    %v8135 = vunpack.c.l.b16 %v7486
    %v8136 = vunpack.c.h.b16 %v7486
    %v8137 = vunpack.c.l.b16 %v7487
    %v8138 = vunpack.c.l.b16 %v7488
    %v8139 = vunpack.c.h.b16 %v7488
    %v8140 = vunpack.c.l.b16 %v7489
    %v8141 = vunpack.c.h.b16 %v7489
    %v8142 = vunpack.c.l.b16 %v7490
    %v8143 = vunpack.c.h.b16 %v7490
    %v8144 = vunpack.c.l.b16 %v7491
    %v8145 = vunpack.c.l.b16 %v7492
    %v8146 = vunpack.c.h.b16 %v7492
    %v8147 = vunpack.c.l.b16 %v7493
    %v8148 = vunpack.c.h.b16 %v7493
    %v8149 = vunpack.c.l.b16 %v7494
    %v8150 = vunpack.c.h.b16 %v7494
    %v8151 = vunpack.c.l.b16 %v7495
    %v8152 = vunpack.c.l.b16 %v7496
    %v8153 = vunpack.c.h.b16 %v7496
    %v8154 = vunpack.c.l.b16 %v7497
    %v8155 = vunpack.c.h.b16 %v7497
    %v8156 = vunpack.c.l.b16 %v7498
    %v8157 = vunpack.c.h.b16 %v7498
    %v8158 = vunpack.c.l.b16 %v7499
    %v8159 = vunpack.c.l.b16 %v7500
    %v8160 = vunpack.c.h.b16 %v7500
    %v8161 = vunpack.c.l.b16 %v7501
    %v8162 = vunpack.c.h.b16 %v7501
    %v8163 = vunpack.c.l.b16 %v7502
    %v8164 = vunpack.c.h.b16 %v7502
    %v8165 = vunpack.c.l.b16 %v7503
    %v8166 = vunpack.c.l.b16 %v7504
    %v8167 = vunpack.c.h.b16 %v7504
    %v8168 = vunpack.c.l.b16 %v7505
    %v8169 = vunpack.c.h.b16 %v7505
    %v8170 = vunpack.c.l.b16 %v7506
    %v8171 = vunpack.c.h.b16 %v7506
    %v8172 = vunpack.c.l.b16 %v7507
    %v8173 = vunpack.c.l.b16 %v7508
    %v8174 = vunpack.c.h.b16 %v7508
    %v8175 = vunpack.c.l.b16 %v7509
    %v8176 = vunpack.c.h.b16 %v7509
    %v8177 = vunpack.c.l.b16 %v7510
    %v8178 = vunpack.c.h.b16 %v7510
    %v8179 = vunpack.c.l.b16 %v7511
    %v8180 = vunpack.c.l.b16 %v7512
    %v8181 = vunpack.c.h.b16 %v7512
    %v8182 = vunpack.c.l.b16 %v7513
    %v8183 = vunpack.c.h.b16 %v7513
    %v8184 = vunpack.c.l.b16 %v7514
    %v8185 = vunpack.c.h.b16 %v7514
    %v8186 = vunpack.c.l.b16 %v7515
    %v8187 = vunpack.c.l.b16 %v7516
    %v8188 = vunpack.c.h.b16 %v7516
    %v8189 = vunpack.c.l.b16 %v7517
    %v8190 = vunpack.c.h.b16 %v7517
    %v8191 = vunpack.c.l.b16 %v7518
    %v8192 = vunpack.c.h.b16 %v7518
    %v8193 = vunpack.c.l.b16 %v7519
    %v8194 = vunpack.c.l.b16 %v7520
    %v8195 = vunpack.c.h.b16 %v7520
    %v8196 = vunpack.c.l.b16 %v7521
    %v8197 = vunpack.c.h.b16 %v7521
    %v8198 = vunpack.c.l.b16 %v7522
    %v8199 = vunpack.c.h.b16 %v7522
    %v8200 = vunpack.c.l.b16 %v7523
    %v8201 = vunpack.c.l.b16 %v7524
    %v8202 = vunpack.c.h.b16 %v7524
    %v8203 = vunpack.c.l.b16 %v7525
    %v8204 = vunpack.c.h.b16 %v7525
    %v8205 = vunpack.c.l.b16 %v7526
    %v8206 = vunpack.c.h.b16 %v7526
    %v8207 = vunpack.c.l.b16 %v7527
    %v8208 = vunpack.c.l.b16 %v7528
    %v8209 = vunpack.c.h.b16 %v7528
    %v8210 = vunpack.c.l.b16 %v7529
    %v8211 = vunpack.c.h.b16 %v7529
    %v8212 = vunpack.c.l.b16 %v7530
    %v8213 = vunpack.c.h.b16 %v7530
    %v8214 = vunpack.c.l.b16 %v7531
    %v8215 = vunpack.c.l.b16 %v7532
    %v8216 = vunpack.c.h.b16 %v7532
    %v8217 = vunpack.c.l.b16 %v7533
    %v8218 = vunpack.c.h.b16 %v7533
    %v8219 = vunpack.c.l.b16 %v7534
    %v8220 = vunpack.c.h.b16 %v7534
    %v8221 = vunpack.c.l.b16 %v7535
    %v8222 = vunpack.c.l.b16 %v7536
    %v8223 = vunpack.c.h.b16 %v7536
    %v8224 = vunpack.c.l.b16 %v7537
    %v8225 = vunpack.c.h.b16 %v7537
    %v8226 = vunpack.c.l.b16 %v7538
    %v8227 = vunpack.c.h.b16 %v7538
    %v8228 = vunpack.c.l.b16 %v7539
    %v8229 = vunpack.c.l.b16 %v7540
    %v8230 = vunpack.c.h.b16 %v7540
    %v8231 = vunpack.c.l.b16 %v7541
    %v8232 = vunpack.c.h.b16 %v7541
    %v8233 = vunpack.c.l.b16 %v7542
    %v8234 = vunpack.c.h.b16 %v7542
    %v8235 = vunpack.c.l.b16 %v7543
    %v8236 = vunpack.c.l.b16 %v7544
    %v8237 = vunpack.c.h.b16 %v7544
    %v8238 = vunpack.c.l.b16 %v7545
    %v8239 = vunpack.c.h.b16 %v7545
    %v8240 = vunpack.c.l.b16 %v7546
    %v8241 = vunpack.c.h.b16 %v7546
    %v8242 = vunpack.c.l.b16 %v7547
    %v8243 = vunpack.c.l.b16 %v7548
    %v8244 = vunpack.c.h.b16 %v7548
    %v8245 = vunpack.c.l.b16 %v7549
    %v8246 = vunpack.c.h.b16 %v7549
    %v8247 = vunpack.c.l.b16 %v7550
    %v8248 = vunpack.c.h.b16 %v7550
    %v8249 = vunpack.c.l.b16 %v7551
    %v8250 = vunpack.c.l.b16 %v7552
    %v8251 = vunpack.c.h.b16 %v7552
    %v8252 = vunpack.c.l.b16 %v7553
    %v8253 = vunpack.c.h.b16 %v7553
    %v8254 = vunpack.c.l.b16 %v7554
    %v8255 = vunpack.c.h.b16 %v7554
    %v8256 = vunpack.c.l.b16 %v7555
    %v8257 = vunpack.c.l.b16 %v7556
    %v8258 = vunpack.c.h.b16 %v7556
    %v8259 = vunpack.c.l.b16 %v7557
    %v8260 = vunpack.c.h.b16 %v7557
    %v8261 = vunpack.c.l.b16 %v7558
    %v8262 = vunpack.c.h.b16 %v7558
    %v8263 = vunpack.c.l.b16 %v7559
    %v8264 = vunpack.c.l.b16 %v7560
    %v8265 = vunpack.c.h.b16 %v7560
    %v8266 = vunpack.c.l.b16 %v7561
    %v8267 = vunpack.c.h.b16 %v7561
    %v8268 = vunpack.c.l.b16 %v7562
    %v8269 = vunpack.c.h.b16 %v7562
    %v8270 = vunpack.c.l.b16 %v7563
    %v8271 = vunpack.c.l.b16 %v7564
    %v8272 = vunpack.c.h.b16 %v7564
    %v8273 = vunpack.c.l.b16 %v7565
    %v8274 = vunpack.c.h.b16 %v7565
    %v8275 = vunpack.c.l.b16 %v7566
    %v8276 = vunpack.c.h.b16 %v7566
    %v8277 = vunpack.c.l.b16 %v7567
    %v8278 = vunpack.c.l.b16 %v7568
    %v8279 = vunpack.c.h.b16 %v7568
    %v8280 = vunpack.c.l.b16 %v7569
    %v8281 = vunpack.c.h.b16 %v7569
    %v8282 = vunpack.c.l.b16 %v7570
    %v8283 = vunpack.c.h.b16 %v7570
    %v8284 = vunpack.c.l.b16 %v7571
    %v8285 = vunpack.c.l.b16 %v7572
    %v8286 = vunpack.c.h.b16 %v7572
    %v8287 = vunpack.c.l.b16 %v7573
    %v8288 = vunpack.c.h.b16 %v7573
    %v8289 = vunpack.c.l.b16 %v7574
    %v8290 = vunpack.c.h.b16 %v7574
    %v8291 = vunpack.c.l.b16 %v7575
    %v8292 = vunpack.c.l.b16 %v7576
    %v8293 = vunpack.c.h.b16 %v7576
    %v8294 = vunpack.c.l.b16 %v7577
    %v8295 = vunpack.c.h.b16 %v7577
    %v8296 = vunpack.c.l.b16 %v7578
    %v8297 = vunpack.c.h.b16 %v7578
    %v8298 = vunpack.c.l.b16 %v7579
    %v8299 = vunpack.c.l.b16 %v7580
    %v8300 = vunpack.c.h.b16 %v7580
    %v8301 = vunpack.c.l.b16 %v7581
    %v8302 = vunpack.c.h.b16 %v7581
    %v8303 = vunpack.c.l.b16 %v7582
    %v8304 = vunpack.c.h.b16 %v7582
    %v8305 = vunpack.c.l.b16 %v7583
    %v8306 = vunpack.c.l.b16 %v7584
    %v8307 = vunpack.c.h.b16 %v7584
    %v8308 = vunpack.c.l.b16 %v7585
    %v8309 = vunpack.c.h.b16 %v7585
    %v8310 = vunpack.c.l.b16 %v7586
    %v8311 = vunpack.c.h.b16 %v7586
    %v8312 = vunpack.c.l.b16 %v7587
    %v8313 = vunpack.c.l.b16 %v7588
    %v8314 = vunpack.c.h.b16 %v7588
    %v8315 = vunpack.c.l.b16 %v7589
    %v8316 = vunpack.c.h.b16 %v7589
    %v8317 = vunpack.c.l.b16 %v7590
    %v8318 = vunpack.c.h.b16 %v7590
    %v8319 = vunpack.c.l.b16 %v7591
    %v8320 = vunpack.c.l.b16 %v7592
    %v8321 = vunpack.c.h.b16 %v7592
    %v8322 = vunpack.c.l.b16 %v7593
    %v8323 = vunpack.c.h.b16 %v7593
    %v8324 = vunpack.c.l.b16 %v7594
    %v8325 = vunpack.c.h.b16 %v7594
    %v8326 = vunpack.c.l.b16 %v7595
    %v8327 = vunpack.c.l.b16 %v7596
    %v8328 = vunpack.c.h.b16 %v7596
    %v8329 = vunpack.c.l.b16 %v7597
    %v8330 = vunpack.c.h.b16 %v7597
    %v8331 = vunpack.c.l.b16 %v7598
    %v8332 = vunpack.c.h.b16 %v7598
    %v8333 = vunpack.c.l.b16 %v7599
    %v8334 = vpack.c.b16 %v7893, %v7886
    %v8335 = vpack.c.b16 %v7894, %v7887
    %v8336 = vpack.c.b16 %v7895, %v7888
    %v8337 = vpack.c.b16 %v7896, %v7889
    %v8338 = vpack.c.b16 %v7897, %v7890
    %v8339 = vpack.c.b16 %v7898, %v7891
    %v8340 = vpack.c.b16 %v7899, %v7892
    %v8341 = vpack.c.b16 %v7907, %v7900
    %v8342 = vpack.c.b16 %v7908, %v7901
    %v8343 = vpack.c.b16 %v7909, %v7902
    %v8344 = vpack.c.b16 %v7910, %v7903
    %v8345 = vpack.c.b16 %v7911, %v7904
    %v8346 = vpack.c.b16 %v7912, %v7905
    %v8347 = vpack.c.b16 %v7913, %v7906
    %v8348 = vpack.c.b16 %v7921, %v7914
    %v8349 = vpack.c.b16 %v7922, %v7915
    %v8350 = vpack.c.b16 %v7923, %v7916
    %v8351 = vpack.c.b16 %v7924, %v7917
    %v8352 = vpack.c.b16 %v7925, %v7918
    %v8353 = vpack.c.b16 %v7926, %v7919
    %v8354 = vpack.c.b16 %v7927, %v7920
    %v8355 = vpack.c.b16 %v7935, %v7928
    %v8356 = vpack.c.b16 %v7936, %v7929
    %v8357 = vpack.c.b16 %v7937, %v7930
    %v8358 = vpack.c.b16 %v7938, %v7931
    %v8359 = vpack.c.b16 %v7939, %v7932
    %v8360 = vpack.c.b16 %v7940, %v7933
    %v8361 = vpack.c.b16 %v7941, %v7934
    %v8362 = vpack.c.b16 %v7949, %v7942
    %v8363 = vpack.c.b16 %v7950, %v7943
    %v8364 = vpack.c.b16 %v7951, %v7944
    %v8365 = vpack.c.b16 %v7952, %v7945
    %v8366 = vpack.c.b16 %v7953, %v7946
    %v8367 = vpack.c.b16 %v7954, %v7947
    %v8368 = vpack.c.b16 %v7955, %v7948
    %v8369 = vpack.c.b16 %v7963, %v7956
    %v8370 = vpack.c.b16 %v7964, %v7957
    %v8371 = vpack.c.b16 %v7965, %v7958
    %v8372 = vpack.c.b16 %v7966, %v7959
    %v8373 = vpack.c.b16 %v7967, %v7960
    %v8374 = vpack.c.b16 %v7968, %v7961
    %v8375 = vpack.c.b16 %v7969, %v7962
    %v8376 = vpack.c.b16 %v7977, %v7970
    %v8377 = vpack.c.b16 %v7978, %v7971
    %v8378 = vpack.c.b16 %v7979, %v7972
    %v8379 = vpack.c.b16 %v7980, %v7973
    %v8380 = vpack.c.b16 %v7981, %v7974
    %v8381 = vpack.c.b16 %v7982, %v7975
    %v8382 = vpack.c.b16 %v7983, %v7976
    %v8383 = vpack.c.b16 %v7991, %v7984
    %v8384 = vpack.c.b16 %v7992, %v7985
    %v8385 = vpack.c.b16 %v7993, %v7986
    %v8386 = vpack.c.b16 %v7994, %v7987
    %v8387 = vpack.c.b16 %v7995, %v7988
    %v8388 = vpack.c.b16 %v7996, %v7989
    %v8389 = vpack.c.b16 %v7997, %v7990
    %v8390 = vpack.c.b16 %v8005, %v7998
    %v8391 = vpack.c.b16 %v8006, %v7999
    %v8392 = vpack.c.b16 %v8007, %v8000
    %v8393 = vpack.c.b16 %v8008, %v8001
    %v8394 = vpack.c.b16 %v8009, %v8002
    %v8395 = vpack.c.b16 %v8010, %v8003
    %v8396 = vpack.c.b16 %v8011, %v8004
    %v8397 = vpack.c.b16 %v8019, %v8012
    %v8398 = vpack.c.b16 %v8020, %v8013
    %v8399 = vpack.c.b16 %v8021, %v8014
    %v8400 = vpack.c.b16 %v8022, %v8015
    %v8401 = vpack.c.b16 %v8023, %v8016
    %v8402 = vpack.c.b16 %v8024, %v8017
    %v8403 = vpack.c.b16 %v8025, %v8018
    %v8404 = vpack.c.b16 %v8033, %v8026
    %v8405 = vpack.c.b16 %v8034, %v8027
    %v8406 = vpack.c.b16 %v8035, %v8028
    %v8407 = vpack.c.b16 %v8036, %v8029
    %v8408 = vpack.c.b16 %v8037, %v8030
    %v8409 = vpack.c.b16 %v8038, %v8031
    %v8410 = vpack.c.b16 %v8039, %v8032
    %v8411 = vpack.c.b16 %v8047, %v8040
    %v8412 = vpack.c.b16 %v8048, %v8041
    %v8413 = vpack.c.b16 %v8049, %v8042
    %v8414 = vpack.c.b16 %v8050, %v8043
    %v8415 = vpack.c.b16 %v8051, %v8044
    %v8416 = vpack.c.b16 %v8052, %v8045
    %v8417 = vpack.c.b16 %v8053, %v8046
    %v8418 = vpack.c.b16 %v8061, %v8054
    %v8419 = vpack.c.b16 %v8062, %v8055
    %v8420 = vpack.c.b16 %v8063, %v8056
    %v8421 = vpack.c.b16 %v8064, %v8057
    %v8422 = vpack.c.b16 %v8065, %v8058
    %v8423 = vpack.c.b16 %v8066, %v8059
    %v8424 = vpack.c.b16 %v8067, %v8060
    %v8425 = vpack.c.b16 %v8075, %v8068
    %v8426 = vpack.c.b16 %v8076, %v8069
    %v8427 = vpack.c.b16 %v8077, %v8070
    %v8428 = vpack.c.b16 %v8078, %v8071
    %v8429 = vpack.c.b16 %v8079, %v8072
    %v8430 = vpack.c.b16 %v8080, %v8073
    %v8431 = vpack.c.b16 %v8081, %v8074
    %v8432 = vpack.c.b16 %v8089, %v8082
    %v8433 = vpack.c.b16 %v8090, %v8083
    %v8434 = vpack.c.b16 %v8091, %v8084
    %v8435 = vpack.c.b16 %v8092, %v8085
    %v8436 = vpack.c.b16 %v8093, %v8086
    %v8437 = vpack.c.b16 %v8094, %v8087
    %v8438 = vpack.c.b16 %v8095, %v8088
    %v8439 = vpack.c.b16 %v8103, %v8096
    %v8440 = vpack.c.b16 %v8104, %v8097
    %v8441 = vpack.c.b16 %v8105, %v8098
    %v8442 = vpack.c.b16 %v8106, %v8099
    %v8443 = vpack.c.b16 %v8107, %v8100
    %v8444 = vpack.c.b16 %v8108, %v8101
    %v8445 = vpack.c.b16 %v8109, %v8102
    %v8446 = vpack.c.b16 %v8117, %v8110
    %v8447 = vpack.c.b16 %v8118, %v8111
    %v8448 = vpack.c.b16 %v8119, %v8112
    %v8449 = vpack.c.b16 %v8120, %v8113
    %v8450 = vpack.c.b16 %v8121, %v8114
    %v8451 = vpack.c.b16 %v8122, %v8115
    %v8452 = vpack.c.b16 %v8123, %v8116
    %v8453 = vpack.c.b16 %v8131, %v8124
    %v8454 = vpack.c.b16 %v8132, %v8125
    %v8455 = vpack.c.b16 %v8133, %v8126
    %v8456 = vpack.c.b16 %v8134, %v8127
    %v8457 = vpack.c.b16 %v8135, %v8128
    %v8458 = vpack.c.b16 %v8136, %v8129
    %v8459 = vpack.c.b16 %v8137, %v8130
    %v8460 = vpack.c.b16 %v8145, %v8138
    %v8461 = vpack.c.b16 %v8146, %v8139
    %v8462 = vpack.c.b16 %v8147, %v8140
    %v8463 = vpack.c.b16 %v8148, %v8141
    %v8464 = vpack.c.b16 %v8149, %v8142
    %v8465 = vpack.c.b16 %v8150, %v8143
    %v8466 = vpack.c.b16 %v8151, %v8144
    %v8467 = vpack.c.b16 %v8159, %v8152
    %v8468 = vpack.c.b16 %v8160, %v8153
    %v8469 = vpack.c.b16 %v8161, %v8154
    %v8470 = vpack.c.b16 %v8162, %v8155
    %v8471 = vpack.c.b16 %v8163, %v8156
    %v8472 = vpack.c.b16 %v8164, %v8157
    %v8473 = vpack.c.b16 %v8165, %v8158
    %v8474 = vpack.c.b16 %v8173, %v8166
    %v8475 = vpack.c.b16 %v8174, %v8167
    %v8476 = vpack.c.b16 %v8175, %v8168
    %v8477 = vpack.c.b16 %v8176, %v8169
    %v8478 = vpack.c.b16 %v8177, %v8170
    %v8479 = vpack.c.b16 %v8178, %v8171
    %v8480 = vpack.c.b16 %v8179, %v8172
    %v8481 = vpack.c.b16 %v8187, %v8180
    %v8482 = vpack.c.b16 %v8188, %v8181
    %v8483 = vpack.c.b16 %v8189, %v8182
    %v8484 = vpack.c.b16 %v8190, %v8183
    %v8485 = vpack.c.b16 %v8191, %v8184
    %v8486 = vpack.c.b16 %v8192, %v8185
    %v8487 = vpack.c.b16 %v8193, %v8186
    %v8488 = vpack.c.b16 %v8201, %v8194
    %v8489 = vpack.c.b16 %v8202, %v8195
    %v8490 = vpack.c.b16 %v8203, %v8196
    %v8491 = vpack.c.b16 %v8204, %v8197
    %v8492 = vpack.c.b16 %v8205, %v8198
    %v8493 = vpack.c.b16 %v8206, %v8199
    %v8494 = vpack.c.b16 %v8207, %v8200
    %v8495 = vpack.c.b16 %v8215, %v8208
    %v8496 = vpack.c.b16 %v8216, %v8209
    %v8497 = vpack.c.b16 %v8217, %v8210
    %v8498 = vpack.c.b16 %v8218, %v8211
    %v8499 = vpack.c.b16 %v8219, %v8212
    %v8500 = vpack.c.b16 %v8220, %v8213
    %v8501 = vpack.c.b16 %v8221, %v8214
    %v8502 = vpack.c.b16 %v8229, %v8222
    %v8503 = vpack.c.b16 %v8230, %v8223
    %v8504 = vpack.c.b16 %v8231, %v8224
    %v8505 = vpack.c.b16 %v8232, %v8225
    %v8506 = vpack.c.b16 %v8233, %v8226
    %v8507 = vpack.c.b16 %v8234, %v8227
    %v8508 = vpack.c.b16 %v8235, %v8228
    %v8509 = vpack.c.b16 %v8243, %v8236
    %v8510 = vpack.c.b16 %v8244, %v8237
    %v8511 = vpack.c.b16 %v8245, %v8238
    %v8512 = vpack.c.b16 %v8246, %v8239
    %v8513 = vpack.c.b16 %v8247, %v8240
    %v8514 = vpack.c.b16 %v8248, %v8241
    %v8515 = vpack.c.b16 %v8249, %v8242
    %v8516 = vpack.c.b16 %v8257, %v8250
    %v8517 = vpack.c.b16 %v8258, %v8251
    %v8518 = vpack.c.b16 %v8259, %v8252
    %v8519 = vpack.c.b16 %v8260, %v8253
    %v8520 = vpack.c.b16 %v8261, %v8254
    %v8521 = vpack.c.b16 %v8262, %v8255
    %v8522 = vpack.c.b16 %v8263, %v8256
    %v8523 = vpack.c.b16 %v8271, %v8264
    %v8524 = vpack.c.b16 %v8272, %v8265
    %v8525 = vpack.c.b16 %v8273, %v8266
    %v8526 = vpack.c.b16 %v8274, %v8267
    %v8527 = vpack.c.b16 %v8275, %v8268
    %v8528 = vpack.c.b16 %v8276, %v8269
    %v8529 = vpack.c.b16 %v8277, %v8270
    %v8530 = vpack.c.b16 %v8285, %v8278
    %v8531 = vpack.c.b16 %v8286, %v8279
    %v8532 = vpack.c.b16 %v8287, %v8280
    %v8533 = vpack.c.b16 %v8288, %v8281
    %v8534 = vpack.c.b16 %v8289, %v8282
    %v8535 = vpack.c.b16 %v8290, %v8283
    %v8536 = vpack.c.b16 %v8291, %v8284
    %v8537 = vpack.c.b16 %v8299, %v8292
    %v8538 = vpack.c.b16 %v8300, %v8293
    %v8539 = vpack.c.b16 %v8301, %v8294
    %v8540 = vpack.c.b16 %v8302, %v8295
    %v8541 = vpack.c.b16 %v8303, %v8296
    %v8542 = vpack.c.b16 %v8304, %v8297
    %v8543 = vpack.c.b16 %v8305, %v8298
    %v8544 = vpack.c.b16 %v8313, %v8306
    %v8545 = vpack.c.b16 %v8314, %v8307
    %v8546 = vpack.c.b16 %v8315, %v8308
    %v8547 = vpack.c.b16 %v8316, %v8309
    %v8548 = vpack.c.b16 %v8317, %v8310
    %v8549 = vpack.c.b16 %v8318, %v8311
    %v8550 = vpack.c.b16 %v8319, %v8312
    %v8551 = vpack.c.b16 %v8327, %v8320
    %v8552 = vpack.c.b16 %v8328, %v8321
    %v8553 = vpack.c.b16 %v8329, %v8322
    %v8554 = vpack.c.b16 %v8330, %v8323
    %v8555 = vpack.c.b16 %v8331, %v8324
    %v8556 = vpack.c.b16 %v8332, %v8325
    %v8557 = vpack.c.b16 %v8333, %v8326
    %8782 = vmatpush.bf16.msra.mxu0 %v8383
    %8783 = vmatpush.bf16.msra.mxu0 %v8376
    %8784 = vmatpush.bf16.msra.mxu0 %v8369
    %8785 = vmatpush.bf16.msra.mxu0 %v8362
    %8786 = vmatpush.bf16.msra.mxu0 %v8355
    %8787 = vmatpush.bf16.msra.mxu0 %v8348
    %8788 = vmatpush.bf16.msra.mxu0 %v8341
    %8789 = vmatpush.bf16.msra.mxu0 %v8334
    %8790 = vmatmul.bf16.gmra.mxu0 %v7622
    %v8791 = vpop.f32.mrf.mxu0
    %v8792 = vadd.f32 %v7602, %v8791
    %v8793 = vpop.f32.mrf.mxu0
    %8794 = vdwg.mxu0
    %8795 = vmatpush.bf16.msra.mxu0 %v8439
    %8796 = vmatpush.bf16.msra.mxu0 %v8432
    %8797 = vmatpush.bf16.msra.mxu0 %v8425
    %8798 = vmatpush.bf16.msra.mxu0 %v8418
    %8799 = vmatpush.bf16.msra.mxu0 %v8411
    %8800 = vmatpush.bf16.msra.mxu0 %v8404
    %8801 = vmatpush.bf16.msra.mxu0 %v8397
    %8802 = vmatpush.bf16.msra.mxu0 %v8390
    %8803 = vmatmul.bf16.gmra.mxu0 %v7623
    %v8804 = vpop.f32.mrf.mxu0
    %v8805 = vadd.f32 %v8792, %v8804
    %v8806 = vpop.f32.mrf.mxu0
    %8807 = vdwg.mxu0
    %8808 = vmatpush.bf16.msra.mxu0 %v8495
    %8809 = vmatpush.bf16.msra.mxu0 %v8488
    %8810 = vmatpush.bf16.msra.mxu0 %v8481
    %8811 = vmatpush.bf16.msra.mxu0 %v8474
    %8812 = vmatpush.bf16.msra.mxu0 %v8467
    %8813 = vmatpush.bf16.msra.mxu0 %v8460
    %8814 = vmatpush.bf16.msra.mxu0 %v8453
    %8815 = vmatpush.bf16.msra.mxu0 %v8446
    %8816 = vmatmul.bf16.gmra.mxu0 %v7624
    %v8817 = vpop.f32.mrf.mxu0
    %v8818 = vadd.f32 %v8805, %v8817
    %v8819 = vpop.f32.mrf.mxu0
    %8820 = vdwg.mxu0
    %8821 = vmatpush.bf16.msra.mxu0 %v8551
    %8822 = vmatpush.bf16.msra.mxu0 %v8544
    %8823 = vmatpush.bf16.msra.mxu0 %v8537
    %8824 = vmatpush.bf16.msra.mxu0 %v8530
    %8825 = vmatpush.bf16.msra.mxu0 %v8523
    %8826 = vmatpush.bf16.msra.mxu0 %v8516
    %8827 = vmatpush.bf16.msra.mxu0 %v8509
    %8828 = vmatpush.bf16.msra.mxu0 %v8502
    %8829 = vmatmul.bf16.gmra.mxu0 %v7625
    %v8830 = vpop.f32.mrf.mxu0
    %v8831 = vadd.f32 %v8818, %v8830
    %v8832 = vpop.f32.mrf.mxu0
    %8833 = vdwg.mxu0
    %8834 = vmatpush.bf16.msra.mxu0 %v8384
    %8835 = vmatpush.bf16.msra.mxu0 %v8377
    %8836 = vmatpush.bf16.msra.mxu0 %v8370
    %8837 = vmatpush.bf16.msra.mxu0 %v8363
    %8838 = vmatpush.bf16.msra.mxu0 %v8356
    %8839 = vmatpush.bf16.msra.mxu0 %v8349
    %8840 = vmatpush.bf16.msra.mxu0 %v8342
    %8841 = vmatpush.bf16.msra.mxu0 %v8335
    %8842 = vmatmul.bf16.gmra.mxu0 %v7622
    %v8843 = vpop.f32.mrf.mxu0
    %v8844 = vadd.f32 %v7603, %v8843
    %v8845 = vpop.f32.mrf.mxu0
    %8846 = vdwg.mxu0
    %8847 = vmatpush.bf16.msra.mxu0 %v8440
    %8848 = vmatpush.bf16.msra.mxu0 %v8433
    %8849 = vmatpush.bf16.msra.mxu0 %v8426
    %8850 = vmatpush.bf16.msra.mxu0 %v8419
    %8851 = vmatpush.bf16.msra.mxu0 %v8412
    %8852 = vmatpush.bf16.msra.mxu0 %v8405
    %8853 = vmatpush.bf16.msra.mxu0 %v8398
    %8854 = vmatpush.bf16.msra.mxu0 %v8391
    %8855 = vmatmul.bf16.gmra.mxu0 %v7623
    %v8856 = vpop.f32.mrf.mxu0
    %v8857 = vadd.f32 %v8844, %v8856
    %v8858 = vpop.f32.mrf.mxu0
    %8859 = vdwg.mxu0
    %8860 = vmatpush.bf16.msra.mxu0 %v8496
    %8861 = vmatpush.bf16.msra.mxu0 %v8489
    %8862 = vmatpush.bf16.msra.mxu0 %v8482
    %8863 = vmatpush.bf16.msra.mxu0 %v8475
    %8864 = vmatpush.bf16.msra.mxu0 %v8468
    %8865 = vmatpush.bf16.msra.mxu0 %v8461
    %8866 = vmatpush.bf16.msra.mxu0 %v8454
    %8867 = vmatpush.bf16.msra.mxu0 %v8447
    %8868 = vmatmul.bf16.gmra.mxu0 %v7624
    %v8869 = vpop.f32.mrf.mxu0
    %v8870 = vadd.f32 %v8857, %v8869
    %v8871 = vpop.f32.mrf.mxu0
    %8872 = vdwg.mxu0
    %8873 = vmatpush.bf16.msra.mxu0 %v8552
    %8874 = vmatpush.bf16.msra.mxu0 %v8545
    %8875 = vmatpush.bf16.msra.mxu0 %v8538
    %8876 = vmatpush.bf16.msra.mxu0 %v8531
    %8877 = vmatpush.bf16.msra.mxu0 %v8524
    %8878 = vmatpush.bf16.msra.mxu0 %v8517
    %8879 = vmatpush.bf16.msra.mxu0 %v8510
    %8880 = vmatpush.bf16.msra.mxu0 %v8503
    %8881 = vmatmul.bf16.gmra.mxu0 %v7625
    %v8882 = vpop.f32.mrf.mxu0
    %v8883 = vadd.f32 %v8870, %v8882
    %v8884 = vpop.f32.mrf.mxu0
    %8885 = vdwg.mxu0
    %8886 = vmatpush.bf16.msra.mxu0 %v8385
    %8887 = vmatpush.bf16.msra.mxu0 %v8378
    %8888 = vmatpush.bf16.msra.mxu0 %v8371
    %8889 = vmatpush.bf16.msra.mxu0 %v8364
    %8890 = vmatpush.bf16.msra.mxu0 %v8357
    %8891 = vmatpush.bf16.msra.mxu0 %v8350
    %8892 = vmatpush.bf16.msra.mxu0 %v8343
    %8893 = vmatpush.bf16.msra.mxu0 %v8336
    %8894 = vmatmul.bf16.gmra.mxu0 %v7622
    %v8895 = vpop.f32.mrf.mxu0
    %v8896 = vadd.f32 %v7604, %v8895
    %v8897 = vpop.f32.mrf.mxu0
    %8898 = vdwg.mxu0
    %8899 = vmatpush.bf16.msra.mxu0 %v8441
    %8900 = vmatpush.bf16.msra.mxu0 %v8434
    %8901 = vmatpush.bf16.msra.mxu0 %v8427
    %8902 = vmatpush.bf16.msra.mxu0 %v8420
    %8903 = vmatpush.bf16.msra.mxu0 %v8413
    %8904 = vmatpush.bf16.msra.mxu0 %v8406
    %8905 = vmatpush.bf16.msra.mxu0 %v8399
    %8906 = vmatpush.bf16.msra.mxu0 %v8392
    %8907 = vmatmul.bf16.gmra.mxu0 %v7623
    %v8908 = vpop.f32.mrf.mxu0
    %v8909 = vadd.f32 %v8896, %v8908
    %v8910 = vpop.f32.mrf.mxu0
    %8911 = vdwg.mxu0
    %8912 = vmatpush.bf16.msra.mxu0 %v8497
    %8913 = vmatpush.bf16.msra.mxu0 %v8490
    %8914 = vmatpush.bf16.msra.mxu0 %v8483
    %8915 = vmatpush.bf16.msra.mxu0 %v8476
    %8916 = vmatpush.bf16.msra.mxu0 %v8469
    %8917 = vmatpush.bf16.msra.mxu0 %v8462
    %8918 = vmatpush.bf16.msra.mxu0 %v8455
    %8919 = vmatpush.bf16.msra.mxu0 %v8448
    %8920 = vmatmul.bf16.gmra.mxu0 %v7624
    %v8921 = vpop.f32.mrf.mxu0
    %v8922 = vadd.f32 %v8909, %v8921
    %v8923 = vpop.f32.mrf.mxu0
    %8924 = vdwg.mxu0
    %8925 = vmatpush.bf16.msra.mxu0 %v8553
    %8926 = vmatpush.bf16.msra.mxu0 %v8546
    %8927 = vmatpush.bf16.msra.mxu0 %v8539
    %8928 = vmatpush.bf16.msra.mxu0 %v8532
    %8929 = vmatpush.bf16.msra.mxu0 %v8525
    %8930 = vmatpush.bf16.msra.mxu0 %v8518
    %8931 = vmatpush.bf16.msra.mxu0 %v8511
    %8932 = vmatpush.bf16.msra.mxu0 %v8504
    %8933 = vmatmul.bf16.gmra.mxu0 %v7625
    %v8934 = vpop.f32.mrf.mxu0
    %v8935 = vadd.f32 %v8922, %v8934
    %v8936 = vpop.f32.mrf.mxu0
    %8937 = vdwg.mxu0
    %8938 = vmatpush.bf16.msra.mxu0 %v8386
    %8939 = vmatpush.bf16.msra.mxu0 %v8379
    %8940 = vmatpush.bf16.msra.mxu0 %v8372
    %8941 = vmatpush.bf16.msra.mxu0 %v8365
    %8942 = vmatpush.bf16.msra.mxu0 %v8358
    %8943 = vmatpush.bf16.msra.mxu0 %v8351
    %8944 = vmatpush.bf16.msra.mxu0 %v8344
    %8945 = vmatpush.bf16.msra.mxu0 %v8337
    %8946 = vmatmul.bf16.gmra.mxu0 %v7622
    %v8947 = vpop.f32.mrf.mxu0
    %v8948 = vadd.f32 %v7605, %v8947
    %v8949 = vpop.f32.mrf.mxu0
    %8950 = vdwg.mxu0
    %8951 = vmatpush.bf16.msra.mxu0 %v8442
    %8952 = vmatpush.bf16.msra.mxu0 %v8435
    %8953 = vmatpush.bf16.msra.mxu0 %v8428
    %8954 = vmatpush.bf16.msra.mxu0 %v8421
    %8955 = vmatpush.bf16.msra.mxu0 %v8414
    %8956 = vmatpush.bf16.msra.mxu0 %v8407
    %8957 = vmatpush.bf16.msra.mxu0 %v8400
    %8958 = vmatpush.bf16.msra.mxu0 %v8393
    %8959 = vmatmul.bf16.gmra.mxu0 %v7623
    %v8960 = vpop.f32.mrf.mxu0
    %v8961 = vadd.f32 %v8948, %v8960
    %v8962 = vpop.f32.mrf.mxu0
    %8963 = vdwg.mxu0
    %8964 = vmatpush.bf16.msra.mxu0 %v8498
    %8965 = vmatpush.bf16.msra.mxu0 %v8491
    %8966 = vmatpush.bf16.msra.mxu0 %v8484
    %8967 = vmatpush.bf16.msra.mxu0 %v8477
    %8968 = vmatpush.bf16.msra.mxu0 %v8470
    %8969 = vmatpush.bf16.msra.mxu0 %v8463
    %8970 = vmatpush.bf16.msra.mxu0 %v8456
    %8971 = vmatpush.bf16.msra.mxu0 %v8449
    %8972 = vmatmul.bf16.gmra.mxu0 %v7624
    %v8973 = vpop.f32.mrf.mxu0
    %v8974 = vadd.f32 %v8961, %v8973
    %v8975 = vpop.f32.mrf.mxu0
    %8976 = vdwg.mxu0
    %8977 = vmatpush.bf16.msra.mxu0 %v8554
    %8978 = vmatpush.bf16.msra.mxu0 %v8547
    %8979 = vmatpush.bf16.msra.mxu0 %v8540
    %8980 = vmatpush.bf16.msra.mxu0 %v8533
    %8981 = vmatpush.bf16.msra.mxu0 %v8526
    %8982 = vmatpush.bf16.msra.mxu0 %v8519
    %8983 = vmatpush.bf16.msra.mxu0 %v8512
    %8984 = vmatpush.bf16.msra.mxu0 %v8505
    %8985 = vmatmul.bf16.gmra.mxu0 %v7625
    %v8986 = vpop.f32.mrf.mxu0
    %v8987 = vadd.f32 %v8974, %v8986
    %v8988 = vpop.f32.mrf.mxu0
    %8989 = vdwg.mxu0
    %8990 = vmatpush.bf16.msra.mxu0 %v8387
    %8991 = vmatpush.bf16.msra.mxu0 %v8380
    %8992 = vmatpush.bf16.msra.mxu0 %v8373
    %8993 = vmatpush.bf16.msra.mxu0 %v8366
    %8994 = vmatpush.bf16.msra.mxu0 %v8359
    %8995 = vmatpush.bf16.msra.mxu0 %v8352
    %8996 = vmatpush.bf16.msra.mxu0 %v8345
    %8997 = vmatpush.bf16.msra.mxu0 %v8338
    %8998 = vmatmul.bf16.gmra.mxu0 %v7622
    %v8999 = vpop.f32.mrf.mxu0
    %v9000 = vadd.f32 %v7606, %v8999
    %v9001 = vpop.f32.mrf.mxu0
    %9002 = vdwg.mxu0
    %9003 = vmatpush.bf16.msra.mxu0 %v8443
    %9004 = vmatpush.bf16.msra.mxu0 %v8436
    %9005 = vmatpush.bf16.msra.mxu0 %v8429
    %9006 = vmatpush.bf16.msra.mxu0 %v8422
    %9007 = vmatpush.bf16.msra.mxu0 %v8415
    %9008 = vmatpush.bf16.msra.mxu0 %v8408
    %9009 = vmatpush.bf16.msra.mxu0 %v8401
    %9010 = vmatpush.bf16.msra.mxu0 %v8394
    %9011 = vmatmul.bf16.gmra.mxu0 %v7623
    %v9012 = vpop.f32.mrf.mxu0
    %v9013 = vadd.f32 %v9000, %v9012
    %v9014 = vpop.f32.mrf.mxu0
    %9015 = vdwg.mxu0
    %9016 = vmatpush.bf16.msra.mxu0 %v8499
    %9017 = vmatpush.bf16.msra.mxu0 %v8492
    %9018 = vmatpush.bf16.msra.mxu0 %v8485
    %9019 = vmatpush.bf16.msra.mxu0 %v8478
    %9020 = vmatpush.bf16.msra.mxu0 %v8471
    %9021 = vmatpush.bf16.msra.mxu0 %v8464
    %9022 = vmatpush.bf16.msra.mxu0 %v8457
    %9023 = vmatpush.bf16.msra.mxu0 %v8450
    %9024 = vmatmul.bf16.gmra.mxu0 %v7624
    %v9025 = vpop.f32.mrf.mxu0
    %v9026 = vadd.f32 %v9013, %v9025
    %v9027 = vpop.f32.mrf.mxu0
    %9028 = vdwg.mxu0
    %9029 = vmatpush.bf16.msra.mxu0 %v8555
    %9030 = vmatpush.bf16.msra.mxu0 %v8548
    %9031 = vmatpush.bf16.msra.mxu0 %v8541
    %9032 = vmatpush.bf16.msra.mxu0 %v8534
    %9033 = vmatpush.bf16.msra.mxu0 %v8527
    %9034 = vmatpush.bf16.msra.mxu0 %v8520
    %9035 = vmatpush.bf16.msra.mxu0 %v8513
    %9036 = vmatpush.bf16.msra.mxu0 %v8506
    %9037 = vmatmul.bf16.gmra.mxu0 %v7625
    %v9038 = vpop.f32.mrf.mxu0
    %v9039 = vadd.f32 %v9026, %v9038
    %v9040 = vpop.f32.mrf.mxu0
    %9041 = vdwg.mxu0
    %9042 = vmatpush.bf16.msra.mxu0 %v8388
    %9043 = vmatpush.bf16.msra.mxu0 %v8381
    %9044 = vmatpush.bf16.msra.mxu0 %v8374
    %9045 = vmatpush.bf16.msra.mxu0 %v8367
    %9046 = vmatpush.bf16.msra.mxu0 %v8360
    %9047 = vmatpush.bf16.msra.mxu0 %v8353
    %9048 = vmatpush.bf16.msra.mxu0 %v8346
    %9049 = vmatpush.bf16.msra.mxu0 %v8339
    %9050 = vmatmul.bf16.gmra.mxu0 %v7622
    %v9051 = vpop.f32.mrf.mxu0
    %v9052 = vadd.f32 %v7607, %v9051
    %v9053 = vpop.f32.mrf.mxu0
    %9054 = vdwg.mxu0
    %9055 = vmatpush.bf16.msra.mxu0 %v8444
    %9056 = vmatpush.bf16.msra.mxu0 %v8437
    %9057 = vmatpush.bf16.msra.mxu0 %v8430
    %9058 = vmatpush.bf16.msra.mxu0 %v8423
    %9059 = vmatpush.bf16.msra.mxu0 %v8416
    %9060 = vmatpush.bf16.msra.mxu0 %v8409
    %9061 = vmatpush.bf16.msra.mxu0 %v8402
    %9062 = vmatpush.bf16.msra.mxu0 %v8395
    %9063 = vmatmul.bf16.gmra.mxu0 %v7623
    %v9064 = vpop.f32.mrf.mxu0
    %v9065 = vadd.f32 %v9052, %v9064
    %v9066 = vpop.f32.mrf.mxu0
    %9067 = vdwg.mxu0
    %9068 = vmatpush.bf16.msra.mxu0 %v8500
    %9069 = vmatpush.bf16.msra.mxu0 %v8493
    %9070 = vmatpush.bf16.msra.mxu0 %v8486
    %9071 = vmatpush.bf16.msra.mxu0 %v8479
    %9072 = vmatpush.bf16.msra.mxu0 %v8472
    %9073 = vmatpush.bf16.msra.mxu0 %v8465
    %9074 = vmatpush.bf16.msra.mxu0 %v8458
    %9075 = vmatpush.bf16.msra.mxu0 %v8451
    %9076 = vmatmul.bf16.gmra.mxu0 %v7624
    %v9077 = vpop.f32.mrf.mxu0
    %v9078 = vadd.f32 %v9065, %v9077
    %v9079 = vpop.f32.mrf.mxu0
    %9080 = vdwg.mxu0
    %9081 = vmatpush.bf16.msra.mxu0 %v8556
    %9082 = vmatpush.bf16.msra.mxu0 %v8549
    %9083 = vmatpush.bf16.msra.mxu0 %v8542
    %9084 = vmatpush.bf16.msra.mxu0 %v8535
    %9085 = vmatpush.bf16.msra.mxu0 %v8528
    %9086 = vmatpush.bf16.msra.mxu0 %v8521
    %9087 = vmatpush.bf16.msra.mxu0 %v8514
    %9088 = vmatpush.bf16.msra.mxu0 %v8507
    %9089 = vmatmul.bf16.gmra.mxu0 %v7625
    %v9090 = vpop.f32.mrf.mxu0
    %v9091 = vadd.f32 %v9078, %v9090
    %v9092 = vpop.f32.mrf.mxu0
    %9093 = vdwg.mxu0
    %9094 = vmatpush.bf16.msra.mxu0 %v8389
    %9095 = vmatpush.bf16.msra.mxu0 %v8382
    %9096 = vmatpush.bf16.msra.mxu0 %v8375
    %9097 = vmatpush.bf16.msra.mxu0 %v8368
    %9098 = vmatpush.bf16.msra.mxu0 %v8361
    %9099 = vmatpush.bf16.msra.mxu0 %v8354
    %9100 = vmatpush.bf16.msra.mxu0 %v8347
    %9101 = vmatpush.bf16.msra.mxu0 %v8340
    %9102 = vmatmul.bf16.gmra.mxu0 %v7622
    %v9103 = vpop.f32.mrf.mxu0
    %v9104 = vadd.f32 %v7608, %v9103
    %v9105 = vpop.f32.mrf.mxu0
    %9106 = vdwg.mxu0
    %9107 = vmatpush.bf16.msra.mxu0 %v8445
    %9108 = vmatpush.bf16.msra.mxu0 %v8438
    %9109 = vmatpush.bf16.msra.mxu0 %v8431
    %9110 = vmatpush.bf16.msra.mxu0 %v8424
    %9111 = vmatpush.bf16.msra.mxu0 %v8417
    %9112 = vmatpush.bf16.msra.mxu0 %v8410
    %9113 = vmatpush.bf16.msra.mxu0 %v8403
    %9114 = vmatpush.bf16.msra.mxu0 %v8396
    %9115 = vmatmul.bf16.gmra.mxu0 %v7623
    %v9116 = vpop.f32.mrf.mxu0
    %v9117 = vadd.f32 %v9104, %v9116
    %v9118 = vpop.f32.mrf.mxu0
    %9119 = vdwg.mxu0
    %9120 = vmatpush.bf16.msra.mxu0 %v8501
    %9121 = vmatpush.bf16.msra.mxu0 %v8494
    %9122 = vmatpush.bf16.msra.mxu0 %v8487
    %9123 = vmatpush.bf16.msra.mxu0 %v8480
    %9124 = vmatpush.bf16.msra.mxu0 %v8473
    %9125 = vmatpush.bf16.msra.mxu0 %v8466
    %9126 = vmatpush.bf16.msra.mxu0 %v8459
    %9127 = vmatpush.bf16.msra.mxu0 %v8452
    %9128 = vmatmul.bf16.gmra.mxu0 %v7624
    %v9129 = vpop.f32.mrf.mxu0
    %v9130 = vadd.f32 %v9117, %v9129
    %v9131 = vpop.f32.mrf.mxu0
    %9132 = vdwg.mxu0
    %9133 = vmatpush.bf16.msra.mxu0 %v8557
    %9134 = vmatpush.bf16.msra.mxu0 %v8550
    %9135 = vmatpush.bf16.msra.mxu0 %v8543
    %9136 = vmatpush.bf16.msra.mxu0 %v8536
    %9137 = vmatpush.bf16.msra.mxu0 %v8529
    %9138 = vmatpush.bf16.msra.mxu0 %v8522
    %9139 = vmatpush.bf16.msra.mxu0 %v8515
    %9140 = vmatpush.bf16.msra.mxu0 %v8508
    %9141 = vmatmul.bf16.gmra.mxu0 %v7625
    %v9142 = vpop.f32.mrf.mxu0
    %v9143 = vadd.f32 %v9130, %v9142
    %v9144 = vpop.f32.mrf.mxu0
    %9145 = vdwg.mxu0
    %v9146 = vxor.u32 %v8831, 2147483648
    %v9147 = vxor.u32 %v8883, 2147483648
    %v9148 = vxor.u32 %v8935, 2147483648
    %v9149 = vxor.u32 %v8987, 2147483648
    %v9150 = vxor.u32 %v9039, 2147483648
    %v9151 = vxor.u32 %v9091, 2147483648
    %v9152 = vxor.u32 %v9143, 2147483648
    %v9153 = vmul.f32 %v9146, 1.442695
    %v9154 = vpow.pop %v9153
    %v9155 = vmul.f32 %v9147, 1.442695
    %v9156 = vpow.pop %v9155
    %v9157 = vmul.f32 %v9148, 1.442695
    %v9158 = vpow.pop %v9157
    %v9159 = vmul.f32 %v9149, 1.442695
    %v9160 = vpow.pop %v9159
    %v9161 = vmul.f32 %v9150, 1.442695
    %v9162 = vpow.pop %v9161
    %v9163 = vmul.f32 %v9151, 1.442695
    %v9164 = vpow.pop %v9163
    %v9165 = vmul.f32 %v9152, 1.442695
    %v9166 = vpow.pop %v9165
    %v9167 = vadd.f32 %v9154, 1.0
    %v9168 = vadd.f32 %v9156, 1.0
    %v9169 = vadd.f32 %v9158, 1.0
    %v9170 = vadd.f32 %v9160, 1.0
    %v9171 = vadd.f32 %v9162, 1.0
    %v9172 = vadd.f32 %v9164, 1.0
    %v9173 = vadd.f32 %v9166, 1.0
    %v9174 = vrcp.pop %v9167
    %v9175 = vmul.f32 %v9167, %v9174
    %v9176 = vsub.f32 1.0, %v9175
    %v9177 = vmul.f32 %v9174, %v9176
    %v9178 = vadd.f32 %v9174, %v9177
    %vm9179 = vweird.f32 %v9167
    %vm9180 = vweird.f32 %v9174
    %vm9181 = vmor %vm9179, %vm9180
    %v9182 = vsel %vm9181, %v9174, %v9178
    %v9183 = vand.u32 2147483647, %v9167
    %vm9184 = vcmp.eq.f32.partialorder %v9183, 8.507059e+37
    %v9185 = vand.u32 %v9167, 2147483648
    %v9186 = vor.u32 1.1754944e-38, %v9185
    %v9187 = vsel %vm9184, %v9186, %v9182
    %v9188 = vmul.f32 1.0, %v9187
    %v9189 = vrcp.pop %v9168
    %v9190 = vmul.f32 %v9168, %v9189
    %v9191 = vsub.f32 1.0, %v9190
    %v9192 = vmul.f32 %v9189, %v9191
    %v9193 = vadd.f32 %v9189, %v9192
    %vm9194 = vweird.f32 %v9168
    %vm9195 = vweird.f32 %v9189
    %vm9196 = vmor %vm9194, %vm9195
    %v9197 = vsel %vm9196, %v9189, %v9193
    %v9198 = vand.u32 2147483647, %v9168
    %vm9199 = vcmp.eq.f32.partialorder %v9198, 8.507059e+37
    %v9200 = vand.u32 %v9168, 2147483648
    %v9201 = vor.u32 1.1754944e-38, %v9200
    %v9202 = vsel %vm9199, %v9201, %v9197
    %v9203 = vmul.f32 1.0, %v9202
    %v9204 = vrcp.pop %v9169
    %v9205 = vmul.f32 %v9169, %v9204
    %v9206 = vsub.f32 1.0, %v9205
    %v9207 = vmul.f32 %v9204, %v9206
    %v9208 = vadd.f32 %v9204, %v9207
    %vm9209 = vweird.f32 %v9169
    %vm9210 = vweird.f32 %v9204
    %vm9211 = vmor %vm9209, %vm9210
    %v9212 = vsel %vm9211, %v9204, %v9208
    %v9213 = vand.u32 2147483647, %v9169
    %vm9214 = vcmp.eq.f32.partialorder %v9213, 8.507059e+37
    %v9215 = vand.u32 %v9169, 2147483648
    %v9216 = vor.u32 1.1754944e-38, %v9215
    %v9217 = vsel %vm9214, %v9216, %v9212
    %v9218 = vmul.f32 1.0, %v9217
    %v9219 = vrcp.pop %v9170
    %v9220 = vmul.f32 %v9170, %v9219
    %v9221 = vsub.f32 1.0, %v9220
    %v9222 = vmul.f32 %v9219, %v9221
    %v9223 = vadd.f32 %v9219, %v9222
    %vm9224 = vweird.f32 %v9170
    %vm9225 = vweird.f32 %v9219
    %vm9226 = vmor %vm9224, %vm9225
    %v9227 = vsel %vm9226, %v9219, %v9223
    %v9228 = vand.u32 2147483647, %v9170
    %vm9229 = vcmp.eq.f32.partialorder %v9228, 8.507059e+37
    %v9230 = vand.u32 %v9170, 2147483648
    %v9231 = vor.u32 1.1754944e-38, %v9230
    %v9232 = vsel %vm9229, %v9231, %v9227
    %v9233 = vmul.f32 1.0, %v9232
    %v9234 = vrcp.pop %v9171
    %v9235 = vmul.f32 %v9171, %v9234
    %v9236 = vsub.f32 1.0, %v9235
    %v9237 = vmul.f32 %v9234, %v9236
    %v9238 = vadd.f32 %v9234, %v9237
    %vm9239 = vweird.f32 %v9171
    %vm9240 = vweird.f32 %v9234
    %vm9241 = vmor %vm9239, %vm9240
    %v9242 = vsel %vm9241, %v9234, %v9238
    %v9243 = vand.u32 2147483647, %v9171
    %vm9244 = vcmp.eq.f32.partialorder %v9243, 8.507059e+37
    %v9245 = vand.u32 %v9171, 2147483648
    %v9246 = vor.u32 1.1754944e-38, %v9245
    %v9247 = vsel %vm9244, %v9246, %v9242
    %v9248 = vmul.f32 1.0, %v9247
    %v9249 = vrcp.pop %v9172
    %v9250 = vmul.f32 %v9172, %v9249
    %v9251 = vsub.f32 1.0, %v9250
    %v9252 = vmul.f32 %v9249, %v9251
    %v9253 = vadd.f32 %v9249, %v9252
    %vm9254 = vweird.f32 %v9172
    %vm9255 = vweird.f32 %v9249
    %vm9256 = vmor %vm9254, %vm9255
    %v9257 = vsel %vm9256, %v9249, %v9253
    %v9258 = vand.u32 2147483647, %v9172
    %vm9259 = vcmp.eq.f32.partialorder %v9258, 8.507059e+37
    %v9260 = vand.u32 %v9172, 2147483648
    %v9261 = vor.u32 1.1754944e-38, %v9260
    %v9262 = vsel %vm9259, %v9261, %v9257
    %v9263 = vmul.f32 1.0, %v9262
    %v9264 = vrcp.pop %v9173
    %v9265 = vmul.f32 %v9173, %v9264
    %v9266 = vsub.f32 1.0, %v9265
    %v9267 = vmul.f32 %v9264, %v9266
    %v9268 = vadd.f32 %v9264, %v9267
    %vm9269 = vweird.f32 %v9173
    %vm9270 = vweird.f32 %v9264
    %vm9271 = vmor %vm9269, %vm9270
    %v9272 = vsel %vm9271, %v9264, %v9268
    %v9273 = vand.u32 2147483647, %v9173
    %vm9274 = vcmp.eq.f32.partialorder %v9273, 8.507059e+37
    %v9275 = vand.u32 %v9173, 2147483648
    %v9276 = vor.u32 1.1754944e-38, %v9275
    %v9277 = vsel %vm9274, %v9276, %v9272
    %v9278 = vmul.f32 1.0, %v9277
    %v9285 = vrot.slane %v9203, 4
    %v9286 = vrot.slane %v9233, 4
    %v9287 = vrot.slane %v9263, 4
    %v9288 = vsel %vm5264, %v9188, %v9285
    %v9289 = vsel %vm5264, %v9218, %v9286
    %v9290 = vsel %vm5264, %v9248, %v9287
    %9294 = vst [vmem:[#allocation2] sm:$0xff] %v9288
    %9295 = vst [vmem:[#allocation2 + $0x8] sm:$0xff] %v9289
    %9296 = vst [vmem:[#allocation2 + $0x10] sm:$0xff] %v9290
    %vm9297 = vcmask 125952
    %9298 = vst.msk [vmem:[#allocation2 + $0x18] sm:$0xf] %vm9297, %v9278
    %s9299 = scalar_lea.vmem %s9, 1792
    %v9300 = vld [vmem:[%s9299] sm:$0xff]
    %v9301 = vld [vmem:[%s9299 + $0x8] sm:$0xff]
    %v9302 = vld [vmem:[%s9299 + $0x10] sm:$0xff]
    %v9303 = vld [vmem:[%s9299 + $0x18] sm:$0xf]
    %v9304 = vld [vmem:[%s9299 + $0x1c] sm:$0xff]
    %v9305 = vld [vmem:[%s9299 + $0x24] sm:$0xff]
    %v9306 = vld [vmem:[%s9299 + $0x2c] sm:$0xff]
    %v9307 = vld [vmem:[%s9299 + $0x34] sm:$0xf]
    %v9308 = vld [vmem:[%s9299 + $0x38] sm:$0xff]
    %v9309 = vld [vmem:[%s9299 + $0x40] sm:$0xff]
    %v9310 = vld [vmem:[%s9299 + $0x48] sm:$0xff]
    %v9311 = vld [vmem:[%s9299 + $0x50] sm:$0xf]
    %v9312 = vld [vmem:[%s9299 + $0x54] sm:$0xff]
    %v9313 = vld [vmem:[%s9299 + $0x5c] sm:$0xff]
    %v9314 = vld [vmem:[%s9299 + $0x64] sm:$0xff]
    %v9315 = vld [vmem:[%s9299 + $0x6c] sm:$0xf]
    %v9316 = vld [vmem:[%s9299 + $0x70] sm:$0xff]
    %v9317 = vld [vmem:[%s9299 + $0x78] sm:$0xff]
    %v9318 = vld [vmem:[%s9299 + $0x80] sm:$0xff]
    %v9319 = vld [vmem:[%s9299 + $0x88] sm:$0xf]
    %v9320 = vld [vmem:[%s9299 + $0x8c] sm:$0xff]
    %v9321 = vld [vmem:[%s9299 + $0x94] sm:$0xff]
    %v9322 = vld [vmem:[%s9299 + $0x9c] sm:$0xff]
    %v9323 = vld [vmem:[%s9299 + $0xa4] sm:$0xf]
    %v9324 = vld [vmem:[%s9299 + $0xa8] sm:$0xff]
    %v9325 = vld [vmem:[%s9299 + $0xb0] sm:$0xff]
    %v9326 = vld [vmem:[%s9299 + $0xb8] sm:$0xff]
    %v9327 = vld [vmem:[%s9299 + $0xc0] sm:$0xf]
    %v9328 = vld [vmem:[%s9299 + $0xc4] sm:$0xff]
    %v9329 = vld [vmem:[%s9299 + $0xcc] sm:$0xff]
    %v9330 = vld [vmem:[%s9299 + $0xd4] sm:$0xff]
    %v9331 = vld [vmem:[%s9299 + $0xdc] sm:$0xf]
    %v9332 = vld [vmem:[%s9299 + $0xe0] sm:$0xff]
    %v9333 = vld [vmem:[%s9299 + $0xe8] sm:$0xff]
    %v9334 = vld [vmem:[%s9299 + $0xf0] sm:$0xff]
    %v9335 = vld [vmem:[%s9299 + $0xf8] sm:$0xf]
    %v9336 = vld [vmem:[%s9299 + $0xfc] sm:$0xff]
    %v9337 = vld [vmem:[%s9299 + $0x104] sm:$0xff]
    %v9338 = vld [vmem:[%s9299 + $0x10c] sm:$0xff]
    %v9339 = vld [vmem:[%s9299 + $0x114] sm:$0xf]
    %v9340 = vld [vmem:[%s9299 + $0x118] sm:$0xff]
    %v9341 = vld [vmem:[%s9299 + $0x120] sm:$0xff]
    %v9342 = vld [vmem:[%s9299 + $0x128] sm:$0xff]
    %v9343 = vld [vmem:[%s9299 + $0x130] sm:$0xf]
    %v9344 = vld [vmem:[%s9299 + $0x134] sm:$0xff]
    %v9345 = vld [vmem:[%s9299 + $0x13c] sm:$0xff]
    %v9346 = vld [vmem:[%s9299 + $0x144] sm:$0xff]
    %v9347 = vld [vmem:[%s9299 + $0x14c] sm:$0xf]
    %v9348 = vld [vmem:[%s9299 + $0x150] sm:$0xff]
    %v9349 = vld [vmem:[%s9299 + $0x158] sm:$0xff]
    %v9350 = vld [vmem:[%s9299 + $0x160] sm:$0xff]
    %v9351 = vld [vmem:[%s9299 + $0x168] sm:$0xf]
    %v9352 = vld [vmem:[%s9299 + $0x16c] sm:$0xff]
    %v9353 = vld [vmem:[%s9299 + $0x174] sm:$0xff]
    %v9354 = vld [vmem:[%s9299 + $0x17c] sm:$0xff]
    %v9355 = vld [vmem:[%s9299 + $0x184] sm:$0xf]
    %v9356 = vld [vmem:[%s9299 + $0x188] sm:$0xff]
    %v9357 = vld [vmem:[%s9299 + $0x190] sm:$0xff]
    %v9358 = vld [vmem:[%s9299 + $0x198] sm:$0xff]
    %v9359 = vld [vmem:[%s9299 + $0x1a0] sm:$0xf]
    %v9360 = vld [vmem:[%s9299 + $0x1a4] sm:$0xff]
    %v9361 = vld [vmem:[%s9299 + $0x1ac] sm:$0xff]
    %v9362 = vld [vmem:[%s9299 + $0x1b4] sm:$0xff]
    %v9363 = vld [vmem:[%s9299 + $0x1bc] sm:$0xf]
    %v9364 = vld [vmem:[%s9299 + $0x1c0] sm:$0xff]
    %v9365 = vld [vmem:[%s9299 + $0x1c8] sm:$0xff]
    %v9366 = vld [vmem:[%s9299 + $0x1d0] sm:$0xff]
    %v9367 = vld [vmem:[%s9299 + $0x1d8] sm:$0xf]
    %v9368 = vld [vmem:[%s9299 + $0x1dc] sm:$0xff]
    %v9369 = vld [vmem:[%s9299 + $0x1e4] sm:$0xff]
    %v9370 = vld [vmem:[%s9299 + $0x1ec] sm:$0xff]
    %v9371 = vld [vmem:[%s9299 + $0x1f4] sm:$0xf]
    %v9372 = vld [vmem:[%s9299 + $0x1f8] sm:$0xff]
    %v9373 = vld [vmem:[%s9299 + $0x200] sm:$0xff]
    %v9374 = vld [vmem:[%s9299 + $0x208] sm:$0xff]
    %v9375 = vld [vmem:[%s9299 + $0x210] sm:$0xf]
    %v9376 = vld [vmem:[%s9299 + $0x214] sm:$0xff]
    %v9377 = vld [vmem:[%s9299 + $0x21c] sm:$0xff]
    %v9378 = vld [vmem:[%s9299 + $0x224] sm:$0xff]
    %v9379 = vld [vmem:[%s9299 + $0x22c] sm:$0xf]
    %v9380 = vld [vmem:[%s9299 + $0x230] sm:$0xff]
    %v9381 = vld [vmem:[%s9299 + $0x238] sm:$0xff]
    %v9382 = vld [vmem:[%s9299 + $0x240] sm:$0xff]
    %v9383 = vld [vmem:[%s9299 + $0x248] sm:$0xf]
    %v9384 = vld [vmem:[%s9299 + $0x24c] sm:$0xff]
    %v9385 = vld [vmem:[%s9299 + $0x254] sm:$0xff]
    %v9386 = vld [vmem:[%s9299 + $0x25c] sm:$0xff]
    %v9387 = vld [vmem:[%s9299 + $0x264] sm:$0xf]
    %v9388 = vld [vmem:[%s9299 + $0x268] sm:$0xff]
    %v9389 = vld [vmem:[%s9299 + $0x270] sm:$0xff]
    %v9390 = vld [vmem:[%s9299 + $0x278] sm:$0xff]
    %v9391 = vld [vmem:[%s9299 + $0x280] sm:$0xf]
    %v9392 = vld [vmem:[%s9299 + $0x284] sm:$0xff]
    %v9393 = vld [vmem:[%s9299 + $0x28c] sm:$0xff]
    %v9394 = vld [vmem:[%s9299 + $0x294] sm:$0xff]
    %v9395 = vld [vmem:[%s9299 + $0x29c] sm:$0xf]
    %v9396 = vld [vmem:[%s9299 + $0x2a0] sm:$0xff]
    %v9397 = vld [vmem:[%s9299 + $0x2a8] sm:$0xff]
    %v9398 = vld [vmem:[%s9299 + $0x2b0] sm:$0xff]
    %v9399 = vld [vmem:[%s9299 + $0x2b8] sm:$0xf]
    %v9400 = vld [vmem:[%s9299 + $0x2bc] sm:$0xff]
    %v9401 = vld [vmem:[%s9299 + $0x2c4] sm:$0xff]
    %v9402 = vld [vmem:[%s9299 + $0x2cc] sm:$0xff]
    %v9403 = vld [vmem:[%s9299 + $0x2d4] sm:$0xf]
    %v9404 = vld [vmem:[%s9299 + $0x2d8] sm:$0xff]
    %v9405 = vld [vmem:[%s9299 + $0x2e0] sm:$0xff]
    %v9406 = vld [vmem:[%s9299 + $0x2e8] sm:$0xff]
    %v9407 = vld [vmem:[%s9299 + $0x2f0] sm:$0xf]
    %v9408 = vld [vmem:[%s9299 + $0x2f4] sm:$0xff]
    %v9409 = vld [vmem:[%s9299 + $0x2fc] sm:$0xff]
    %v9410 = vld [vmem:[%s9299 + $0x304] sm:$0xff]
    %v9411 = vld [vmem:[%s9299 + $0x30c] sm:$0xf]
    %v9412 = vld [vmem:[%s9299 + $0x310] sm:$0xff]
    %v9413 = vld [vmem:[%s9299 + $0x318] sm:$0xff]
    %v9414 = vld [vmem:[%s9299 + $0x320] sm:$0xff]
    %v9415 = vld [vmem:[%s9299 + $0x328] sm:$0xf]
    %v9416 = vld [vmem:[%s9299 + $0x32c] sm:$0xff]
    %v9417 = vld [vmem:[%s9299 + $0x334] sm:$0xff]
    %v9418 = vld [vmem:[%s9299 + $0x33c] sm:$0xff]
    %v9419 = vld [vmem:[%s9299 + $0x344] sm:$0xf]
    %v9420 = vld [vmem:[%s9299 + $0x348] sm:$0xff]
    %v9421 = vld [vmem:[%s9299 + $0x350] sm:$0xff]
    %v9422 = vld [vmem:[%s9299 + $0x358] sm:$0xff]
    %v9423 = vld [vmem:[%s9299 + $0x360] sm:$0xf]
    %v9424 = vld [vmem:[%s9299 + $0x364] sm:$0xff]
    %v9425 = vld [vmem:[%s9299 + $0x36c] sm:$0xff]
    %v9426 = vld [vmem:[%s9299 + $0x374] sm:$0xff]
    %v9427 = vld [vmem:[%s9299 + $0x37c] sm:$0xf]
    %v9428 = vld [vmem:[%s9299 + $0x380] sm:$0xff]
    %v9429 = vld [vmem:[%s9299 + $0x388] sm:$0xff]
    %v9430 = vld [vmem:[%s9299 + $0x390] sm:$0xff]
    %v9431 = vld [vmem:[%s9299 + $0x398] sm:$0xf]
    %v9432 = vld [vmem:[%s9299 + $0x39c] sm:$0xff]
    %v9433 = vld [vmem:[%s9299 + $0x3a4] sm:$0xff]
    %v9434 = vld [vmem:[%s9299 + $0x3ac] sm:$0xff]
    %v9435 = vld [vmem:[%s9299 + $0x3b4] sm:$0xf]
    %v9436 = vld [vmem:[%s9299 + $0x3b8] sm:$0xff]
    %v9437 = vld [vmem:[%s9299 + $0x3c0] sm:$0xff]
    %v9438 = vld [vmem:[%s9299 + $0x3c8] sm:$0xff]
    %v9439 = vld [vmem:[%s9299 + $0x3d0] sm:$0xf]
    %v9440 = vld [vmem:[%s9299 + $0x3d4] sm:$0xff]
    %v9441 = vld [vmem:[%s9299 + $0x3dc] sm:$0xff]
    %v9442 = vld [vmem:[%s9299 + $0x3e4] sm:$0xff]
    %v9443 = vld [vmem:[%s9299 + $0x3ec] sm:$0xf]
    %v9444 = vld [vmem:[%s9299 + $0x3f0] sm:$0xff]
    %v9445 = vld [vmem:[%s9299 + $0x3f8] sm:$0xff]
    %v9446 = vld [vmem:[%s9299 + $0x400] sm:$0xff]
    %v9447 = vld [vmem:[%s9299 + $0x408] sm:$0xf]
    %v9448 = vld [vmem:[%s9299 + $0x40c] sm:$0xff]
    %v9449 = vld [vmem:[%s9299 + $0x414] sm:$0xff]
    %v9450 = vld [vmem:[%s9299 + $0x41c] sm:$0xff]
    %v9451 = vld [vmem:[%s9299 + $0x424] sm:$0xf]
    %v9452 = vld [vmem:[%s9299 + $0x428] sm:$0xff]
    %v9453 = vld [vmem:[%s9299 + $0x430] sm:$0xff]
    %v9454 = vld [vmem:[%s9299 + $0x438] sm:$0xff]
    %v9455 = vld [vmem:[%s9299 + $0x440] sm:$0xf]
    %v9456 = vld [vmem:[%s9299 + $0x444] sm:$0xff]
    %v9457 = vld [vmem:[%s9299 + $0x44c] sm:$0xff]
    %v9458 = vld [vmem:[%s9299 + $0x454] sm:$0xff]
    %v9459 = vld [vmem:[%s9299 + $0x45c] sm:$0xf]
    %v9460 = vld [vmem:[%s9299 + $0x460] sm:$0xff]
    %v9461 = vld [vmem:[%s9299 + $0x468] sm:$0xff]
    %v9462 = vld [vmem:[%s9299 + $0x470] sm:$0xff]
    %v9463 = vld [vmem:[%s9299 + $0x478] sm:$0xf]
    %v9464 = vld [vmem:[%s9299 + $0x47c] sm:$0xff]
    %v9465 = vld [vmem:[%s9299 + $0x484] sm:$0xff]
    %v9466 = vld [vmem:[%s9299 + $0x48c] sm:$0xff]
    %v9467 = vld [vmem:[%s9299 + $0x494] sm:$0xf]
    %v9468 = vld [vmem:[%s9299 + $0x498] sm:$0xff]
    %v9469 = vld [vmem:[%s9299 + $0x4a0] sm:$0xff]
    %v9470 = vld [vmem:[%s9299 + $0x4a8] sm:$0xff]
    %v9471 = vld [vmem:[%s9299 + $0x4b0] sm:$0xf]
    %v9472 = vld [vmem:[%s9299 + $0x4b4] sm:$0xff]
    %v9473 = vld [vmem:[%s9299 + $0x4bc] sm:$0xff]
    %v9474 = vld [vmem:[%s9299 + $0x4c4] sm:$0xff]
    %v9475 = vld [vmem:[%s9299 + $0x4cc] sm:$0xf]
    %v9476 = vld [vmem:[%s9299 + $0x4d0] sm:$0xff]
    %v9477 = vld [vmem:[%s9299 + $0x4d8] sm:$0xff]
    %v9478 = vld [vmem:[%s9299 + $0x4e0] sm:$0xff]
    %v9479 = vld [vmem:[%s9299 + $0x4e8] sm:$0xf]
    %v9480 = vld [vmem:[%s9299 + $0x4ec] sm:$0xff]
    %v9481 = vld [vmem:[%s9299 + $0x4f4] sm:$0xff]
    %v9482 = vld [vmem:[%s9299 + $0x4fc] sm:$0xff]
    %v9483 = vld [vmem:[%s9299 + $0x504] sm:$0xf]
    %v9484 = vld [vmem:[%s9299 + $0x508] sm:$0xff]
    %v9485 = vld [vmem:[%s9299 + $0x510] sm:$0xff]
    %v9486 = vld [vmem:[%s9299 + $0x518] sm:$0xff]
    %v9487 = vld [vmem:[%s9299 + $0x520] sm:$0xf]
    %v9488 = vld [vmem:[%s9299 + $0x524] sm:$0xff]
    %v9489 = vld [vmem:[%s9299 + $0x52c] sm:$0xff]
    %v9490 = vld [vmem:[%s9299 + $0x534] sm:$0xff]
    %v9491 = vld [vmem:[%s9299 + $0x53c] sm:$0xf]
    %v9492 = vld [vmem:[%s9299 + $0x540] sm:$0xff]
    %v9493 = vld [vmem:[%s9299 + $0x548] sm:$0xff]
    %v9494 = vld [vmem:[%s9299 + $0x550] sm:$0xff]
    %v9495 = vld [vmem:[%s9299 + $0x558] sm:$0xf]
    %v9496 = vld [vmem:[%s9299 + $0x55c] sm:$0xff]
    %v9497 = vld [vmem:[%s9299 + $0x564] sm:$0xff]
    %v9498 = vld [vmem:[%s9299 + $0x56c] sm:$0xff]
    %v9499 = vld [vmem:[%s9299 + $0x574] sm:$0xf]
    %v9500 = vld [vmem:[%s9299 + $0x578] sm:$0xff]
    %v9501 = vld [vmem:[%s9299 + $0x580] sm:$0xff]
    %v9502 = vld [vmem:[%s9299 + $0x588] sm:$0xff]
    %v9503 = vld [vmem:[%s9299 + $0x590] sm:$0xf]
    %v9504 = vld [vmem:[%s9299 + $0x594] sm:$0xff]
    %v9505 = vld [vmem:[%s9299 + $0x59c] sm:$0xff]
    %v9506 = vld [vmem:[%s9299 + $0x5a4] sm:$0xff]
    %v9507 = vld [vmem:[%s9299 + $0x5ac] sm:$0xf]
    %v9508 = vld [vmem:[%s9299 + $0x5b0] sm:$0xff]
    %v9509 = vld [vmem:[%s9299 + $0x5b8] sm:$0xff]
    %v9510 = vld [vmem:[%s9299 + $0x5c0] sm:$0xff]
    %v9511 = vld [vmem:[%s9299 + $0x5c8] sm:$0xf]
    %v9512 = vld [vmem:[%s9299 + $0x5cc] sm:$0xff]
    %v9513 = vld [vmem:[%s9299 + $0x5d4] sm:$0xff]
    %v9514 = vld [vmem:[%s9299 + $0x5dc] sm:$0xff]
    %v9515 = vld [vmem:[%s9299 + $0x5e4] sm:$0xf]
    %v9516 = vld [vmem:[%s9299 + $0x5e8] sm:$0xff]
    %v9517 = vld [vmem:[%s9299 + $0x5f0] sm:$0xff]
    %v9518 = vld [vmem:[%s9299 + $0x5f8] sm:$0xff]
    %v9519 = vld [vmem:[%s9299 + $0x600] sm:$0xf]
    %v9520 = vld [vmem:[%s9299 + $0x604] sm:$0xff]
    %v9521 = vld [vmem:[%s9299 + $0x60c] sm:$0xff]
    %v9522 = vld [vmem:[%s9299 + $0x614] sm:$0xff]
    %v9523 = vld [vmem:[%s9299 + $0x61c] sm:$0xf]
    %v9524 = vld [vmem:[%s9299 + $0x620] sm:$0xff]
    %v9525 = vld [vmem:[%s9299 + $0x628] sm:$0xff]
    %v9526 = vld [vmem:[%s9299 + $0x630] sm:$0xff]
    %v9527 = vld [vmem:[%s9299 + $0x638] sm:$0xf]
    %v9528 = vld [vmem:[%s9299 + $0x63c] sm:$0xff]
    %v9529 = vld [vmem:[%s9299 + $0x644] sm:$0xff]
    %v9530 = vld [vmem:[%s9299 + $0x64c] sm:$0xff]
    %v9531 = vld [vmem:[%s9299 + $0x654] sm:$0xf]
    %v9532 = vld [vmem:[%s9299 + $0x658] sm:$0xff]
    %v9533 = vld [vmem:[%s9299 + $0x660] sm:$0xff]
    %v9534 = vld [vmem:[%s9299 + $0x668] sm:$0xff]
    %v9535 = vld [vmem:[%s9299 + $0x670] sm:$0xf]
    %v9536 = vld [vmem:[%s9299 + $0x674] sm:$0xff]
    %v9537 = vld [vmem:[%s9299 + $0x67c] sm:$0xff]
    %v9538 = vld [vmem:[%s9299 + $0x684] sm:$0xff]
    %v9539 = vld [vmem:[%s9299 + $0x68c] sm:$0xf]
    %v9540 = vld [vmem:[%s9299 + $0x690] sm:$0xff]
    %v9541 = vld [vmem:[%s9299 + $0x698] sm:$0xff]
    %v9542 = vld [vmem:[%s9299 + $0x6a0] sm:$0xff]
    %v9543 = vld [vmem:[%s9299 + $0x6a8] sm:$0xf]
    %v9544 = vld [vmem:[%s9299 + $0x6ac] sm:$0xff]
    %v9545 = vld [vmem:[%s9299 + $0x6b4] sm:$0xff]
    %v9546 = vld [vmem:[%s9299 + $0x6bc] sm:$0xff]
    %v9547 = vld [vmem:[%s9299 + $0x6c4] sm:$0xf]
    %v9548 = vld [vmem:[%s9299 + $0x6c8] sm:$0xff]
    %v9549 = vld [vmem:[%s9299 + $0x6d0] sm:$0xff]
    %v9550 = vld [vmem:[%s9299 + $0x6d8] sm:$0xff]
    %v9551 = vld [vmem:[%s9299 + $0x6e0] sm:$0xf]
    %v9552 = vld [vmem:[%s9299 + $0x6e4] sm:$0xff]
    %v9553 = vld [vmem:[%s9299 + $0x6ec] sm:$0xff]
    %v9554 = vld [vmem:[%s9299 + $0x6f4] sm:$0xff]
    %v9555 = vld [vmem:[%s9299 + $0x6fc] sm:$0xf]
    %s9556 = scalar_lea.vmem %s10, 7
    %v9557 = vld [vmem:[%s9556] sm:$0x7f]
    %v9559 = vperm.slane %v9557, 0
    %v9560 = vperm.slane %v9557, 1
    %v9561 = vperm.slane %v9557, 2
    %v9562 = vperm.slane %v9557, 3
    %v9563 = vperm.slane %v9557, 4
    %v9564 = vperm.slane %v9557, 5
    %v9565 = vperm.slane %v9557, 6
    %v9575 = vunpack.c.l.b16 %v7340
    %v9576 = vunpack.c.h.b16 %v7340
    %v9577 = vunpack.c.l.b16 %v7341
    %v9578 = vunpack.c.h.b16 %v7341
    %v9579 = vpack.c.b16 %v9575, %v9575
    %v9580 = vpack.c.b16 %v9576, %v9576
    %v9581 = vpack.c.b16 %v9577, %v9577
    %v9582 = vpack.c.b16 %v9578, %v9578
    %v9843 = vunpack.c.l.b16 %v9300
    %v9844 = vunpack.c.h.b16 %v9300
    %v9845 = vunpack.c.l.b16 %v9301
    %v9846 = vunpack.c.h.b16 %v9301
    %v9847 = vunpack.c.l.b16 %v9302
    %v9848 = vunpack.c.h.b16 %v9302
    %v9849 = vunpack.c.l.b16 %v9303
    %v9850 = vunpack.c.l.b16 %v9304
    %v9851 = vunpack.c.h.b16 %v9304
    %v9852 = vunpack.c.l.b16 %v9305
    %v9853 = vunpack.c.h.b16 %v9305
    %v9854 = vunpack.c.l.b16 %v9306
    %v9855 = vunpack.c.h.b16 %v9306
    %v9856 = vunpack.c.l.b16 %v9307
    %v9857 = vunpack.c.l.b16 %v9308
    %v9858 = vunpack.c.h.b16 %v9308
    %v9859 = vunpack.c.l.b16 %v9309
    %v9860 = vunpack.c.h.b16 %v9309
    %v9861 = vunpack.c.l.b16 %v9310
    %v9862 = vunpack.c.h.b16 %v9310
    %v9863 = vunpack.c.l.b16 %v9311
    %v9864 = vunpack.c.l.b16 %v9312
    %v9865 = vunpack.c.h.b16 %v9312
    %v9866 = vunpack.c.l.b16 %v9313
    %v9867 = vunpack.c.h.b16 %v9313
    %v9868 = vunpack.c.l.b16 %v9314
    %v9869 = vunpack.c.h.b16 %v9314
    %v9870 = vunpack.c.l.b16 %v9315
    %v9871 = vunpack.c.l.b16 %v9316
    %v9872 = vunpack.c.h.b16 %v9316
    %v9873 = vunpack.c.l.b16 %v9317
    %v9874 = vunpack.c.h.b16 %v9317
    %v9875 = vunpack.c.l.b16 %v9318
    %v9876 = vunpack.c.h.b16 %v9318
    %v9877 = vunpack.c.l.b16 %v9319
    %v9878 = vunpack.c.l.b16 %v9320
    %v9879 = vunpack.c.h.b16 %v9320
    %v9880 = vunpack.c.l.b16 %v9321
    %v9881 = vunpack.c.h.b16 %v9321
    %v9882 = vunpack.c.l.b16 %v9322
    %v9883 = vunpack.c.h.b16 %v9322
    %v9884 = vunpack.c.l.b16 %v9323
    %v9885 = vunpack.c.l.b16 %v9324
    %v9886 = vunpack.c.h.b16 %v9324
    %v9887 = vunpack.c.l.b16 %v9325
    %v9888 = vunpack.c.h.b16 %v9325
    %v9889 = vunpack.c.l.b16 %v9326
    %v9890 = vunpack.c.h.b16 %v9326
    %v9891 = vunpack.c.l.b16 %v9327
    %v9892 = vunpack.c.l.b16 %v9328
    %v9893 = vunpack.c.h.b16 %v9328
    %v9894 = vunpack.c.l.b16 %v9329
    %v9895 = vunpack.c.h.b16 %v9329
    %v9896 = vunpack.c.l.b16 %v9330
    %v9897 = vunpack.c.h.b16 %v9330
    %v9898 = vunpack.c.l.b16 %v9331
    %v9899 = vunpack.c.l.b16 %v9332
    %v9900 = vunpack.c.h.b16 %v9332
    %v9901 = vunpack.c.l.b16 %v9333
    %v9902 = vunpack.c.h.b16 %v9333
    %v9903 = vunpack.c.l.b16 %v9334
    %v9904 = vunpack.c.h.b16 %v9334
    %v9905 = vunpack.c.l.b16 %v9335
    %v9906 = vunpack.c.l.b16 %v9336
    %v9907 = vunpack.c.h.b16 %v9336
    %v9908 = vunpack.c.l.b16 %v9337
    %v9909 = vunpack.c.h.b16 %v9337
    %v9910 = vunpack.c.l.b16 %v9338
    %v9911 = vunpack.c.h.b16 %v9338
    %v9912 = vunpack.c.l.b16 %v9339
    %v9913 = vunpack.c.l.b16 %v9340
    %v9914 = vunpack.c.h.b16 %v9340
    %v9915 = vunpack.c.l.b16 %v9341
    %v9916 = vunpack.c.h.b16 %v9341
    %v9917 = vunpack.c.l.b16 %v9342
    %v9918 = vunpack.c.h.b16 %v9342
    %v9919 = vunpack.c.l.b16 %v9343
    %v9920 = vunpack.c.l.b16 %v9344
    %v9921 = vunpack.c.h.b16 %v9344
    %v9922 = vunpack.c.l.b16 %v9345
    %v9923 = vunpack.c.h.b16 %v9345
    %v9924 = vunpack.c.l.b16 %v9346
    %v9925 = vunpack.c.h.b16 %v9346
    %v9926 = vunpack.c.l.b16 %v9347
    %v9927 = vunpack.c.l.b16 %v9348
    %v9928 = vunpack.c.h.b16 %v9348
    %v9929 = vunpack.c.l.b16 %v9349
    %v9930 = vunpack.c.h.b16 %v9349
    %v9931 = vunpack.c.l.b16 %v9350
    %v9932 = vunpack.c.h.b16 %v9350
    %v9933 = vunpack.c.l.b16 %v9351
    %v9934 = vunpack.c.l.b16 %v9352
    %v9935 = vunpack.c.h.b16 %v9352
    %v9936 = vunpack.c.l.b16 %v9353
    %v9937 = vunpack.c.h.b16 %v9353
    %v9938 = vunpack.c.l.b16 %v9354
    %v9939 = vunpack.c.h.b16 %v9354
    %v9940 = vunpack.c.l.b16 %v9355
    %v9941 = vunpack.c.l.b16 %v9356
    %v9942 = vunpack.c.h.b16 %v9356
    %v9943 = vunpack.c.l.b16 %v9357
    %v9944 = vunpack.c.h.b16 %v9357
    %v9945 = vunpack.c.l.b16 %v9358
    %v9946 = vunpack.c.h.b16 %v9358
    %v9947 = vunpack.c.l.b16 %v9359
    %v9948 = vunpack.c.l.b16 %v9360
    %v9949 = vunpack.c.h.b16 %v9360
    %v9950 = vunpack.c.l.b16 %v9361
    %v9951 = vunpack.c.h.b16 %v9361
    %v9952 = vunpack.c.l.b16 %v9362
    %v9953 = vunpack.c.h.b16 %v9362
    %v9954 = vunpack.c.l.b16 %v9363
    %v9955 = vunpack.c.l.b16 %v9364
    %v9956 = vunpack.c.h.b16 %v9364
    %v9957 = vunpack.c.l.b16 %v9365
    %v9958 = vunpack.c.h.b16 %v9365
    %v9959 = vunpack.c.l.b16 %v9366
    %v9960 = vunpack.c.h.b16 %v9366
    %v9961 = vunpack.c.l.b16 %v9367
    %v9962 = vunpack.c.l.b16 %v9368
    %v9963 = vunpack.c.h.b16 %v9368
    %v9964 = vunpack.c.l.b16 %v9369
    %v9965 = vunpack.c.h.b16 %v9369
    %v9966 = vunpack.c.l.b16 %v9370
    %v9967 = vunpack.c.h.b16 %v9370
    %v9968 = vunpack.c.l.b16 %v9371
    %v9969 = vunpack.c.l.b16 %v9372
    %v9970 = vunpack.c.h.b16 %v9372
    %v9971 = vunpack.c.l.b16 %v9373
    %v9972 = vunpack.c.h.b16 %v9373
    %v9973 = vunpack.c.l.b16 %v9374
    %v9974 = vunpack.c.h.b16 %v9374
    %v9975 = vunpack.c.l.b16 %v9375
    %v9976 = vunpack.c.l.b16 %v9376
    %v9977 = vunpack.c.h.b16 %v9376
    %v9978 = vunpack.c.l.b16 %v9377
    %v9979 = vunpack.c.h.b16 %v9377
    %v9980 = vunpack.c.l.b16 %v9378
    %v9981 = vunpack.c.h.b16 %v9378
    %v9982 = vunpack.c.l.b16 %v9379
    %v9983 = vunpack.c.l.b16 %v9380
    %v9984 = vunpack.c.h.b16 %v9380
    %v9985 = vunpack.c.l.b16 %v9381
    %v9986 = vunpack.c.h.b16 %v9381
    %v9987 = vunpack.c.l.b16 %v9382
    %v9988 = vunpack.c.h.b16 %v9382
    %v9989 = vunpack.c.l.b16 %v9383
    %v9990 = vunpack.c.l.b16 %v9384
    %v9991 = vunpack.c.h.b16 %v9384
    %v9992 = vunpack.c.l.b16 %v9385
    %v9993 = vunpack.c.h.b16 %v9385
    %v9994 = vunpack.c.l.b16 %v9386
    %v9995 = vunpack.c.h.b16 %v9386
    %v9996 = vunpack.c.l.b16 %v9387
    %v9997 = vunpack.c.l.b16 %v9388
    %v9998 = vunpack.c.h.b16 %v9388
    %v9999 = vunpack.c.l.b16 %v9389
    %v10000 = vunpack.c.h.b16 %v9389
    %v10001 = vunpack.c.l.b16 %v9390
    %v10002 = vunpack.c.h.b16 %v9390
    %v10003 = vunpack.c.l.b16 %v9391
    %v10004 = vunpack.c.l.b16 %v9392
    %v10005 = vunpack.c.h.b16 %v9392
    %v10006 = vunpack.c.l.b16 %v9393
    %v10007 = vunpack.c.h.b16 %v9393
    %v10008 = vunpack.c.l.b16 %v9394
    %v10009 = vunpack.c.h.b16 %v9394
    %v10010 = vunpack.c.l.b16 %v9395
    %v10011 = vunpack.c.l.b16 %v9396
    %v10012 = vunpack.c.h.b16 %v9396
    %v10013 = vunpack.c.l.b16 %v9397
    %v10014 = vunpack.c.h.b16 %v9397
    %v10015 = vunpack.c.l.b16 %v9398
    %v10016 = vunpack.c.h.b16 %v9398
    %v10017 = vunpack.c.l.b16 %v9399
    %v10018 = vunpack.c.l.b16 %v9400
    %v10019 = vunpack.c.h.b16 %v9400
    %v10020 = vunpack.c.l.b16 %v9401
    %v10021 = vunpack.c.h.b16 %v9401
    %v10022 = vunpack.c.l.b16 %v9402
    %v10023 = vunpack.c.h.b16 %v9402
    %v10024 = vunpack.c.l.b16 %v9403
    %v10025 = vunpack.c.l.b16 %v9404
    %v10026 = vunpack.c.h.b16 %v9404
    %v10027 = vunpack.c.l.b16 %v9405
    %v10028 = vunpack.c.h.b16 %v9405
    %v10029 = vunpack.c.l.b16 %v9406
    %v10030 = vunpack.c.h.b16 %v9406
    %v10031 = vunpack.c.l.b16 %v9407
    %v10032 = vunpack.c.l.b16 %v9408
    %v10033 = vunpack.c.h.b16 %v9408
    %v10034 = vunpack.c.l.b16 %v9409
    %v10035 = vunpack.c.h.b16 %v9409
    %v10036 = vunpack.c.l.b16 %v9410
    %v10037 = vunpack.c.h.b16 %v9410
    %v10038 = vunpack.c.l.b16 %v9411
    %v10039 = vunpack.c.l.b16 %v9412
    %v10040 = vunpack.c.h.b16 %v9412
    %v10041 = vunpack.c.l.b16 %v9413
    %v10042 = vunpack.c.h.b16 %v9413
    %v10043 = vunpack.c.l.b16 %v9414
    %v10044 = vunpack.c.h.b16 %v9414
    %v10045 = vunpack.c.l.b16 %v9415
    %v10046 = vunpack.c.l.b16 %v9416
    %v10047 = vunpack.c.h.b16 %v9416
    %v10048 = vunpack.c.l.b16 %v9417
    %v10049 = vunpack.c.h.b16 %v9417
    %v10050 = vunpack.c.l.b16 %v9418
    %v10051 = vunpack.c.h.b16 %v9418
    %v10052 = vunpack.c.l.b16 %v9419
    %v10053 = vunpack.c.l.b16 %v9420
    %v10054 = vunpack.c.h.b16 %v9420
    %v10055 = vunpack.c.l.b16 %v9421
    %v10056 = vunpack.c.h.b16 %v9421
    %v10057 = vunpack.c.l.b16 %v9422
    %v10058 = vunpack.c.h.b16 %v9422
    %v10059 = vunpack.c.l.b16 %v9423
    %v10060 = vunpack.c.l.b16 %v9424
    %v10061 = vunpack.c.h.b16 %v9424
    %v10062 = vunpack.c.l.b16 %v9425
    %v10063 = vunpack.c.h.b16 %v9425
    %v10064 = vunpack.c.l.b16 %v9426
    %v10065 = vunpack.c.h.b16 %v9426
    %v10066 = vunpack.c.l.b16 %v9427
    %v10067 = vunpack.c.l.b16 %v9428
    %v10068 = vunpack.c.h.b16 %v9428
    %v10069 = vunpack.c.l.b16 %v9429
    %v10070 = vunpack.c.h.b16 %v9429
    %v10071 = vunpack.c.l.b16 %v9430
    %v10072 = vunpack.c.h.b16 %v9430
    %v10073 = vunpack.c.l.b16 %v9431
    %v10074 = vunpack.c.l.b16 %v9432
    %v10075 = vunpack.c.h.b16 %v9432
    %v10076 = vunpack.c.l.b16 %v9433
    %v10077 = vunpack.c.h.b16 %v9433
    %v10078 = vunpack.c.l.b16 %v9434
    %v10079 = vunpack.c.h.b16 %v9434
    %v10080 = vunpack.c.l.b16 %v9435
    %v10081 = vunpack.c.l.b16 %v9436
    %v10082 = vunpack.c.h.b16 %v9436
    %v10083 = vunpack.c.l.b16 %v9437
    %v10084 = vunpack.c.h.b16 %v9437
    %v10085 = vunpack.c.l.b16 %v9438
    %v10086 = vunpack.c.h.b16 %v9438
    %v10087 = vunpack.c.l.b16 %v9439
    %v10088 = vunpack.c.l.b16 %v9440
    %v10089 = vunpack.c.h.b16 %v9440
    %v10090 = vunpack.c.l.b16 %v9441
    %v10091 = vunpack.c.h.b16 %v9441
    %v10092 = vunpack.c.l.b16 %v9442
    %v10093 = vunpack.c.h.b16 %v9442
    %v10094 = vunpack.c.l.b16 %v9443
    %v10095 = vunpack.c.l.b16 %v9444
    %v10096 = vunpack.c.h.b16 %v9444
    %v10097 = vunpack.c.l.b16 %v9445
    %v10098 = vunpack.c.h.b16 %v9445
    %v10099 = vunpack.c.l.b16 %v9446
    %v10100 = vunpack.c.h.b16 %v9446
    %v10101 = vunpack.c.l.b16 %v9447
    %v10102 = vunpack.c.l.b16 %v9448
    %v10103 = vunpack.c.h.b16 %v9448
    %v10104 = vunpack.c.l.b16 %v9449
    %v10105 = vunpack.c.h.b16 %v9449
    %v10106 = vunpack.c.l.b16 %v9450
    %v10107 = vunpack.c.h.b16 %v9450
    %v10108 = vunpack.c.l.b16 %v9451
    %v10109 = vunpack.c.l.b16 %v9452
    %v10110 = vunpack.c.h.b16 %v9452
    %v10111 = vunpack.c.l.b16 %v9453
    %v10112 = vunpack.c.h.b16 %v9453
    %v10113 = vunpack.c.l.b16 %v9454
    %v10114 = vunpack.c.h.b16 %v9454
    %v10115 = vunpack.c.l.b16 %v9455
    %v10116 = vunpack.c.l.b16 %v9456
    %v10117 = vunpack.c.h.b16 %v9456
    %v10118 = vunpack.c.l.b16 %v9457
    %v10119 = vunpack.c.h.b16 %v9457
    %v10120 = vunpack.c.l.b16 %v9458
    %v10121 = vunpack.c.h.b16 %v9458
    %v10122 = vunpack.c.l.b16 %v9459
    %v10123 = vunpack.c.l.b16 %v9460
    %v10124 = vunpack.c.h.b16 %v9460
    %v10125 = vunpack.c.l.b16 %v9461
    %v10126 = vunpack.c.h.b16 %v9461
    %v10127 = vunpack.c.l.b16 %v9462
    %v10128 = vunpack.c.h.b16 %v9462
    %v10129 = vunpack.c.l.b16 %v9463
    %v10130 = vunpack.c.l.b16 %v9464
    %v10131 = vunpack.c.h.b16 %v9464
    %v10132 = vunpack.c.l.b16 %v9465
    %v10133 = vunpack.c.h.b16 %v9465
    %v10134 = vunpack.c.l.b16 %v9466
    %v10135 = vunpack.c.h.b16 %v9466
    %v10136 = vunpack.c.l.b16 %v9467
    %v10137 = vunpack.c.l.b16 %v9468
    %v10138 = vunpack.c.h.b16 %v9468
    %v10139 = vunpack.c.l.b16 %v9469
    %v10140 = vunpack.c.h.b16 %v9469
    %v10141 = vunpack.c.l.b16 %v9470
    %v10142 = vunpack.c.h.b16 %v9470
    %v10143 = vunpack.c.l.b16 %v9471
    %v10144 = vunpack.c.l.b16 %v9472
    %v10145 = vunpack.c.h.b16 %v9472
    %v10146 = vunpack.c.l.b16 %v9473
    %v10147 = vunpack.c.h.b16 %v9473
    %v10148 = vunpack.c.l.b16 %v9474
    %v10149 = vunpack.c.h.b16 %v9474
    %v10150 = vunpack.c.l.b16 %v9475
    %v10151 = vunpack.c.l.b16 %v9476
    %v10152 = vunpack.c.h.b16 %v9476
    %v10153 = vunpack.c.l.b16 %v9477
    %v10154 = vunpack.c.h.b16 %v9477
    %v10155 = vunpack.c.l.b16 %v9478
    %v10156 = vunpack.c.h.b16 %v9478
    %v10157 = vunpack.c.l.b16 %v9479
    %v10158 = vunpack.c.l.b16 %v9480
    %v10159 = vunpack.c.h.b16 %v9480
    %v10160 = vunpack.c.l.b16 %v9481
    %v10161 = vunpack.c.h.b16 %v9481
    %v10162 = vunpack.c.l.b16 %v9482
    %v10163 = vunpack.c.h.b16 %v9482
    %v10164 = vunpack.c.l.b16 %v9483
    %v10165 = vunpack.c.l.b16 %v9484
    %v10166 = vunpack.c.h.b16 %v9484
    %v10167 = vunpack.c.l.b16 %v9485
    %v10168 = vunpack.c.h.b16 %v9485
    %v10169 = vunpack.c.l.b16 %v9486
    %v10170 = vunpack.c.h.b16 %v9486
    %v10171 = vunpack.c.l.b16 %v9487
    %v10172 = vunpack.c.l.b16 %v9488
    %v10173 = vunpack.c.h.b16 %v9488
    %v10174 = vunpack.c.l.b16 %v9489
    %v10175 = vunpack.c.h.b16 %v9489
    %v10176 = vunpack.c.l.b16 %v9490
    %v10177 = vunpack.c.h.b16 %v9490
    %v10178 = vunpack.c.l.b16 %v9491
    %v10179 = vunpack.c.l.b16 %v9492
    %v10180 = vunpack.c.h.b16 %v9492
    %v10181 = vunpack.c.l.b16 %v9493
    %v10182 = vunpack.c.h.b16 %v9493
    %v10183 = vunpack.c.l.b16 %v9494
    %v10184 = vunpack.c.h.b16 %v9494
    %v10185 = vunpack.c.l.b16 %v9495
    %v10186 = vunpack.c.l.b16 %v9496
    %v10187 = vunpack.c.h.b16 %v9496
    %v10188 = vunpack.c.l.b16 %v9497
    %v10189 = vunpack.c.h.b16 %v9497
    %v10190 = vunpack.c.l.b16 %v9498
    %v10191 = vunpack.c.h.b16 %v9498
    %v10192 = vunpack.c.l.b16 %v9499
    %v10193 = vunpack.c.l.b16 %v9500
    %v10194 = vunpack.c.h.b16 %v9500
    %v10195 = vunpack.c.l.b16 %v9501
    %v10196 = vunpack.c.h.b16 %v9501
    %v10197 = vunpack.c.l.b16 %v9502
    %v10198 = vunpack.c.h.b16 %v9502
    %v10199 = vunpack.c.l.b16 %v9503
    %v10200 = vunpack.c.l.b16 %v9504
    %v10201 = vunpack.c.h.b16 %v9504
    %v10202 = vunpack.c.l.b16 %v9505
    %v10203 = vunpack.c.h.b16 %v9505
    %v10204 = vunpack.c.l.b16 %v9506
    %v10205 = vunpack.c.h.b16 %v9506
    %v10206 = vunpack.c.l.b16 %v9507
    %v10207 = vunpack.c.l.b16 %v9508
    %v10208 = vunpack.c.h.b16 %v9508
    %v10209 = vunpack.c.l.b16 %v9509
    %v10210 = vunpack.c.h.b16 %v9509
    %v10211 = vunpack.c.l.b16 %v9510
    %v10212 = vunpack.c.h.b16 %v9510
    %v10213 = vunpack.c.l.b16 %v9511
    %v10214 = vunpack.c.l.b16 %v9512
    %v10215 = vunpack.c.h.b16 %v9512
    %v10216 = vunpack.c.l.b16 %v9513
    %v10217 = vunpack.c.h.b16 %v9513
    %v10218 = vunpack.c.l.b16 %v9514
    %v10219 = vunpack.c.h.b16 %v9514
    %v10220 = vunpack.c.l.b16 %v9515
    %v10221 = vunpack.c.l.b16 %v9516
    %v10222 = vunpack.c.h.b16 %v9516
    %v10223 = vunpack.c.l.b16 %v9517
    %v10224 = vunpack.c.h.b16 %v9517
    %v10225 = vunpack.c.l.b16 %v9518
    %v10226 = vunpack.c.h.b16 %v9518
    %v10227 = vunpack.c.l.b16 %v9519
    %v10228 = vunpack.c.l.b16 %v9520
    %v10229 = vunpack.c.h.b16 %v9520
    %v10230 = vunpack.c.l.b16 %v9521
    %v10231 = vunpack.c.h.b16 %v9521
    %v10232 = vunpack.c.l.b16 %v9522
    %v10233 = vunpack.c.h.b16 %v9522
    %v10234 = vunpack.c.l.b16 %v9523
    %v10235 = vunpack.c.l.b16 %v9524
    %v10236 = vunpack.c.h.b16 %v9524
    %v10237 = vunpack.c.l.b16 %v9525
    %v10238 = vunpack.c.h.b16 %v9525
    %v10239 = vunpack.c.l.b16 %v9526
    %v10240 = vunpack.c.h.b16 %v9526
    %v10241 = vunpack.c.l.b16 %v9527
    %v10242 = vunpack.c.l.b16 %v9528
    %v10243 = vunpack.c.h.b16 %v9528
    %v10244 = vunpack.c.l.b16 %v9529
    %v10245 = vunpack.c.h.b16 %v9529
    %v10246 = vunpack.c.l.b16 %v9530
    %v10247 = vunpack.c.h.b16 %v9530
    %v10248 = vunpack.c.l.b16 %v9531
    %v10249 = vunpack.c.l.b16 %v9532
    %v10250 = vunpack.c.h.b16 %v9532
    %v10251 = vunpack.c.l.b16 %v9533
    %v10252 = vunpack.c.h.b16 %v9533
    %v10253 = vunpack.c.l.b16 %v9534
    %v10254 = vunpack.c.h.b16 %v9534
    %v10255 = vunpack.c.l.b16 %v9535
    %v10256 = vunpack.c.l.b16 %v9536
    %v10257 = vunpack.c.h.b16 %v9536
    %v10258 = vunpack.c.l.b16 %v9537
    %v10259 = vunpack.c.h.b16 %v9537
    %v10260 = vunpack.c.l.b16 %v9538
    %v10261 = vunpack.c.h.b16 %v9538
    %v10262 = vunpack.c.l.b16 %v9539
    %v10263 = vunpack.c.l.b16 %v9540
    %v10264 = vunpack.c.h.b16 %v9540
    %v10265 = vunpack.c.l.b16 %v9541
    %v10266 = vunpack.c.h.b16 %v9541
    %v10267 = vunpack.c.l.b16 %v9542
    %v10268 = vunpack.c.h.b16 %v9542
    %v10269 = vunpack.c.l.b16 %v9543
    %v10270 = vunpack.c.l.b16 %v9544
    %v10271 = vunpack.c.h.b16 %v9544
    %v10272 = vunpack.c.l.b16 %v9545
    %v10273 = vunpack.c.h.b16 %v9545
    %v10274 = vunpack.c.l.b16 %v9546
    %v10275 = vunpack.c.h.b16 %v9546
    %v10276 = vunpack.c.l.b16 %v9547
    %v10277 = vunpack.c.l.b16 %v9548
    %v10278 = vunpack.c.h.b16 %v9548
    %v10279 = vunpack.c.l.b16 %v9549
    %v10280 = vunpack.c.h.b16 %v9549
    %v10281 = vunpack.c.l.b16 %v9550
    %v10282 = vunpack.c.h.b16 %v9550
    %v10283 = vunpack.c.l.b16 %v9551
    %v10284 = vunpack.c.l.b16 %v9552
    %v10285 = vunpack.c.h.b16 %v9552
    %v10286 = vunpack.c.l.b16 %v9553
    %v10287 = vunpack.c.h.b16 %v9553
    %v10288 = vunpack.c.l.b16 %v9554
    %v10289 = vunpack.c.h.b16 %v9554
    %v10290 = vunpack.c.l.b16 %v9555
    %v10291 = vpack.c.b16 %v9850, %v9843
    %v10292 = vpack.c.b16 %v9851, %v9844
    %v10293 = vpack.c.b16 %v9852, %v9845
    %v10294 = vpack.c.b16 %v9853, %v9846
    %v10295 = vpack.c.b16 %v9854, %v9847
    %v10296 = vpack.c.b16 %v9855, %v9848
    %v10297 = vpack.c.b16 %v9856, %v9849
    %v10298 = vpack.c.b16 %v9864, %v9857
    %v10299 = vpack.c.b16 %v9865, %v9858
    %v10300 = vpack.c.b16 %v9866, %v9859
    %v10301 = vpack.c.b16 %v9867, %v9860
    %v10302 = vpack.c.b16 %v9868, %v9861
    %v10303 = vpack.c.b16 %v9869, %v9862
    %v10304 = vpack.c.b16 %v9870, %v9863
    %v10305 = vpack.c.b16 %v9878, %v9871
    %v10306 = vpack.c.b16 %v9879, %v9872
    %v10307 = vpack.c.b16 %v9880, %v9873
    %v10308 = vpack.c.b16 %v9881, %v9874
    %v10309 = vpack.c.b16 %v9882, %v9875
    %v10310 = vpack.c.b16 %v9883, %v9876
    %v10311 = vpack.c.b16 %v9884, %v9877
    %v10312 = vpack.c.b16 %v9892, %v9885
    %v10313 = vpack.c.b16 %v9893, %v9886
    %v10314 = vpack.c.b16 %v9894, %v9887
    %v10315 = vpack.c.b16 %v9895, %v9888
    %v10316 = vpack.c.b16 %v9896, %v9889
    %v10317 = vpack.c.b16 %v9897, %v9890
    %v10318 = vpack.c.b16 %v9898, %v9891
    %v10319 = vpack.c.b16 %v9906, %v9899
    %v10320 = vpack.c.b16 %v9907, %v9900
    %v10321 = vpack.c.b16 %v9908, %v9901
    %v10322 = vpack.c.b16 %v9909, %v9902
    %v10323 = vpack.c.b16 %v9910, %v9903
    %v10324 = vpack.c.b16 %v9911, %v9904
    %v10325 = vpack.c.b16 %v9912, %v9905
    %v10326 = vpack.c.b16 %v9920, %v9913
    %v10327 = vpack.c.b16 %v9921, %v9914
    %v10328 = vpack.c.b16 %v9922, %v9915
    %v10329 = vpack.c.b16 %v9923, %v9916
    %v10330 = vpack.c.b16 %v9924, %v9917
    %v10331 = vpack.c.b16 %v9925, %v9918
    %v10332 = vpack.c.b16 %v9926, %v9919
    %v10333 = vpack.c.b16 %v9934, %v9927
    %v10334 = vpack.c.b16 %v9935, %v9928
    %v10335 = vpack.c.b16 %v9936, %v9929
    %v10336 = vpack.c.b16 %v9937, %v9930
    %v10337 = vpack.c.b16 %v9938, %v9931
    %v10338 = vpack.c.b16 %v9939, %v9932
    %v10339 = vpack.c.b16 %v9940, %v9933
    %v10340 = vpack.c.b16 %v9948, %v9941
    %v10341 = vpack.c.b16 %v9949, %v9942
    %v10342 = vpack.c.b16 %v9950, %v9943
    %v10343 = vpack.c.b16 %v9951, %v9944
    %v10344 = vpack.c.b16 %v9952, %v9945
    %v10345 = vpack.c.b16 %v9953, %v9946
    %v10346 = vpack.c.b16 %v9954, %v9947
    %v10347 = vpack.c.b16 %v9962, %v9955
    %v10348 = vpack.c.b16 %v9963, %v9956
    %v10349 = vpack.c.b16 %v9964, %v9957
    %v10350 = vpack.c.b16 %v9965, %v9958
    %v10351 = vpack.c.b16 %v9966, %v9959
    %v10352 = vpack.c.b16 %v9967, %v9960
    %v10353 = vpack.c.b16 %v9968, %v9961
    %v10354 = vpack.c.b16 %v9976, %v9969
    %v10355 = vpack.c.b16 %v9977, %v9970
    %v10356 = vpack.c.b16 %v9978, %v9971
    %v10357 = vpack.c.b16 %v9979, %v9972
    %v10358 = vpack.c.b16 %v9980, %v9973
    %v10359 = vpack.c.b16 %v9981, %v9974
    %v10360 = vpack.c.b16 %v9982, %v9975
    %v10361 = vpack.c.b16 %v9990, %v9983
    %v10362 = vpack.c.b16 %v9991, %v9984
    %v10363 = vpack.c.b16 %v9992, %v9985
    %v10364 = vpack.c.b16 %v9993, %v9986
    %v10365 = vpack.c.b16 %v9994, %v9987
    %v10366 = vpack.c.b16 %v9995, %v9988
    %v10367 = vpack.c.b16 %v9996, %v9989
    %v10368 = vpack.c.b16 %v10004, %v9997
    %v10369 = vpack.c.b16 %v10005, %v9998
    %v10370 = vpack.c.b16 %v10006, %v9999
    %v10371 = vpack.c.b16 %v10007, %v10000
    %v10372 = vpack.c.b16 %v10008, %v10001
    %v10373 = vpack.c.b16 %v10009, %v10002
    %v10374 = vpack.c.b16 %v10010, %v10003
    %v10375 = vpack.c.b16 %v10018, %v10011
    %v10376 = vpack.c.b16 %v10019, %v10012
    %v10377 = vpack.c.b16 %v10020, %v10013
    %v10378 = vpack.c.b16 %v10021, %v10014
    %v10379 = vpack.c.b16 %v10022, %v10015
    %v10380 = vpack.c.b16 %v10023, %v10016
    %v10381 = vpack.c.b16 %v10024, %v10017
    %v10382 = vpack.c.b16 %v10032, %v10025
    %v10383 = vpack.c.b16 %v10033, %v10026
    %v10384 = vpack.c.b16 %v10034, %v10027
    %v10385 = vpack.c.b16 %v10035, %v10028
    %v10386 = vpack.c.b16 %v10036, %v10029
    %v10387 = vpack.c.b16 %v10037, %v10030
    %v10388 = vpack.c.b16 %v10038, %v10031
    %v10389 = vpack.c.b16 %v10046, %v10039
    %v10390 = vpack.c.b16 %v10047, %v10040
    %v10391 = vpack.c.b16 %v10048, %v10041
    %v10392 = vpack.c.b16 %v10049, %v10042
    %v10393 = vpack.c.b16 %v10050, %v10043
    %v10394 = vpack.c.b16 %v10051, %v10044
    %v10395 = vpack.c.b16 %v10052, %v10045
    %v10396 = vpack.c.b16 %v10060, %v10053
    %v10397 = vpack.c.b16 %v10061, %v10054
    %v10398 = vpack.c.b16 %v10062, %v10055
    %v10399 = vpack.c.b16 %v10063, %v10056
    %v10400 = vpack.c.b16 %v10064, %v10057
    %v10401 = vpack.c.b16 %v10065, %v10058
    %v10402 = vpack.c.b16 %v10066, %v10059
    %v10403 = vpack.c.b16 %v10074, %v10067
    %v10404 = vpack.c.b16 %v10075, %v10068
    %v10405 = vpack.c.b16 %v10076, %v10069
    %v10406 = vpack.c.b16 %v10077, %v10070
    %v10407 = vpack.c.b16 %v10078, %v10071
    %v10408 = vpack.c.b16 %v10079, %v10072
    %v10409 = vpack.c.b16 %v10080, %v10073
    %v10410 = vpack.c.b16 %v10088, %v10081
    %v10411 = vpack.c.b16 %v10089, %v10082
    %v10412 = vpack.c.b16 %v10090, %v10083
    %v10413 = vpack.c.b16 %v10091, %v10084
    %v10414 = vpack.c.b16 %v10092, %v10085
    %v10415 = vpack.c.b16 %v10093, %v10086
    %v10416 = vpack.c.b16 %v10094, %v10087
    %v10417 = vpack.c.b16 %v10102, %v10095
    %v10418 = vpack.c.b16 %v10103, %v10096
    %v10419 = vpack.c.b16 %v10104, %v10097
    %v10420 = vpack.c.b16 %v10105, %v10098
    %v10421 = vpack.c.b16 %v10106, %v10099
    %v10422 = vpack.c.b16 %v10107, %v10100
    %v10423 = vpack.c.b16 %v10108, %v10101
    %v10424 = vpack.c.b16 %v10116, %v10109
    %v10425 = vpack.c.b16 %v10117, %v10110
    %v10426 = vpack.c.b16 %v10118, %v10111
    %v10427 = vpack.c.b16 %v10119, %v10112
    %v10428 = vpack.c.b16 %v10120, %v10113
    %v10429 = vpack.c.b16 %v10121, %v10114
    %v10430 = vpack.c.b16 %v10122, %v10115
    %v10431 = vpack.c.b16 %v10130, %v10123
    %v10432 = vpack.c.b16 %v10131, %v10124
    %v10433 = vpack.c.b16 %v10132, %v10125
    %v10434 = vpack.c.b16 %v10133, %v10126
    %v10435 = vpack.c.b16 %v10134, %v10127
    %v10436 = vpack.c.b16 %v10135, %v10128
    %v10437 = vpack.c.b16 %v10136, %v10129
    %v10438 = vpack.c.b16 %v10144, %v10137
    %v10439 = vpack.c.b16 %v10145, %v10138
    %v10440 = vpack.c.b16 %v10146, %v10139
    %v10441 = vpack.c.b16 %v10147, %v10140
    %v10442 = vpack.c.b16 %v10148, %v10141
    %v10443 = vpack.c.b16 %v10149, %v10142
    %v10444 = vpack.c.b16 %v10150, %v10143
    %v10445 = vpack.c.b16 %v10158, %v10151
    %v10446 = vpack.c.b16 %v10159, %v10152
    %v10447 = vpack.c.b16 %v10160, %v10153
    %v10448 = vpack.c.b16 %v10161, %v10154
    %v10449 = vpack.c.b16 %v10162, %v10155
    %v10450 = vpack.c.b16 %v10163, %v10156
    %v10451 = vpack.c.b16 %v10164, %v10157
    %v10452 = vpack.c.b16 %v10172, %v10165
    %v10453 = vpack.c.b16 %v10173, %v10166
    %v10454 = vpack.c.b16 %v10174, %v10167
    %v10455 = vpack.c.b16 %v10175, %v10168
    %v10456 = vpack.c.b16 %v10176, %v10169
    %v10457 = vpack.c.b16 %v10177, %v10170
    %v10458 = vpack.c.b16 %v10178, %v10171
    %v10459 = vpack.c.b16 %v10186, %v10179
    %v10460 = vpack.c.b16 %v10187, %v10180
    %v10461 = vpack.c.b16 %v10188, %v10181
    %v10462 = vpack.c.b16 %v10189, %v10182
    %v10463 = vpack.c.b16 %v10190, %v10183
    %v10464 = vpack.c.b16 %v10191, %v10184
    %v10465 = vpack.c.b16 %v10192, %v10185
    %v10466 = vpack.c.b16 %v10200, %v10193
    %v10467 = vpack.c.b16 %v10201, %v10194
    %v10468 = vpack.c.b16 %v10202, %v10195
    %v10469 = vpack.c.b16 %v10203, %v10196
    %v10470 = vpack.c.b16 %v10204, %v10197
    %v10471 = vpack.c.b16 %v10205, %v10198
    %v10472 = vpack.c.b16 %v10206, %v10199
    %v10473 = vpack.c.b16 %v10214, %v10207
    %v10474 = vpack.c.b16 %v10215, %v10208
    %v10475 = vpack.c.b16 %v10216, %v10209
    %v10476 = vpack.c.b16 %v10217, %v10210
    %v10477 = vpack.c.b16 %v10218, %v10211
    %v10478 = vpack.c.b16 %v10219, %v10212
    %v10479 = vpack.c.b16 %v10220, %v10213
    %v10480 = vpack.c.b16 %v10228, %v10221
    %v10481 = vpack.c.b16 %v10229, %v10222
    %v10482 = vpack.c.b16 %v10230, %v10223
    %v10483 = vpack.c.b16 %v10231, %v10224
    %v10484 = vpack.c.b16 %v10232, %v10225
    %v10485 = vpack.c.b16 %v10233, %v10226
    %v10486 = vpack.c.b16 %v10234, %v10227
    %v10487 = vpack.c.b16 %v10242, %v10235
    %v10488 = vpack.c.b16 %v10243, %v10236
    %v10489 = vpack.c.b16 %v10244, %v10237
    %v10490 = vpack.c.b16 %v10245, %v10238
    %v10491 = vpack.c.b16 %v10246, %v10239
    %v10492 = vpack.c.b16 %v10247, %v10240
    %v10493 = vpack.c.b16 %v10248, %v10241
    %v10494 = vpack.c.b16 %v10256, %v10249
    %v10495 = vpack.c.b16 %v10257, %v10250
    %v10496 = vpack.c.b16 %v10258, %v10251
    %v10497 = vpack.c.b16 %v10259, %v10252
    %v10498 = vpack.c.b16 %v10260, %v10253
    %v10499 = vpack.c.b16 %v10261, %v10254
    %v10500 = vpack.c.b16 %v10262, %v10255
    %v10501 = vpack.c.b16 %v10270, %v10263
    %v10502 = vpack.c.b16 %v10271, %v10264
    %v10503 = vpack.c.b16 %v10272, %v10265
    %v10504 = vpack.c.b16 %v10273, %v10266
    %v10505 = vpack.c.b16 %v10274, %v10267
    %v10506 = vpack.c.b16 %v10275, %v10268
    %v10507 = vpack.c.b16 %v10276, %v10269
    %v10508 = vpack.c.b16 %v10284, %v10277
    %v10509 = vpack.c.b16 %v10285, %v10278
    %v10510 = vpack.c.b16 %v10286, %v10279
    %v10511 = vpack.c.b16 %v10287, %v10280
    %v10512 = vpack.c.b16 %v10288, %v10281
    %v10513 = vpack.c.b16 %v10289, %v10282
    %v10514 = vpack.c.b16 %v10290, %v10283
    %10739 = vmatpush.bf16.msra.mxu0 %v10340
    %10740 = vmatpush.bf16.msra.mxu0 %v10333
    %10741 = vmatpush.bf16.msra.mxu0 %v10326
    %10742 = vmatpush.bf16.msra.mxu0 %v10319
    %10743 = vmatpush.bf16.msra.mxu0 %v10312
    %10744 = vmatpush.bf16.msra.mxu0 %v10305
    %10745 = vmatpush.bf16.msra.mxu0 %v10298
    %10746 = vmatpush.bf16.msra.mxu0 %v10291
    %10747 = vmatmul.bf16.gmra.mxu0 %v9579
    %v10748 = vpop.f32.mrf.mxu0
    %v10749 = vadd.f32 %v9559, %v10748
    %v10750 = vpop.f32.mrf.mxu0
    %10751 = vdwg.mxu0
    %10752 = vmatpush.bf16.msra.mxu0 %v10396
    %10753 = vmatpush.bf16.msra.mxu0 %v10389
    %10754 = vmatpush.bf16.msra.mxu0 %v10382
    %10755 = vmatpush.bf16.msra.mxu0 %v10375
    %10756 = vmatpush.bf16.msra.mxu0 %v10368
    %10757 = vmatpush.bf16.msra.mxu0 %v10361
    %10758 = vmatpush.bf16.msra.mxu0 %v10354
    %10759 = vmatpush.bf16.msra.mxu0 %v10347
    %10760 = vmatmul.bf16.gmra.mxu0 %v9580
    %v10761 = vpop.f32.mrf.mxu0
    %v10762 = vadd.f32 %v10749, %v10761
    %v10763 = vpop.f32.mrf.mxu0
    %10764 = vdwg.mxu0
    %10765 = vmatpush.bf16.msra.mxu0 %v10452
    %10766 = vmatpush.bf16.msra.mxu0 %v10445
    %10767 = vmatpush.bf16.msra.mxu0 %v10438
    %10768 = vmatpush.bf16.msra.mxu0 %v10431
    %10769 = vmatpush.bf16.msra.mxu0 %v10424
    %10770 = vmatpush.bf16.msra.mxu0 %v10417
    %10771 = vmatpush.bf16.msra.mxu0 %v10410
    %10772 = vmatpush.bf16.msra.mxu0 %v10403
    %10773 = vmatmul.bf16.gmra.mxu0 %v9581
    %v10774 = vpop.f32.mrf.mxu0
    %v10775 = vadd.f32 %v10762, %v10774
    %v10776 = vpop.f32.mrf.mxu0
    %10777 = vdwg.mxu0
    %10778 = vmatpush.bf16.msra.mxu0 %v10508
    %10779 = vmatpush.bf16.msra.mxu0 %v10501
    %10780 = vmatpush.bf16.msra.mxu0 %v10494
    %10781 = vmatpush.bf16.msra.mxu0 %v10487
    %10782 = vmatpush.bf16.msra.mxu0 %v10480
    %10783 = vmatpush.bf16.msra.mxu0 %v10473
    %10784 = vmatpush.bf16.msra.mxu0 %v10466
    %10785 = vmatpush.bf16.msra.mxu0 %v10459
    %10786 = vmatmul.bf16.gmra.mxu0 %v9582
    %v10787 = vpop.f32.mrf.mxu0
    %v10788 = vadd.f32 %v10775, %v10787
    %v10789 = vpop.f32.mrf.mxu0
    %10790 = vdwg.mxu0
    %10791 = vmatpush.bf16.msra.mxu0 %v10341
    %10792 = vmatpush.bf16.msra.mxu0 %v10334
    %10793 = vmatpush.bf16.msra.mxu0 %v10327
    %10794 = vmatpush.bf16.msra.mxu0 %v10320
    %10795 = vmatpush.bf16.msra.mxu0 %v10313
    %10796 = vmatpush.bf16.msra.mxu0 %v10306
    %10797 = vmatpush.bf16.msra.mxu0 %v10299
    %10798 = vmatpush.bf16.msra.mxu0 %v10292
    %10799 = vmatmul.bf16.gmra.mxu0 %v9579
    %v10800 = vpop.f32.mrf.mxu0
    %v10801 = vadd.f32 %v9560, %v10800
    %v10802 = vpop.f32.mrf.mxu0
    %10803 = vdwg.mxu0
    %10804 = vmatpush.bf16.msra.mxu0 %v10397
    %10805 = vmatpush.bf16.msra.mxu0 %v10390
    %10806 = vmatpush.bf16.msra.mxu0 %v10383
    %10807 = vmatpush.bf16.msra.mxu0 %v10376
    %10808 = vmatpush.bf16.msra.mxu0 %v10369
    %10809 = vmatpush.bf16.msra.mxu0 %v10362
    %10810 = vmatpush.bf16.msra.mxu0 %v10355
    %10811 = vmatpush.bf16.msra.mxu0 %v10348
    %10812 = vmatmul.bf16.gmra.mxu0 %v9580
    %v10813 = vpop.f32.mrf.mxu0
    %v10814 = vadd.f32 %v10801, %v10813
    %v10815 = vpop.f32.mrf.mxu0
    %10816 = vdwg.mxu0
    %10817 = vmatpush.bf16.msra.mxu0 %v10453
    %10818 = vmatpush.bf16.msra.mxu0 %v10446
    %10819 = vmatpush.bf16.msra.mxu0 %v10439
    %10820 = vmatpush.bf16.msra.mxu0 %v10432
    %10821 = vmatpush.bf16.msra.mxu0 %v10425
    %10822 = vmatpush.bf16.msra.mxu0 %v10418
    %10823 = vmatpush.bf16.msra.mxu0 %v10411
    %10824 = vmatpush.bf16.msra.mxu0 %v10404
    %10825 = vmatmul.bf16.gmra.mxu0 %v9581
    %v10826 = vpop.f32.mrf.mxu0
    %v10827 = vadd.f32 %v10814, %v10826
    %v10828 = vpop.f32.mrf.mxu0
    %10829 = vdwg.mxu0
    %10830 = vmatpush.bf16.msra.mxu0 %v10509
    %10831 = vmatpush.bf16.msra.mxu0 %v10502
    %10832 = vmatpush.bf16.msra.mxu0 %v10495
    %10833 = vmatpush.bf16.msra.mxu0 %v10488
    %10834 = vmatpush.bf16.msra.mxu0 %v10481
    %10835 = vmatpush.bf16.msra.mxu0 %v10474
    %10836 = vmatpush.bf16.msra.mxu0 %v10467
    %10837 = vmatpush.bf16.msra.mxu0 %v10460
    %10838 = vmatmul.bf16.gmra.mxu0 %v9582
    %v10839 = vpop.f32.mrf.mxu0
    %v10840 = vadd.f32 %v10827, %v10839
    %v10841 = vpop.f32.mrf.mxu0
    %10842 = vdwg.mxu0
    %10843 = vmatpush.bf16.msra.mxu0 %v10342
    %10844 = vmatpush.bf16.msra.mxu0 %v10335
    %10845 = vmatpush.bf16.msra.mxu0 %v10328
    %10846 = vmatpush.bf16.msra.mxu0 %v10321
    %10847 = vmatpush.bf16.msra.mxu0 %v10314
    %10848 = vmatpush.bf16.msra.mxu0 %v10307
    %10849 = vmatpush.bf16.msra.mxu0 %v10300
    %10850 = vmatpush.bf16.msra.mxu0 %v10293
    %10851 = vmatmul.bf16.gmra.mxu0 %v9579
    %v10852 = vpop.f32.mrf.mxu0
    %v10853 = vadd.f32 %v9561, %v10852
    %v10854 = vpop.f32.mrf.mxu0
    %10855 = vdwg.mxu0
    %10856 = vmatpush.bf16.msra.mxu0 %v10398
    %10857 = vmatpush.bf16.msra.mxu0 %v10391
    %10858 = vmatpush.bf16.msra.mxu0 %v10384
    %10859 = vmatpush.bf16.msra.mxu0 %v10377
    %10860 = vmatpush.bf16.msra.mxu0 %v10370
    %10861 = vmatpush.bf16.msra.mxu0 %v10363
    %10862 = vmatpush.bf16.msra.mxu0 %v10356
    %10863 = vmatpush.bf16.msra.mxu0 %v10349
    %10864 = vmatmul.bf16.gmra.mxu0 %v9580
    %v10865 = vpop.f32.mrf.mxu0
    %v10866 = vadd.f32 %v10853, %v10865
    %v10867 = vpop.f32.mrf.mxu0
    %10868 = vdwg.mxu0
    %10869 = vmatpush.bf16.msra.mxu0 %v10454
    %10870 = vmatpush.bf16.msra.mxu0 %v10447
    %10871 = vmatpush.bf16.msra.mxu0 %v10440
    %10872 = vmatpush.bf16.msra.mxu0 %v10433
    %10873 = vmatpush.bf16.msra.mxu0 %v10426
    %10874 = vmatpush.bf16.msra.mxu0 %v10419
    %10875 = vmatpush.bf16.msra.mxu0 %v10412
    %10876 = vmatpush.bf16.msra.mxu0 %v10405
    %10877 = vmatmul.bf16.gmra.mxu0 %v9581
    %v10878 = vpop.f32.mrf.mxu0
    %v10879 = vadd.f32 %v10866, %v10878
    %v10880 = vpop.f32.mrf.mxu0
    %10881 = vdwg.mxu0
    %10882 = vmatpush.bf16.msra.mxu0 %v10510
    %10883 = vmatpush.bf16.msra.mxu0 %v10503
    %10884 = vmatpush.bf16.msra.mxu0 %v10496
    %10885 = vmatpush.bf16.msra.mxu0 %v10489
    %10886 = vmatpush.bf16.msra.mxu0 %v10482
    %10887 = vmatpush.bf16.msra.mxu0 %v10475
    %10888 = vmatpush.bf16.msra.mxu0 %v10468
    %10889 = vmatpush.bf16.msra.mxu0 %v10461
    %10890 = vmatmul.bf16.gmra.mxu0 %v9582
    %v10891 = vpop.f32.mrf.mxu0
    %v10892 = vadd.f32 %v10879, %v10891
    %v10893 = vpop.f32.mrf.mxu0
    %10894 = vdwg.mxu0
    %10895 = vmatpush.bf16.msra.mxu0 %v10343
    %10896 = vmatpush.bf16.msra.mxu0 %v10336
    %10897 = vmatpush.bf16.msra.mxu0 %v10329
    %10898 = vmatpush.bf16.msra.mxu0 %v10322
    %10899 = vmatpush.bf16.msra.mxu0 %v10315
    %10900 = vmatpush.bf16.msra.mxu0 %v10308
    %10901 = vmatpush.bf16.msra.mxu0 %v10301
    %10902 = vmatpush.bf16.msra.mxu0 %v10294
    %10903 = vmatmul.bf16.gmra.mxu0 %v9579
    %v10904 = vpop.f32.mrf.mxu0
    %v10905 = vadd.f32 %v9562, %v10904
    %v10906 = vpop.f32.mrf.mxu0
    %10907 = vdwg.mxu0
    %10908 = vmatpush.bf16.msra.mxu0 %v10399
    %10909 = vmatpush.bf16.msra.mxu0 %v10392
    %10910 = vmatpush.bf16.msra.mxu0 %v10385
    %10911 = vmatpush.bf16.msra.mxu0 %v10378
    %10912 = vmatpush.bf16.msra.mxu0 %v10371
    %10913 = vmatpush.bf16.msra.mxu0 %v10364
    %10914 = vmatpush.bf16.msra.mxu0 %v10357
    %10915 = vmatpush.bf16.msra.mxu0 %v10350
    %10916 = vmatmul.bf16.gmra.mxu0 %v9580
    %v10917 = vpop.f32.mrf.mxu0
    %v10918 = vadd.f32 %v10905, %v10917
    %v10919 = vpop.f32.mrf.mxu0
    %10920 = vdwg.mxu0
    %10921 = vmatpush.bf16.msra.mxu0 %v10455
    %10922 = vmatpush.bf16.msra.mxu0 %v10448
    %10923 = vmatpush.bf16.msra.mxu0 %v10441
    %10924 = vmatpush.bf16.msra.mxu0 %v10434
    %10925 = vmatpush.bf16.msra.mxu0 %v10427
    %10926 = vmatpush.bf16.msra.mxu0 %v10420
    %10927 = vmatpush.bf16.msra.mxu0 %v10413
    %10928 = vmatpush.bf16.msra.mxu0 %v10406
    %10929 = vmatmul.bf16.gmra.mxu0 %v9581
    %v10930 = vpop.f32.mrf.mxu0
    %v10931 = vadd.f32 %v10918, %v10930
    %v10932 = vpop.f32.mrf.mxu0
    %10933 = vdwg.mxu0
    %10934 = vmatpush.bf16.msra.mxu0 %v10511
    %10935 = vmatpush.bf16.msra.mxu0 %v10504
    %10936 = vmatpush.bf16.msra.mxu0 %v10497
    %10937 = vmatpush.bf16.msra.mxu0 %v10490
    %10938 = vmatpush.bf16.msra.mxu0 %v10483
    %10939 = vmatpush.bf16.msra.mxu0 %v10476
    %10940 = vmatpush.bf16.msra.mxu0 %v10469
    %10941 = vmatpush.bf16.msra.mxu0 %v10462
    %10942 = vmatmul.bf16.gmra.mxu0 %v9582
    %v10943 = vpop.f32.mrf.mxu0
    %v10944 = vadd.f32 %v10931, %v10943
    %v10945 = vpop.f32.mrf.mxu0
    %10946 = vdwg.mxu0
    %10947 = vmatpush.bf16.msra.mxu0 %v10344
    %10948 = vmatpush.bf16.msra.mxu0 %v10337
    %10949 = vmatpush.bf16.msra.mxu0 %v10330
    %10950 = vmatpush.bf16.msra.mxu0 %v10323
    %10951 = vmatpush.bf16.msra.mxu0 %v10316
    %10952 = vmatpush.bf16.msra.mxu0 %v10309
    %10953 = vmatpush.bf16.msra.mxu0 %v10302
    %10954 = vmatpush.bf16.msra.mxu0 %v10295
    %10955 = vmatmul.bf16.gmra.mxu0 %v9579
    %v10956 = vpop.f32.mrf.mxu0
    %v10957 = vadd.f32 %v9563, %v10956
    %v10958 = vpop.f32.mrf.mxu0
    %10959 = vdwg.mxu0
    %10960 = vmatpush.bf16.msra.mxu0 %v10400
    %10961 = vmatpush.bf16.msra.mxu0 %v10393
    %10962 = vmatpush.bf16.msra.mxu0 %v10386
    %10963 = vmatpush.bf16.msra.mxu0 %v10379
    %10964 = vmatpush.bf16.msra.mxu0 %v10372
    %10965 = vmatpush.bf16.msra.mxu0 %v10365
    %10966 = vmatpush.bf16.msra.mxu0 %v10358
    %10967 = vmatpush.bf16.msra.mxu0 %v10351
    %10968 = vmatmul.bf16.gmra.mxu0 %v9580
    %v10969 = vpop.f32.mrf.mxu0
    %v10970 = vadd.f32 %v10957, %v10969
    %v10971 = vpop.f32.mrf.mxu0
    %10972 = vdwg.mxu0
    %10973 = vmatpush.bf16.msra.mxu0 %v10456
    %10974 = vmatpush.bf16.msra.mxu0 %v10449
    %10975 = vmatpush.bf16.msra.mxu0 %v10442
    %10976 = vmatpush.bf16.msra.mxu0 %v10435
    %10977 = vmatpush.bf16.msra.mxu0 %v10428
    %10978 = vmatpush.bf16.msra.mxu0 %v10421
    %10979 = vmatpush.bf16.msra.mxu0 %v10414
    %10980 = vmatpush.bf16.msra.mxu0 %v10407
    %10981 = vmatmul.bf16.gmra.mxu0 %v9581
    %v10982 = vpop.f32.mrf.mxu0
    %v10983 = vadd.f32 %v10970, %v10982
    %v10984 = vpop.f32.mrf.mxu0
    %10985 = vdwg.mxu0
    %10986 = vmatpush.bf16.msra.mxu0 %v10512
    %10987 = vmatpush.bf16.msra.mxu0 %v10505
    %10988 = vmatpush.bf16.msra.mxu0 %v10498
    %10989 = vmatpush.bf16.msra.mxu0 %v10491
    %10990 = vmatpush.bf16.msra.mxu0 %v10484
    %10991 = vmatpush.bf16.msra.mxu0 %v10477
    %10992 = vmatpush.bf16.msra.mxu0 %v10470
    %10993 = vmatpush.bf16.msra.mxu0 %v10463
    %10994 = vmatmul.bf16.gmra.mxu0 %v9582
    %v10995 = vpop.f32.mrf.mxu0
    %v10996 = vadd.f32 %v10983, %v10995
    %v10997 = vpop.f32.mrf.mxu0
    %10998 = vdwg.mxu0
    %10999 = vmatpush.bf16.msra.mxu0 %v10345
    %11000 = vmatpush.bf16.msra.mxu0 %v10338
    %11001 = vmatpush.bf16.msra.mxu0 %v10331
    %11002 = vmatpush.bf16.msra.mxu0 %v10324
    %11003 = vmatpush.bf16.msra.mxu0 %v10317
    %11004 = vmatpush.bf16.msra.mxu0 %v10310
    %11005 = vmatpush.bf16.msra.mxu0 %v10303
    %11006 = vmatpush.bf16.msra.mxu0 %v10296
    %11007 = vmatmul.bf16.gmra.mxu0 %v9579
    %v11008 = vpop.f32.mrf.mxu0
    %v11009 = vadd.f32 %v9564, %v11008
    %v11010 = vpop.f32.mrf.mxu0
    %11011 = vdwg.mxu0
    %11012 = vmatpush.bf16.msra.mxu0 %v10401
    %11013 = vmatpush.bf16.msra.mxu0 %v10394
    %11014 = vmatpush.bf16.msra.mxu0 %v10387
    %11015 = vmatpush.bf16.msra.mxu0 %v10380
    %11016 = vmatpush.bf16.msra.mxu0 %v10373
    %11017 = vmatpush.bf16.msra.mxu0 %v10366
    %11018 = vmatpush.bf16.msra.mxu0 %v10359
    %11019 = vmatpush.bf16.msra.mxu0 %v10352
    %11020 = vmatmul.bf16.gmra.mxu0 %v9580
    %v11021 = vpop.f32.mrf.mxu0
    %v11022 = vadd.f32 %v11009, %v11021
    %v11023 = vpop.f32.mrf.mxu0
    %11024 = vdwg.mxu0
    %11025 = vmatpush.bf16.msra.mxu0 %v10457
    %11026 = vmatpush.bf16.msra.mxu0 %v10450
    %11027 = vmatpush.bf16.msra.mxu0 %v10443
    %11028 = vmatpush.bf16.msra.mxu0 %v10436
    %11029 = vmatpush.bf16.msra.mxu0 %v10429
    %11030 = vmatpush.bf16.msra.mxu0 %v10422
    %11031 = vmatpush.bf16.msra.mxu0 %v10415
    %11032 = vmatpush.bf16.msra.mxu0 %v10408
    %11033 = vmatmul.bf16.gmra.mxu0 %v9581
    %v11034 = vpop.f32.mrf.mxu0
    %v11035 = vadd.f32 %v11022, %v11034
    %v11036 = vpop.f32.mrf.mxu0
    %11037 = vdwg.mxu0
    %11038 = vmatpush.bf16.msra.mxu0 %v10513
    %11039 = vmatpush.bf16.msra.mxu0 %v10506
    %11040 = vmatpush.bf16.msra.mxu0 %v10499
    %11041 = vmatpush.bf16.msra.mxu0 %v10492
    %11042 = vmatpush.bf16.msra.mxu0 %v10485
    %11043 = vmatpush.bf16.msra.mxu0 %v10478
    %11044 = vmatpush.bf16.msra.mxu0 %v10471
    %11045 = vmatpush.bf16.msra.mxu0 %v10464
    %11046 = vmatmul.bf16.gmra.mxu0 %v9582
    %v11047 = vpop.f32.mrf.mxu0
    %v11048 = vadd.f32 %v11035, %v11047
    %v11049 = vpop.f32.mrf.mxu0
    %11050 = vdwg.mxu0
    %11051 = vmatpush.bf16.msra.mxu0 %v10346
    %11052 = vmatpush.bf16.msra.mxu0 %v10339
    %11053 = vmatpush.bf16.msra.mxu0 %v10332
    %11054 = vmatpush.bf16.msra.mxu0 %v10325
    %11055 = vmatpush.bf16.msra.mxu0 %v10318
    %11056 = vmatpush.bf16.msra.mxu0 %v10311
    %11057 = vmatpush.bf16.msra.mxu0 %v10304
    %11058 = vmatpush.bf16.msra.mxu0 %v10297
    %11059 = vmatmul.bf16.gmra.mxu0 %v9579
    %v11060 = vpop.f32.mrf.mxu0
    %v11061 = vadd.f32 %v9565, %v11060
    %v11062 = vpop.f32.mrf.mxu0
    %11063 = vdwg.mxu0
    %11064 = vmatpush.bf16.msra.mxu0 %v10402
    %11065 = vmatpush.bf16.msra.mxu0 %v10395
    %11066 = vmatpush.bf16.msra.mxu0 %v10388
    %11067 = vmatpush.bf16.msra.mxu0 %v10381
    %11068 = vmatpush.bf16.msra.mxu0 %v10374
    %11069 = vmatpush.bf16.msra.mxu0 %v10367
    %11070 = vmatpush.bf16.msra.mxu0 %v10360
    %11071 = vmatpush.bf16.msra.mxu0 %v10353
    %11072 = vmatmul.bf16.gmra.mxu0 %v9580
    %v11073 = vpop.f32.mrf.mxu0
    %v11074 = vadd.f32 %v11061, %v11073
    %v11075 = vpop.f32.mrf.mxu0
    %11076 = vdwg.mxu0
    %11077 = vmatpush.bf16.msra.mxu0 %v10458
    %11078 = vmatpush.bf16.msra.mxu0 %v10451
    %11079 = vmatpush.bf16.msra.mxu0 %v10444
    %11080 = vmatpush.bf16.msra.mxu0 %v10437
    %11081 = vmatpush.bf16.msra.mxu0 %v10430
    %11082 = vmatpush.bf16.msra.mxu0 %v10423
    %11083 = vmatpush.bf16.msra.mxu0 %v10416
    %11084 = vmatpush.bf16.msra.mxu0 %v10409
    %11085 = vmatmul.bf16.gmra.mxu0 %v9581
    %v11086 = vpop.f32.mrf.mxu0
    %v11087 = vadd.f32 %v11074, %v11086
    %v11088 = vpop.f32.mrf.mxu0
    %11089 = vdwg.mxu0
    %11090 = vmatpush.bf16.msra.mxu0 %v10514
    %11091 = vmatpush.bf16.msra.mxu0 %v10507
    %11092 = vmatpush.bf16.msra.mxu0 %v10500
    %11093 = vmatpush.bf16.msra.mxu0 %v10493
    %11094 = vmatpush.bf16.msra.mxu0 %v10486
    %11095 = vmatpush.bf16.msra.mxu0 %v10479
    %11096 = vmatpush.bf16.msra.mxu0 %v10472
    %11097 = vmatpush.bf16.msra.mxu0 %v10465
    %11098 = vmatmul.bf16.gmra.mxu0 %v9582
    %v11099 = vpop.f32.mrf.mxu0
    %v11100 = vadd.f32 %v11087, %v11099
    %v11101 = vpop.f32.mrf.mxu0
    %11102 = vdwg.mxu0
    %v11103 = vxor.u32 %v10788, 2147483648
    %v11104 = vxor.u32 %v10840, 2147483648
    %v11105 = vxor.u32 %v10892, 2147483648
    %v11106 = vxor.u32 %v10944, 2147483648
    %v11107 = vxor.u32 %v10996, 2147483648
    %v11108 = vxor.u32 %v11048, 2147483648
    %v11109 = vxor.u32 %v11100, 2147483648
    %v11110 = vmul.f32 %v11103, 1.442695
    %v11111 = vpow.pop %v11110
    %v11112 = vmul.f32 %v11104, 1.442695
    %v11113 = vpow.pop %v11112
    %v11114 = vmul.f32 %v11105, 1.442695
    %v11115 = vpow.pop %v11114
    %v11116 = vmul.f32 %v11106, 1.442695
    %v11117 = vpow.pop %v11116
    %v11118 = vmul.f32 %v11107, 1.442695
    %v11119 = vpow.pop %v11118
    %v11120 = vmul.f32 %v11108, 1.442695
    %v11121 = vpow.pop %v11120
    %v11122 = vmul.f32 %v11109, 1.442695
    %v11123 = vpow.pop %v11122
    %v11124 = vadd.f32 %v11111, 1.0
    %v11125 = vadd.f32 %v11113, 1.0
    %v11126 = vadd.f32 %v11115, 1.0
    %v11127 = vadd.f32 %v11117, 1.0
    %v11128 = vadd.f32 %v11119, 1.0
    %v11129 = vadd.f32 %v11121, 1.0
    %v11130 = vadd.f32 %v11123, 1.0
    %v11131 = vrcp.pop %v11124
    %v11132 = vmul.f32 %v11124, %v11131
    %v11133 = vsub.f32 1.0, %v11132
    %v11134 = vmul.f32 %v11131, %v11133
    %v11135 = vadd.f32 %v11131, %v11134
    %vm11136 = vweird.f32 %v11124
    %vm11137 = vweird.f32 %v11131
    %vm11138 = vmor %vm11136, %vm11137
    %v11139 = vsel %vm11138, %v11131, %v11135
    %v11140 = vand.u32 2147483647, %v11124
    %vm11141 = vcmp.eq.f32.partialorder %v11140, 8.507059e+37
    %v11142 = vand.u32 %v11124, 2147483648
    %v11143 = vor.u32 1.1754944e-38, %v11142
    %v11144 = vsel %vm11141, %v11143, %v11139
    %v11145 = vmul.f32 1.0, %v11144
    %v11146 = vrcp.pop %v11125
    %v11147 = vmul.f32 %v11125, %v11146
    %v11148 = vsub.f32 1.0, %v11147
    %v11149 = vmul.f32 %v11146, %v11148
    %v11150 = vadd.f32 %v11146, %v11149
    %vm11151 = vweird.f32 %v11125
    %vm11152 = vweird.f32 %v11146
    %vm11153 = vmor %vm11151, %vm11152
    %v11154 = vsel %vm11153, %v11146, %v11150
    %v11155 = vand.u32 2147483647, %v11125
    %vm11156 = vcmp.eq.f32.partialorder %v11155, 8.507059e+37
    %v11157 = vand.u32 %v11125, 2147483648
    %v11158 = vor.u32 1.1754944e-38, %v11157
    %v11159 = vsel %vm11156, %v11158, %v11154
    %v11160 = vmul.f32 1.0, %v11159
    %v11161 = vrcp.pop %v11126
    %v11162 = vmul.f32 %v11126, %v11161
    %v11163 = vsub.f32 1.0, %v11162
    %v11164 = vmul.f32 %v11161, %v11163
    %v11165 = vadd.f32 %v11161, %v11164
    %vm11166 = vweird.f32 %v11126
    %vm11167 = vweird.f32 %v11161
    %vm11168 = vmor %vm11166, %vm11167
    %v11169 = vsel %vm11168, %v11161, %v11165
    %v11170 = vand.u32 2147483647, %v11126
    %vm11171 = vcmp.eq.f32.partialorder %v11170, 8.507059e+37
    %v11172 = vand.u32 %v11126, 2147483648
    %v11173 = vor.u32 1.1754944e-38, %v11172
    %v11174 = vsel %vm11171, %v11173, %v11169
    %v11175 = vmul.f32 1.0, %v11174
    %v11176 = vrcp.pop %v11127
    %v11177 = vmul.f32 %v11127, %v11176
    %v11178 = vsub.f32 1.0, %v11177
    %v11179 = vmul.f32 %v11176, %v11178
    %v11180 = vadd.f32 %v11176, %v11179
    %vm11181 = vweird.f32 %v11127
    %vm11182 = vweird.f32 %v11176
    %vm11183 = vmor %vm11181, %vm11182
    %v11184 = vsel %vm11183, %v11176, %v11180
    %v11185 = vand.u32 2147483647, %v11127
    %vm11186 = vcmp.eq.f32.partialorder %v11185, 8.507059e+37
    %v11187 = vand.u32 %v11127, 2147483648
    %v11188 = vor.u32 1.1754944e-38, %v11187
    %v11189 = vsel %vm11186, %v11188, %v11184
    %v11190 = vmul.f32 1.0, %v11189
    %v11191 = vrcp.pop %v11128
    %v11192 = vmul.f32 %v11128, %v11191
    %v11193 = vsub.f32 1.0, %v11192
    %v11194 = vmul.f32 %v11191, %v11193
    %v11195 = vadd.f32 %v11191, %v11194
    %vm11196 = vweird.f32 %v11128
    %vm11197 = vweird.f32 %v11191
    %vm11198 = vmor %vm11196, %vm11197
    %v11199 = vsel %vm11198, %v11191, %v11195
    %v11200 = vand.u32 2147483647, %v11128
    %vm11201 = vcmp.eq.f32.partialorder %v11200, 8.507059e+37
    %v11202 = vand.u32 %v11128, 2147483648
    %v11203 = vor.u32 1.1754944e-38, %v11202
    %v11204 = vsel %vm11201, %v11203, %v11199
    %v11205 = vmul.f32 1.0, %v11204
    %v11206 = vrcp.pop %v11129
    %v11207 = vmul.f32 %v11129, %v11206
    %v11208 = vsub.f32 1.0, %v11207
    %v11209 = vmul.f32 %v11206, %v11208
    %v11210 = vadd.f32 %v11206, %v11209
    %vm11211 = vweird.f32 %v11129
    %vm11212 = vweird.f32 %v11206
    %vm11213 = vmor %vm11211, %vm11212
    %v11214 = vsel %vm11213, %v11206, %v11210
    %v11215 = vand.u32 2147483647, %v11129
    %vm11216 = vcmp.eq.f32.partialorder %v11215, 8.507059e+37
    %v11217 = vand.u32 %v11129, 2147483648
    %v11218 = vor.u32 1.1754944e-38, %v11217
    %v11219 = vsel %vm11216, %v11218, %v11214
    %v11220 = vmul.f32 1.0, %v11219
    %v11221 = vrcp.pop %v11130
    %v11222 = vmul.f32 %v11130, %v11221
    %v11223 = vsub.f32 1.0, %v11222
    %v11224 = vmul.f32 %v11221, %v11223
    %v11225 = vadd.f32 %v11221, %v11224
    %vm11226 = vweird.f32 %v11130
    %vm11227 = vweird.f32 %v11221
    %vm11228 = vmor %vm11226, %vm11227
    %v11229 = vsel %vm11228, %v11221, %v11225
    %v11230 = vand.u32 2147483647, %v11130
    %vm11231 = vcmp.eq.f32.partialorder %v11230, 8.507059e+37
    %v11232 = vand.u32 %v11130, 2147483648
    %v11233 = vor.u32 1.1754944e-38, %v11232
    %v11234 = vsel %vm11231, %v11233, %v11229
    %v11235 = vmul.f32 1.0, %v11234
    %v11242 = vrot.slane %v11160, 4
    %v11243 = vrot.slane %v11190, 4
    %v11244 = vrot.slane %v11220, 4
    %v11245 = vsel %vm5264, %v11145, %v11242
    %v11246 = vsel %vm5264, %v11175, %v11243
    %v11247 = vsel %vm5264, %v11205, %v11244
    %11251 = vst [vmem:[#allocation4] sm:$0xff] %v11245
    %11252 = vst [vmem:[#allocation4 + $0x8] sm:$0xff] %v11246
    %11253 = vst [vmem:[#allocation4 + $0x10] sm:$0xff] %v11247
    %11254 = vst.msk [vmem:[#allocation4 + $0x18] sm:$0xf] %vm9297, %v11235
    %s11255 = scalar_lea.vmem %s9, 3584
    %v11256 = vld [vmem:[%s11255] sm:$0xff]
    %v11257 = vld [vmem:[%s11255 + $0x8] sm:$0xff]
    %v11258 = vld [vmem:[%s11255 + $0x10] sm:$0xff]
    %v11259 = vld [vmem:[%s11255 + $0x18] sm:$0xf]
    %v11260 = vld [vmem:[%s11255 + $0x1c] sm:$0xff]
    %v11261 = vld [vmem:[%s11255 + $0x24] sm:$0xff]
    %v11262 = vld [vmem:[%s11255 + $0x2c] sm:$0xff]
    %v11263 = vld [vmem:[%s11255 + $0x34] sm:$0xf]
    %v11264 = vld [vmem:[%s11255 + $0x38] sm:$0xff]
    %v11265 = vld [vmem:[%s11255 + $0x40] sm:$0xff]
    %v11266 = vld [vmem:[%s11255 + $0x48] sm:$0xff]
    %v11267 = vld [vmem:[%s11255 + $0x50] sm:$0xf]
    %v11268 = vld [vmem:[%s11255 + $0x54] sm:$0xff]
    %v11269 = vld [vmem:[%s11255 + $0x5c] sm:$0xff]
    %v11270 = vld [vmem:[%s11255 + $0x64] sm:$0xff]
    %v11271 = vld [vmem:[%s11255 + $0x6c] sm:$0xf]
    %v11272 = vld [vmem:[%s11255 + $0x70] sm:$0xff]
    %v11273 = vld [vmem:[%s11255 + $0x78] sm:$0xff]
    %v11274 = vld [vmem:[%s11255 + $0x80] sm:$0xff]
    %v11275 = vld [vmem:[%s11255 + $0x88] sm:$0xf]
    %v11276 = vld [vmem:[%s11255 + $0x8c] sm:$0xff]
    %v11277 = vld [vmem:[%s11255 + $0x94] sm:$0xff]
    %v11278 = vld [vmem:[%s11255 + $0x9c] sm:$0xff]
    %v11279 = vld [vmem:[%s11255 + $0xa4] sm:$0xf]
    %v11280 = vld [vmem:[%s11255 + $0xa8] sm:$0xff]
    %v11281 = vld [vmem:[%s11255 + $0xb0] sm:$0xff]
    %v11282 = vld [vmem:[%s11255 + $0xb8] sm:$0xff]
    %v11283 = vld [vmem:[%s11255 + $0xc0] sm:$0xf]
    %v11284 = vld [vmem:[%s11255 + $0xc4] sm:$0xff]
    %v11285 = vld [vmem:[%s11255 + $0xcc] sm:$0xff]
    %v11286 = vld [vmem:[%s11255 + $0xd4] sm:$0xff]
    %v11287 = vld [vmem:[%s11255 + $0xdc] sm:$0xf]
    %v11288 = vld [vmem:[%s11255 + $0xe0] sm:$0xff]
    %v11289 = vld [vmem:[%s11255 + $0xe8] sm:$0xff]
    %v11290 = vld [vmem:[%s11255 + $0xf0] sm:$0xff]
    %v11291 = vld [vmem:[%s11255 + $0xf8] sm:$0xf]
    %v11292 = vld [vmem:[%s11255 + $0xfc] sm:$0xff]
    %v11293 = vld [vmem:[%s11255 + $0x104] sm:$0xff]
    %v11294 = vld [vmem:[%s11255 + $0x10c] sm:$0xff]
    %v11295 = vld [vmem:[%s11255 + $0x114] sm:$0xf]
    %v11296 = vld [vmem:[%s11255 + $0x118] sm:$0xff]
    %v11297 = vld [vmem:[%s11255 + $0x120] sm:$0xff]
    %v11298 = vld [vmem:[%s11255 + $0x128] sm:$0xff]
    %v11299 = vld [vmem:[%s11255 + $0x130] sm:$0xf]
    %v11300 = vld [vmem:[%s11255 + $0x134] sm:$0xff]
    %v11301 = vld [vmem:[%s11255 + $0x13c] sm:$0xff]
    %v11302 = vld [vmem:[%s11255 + $0x144] sm:$0xff]
    %v11303 = vld [vmem:[%s11255 + $0x14c] sm:$0xf]
    %v11304 = vld [vmem:[%s11255 + $0x150] sm:$0xff]
    %v11305 = vld [vmem:[%s11255 + $0x158] sm:$0xff]
    %v11306 = vld [vmem:[%s11255 + $0x160] sm:$0xff]
    %v11307 = vld [vmem:[%s11255 + $0x168] sm:$0xf]
    %v11308 = vld [vmem:[%s11255 + $0x16c] sm:$0xff]
    %v11309 = vld [vmem:[%s11255 + $0x174] sm:$0xff]
    %v11310 = vld [vmem:[%s11255 + $0x17c] sm:$0xff]
    %v11311 = vld [vmem:[%s11255 + $0x184] sm:$0xf]
    %v11312 = vld [vmem:[%s11255 + $0x188] sm:$0xff]
    %v11313 = vld [vmem:[%s11255 + $0x190] sm:$0xff]
    %v11314 = vld [vmem:[%s11255 + $0x198] sm:$0xff]
    %v11315 = vld [vmem:[%s11255 + $0x1a0] sm:$0xf]
    %v11316 = vld [vmem:[%s11255 + $0x1a4] sm:$0xff]
    %v11317 = vld [vmem:[%s11255 + $0x1ac] sm:$0xff]
    %v11318 = vld [vmem:[%s11255 + $0x1b4] sm:$0xff]
    %v11319 = vld [vmem:[%s11255 + $0x1bc] sm:$0xf]
    %v11320 = vld [vmem:[%s11255 + $0x1c0] sm:$0xff]
    %v11321 = vld [vmem:[%s11255 + $0x1c8] sm:$0xff]
    %v11322 = vld [vmem:[%s11255 + $0x1d0] sm:$0xff]
    %v11323 = vld [vmem:[%s11255 + $0x1d8] sm:$0xf]
    %v11324 = vld [vmem:[%s11255 + $0x1dc] sm:$0xff]
    %v11325 = vld [vmem:[%s11255 + $0x1e4] sm:$0xff]
    %v11326 = vld [vmem:[%s11255 + $0x1ec] sm:$0xff]
    %v11327 = vld [vmem:[%s11255 + $0x1f4] sm:$0xf]
    %v11328 = vld [vmem:[%s11255 + $0x1f8] sm:$0xff]
    %v11329 = vld [vmem:[%s11255 + $0x200] sm:$0xff]
    %v11330 = vld [vmem:[%s11255 + $0x208] sm:$0xff]
    %v11331 = vld [vmem:[%s11255 + $0x210] sm:$0xf]
    %v11332 = vld [vmem:[%s11255 + $0x214] sm:$0xff]
    %v11333 = vld [vmem:[%s11255 + $0x21c] sm:$0xff]
    %v11334 = vld [vmem:[%s11255 + $0x224] sm:$0xff]
    %v11335 = vld [vmem:[%s11255 + $0x22c] sm:$0xf]
    %v11336 = vld [vmem:[%s11255 + $0x230] sm:$0xff]
    %v11337 = vld [vmem:[%s11255 + $0x238] sm:$0xff]
    %v11338 = vld [vmem:[%s11255 + $0x240] sm:$0xff]
    %v11339 = vld [vmem:[%s11255 + $0x248] sm:$0xf]
    %v11340 = vld [vmem:[%s11255 + $0x24c] sm:$0xff]
    %v11341 = vld [vmem:[%s11255 + $0x254] sm:$0xff]
    %v11342 = vld [vmem:[%s11255 + $0x25c] sm:$0xff]
    %v11343 = vld [vmem:[%s11255 + $0x264] sm:$0xf]
    %v11344 = vld [vmem:[%s11255 + $0x268] sm:$0xff]
    %v11345 = vld [vmem:[%s11255 + $0x270] sm:$0xff]
    %v11346 = vld [vmem:[%s11255 + $0x278] sm:$0xff]
    %v11347 = vld [vmem:[%s11255 + $0x280] sm:$0xf]
    %v11348 = vld [vmem:[%s11255 + $0x284] sm:$0xff]
    %v11349 = vld [vmem:[%s11255 + $0x28c] sm:$0xff]
    %v11350 = vld [vmem:[%s11255 + $0x294] sm:$0xff]
    %v11351 = vld [vmem:[%s11255 + $0x29c] sm:$0xf]
    %v11352 = vld [vmem:[%s11255 + $0x2a0] sm:$0xff]
    %v11353 = vld [vmem:[%s11255 + $0x2a8] sm:$0xff]
    %v11354 = vld [vmem:[%s11255 + $0x2b0] sm:$0xff]
    %v11355 = vld [vmem:[%s11255 + $0x2b8] sm:$0xf]
    %v11356 = vld [vmem:[%s11255 + $0x2bc] sm:$0xff]
    %v11357 = vld [vmem:[%s11255 + $0x2c4] sm:$0xff]
    %v11358 = vld [vmem:[%s11255 + $0x2cc] sm:$0xff]
    %v11359 = vld [vmem:[%s11255 + $0x2d4] sm:$0xf]
    %v11360 = vld [vmem:[%s11255 + $0x2d8] sm:$0xff]
    %v11361 = vld [vmem:[%s11255 + $0x2e0] sm:$0xff]
    %v11362 = vld [vmem:[%s11255 + $0x2e8] sm:$0xff]
    %v11363 = vld [vmem:[%s11255 + $0x2f0] sm:$0xf]
    %v11364 = vld [vmem:[%s11255 + $0x2f4] sm:$0xff]
    %v11365 = vld [vmem:[%s11255 + $0x2fc] sm:$0xff]
    %v11366 = vld [vmem:[%s11255 + $0x304] sm:$0xff]
    %v11367 = vld [vmem:[%s11255 + $0x30c] sm:$0xf]
    %v11368 = vld [vmem:[%s11255 + $0x310] sm:$0xff]
    %v11369 = vld [vmem:[%s11255 + $0x318] sm:$0xff]
    %v11370 = vld [vmem:[%s11255 + $0x320] sm:$0xff]
    %v11371 = vld [vmem:[%s11255 + $0x328] sm:$0xf]
    %v11372 = vld [vmem:[%s11255 + $0x32c] sm:$0xff]
    %v11373 = vld [vmem:[%s11255 + $0x334] sm:$0xff]
    %v11374 = vld [vmem:[%s11255 + $0x33c] sm:$0xff]
    %v11375 = vld [vmem:[%s11255 + $0x344] sm:$0xf]
    %v11376 = vld [vmem:[%s11255 + $0x348] sm:$0xff]
    %v11377 = vld [vmem:[%s11255 + $0x350] sm:$0xff]
    %v11378 = vld [vmem:[%s11255 + $0x358] sm:$0xff]
    %v11379 = vld [vmem:[%s11255 + $0x360] sm:$0xf]
    %v11380 = vld [vmem:[%s11255 + $0x364] sm:$0xff]
    %v11381 = vld [vmem:[%s11255 + $0x36c] sm:$0xff]
    %v11382 = vld [vmem:[%s11255 + $0x374] sm:$0xff]
    %v11383 = vld [vmem:[%s11255 + $0x37c] sm:$0xf]
    %v11384 = vld [vmem:[%s11255 + $0x380] sm:$0xff]
    %v11385 = vld [vmem:[%s11255 + $0x388] sm:$0xff]
    %v11386 = vld [vmem:[%s11255 + $0x390] sm:$0xff]
    %v11387 = vld [vmem:[%s11255 + $0x398] sm:$0xf]
    %v11388 = vld [vmem:[%s11255 + $0x39c] sm:$0xff]
    %v11389 = vld [vmem:[%s11255 + $0x3a4] sm:$0xff]
    %v11390 = vld [vmem:[%s11255 + $0x3ac] sm:$0xff]
    %v11391 = vld [vmem:[%s11255 + $0x3b4] sm:$0xf]
    %v11392 = vld [vmem:[%s11255 + $0x3b8] sm:$0xff]
    %v11393 = vld [vmem:[%s11255 + $0x3c0] sm:$0xff]
    %v11394 = vld [vmem:[%s11255 + $0x3c8] sm:$0xff]
    %v11395 = vld [vmem:[%s11255 + $0x3d0] sm:$0xf]
    %v11396 = vld [vmem:[%s11255 + $0x3d4] sm:$0xff]
    %v11397 = vld [vmem:[%s11255 + $0x3dc] sm:$0xff]
    %v11398 = vld [vmem:[%s11255 + $0x3e4] sm:$0xff]
    %v11399 = vld [vmem:[%s11255 + $0x3ec] sm:$0xf]
    %v11400 = vld [vmem:[%s11255 + $0x3f0] sm:$0xff]
    %v11401 = vld [vmem:[%s11255 + $0x3f8] sm:$0xff]
    %v11402 = vld [vmem:[%s11255 + $0x400] sm:$0xff]
    %v11403 = vld [vmem:[%s11255 + $0x408] sm:$0xf]
    %v11404 = vld [vmem:[%s11255 + $0x40c] sm:$0xff]
    %v11405 = vld [vmem:[%s11255 + $0x414] sm:$0xff]
    %v11406 = vld [vmem:[%s11255 + $0x41c] sm:$0xff]
    %v11407 = vld [vmem:[%s11255 + $0x424] sm:$0xf]
    %v11408 = vld [vmem:[%s11255 + $0x428] sm:$0xff]
    %v11409 = vld [vmem:[%s11255 + $0x430] sm:$0xff]
    %v11410 = vld [vmem:[%s11255 + $0x438] sm:$0xff]
    %v11411 = vld [vmem:[%s11255 + $0x440] sm:$0xf]
    %v11412 = vld [vmem:[%s11255 + $0x444] sm:$0xff]
    %v11413 = vld [vmem:[%s11255 + $0x44c] sm:$0xff]
    %v11414 = vld [vmem:[%s11255 + $0x454] sm:$0xff]
    %v11415 = vld [vmem:[%s11255 + $0x45c] sm:$0xf]
    %v11416 = vld [vmem:[%s11255 + $0x460] sm:$0xff]
    %v11417 = vld [vmem:[%s11255 + $0x468] sm:$0xff]
    %v11418 = vld [vmem:[%s11255 + $0x470] sm:$0xff]
    %v11419 = vld [vmem:[%s11255 + $0x478] sm:$0xf]
    %v11420 = vld [vmem:[%s11255 + $0x47c] sm:$0xff]
    %v11421 = vld [vmem:[%s11255 + $0x484] sm:$0xff]
    %v11422 = vld [vmem:[%s11255 + $0x48c] sm:$0xff]
    %v11423 = vld [vmem:[%s11255 + $0x494] sm:$0xf]
    %v11424 = vld [vmem:[%s11255 + $0x498] sm:$0xff]
    %v11425 = vld [vmem:[%s11255 + $0x4a0] sm:$0xff]
    %v11426 = vld [vmem:[%s11255 + $0x4a8] sm:$0xff]
    %v11427 = vld [vmem:[%s11255 + $0x4b0] sm:$0xf]
    %v11428 = vld [vmem:[%s11255 + $0x4b4] sm:$0xff]
    %v11429 = vld [vmem:[%s11255 + $0x4bc] sm:$0xff]
    %v11430 = vld [vmem:[%s11255 + $0x4c4] sm:$0xff]
    %v11431 = vld [vmem:[%s11255 + $0x4cc] sm:$0xf]
    %v11432 = vld [vmem:[%s11255 + $0x4d0] sm:$0xff]
    %v11433 = vld [vmem:[%s11255 + $0x4d8] sm:$0xff]
    %v11434 = vld [vmem:[%s11255 + $0x4e0] sm:$0xff]
    %v11435 = vld [vmem:[%s11255 + $0x4e8] sm:$0xf]
    %v11436 = vld [vmem:[%s11255 + $0x4ec] sm:$0xff]
    %v11437 = vld [vmem:[%s11255 + $0x4f4] sm:$0xff]
    %v11438 = vld [vmem:[%s11255 + $0x4fc] sm:$0xff]
    %v11439 = vld [vmem:[%s11255 + $0x504] sm:$0xf]
    %v11440 = vld [vmem:[%s11255 + $0x508] sm:$0xff]
    %v11441 = vld [vmem:[%s11255 + $0x510] sm:$0xff]
    %v11442 = vld [vmem:[%s11255 + $0x518] sm:$0xff]
    %v11443 = vld [vmem:[%s11255 + $0x520] sm:$0xf]
    %v11444 = vld [vmem:[%s11255 + $0x524] sm:$0xff]
    %v11445 = vld [vmem:[%s11255 + $0x52c] sm:$0xff]
    %v11446 = vld [vmem:[%s11255 + $0x534] sm:$0xff]
    %v11447 = vld [vmem:[%s11255 + $0x53c] sm:$0xf]
    %v11448 = vld [vmem:[%s11255 + $0x540] sm:$0xff]
    %v11449 = vld [vmem:[%s11255 + $0x548] sm:$0xff]
    %v11450 = vld [vmem:[%s11255 + $0x550] sm:$0xff]
    %v11451 = vld [vmem:[%s11255 + $0x558] sm:$0xf]
    %v11452 = vld [vmem:[%s11255 + $0x55c] sm:$0xff]
    %v11453 = vld [vmem:[%s11255 + $0x564] sm:$0xff]
    %v11454 = vld [vmem:[%s11255 + $0x56c] sm:$0xff]
    %v11455 = vld [vmem:[%s11255 + $0x574] sm:$0xf]
    %v11456 = vld [vmem:[%s11255 + $0x578] sm:$0xff]
    %v11457 = vld [vmem:[%s11255 + $0x580] sm:$0xff]
    %v11458 = vld [vmem:[%s11255 + $0x588] sm:$0xff]
    %v11459 = vld [vmem:[%s11255 + $0x590] sm:$0xf]
    %v11460 = vld [vmem:[%s11255 + $0x594] sm:$0xff]
    %v11461 = vld [vmem:[%s11255 + $0x59c] sm:$0xff]
    %v11462 = vld [vmem:[%s11255 + $0x5a4] sm:$0xff]
    %v11463 = vld [vmem:[%s11255 + $0x5ac] sm:$0xf]
    %v11464 = vld [vmem:[%s11255 + $0x5b0] sm:$0xff]
    %v11465 = vld [vmem:[%s11255 + $0x5b8] sm:$0xff]
    %v11466 = vld [vmem:[%s11255 + $0x5c0] sm:$0xff]
    %v11467 = vld [vmem:[%s11255 + $0x5c8] sm:$0xf]
    %v11468 = vld [vmem:[%s11255 + $0x5cc] sm:$0xff]
    %v11469 = vld [vmem:[%s11255 + $0x5d4] sm:$0xff]
    %v11470 = vld [vmem:[%s11255 + $0x5dc] sm:$0xff]
    %v11471 = vld [vmem:[%s11255 + $0x5e4] sm:$0xf]
    %v11472 = vld [vmem:[%s11255 + $0x5e8] sm:$0xff]
    %v11473 = vld [vmem:[%s11255 + $0x5f0] sm:$0xff]
    %v11474 = vld [vmem:[%s11255 + $0x5f8] sm:$0xff]
    %v11475 = vld [vmem:[%s11255 + $0x600] sm:$0xf]
    %v11476 = vld [vmem:[%s11255 + $0x604] sm:$0xff]
    %v11477 = vld [vmem:[%s11255 + $0x60c] sm:$0xff]
    %v11478 = vld [vmem:[%s11255 + $0x614] sm:$0xff]
    %v11479 = vld [vmem:[%s11255 + $0x61c] sm:$0xf]
    %v11480 = vld [vmem:[%s11255 + $0x620] sm:$0xff]
    %v11481 = vld [vmem:[%s11255 + $0x628] sm:$0xff]
    %v11482 = vld [vmem:[%s11255 + $0x630] sm:$0xff]
    %v11483 = vld [vmem:[%s11255 + $0x638] sm:$0xf]
    %v11484 = vld [vmem:[%s11255 + $0x63c] sm:$0xff]
    %v11485 = vld [vmem:[%s11255 + $0x644] sm:$0xff]
    %v11486 = vld [vmem:[%s11255 + $0x64c] sm:$0xff]
    %v11487 = vld [vmem:[%s11255 + $0x654] sm:$0xf]
    %v11488 = vld [vmem:[%s11255 + $0x658] sm:$0xff]
    %v11489 = vld [vmem:[%s11255 + $0x660] sm:$0xff]
    %v11490 = vld [vmem:[%s11255 + $0x668] sm:$0xff]
    %v11491 = vld [vmem:[%s11255 + $0x670] sm:$0xf]
    %v11492 = vld [vmem:[%s11255 + $0x674] sm:$0xff]
    %v11493 = vld [vmem:[%s11255 + $0x67c] sm:$0xff]
    %v11494 = vld [vmem:[%s11255 + $0x684] sm:$0xff]
    %v11495 = vld [vmem:[%s11255 + $0x68c] sm:$0xf]
    %v11496 = vld [vmem:[%s11255 + $0x690] sm:$0xff]
    %v11497 = vld [vmem:[%s11255 + $0x698] sm:$0xff]
    %v11498 = vld [vmem:[%s11255 + $0x6a0] sm:$0xff]
    %v11499 = vld [vmem:[%s11255 + $0x6a8] sm:$0xf]
    %v11500 = vld [vmem:[%s11255 + $0x6ac] sm:$0xff]
    %v11501 = vld [vmem:[%s11255 + $0x6b4] sm:$0xff]
    %v11502 = vld [vmem:[%s11255 + $0x6bc] sm:$0xff]
    %v11503 = vld [vmem:[%s11255 + $0x6c4] sm:$0xf]
    %v11504 = vld [vmem:[%s11255 + $0x6c8] sm:$0xff]
    %v11505 = vld [vmem:[%s11255 + $0x6d0] sm:$0xff]
    %v11506 = vld [vmem:[%s11255 + $0x6d8] sm:$0xff]
    %v11507 = vld [vmem:[%s11255 + $0x6e0] sm:$0xf]
    %v11508 = vld [vmem:[%s11255 + $0x6e4] sm:$0xff]
    %v11509 = vld [vmem:[%s11255 + $0x6ec] sm:$0xff]
    %v11510 = vld [vmem:[%s11255 + $0x6f4] sm:$0xff]
    %v11511 = vld [vmem:[%s11255 + $0x6fc] sm:$0xf]
    %s11512 = scalar_lea.vmem %s10, 14
    %v11513 = vld [vmem:[%s11512] sm:$0x7f]
    %v11515 = vperm.slane %v11513, 0
    %v11516 = vperm.slane %v11513, 1
    %v11517 = vperm.slane %v11513, 2
    %v11518 = vperm.slane %v11513, 3
    %v11519 = vperm.slane %v11513, 4
    %v11520 = vperm.slane %v11513, 5
    %v11521 = vperm.slane %v11513, 6
    %v11531 = vunpack.c.l.b16 %v7342
    %v11532 = vunpack.c.h.b16 %v7342
    %v11533 = vunpack.c.l.b16 %v7343
    %v11534 = vunpack.c.h.b16 %v7343
    %v11535 = vpack.c.b16 %v11531, %v11531
    %v11536 = vpack.c.b16 %v11532, %v11532
    %v11537 = vpack.c.b16 %v11533, %v11533
    %v11538 = vpack.c.b16 %v11534, %v11534
    %v11799 = vunpack.c.l.b16 %v11256
    %v11800 = vunpack.c.h.b16 %v11256
    %v11801 = vunpack.c.l.b16 %v11257
    %v11802 = vunpack.c.h.b16 %v11257
    %v11803 = vunpack.c.l.b16 %v11258
    %v11804 = vunpack.c.h.b16 %v11258
    %v11805 = vunpack.c.l.b16 %v11259
    %v11806 = vunpack.c.l.b16 %v11260
    %v11807 = vunpack.c.h.b16 %v11260
    %v11808 = vunpack.c.l.b16 %v11261
    %v11809 = vunpack.c.h.b16 %v11261
    %v11810 = vunpack.c.l.b16 %v11262
    %v11811 = vunpack.c.h.b16 %v11262
    %v11812 = vunpack.c.l.b16 %v11263
    %v11813 = vunpack.c.l.b16 %v11264
    %v11814 = vunpack.c.h.b16 %v11264
    %v11815 = vunpack.c.l.b16 %v11265
    %v11816 = vunpack.c.h.b16 %v11265
    %v11817 = vunpack.c.l.b16 %v11266
    %v11818 = vunpack.c.h.b16 %v11266
    %v11819 = vunpack.c.l.b16 %v11267
    %v11820 = vunpack.c.l.b16 %v11268
    %v11821 = vunpack.c.h.b16 %v11268
    %v11822 = vunpack.c.l.b16 %v11269
    %v11823 = vunpack.c.h.b16 %v11269
    %v11824 = vunpack.c.l.b16 %v11270
    %v11825 = vunpack.c.h.b16 %v11270
    %v11826 = vunpack.c.l.b16 %v11271
    %v11827 = vunpack.c.l.b16 %v11272
    %v11828 = vunpack.c.h.b16 %v11272
    %v11829 = vunpack.c.l.b16 %v11273
    %v11830 = vunpack.c.h.b16 %v11273
    %v11831 = vunpack.c.l.b16 %v11274
    %v11832 = vunpack.c.h.b16 %v11274
    %v11833 = vunpack.c.l.b16 %v11275
    %v11834 = vunpack.c.l.b16 %v11276
    %v11835 = vunpack.c.h.b16 %v11276
    %v11836 = vunpack.c.l.b16 %v11277
    %v11837 = vunpack.c.h.b16 %v11277
    %v11838 = vunpack.c.l.b16 %v11278
    %v11839 = vunpack.c.h.b16 %v11278
    %v11840 = vunpack.c.l.b16 %v11279
    %v11841 = vunpack.c.l.b16 %v11280
    %v11842 = vunpack.c.h.b16 %v11280
    %v11843 = vunpack.c.l.b16 %v11281
    %v11844 = vunpack.c.h.b16 %v11281
    %v11845 = vunpack.c.l.b16 %v11282
    %v11846 = vunpack.c.h.b16 %v11282
    %v11847 = vunpack.c.l.b16 %v11283
    %v11848 = vunpack.c.l.b16 %v11284
    %v11849 = vunpack.c.h.b16 %v11284
    %v11850 = vunpack.c.l.b16 %v11285
    %v11851 = vunpack.c.h.b16 %v11285
    %v11852 = vunpack.c.l.b16 %v11286
    %v11853 = vunpack.c.h.b16 %v11286
    %v11854 = vunpack.c.l.b16 %v11287
    %v11855 = vunpack.c.l.b16 %v11288
    %v11856 = vunpack.c.h.b16 %v11288
    %v11857 = vunpack.c.l.b16 %v11289
    %v11858 = vunpack.c.h.b16 %v11289
    %v11859 = vunpack.c.l.b16 %v11290
    %v11860 = vunpack.c.h.b16 %v11290
    %v11861 = vunpack.c.l.b16 %v11291
    %v11862 = vunpack.c.l.b16 %v11292
    %v11863 = vunpack.c.h.b16 %v11292
    %v11864 = vunpack.c.l.b16 %v11293
    %v11865 = vunpack.c.h.b16 %v11293
    %v11866 = vunpack.c.l.b16 %v11294
    %v11867 = vunpack.c.h.b16 %v11294
    %v11868 = vunpack.c.l.b16 %v11295
    %v11869 = vunpack.c.l.b16 %v11296
    %v11870 = vunpack.c.h.b16 %v11296
    %v11871 = vunpack.c.l.b16 %v11297
    %v11872 = vunpack.c.h.b16 %v11297
    %v11873 = vunpack.c.l.b16 %v11298
    %v11874 = vunpack.c.h.b16 %v11298
    %v11875 = vunpack.c.l.b16 %v11299
    %v11876 = vunpack.c.l.b16 %v11300
    %v11877 = vunpack.c.h.b16 %v11300
    %v11878 = vunpack.c.l.b16 %v11301
    %v11879 = vunpack.c.h.b16 %v11301
    %v11880 = vunpack.c.l.b16 %v11302
    %v11881 = vunpack.c.h.b16 %v11302
    %v11882 = vunpack.c.l.b16 %v11303
    %v11883 = vunpack.c.l.b16 %v11304
    %v11884 = vunpack.c.h.b16 %v11304
    %v11885 = vunpack.c.l.b16 %v11305
    %v11886 = vunpack.c.h.b16 %v11305
    %v11887 = vunpack.c.l.b16 %v11306
    %v11888 = vunpack.c.h.b16 %v11306
    %v11889 = vunpack.c.l.b16 %v11307
    %v11890 = vunpack.c.l.b16 %v11308
    %v11891 = vunpack.c.h.b16 %v11308
    %v11892 = vunpack.c.l.b16 %v11309
    %v11893 = vunpack.c.h.b16 %v11309
    %v11894 = vunpack.c.l.b16 %v11310
    %v11895 = vunpack.c.h.b16 %v11310
    %v11896 = vunpack.c.l.b16 %v11311
    %v11897 = vunpack.c.l.b16 %v11312
    %v11898 = vunpack.c.h.b16 %v11312
    %v11899 = vunpack.c.l.b16 %v11313
    %v11900 = vunpack.c.h.b16 %v11313
    %v11901 = vunpack.c.l.b16 %v11314
    %v11902 = vunpack.c.h.b16 %v11314
    %v11903 = vunpack.c.l.b16 %v11315
    %v11904 = vunpack.c.l.b16 %v11316
    %v11905 = vunpack.c.h.b16 %v11316
    %v11906 = vunpack.c.l.b16 %v11317
    %v11907 = vunpack.c.h.b16 %v11317
    %v11908 = vunpack.c.l.b16 %v11318
    %v11909 = vunpack.c.h.b16 %v11318
    %v11910 = vunpack.c.l.b16 %v11319
    %v11911 = vunpack.c.l.b16 %v11320
    %v11912 = vunpack.c.h.b16 %v11320
    %v11913 = vunpack.c.l.b16 %v11321
    %v11914 = vunpack.c.h.b16 %v11321
    %v11915 = vunpack.c.l.b16 %v11322
    %v11916 = vunpack.c.h.b16 %v11322
    %v11917 = vunpack.c.l.b16 %v11323
    %v11918 = vunpack.c.l.b16 %v11324
    %v11919 = vunpack.c.h.b16 %v11324
    %v11920 = vunpack.c.l.b16 %v11325
    %v11921 = vunpack.c.h.b16 %v11325
    %v11922 = vunpack.c.l.b16 %v11326
    %v11923 = vunpack.c.h.b16 %v11326
    %v11924 = vunpack.c.l.b16 %v11327
    %v11925 = vunpack.c.l.b16 %v11328
    %v11926 = vunpack.c.h.b16 %v11328
    %v11927 = vunpack.c.l.b16 %v11329
    %v11928 = vunpack.c.h.b16 %v11329
    %v11929 = vunpack.c.l.b16 %v11330
    %v11930 = vunpack.c.h.b16 %v11330
    %v11931 = vunpack.c.l.b16 %v11331
    %v11932 = vunpack.c.l.b16 %v11332
    %v11933 = vunpack.c.h.b16 %v11332
    %v11934 = vunpack.c.l.b16 %v11333
    %v11935 = vunpack.c.h.b16 %v11333
    %v11936 = vunpack.c.l.b16 %v11334
    %v11937 = vunpack.c.h.b16 %v11334
    %v11938 = vunpack.c.l.b16 %v11335
    %v11939 = vunpack.c.l.b16 %v11336
    %v11940 = vunpack.c.h.b16 %v11336
    %v11941 = vunpack.c.l.b16 %v11337
    %v11942 = vunpack.c.h.b16 %v11337
    %v11943 = vunpack.c.l.b16 %v11338
    %v11944 = vunpack.c.h.b16 %v11338
    %v11945 = vunpack.c.l.b16 %v11339
    %v11946 = vunpack.c.l.b16 %v11340
    %v11947 = vunpack.c.h.b16 %v11340
    %v11948 = vunpack.c.l.b16 %v11341
    %v11949 = vunpack.c.h.b16 %v11341
    %v11950 = vunpack.c.l.b16 %v11342
    %v11951 = vunpack.c.h.b16 %v11342
    %v11952 = vunpack.c.l.b16 %v11343
    %v11953 = vunpack.c.l.b16 %v11344
    %v11954 = vunpack.c.h.b16 %v11344
    %v11955 = vunpack.c.l.b16 %v11345
    %v11956 = vunpack.c.h.b16 %v11345
    %v11957 = vunpack.c.l.b16 %v11346
    %v11958 = vunpack.c.h.b16 %v11346
    %v11959 = vunpack.c.l.b16 %v11347
    %v11960 = vunpack.c.l.b16 %v11348
    %v11961 = vunpack.c.h.b16 %v11348
    %v11962 = vunpack.c.l.b16 %v11349
    %v11963 = vunpack.c.h.b16 %v11349
    %v11964 = vunpack.c.l.b16 %v11350
    %v11965 = vunpack.c.h.b16 %v11350
    %v11966 = vunpack.c.l.b16 %v11351
    %v11967 = vunpack.c.l.b16 %v11352
    %v11968 = vunpack.c.h.b16 %v11352
    %v11969 = vunpack.c.l.b16 %v11353
    %v11970 = vunpack.c.h.b16 %v11353
    %v11971 = vunpack.c.l.b16 %v11354
    %v11972 = vunpack.c.h.b16 %v11354
    %v11973 = vunpack.c.l.b16 %v11355
    %v11974 = vunpack.c.l.b16 %v11356
    %v11975 = vunpack.c.h.b16 %v11356
    %v11976 = vunpack.c.l.b16 %v11357
    %v11977 = vunpack.c.h.b16 %v11357
    %v11978 = vunpack.c.l.b16 %v11358
    %v11979 = vunpack.c.h.b16 %v11358
    %v11980 = vunpack.c.l.b16 %v11359
    %v11981 = vunpack.c.l.b16 %v11360
    %v11982 = vunpack.c.h.b16 %v11360
    %v11983 = vunpack.c.l.b16 %v11361
    %v11984 = vunpack.c.h.b16 %v11361
    %v11985 = vunpack.c.l.b16 %v11362
    %v11986 = vunpack.c.h.b16 %v11362
    %v11987 = vunpack.c.l.b16 %v11363
    %v11988 = vunpack.c.l.b16 %v11364
    %v11989 = vunpack.c.h.b16 %v11364
    %v11990 = vunpack.c.l.b16 %v11365
    %v11991 = vunpack.c.h.b16 %v11365
    %v11992 = vunpack.c.l.b16 %v11366
    %v11993 = vunpack.c.h.b16 %v11366
    %v11994 = vunpack.c.l.b16 %v11367
    %v11995 = vunpack.c.l.b16 %v11368
    %v11996 = vunpack.c.h.b16 %v11368
    %v11997 = vunpack.c.l.b16 %v11369
    %v11998 = vunpack.c.h.b16 %v11369
    %v11999 = vunpack.c.l.b16 %v11370
    %v12000 = vunpack.c.h.b16 %v11370
    %v12001 = vunpack.c.l.b16 %v11371
    %v12002 = vunpack.c.l.b16 %v11372
    %v12003 = vunpack.c.h.b16 %v11372
    %v12004 = vunpack.c.l.b16 %v11373
    %v12005 = vunpack.c.h.b16 %v11373
    %v12006 = vunpack.c.l.b16 %v11374
    %v12007 = vunpack.c.h.b16 %v11374
    %v12008 = vunpack.c.l.b16 %v11375
    %v12009 = vunpack.c.l.b16 %v11376
    %v12010 = vunpack.c.h.b16 %v11376
    %v12011 = vunpack.c.l.b16 %v11377
    %v12012 = vunpack.c.h.b16 %v11377
    %v12013 = vunpack.c.l.b16 %v11378
    %v12014 = vunpack.c.h.b16 %v11378
    %v12015 = vunpack.c.l.b16 %v11379
    %v12016 = vunpack.c.l.b16 %v11380
    %v12017 = vunpack.c.h.b16 %v11380
    %v12018 = vunpack.c.l.b16 %v11381
    %v12019 = vunpack.c.h.b16 %v11381
    %v12020 = vunpack.c.l.b16 %v11382
    %v12021 = vunpack.c.h.b16 %v11382
    %v12022 = vunpack.c.l.b16 %v11383
    %v12023 = vunpack.c.l.b16 %v11384
    %v12024 = vunpack.c.h.b16 %v11384
    %v12025 = vunpack.c.l.b16 %v11385
    %v12026 = vunpack.c.h.b16 %v11385
    %v12027 = vunpack.c.l.b16 %v11386
    %v12028 = vunpack.c.h.b16 %v11386
    %v12029 = vunpack.c.l.b16 %v11387
    %v12030 = vunpack.c.l.b16 %v11388
    %v12031 = vunpack.c.h.b16 %v11388
    %v12032 = vunpack.c.l.b16 %v11389
    %v12033 = vunpack.c.h.b16 %v11389
    %v12034 = vunpack.c.l.b16 %v11390
    %v12035 = vunpack.c.h.b16 %v11390
    %v12036 = vunpack.c.l.b16 %v11391
    %v12037 = vunpack.c.l.b16 %v11392
    %v12038 = vunpack.c.h.b16 %v11392
    %v12039 = vunpack.c.l.b16 %v11393
    %v12040 = vunpack.c.h.b16 %v11393
    %v12041 = vunpack.c.l.b16 %v11394
    %v12042 = vunpack.c.h.b16 %v11394
    %v12043 = vunpack.c.l.b16 %v11395
    %v12044 = vunpack.c.l.b16 %v11396
    %v12045 = vunpack.c.h.b16 %v11396
    %v12046 = vunpack.c.l.b16 %v11397
    %v12047 = vunpack.c.h.b16 %v11397
    %v12048 = vunpack.c.l.b16 %v11398
    %v12049 = vunpack.c.h.b16 %v11398
    %v12050 = vunpack.c.l.b16 %v11399
    %v12051 = vunpack.c.l.b16 %v11400
    %v12052 = vunpack.c.h.b16 %v11400
    %v12053 = vunpack.c.l.b16 %v11401
    %v12054 = vunpack.c.h.b16 %v11401
    %v12055 = vunpack.c.l.b16 %v11402
    %v12056 = vunpack.c.h.b16 %v11402
    %v12057 = vunpack.c.l.b16 %v11403
    %v12058 = vunpack.c.l.b16 %v11404
    %v12059 = vunpack.c.h.b16 %v11404
    %v12060 = vunpack.c.l.b16 %v11405
    %v12061 = vunpack.c.h.b16 %v11405
    %v12062 = vunpack.c.l.b16 %v11406
    %v12063 = vunpack.c.h.b16 %v11406
    %v12064 = vunpack.c.l.b16 %v11407
    %v12065 = vunpack.c.l.b16 %v11408
    %v12066 = vunpack.c.h.b16 %v11408
    %v12067 = vunpack.c.l.b16 %v11409
    %v12068 = vunpack.c.h.b16 %v11409
    %v12069 = vunpack.c.l.b16 %v11410
    %v12070 = vunpack.c.h.b16 %v11410
    %v12071 = vunpack.c.l.b16 %v11411
    %v12072 = vunpack.c.l.b16 %v11412
    %v12073 = vunpack.c.h.b16 %v11412
    %v12074 = vunpack.c.l.b16 %v11413
    %v12075 = vunpack.c.h.b16 %v11413
    %v12076 = vunpack.c.l.b16 %v11414
    %v12077 = vunpack.c.h.b16 %v11414
    %v12078 = vunpack.c.l.b16 %v11415
    %v12079 = vunpack.c.l.b16 %v11416
    %v12080 = vunpack.c.h.b16 %v11416
    %v12081 = vunpack.c.l.b16 %v11417
    %v12082 = vunpack.c.h.b16 %v11417
    %v12083 = vunpack.c.l.b16 %v11418
    %v12084 = vunpack.c.h.b16 %v11418
    %v12085 = vunpack.c.l.b16 %v11419
    %v12086 = vunpack.c.l.b16 %v11420
    %v12087 = vunpack.c.h.b16 %v11420
    %v12088 = vunpack.c.l.b16 %v11421
    %v12089 = vunpack.c.h.b16 %v11421
    %v12090 = vunpack.c.l.b16 %v11422
    %v12091 = vunpack.c.h.b16 %v11422
    %v12092 = vunpack.c.l.b16 %v11423
    %v12093 = vunpack.c.l.b16 %v11424
    %v12094 = vunpack.c.h.b16 %v11424
    %v12095 = vunpack.c.l.b16 %v11425
    %v12096 = vunpack.c.h.b16 %v11425
    %v12097 = vunpack.c.l.b16 %v11426
    %v12098 = vunpack.c.h.b16 %v11426
    %v12099 = vunpack.c.l.b16 %v11427
    %v12100 = vunpack.c.l.b16 %v11428
    %v12101 = vunpack.c.h.b16 %v11428
    %v12102 = vunpack.c.l.b16 %v11429
    %v12103 = vunpack.c.h.b16 %v11429
    %v12104 = vunpack.c.l.b16 %v11430
    %v12105 = vunpack.c.h.b16 %v11430
    %v12106 = vunpack.c.l.b16 %v11431
    %v12107 = vunpack.c.l.b16 %v11432
    %v12108 = vunpack.c.h.b16 %v11432
    %v12109 = vunpack.c.l.b16 %v11433
    %v12110 = vunpack.c.h.b16 %v11433
    %v12111 = vunpack.c.l.b16 %v11434
    %v12112 = vunpack.c.h.b16 %v11434
    %v12113 = vunpack.c.l.b16 %v11435
    %v12114 = vunpack.c.l.b16 %v11436
    %v12115 = vunpack.c.h.b16 %v11436
    %v12116 = vunpack.c.l.b16 %v11437
    %v12117 = vunpack.c.h.b16 %v11437
    %v12118 = vunpack.c.l.b16 %v11438
    %v12119 = vunpack.c.h.b16 %v11438
    %v12120 = vunpack.c.l.b16 %v11439
    %v12121 = vunpack.c.l.b16 %v11440
    %v12122 = vunpack.c.h.b16 %v11440
    %v12123 = vunpack.c.l.b16 %v11441
    %v12124 = vunpack.c.h.b16 %v11441
    %v12125 = vunpack.c.l.b16 %v11442
    %v12126 = vunpack.c.h.b16 %v11442
    %v12127 = vunpack.c.l.b16 %v11443
    %v12128 = vunpack.c.l.b16 %v11444
    %v12129 = vunpack.c.h.b16 %v11444
    %v12130 = vunpack.c.l.b16 %v11445
    %v12131 = vunpack.c.h.b16 %v11445
    %v12132 = vunpack.c.l.b16 %v11446
    %v12133 = vunpack.c.h.b16 %v11446
    %v12134 = vunpack.c.l.b16 %v11447
    %v12135 = vunpack.c.l.b16 %v11448
    %v12136 = vunpack.c.h.b16 %v11448
    %v12137 = vunpack.c.l.b16 %v11449
    %v12138 = vunpack.c.h.b16 %v11449
    %v12139 = vunpack.c.l.b16 %v11450
    %v12140 = vunpack.c.h.b16 %v11450
    %v12141 = vunpack.c.l.b16 %v11451
    %v12142 = vunpack.c.l.b16 %v11452
    %v12143 = vunpack.c.h.b16 %v11452
    %v12144 = vunpack.c.l.b16 %v11453
    %v12145 = vunpack.c.h.b16 %v11453
    %v12146 = vunpack.c.l.b16 %v11454
    %v12147 = vunpack.c.h.b16 %v11454
    %v12148 = vunpack.c.l.b16 %v11455
    %v12149 = vunpack.c.l.b16 %v11456
    %v12150 = vunpack.c.h.b16 %v11456
    %v12151 = vunpack.c.l.b16 %v11457
    %v12152 = vunpack.c.h.b16 %v11457
    %v12153 = vunpack.c.l.b16 %v11458
    %v12154 = vunpack.c.h.b16 %v11458
    %v12155 = vunpack.c.l.b16 %v11459
    %v12156 = vunpack.c.l.b16 %v11460
    %v12157 = vunpack.c.h.b16 %v11460
    %v12158 = vunpack.c.l.b16 %v11461
    %v12159 = vunpack.c.h.b16 %v11461
    %v12160 = vunpack.c.l.b16 %v11462
    %v12161 = vunpack.c.h.b16 %v11462
    %v12162 = vunpack.c.l.b16 %v11463
    %v12163 = vunpack.c.l.b16 %v11464
    %v12164 = vunpack.c.h.b16 %v11464
    %v12165 = vunpack.c.l.b16 %v11465
    %v12166 = vunpack.c.h.b16 %v11465
    %v12167 = vunpack.c.l.b16 %v11466
    %v12168 = vunpack.c.h.b16 %v11466
    %v12169 = vunpack.c.l.b16 %v11467
    %v12170 = vunpack.c.l.b16 %v11468
    %v12171 = vunpack.c.h.b16 %v11468
    %v12172 = vunpack.c.l.b16 %v11469
    %v12173 = vunpack.c.h.b16 %v11469
    %v12174 = vunpack.c.l.b16 %v11470
    %v12175 = vunpack.c.h.b16 %v11470
    %v12176 = vunpack.c.l.b16 %v11471
    %v12177 = vunpack.c.l.b16 %v11472
    %v12178 = vunpack.c.h.b16 %v11472
    %v12179 = vunpack.c.l.b16 %v11473
    %v12180 = vunpack.c.h.b16 %v11473
    %v12181 = vunpack.c.l.b16 %v11474
    %v12182 = vunpack.c.h.b16 %v11474
    %v12183 = vunpack.c.l.b16 %v11475
    %v12184 = vunpack.c.l.b16 %v11476
    %v12185 = vunpack.c.h.b16 %v11476
    %v12186 = vunpack.c.l.b16 %v11477
    %v12187 = vunpack.c.h.b16 %v11477
    %v12188 = vunpack.c.l.b16 %v11478
    %v12189 = vunpack.c.h.b16 %v11478
    %v12190 = vunpack.c.l.b16 %v11479
    %v12191 = vunpack.c.l.b16 %v11480
    %v12192 = vunpack.c.h.b16 %v11480
    %v12193 = vunpack.c.l.b16 %v11481
    %v12194 = vunpack.c.h.b16 %v11481
    %v12195 = vunpack.c.l.b16 %v11482
    %v12196 = vunpack.c.h.b16 %v11482
    %v12197 = vunpack.c.l.b16 %v11483
    %v12198 = vunpack.c.l.b16 %v11484
    %v12199 = vunpack.c.h.b16 %v11484
    %v12200 = vunpack.c.l.b16 %v11485
    %v12201 = vunpack.c.h.b16 %v11485
    %v12202 = vunpack.c.l.b16 %v11486
    %v12203 = vunpack.c.h.b16 %v11486
    %v12204 = vunpack.c.l.b16 %v11487
    %v12205 = vunpack.c.l.b16 %v11488
    %v12206 = vunpack.c.h.b16 %v11488
    %v12207 = vunpack.c.l.b16 %v11489
    %v12208 = vunpack.c.h.b16 %v11489
    %v12209 = vunpack.c.l.b16 %v11490
    %v12210 = vunpack.c.h.b16 %v11490
    %v12211 = vunpack.c.l.b16 %v11491
    %v12212 = vunpack.c.l.b16 %v11492
    %v12213 = vunpack.c.h.b16 %v11492
    %v12214 = vunpack.c.l.b16 %v11493
    %v12215 = vunpack.c.h.b16 %v11493
    %v12216 = vunpack.c.l.b16 %v11494
    %v12217 = vunpack.c.h.b16 %v11494
    %v12218 = vunpack.c.l.b16 %v11495
    %v12219 = vunpack.c.l.b16 %v11496
    %v12220 = vunpack.c.h.b16 %v11496
    %v12221 = vunpack.c.l.b16 %v11497
    %v12222 = vunpack.c.h.b16 %v11497
    %v12223 = vunpack.c.l.b16 %v11498
    %v12224 = vunpack.c.h.b16 %v11498
    %v12225 = vunpack.c.l.b16 %v11499
    %v12226 = vunpack.c.l.b16 %v11500
    %v12227 = vunpack.c.h.b16 %v11500
    %v12228 = vunpack.c.l.b16 %v11501
    %v12229 = vunpack.c.h.b16 %v11501
    %v12230 = vunpack.c.l.b16 %v11502
    %v12231 = vunpack.c.h.b16 %v11502
    %v12232 = vunpack.c.l.b16 %v11503
    %v12233 = vunpack.c.l.b16 %v11504
    %v12234 = vunpack.c.h.b16 %v11504
    %v12235 = vunpack.c.l.b16 %v11505
    %v12236 = vunpack.c.h.b16 %v11505
    %v12237 = vunpack.c.l.b16 %v11506
    %v12238 = vunpack.c.h.b16 %v11506
    %v12239 = vunpack.c.l.b16 %v11507
    %v12240 = vunpack.c.l.b16 %v11508
    %v12241 = vunpack.c.h.b16 %v11508
    %v12242 = vunpack.c.l.b16 %v11509
    %v12243 = vunpack.c.h.b16 %v11509
    %v12244 = vunpack.c.l.b16 %v11510
    %v12245 = vunpack.c.h.b16 %v11510
    %v12246 = vunpack.c.l.b16 %v11511
    %v12247 = vpack.c.b16 %v11806, %v11799
    %v12248 = vpack.c.b16 %v11807, %v11800
    %v12249 = vpack.c.b16 %v11808, %v11801
    %v12250 = vpack.c.b16 %v11809, %v11802
    %v12251 = vpack.c.b16 %v11810, %v11803
    %v12252 = vpack.c.b16 %v11811, %v11804
    %v12253 = vpack.c.b16 %v11812, %v11805
    %v12254 = vpack.c.b16 %v11820, %v11813
    %v12255 = vpack.c.b16 %v11821, %v11814
    %v12256 = vpack.c.b16 %v11822, %v11815
    %v12257 = vpack.c.b16 %v11823, %v11816
    %v12258 = vpack.c.b16 %v11824, %v11817
    %v12259 = vpack.c.b16 %v11825, %v11818
    %v12260 = vpack.c.b16 %v11826, %v11819
    %v12261 = vpack.c.b16 %v11834, %v11827
    %v12262 = vpack.c.b16 %v11835, %v11828
    %v12263 = vpack.c.b16 %v11836, %v11829
    %v12264 = vpack.c.b16 %v11837, %v11830
    %v12265 = vpack.c.b16 %v11838, %v11831
    %v12266 = vpack.c.b16 %v11839, %v11832
    %v12267 = vpack.c.b16 %v11840, %v11833
    %v12268 = vpack.c.b16 %v11848, %v11841
    %v12269 = vpack.c.b16 %v11849, %v11842
    %v12270 = vpack.c.b16 %v11850, %v11843
    %v12271 = vpack.c.b16 %v11851, %v11844
    %v12272 = vpack.c.b16 %v11852, %v11845
    %v12273 = vpack.c.b16 %v11853, %v11846
    %v12274 = vpack.c.b16 %v11854, %v11847
    %v12275 = vpack.c.b16 %v11862, %v11855
    %v12276 = vpack.c.b16 %v11863, %v11856
    %v12277 = vpack.c.b16 %v11864, %v11857
    %v12278 = vpack.c.b16 %v11865, %v11858
    %v12279 = vpack.c.b16 %v11866, %v11859
    %v12280 = vpack.c.b16 %v11867, %v11860
    %v12281 = vpack.c.b16 %v11868, %v11861
    %v12282 = vpack.c.b16 %v11876, %v11869
    %v12283 = vpack.c.b16 %v11877, %v11870
    %v12284 = vpack.c.b16 %v11878, %v11871
    %v12285 = vpack.c.b16 %v11879, %v11872
    %v12286 = vpack.c.b16 %v11880, %v11873
    %v12287 = vpack.c.b16 %v11881, %v11874
    %v12288 = vpack.c.b16 %v11882, %v11875
    %v12289 = vpack.c.b16 %v11890, %v11883
    %v12290 = vpack.c.b16 %v11891, %v11884
    %v12291 = vpack.c.b16 %v11892, %v11885
    %v12292 = vpack.c.b16 %v11893, %v11886
    %v12293 = vpack.c.b16 %v11894, %v11887
    %v12294 = vpack.c.b16 %v11895, %v11888
    %v12295 = vpack.c.b16 %v11896, %v11889
    %v12296 = vpack.c.b16 %v11904, %v11897
    %v12297 = vpack.c.b16 %v11905, %v11898
    %v12298 = vpack.c.b16 %v11906, %v11899
    %v12299 = vpack.c.b16 %v11907, %v11900
    %v12300 = vpack.c.b16 %v11908, %v11901
    %v12301 = vpack.c.b16 %v11909, %v11902
    %v12302 = vpack.c.b16 %v11910, %v11903
    %v12303 = vpack.c.b16 %v11918, %v11911
    %v12304 = vpack.c.b16 %v11919, %v11912
    %v12305 = vpack.c.b16 %v11920, %v11913
    %v12306 = vpack.c.b16 %v11921, %v11914
    %v12307 = vpack.c.b16 %v11922, %v11915
    %v12308 = vpack.c.b16 %v11923, %v11916
    %v12309 = vpack.c.b16 %v11924, %v11917
    %v12310 = vpack.c.b16 %v11932, %v11925
    %v12311 = vpack.c.b16 %v11933, %v11926
    %v12312 = vpack.c.b16 %v11934, %v11927
    %v12313 = vpack.c.b16 %v11935, %v11928
    %v12314 = vpack.c.b16 %v11936, %v11929
    %v12315 = vpack.c.b16 %v11937, %v11930
    %v12316 = vpack.c.b16 %v11938, %v11931
    %v12317 = vpack.c.b16 %v11946, %v11939
    %v12318 = vpack.c.b16 %v11947, %v11940
    %v12319 = vpack.c.b16 %v11948, %v11941
    %v12320 = vpack.c.b16 %v11949, %v11942
    %v12321 = vpack.c.b16 %v11950, %v11943
    %v12322 = vpack.c.b16 %v11951, %v11944
    %v12323 = vpack.c.b16 %v11952, %v11945
    %v12324 = vpack.c.b16 %v11960, %v11953
    %v12325 = vpack.c.b16 %v11961, %v11954
    %v12326 = vpack.c.b16 %v11962, %v11955
    %v12327 = vpack.c.b16 %v11963, %v11956
    %v12328 = vpack.c.b16 %v11964, %v11957
    %v12329 = vpack.c.b16 %v11965, %v11958
    %v12330 = vpack.c.b16 %v11966, %v11959
    %v12331 = vpack.c.b16 %v11974, %v11967
    %v12332 = vpack.c.b16 %v11975, %v11968
    %v12333 = vpack.c.b16 %v11976, %v11969
    %v12334 = vpack.c.b16 %v11977, %v11970
    %v12335 = vpack.c.b16 %v11978, %v11971
    %v12336 = vpack.c.b16 %v11979, %v11972
    %v12337 = vpack.c.b16 %v11980, %v11973
    %v12338 = vpack.c.b16 %v11988, %v11981
    %v12339 = vpack.c.b16 %v11989, %v11982
    %v12340 = vpack.c.b16 %v11990, %v11983
    %v12341 = vpack.c.b16 %v11991, %v11984
    %v12342 = vpack.c.b16 %v11992, %v11985
    %v12343 = vpack.c.b16 %v11993, %v11986
    %v12344 = vpack.c.b16 %v11994, %v11987
    %v12345 = vpack.c.b16 %v12002, %v11995
    %v12346 = vpack.c.b16 %v12003, %v11996
    %v12347 = vpack.c.b16 %v12004, %v11997
    %v12348 = vpack.c.b16 %v12005, %v11998
    %v12349 = vpack.c.b16 %v12006, %v11999
    %v12350 = vpack.c.b16 %v12007, %v12000
    %v12351 = vpack.c.b16 %v12008, %v12001
    %v12352 = vpack.c.b16 %v12016, %v12009
    %v12353 = vpack.c.b16 %v12017, %v12010
    %v12354 = vpack.c.b16 %v12018, %v12011
    %v12355 = vpack.c.b16 %v12019, %v12012
    %v12356 = vpack.c.b16 %v12020, %v12013
    %v12357 = vpack.c.b16 %v12021, %v12014
    %v12358 = vpack.c.b16 %v12022, %v12015
    %v12359 = vpack.c.b16 %v12030, %v12023
    %v12360 = vpack.c.b16 %v12031, %v12024
    %v12361 = vpack.c.b16 %v12032, %v12025
    %v12362 = vpack.c.b16 %v12033, %v12026
    %v12363 = vpack.c.b16 %v12034, %v12027
    %v12364 = vpack.c.b16 %v12035, %v12028
    %v12365 = vpack.c.b16 %v12036, %v12029
    %v12366 = vpack.c.b16 %v12044, %v12037
    %v12367 = vpack.c.b16 %v12045, %v12038
    %v12368 = vpack.c.b16 %v12046, %v12039
    %v12369 = vpack.c.b16 %v12047, %v12040
    %v12370 = vpack.c.b16 %v12048, %v12041
    %v12371 = vpack.c.b16 %v12049, %v12042
    %v12372 = vpack.c.b16 %v12050, %v12043
    %v12373 = vpack.c.b16 %v12058, %v12051
    %v12374 = vpack.c.b16 %v12059, %v12052
    %v12375 = vpack.c.b16 %v12060, %v12053
    %v12376 = vpack.c.b16 %v12061, %v12054
    %v12377 = vpack.c.b16 %v12062, %v12055
    %v12378 = vpack.c.b16 %v12063, %v12056
    %v12379 = vpack.c.b16 %v12064, %v12057
    %v12380 = vpack.c.b16 %v12072, %v12065
    %v12381 = vpack.c.b16 %v12073, %v12066
    %v12382 = vpack.c.b16 %v12074, %v12067
    %v12383 = vpack.c.b16 %v12075, %v12068
    %v12384 = vpack.c.b16 %v12076, %v12069
    %v12385 = vpack.c.b16 %v12077, %v12070
    %v12386 = vpack.c.b16 %v12078, %v12071
    %v12387 = vpack.c.b16 %v12086, %v12079
    %v12388 = vpack.c.b16 %v12087, %v12080
    %v12389 = vpack.c.b16 %v12088, %v12081
    %v12390 = vpack.c.b16 %v12089, %v12082
    %v12391 = vpack.c.b16 %v12090, %v12083
    %v12392 = vpack.c.b16 %v12091, %v12084
    %v12393 = vpack.c.b16 %v12092, %v12085
    %v12394 = vpack.c.b16 %v12100, %v12093
    %v12395 = vpack.c.b16 %v12101, %v12094
    %v12396 = vpack.c.b16 %v12102, %v12095
    %v12397 = vpack.c.b16 %v12103, %v12096
    %v12398 = vpack.c.b16 %v12104, %v12097
    %v12399 = vpack.c.b16 %v12105, %v12098
    %v12400 = vpack.c.b16 %v12106, %v12099
    %v12401 = vpack.c.b16 %v12114, %v12107
    %v12402 = vpack.c.b16 %v12115, %v12108
    %v12403 = vpack.c.b16 %v12116, %v12109
    %v12404 = vpack.c.b16 %v12117, %v12110
    %v12405 = vpack.c.b16 %v12118, %v12111
    %v12406 = vpack.c.b16 %v12119, %v12112
    %v12407 = vpack.c.b16 %v12120, %v12113
    %v12408 = vpack.c.b16 %v12128, %v12121
    %v12409 = vpack.c.b16 %v12129, %v12122
    %v12410 = vpack.c.b16 %v12130, %v12123
    %v12411 = vpack.c.b16 %v12131, %v12124
    %v12412 = vpack.c.b16 %v12132, %v12125
    %v12413 = vpack.c.b16 %v12133, %v12126
    %v12414 = vpack.c.b16 %v12134, %v12127
    %v12415 = vpack.c.b16 %v12142, %v12135
    %v12416 = vpack.c.b16 %v12143, %v12136
    %v12417 = vpack.c.b16 %v12144, %v12137
    %v12418 = vpack.c.b16 %v12145, %v12138
    %v12419 = vpack.c.b16 %v12146, %v12139
    %v12420 = vpack.c.b16 %v12147, %v12140
    %v12421 = vpack.c.b16 %v12148, %v12141
    %v12422 = vpack.c.b16 %v12156, %v12149
    %v12423 = vpack.c.b16 %v12157, %v12150
    %v12424 = vpack.c.b16 %v12158, %v12151
    %v12425 = vpack.c.b16 %v12159, %v12152
    %v12426 = vpack.c.b16 %v12160, %v12153
    %v12427 = vpack.c.b16 %v12161, %v12154
    %v12428 = vpack.c.b16 %v12162, %v12155
    %v12429 = vpack.c.b16 %v12170, %v12163
    %v12430 = vpack.c.b16 %v12171, %v12164
    %v12431 = vpack.c.b16 %v12172, %v12165
    %v12432 = vpack.c.b16 %v12173, %v12166
    %v12433 = vpack.c.b16 %v12174, %v12167
    %v12434 = vpack.c.b16 %v12175, %v12168
    %v12435 = vpack.c.b16 %v12176, %v12169
    %v12436 = vpack.c.b16 %v12184, %v12177
    %v12437 = vpack.c.b16 %v12185, %v12178
    %v12438 = vpack.c.b16 %v12186, %v12179
    %v12439 = vpack.c.b16 %v12187, %v12180
    %v12440 = vpack.c.b16 %v12188, %v12181
    %v12441 = vpack.c.b16 %v12189, %v12182
    %v12442 = vpack.c.b16 %v12190, %v12183
    %v12443 = vpack.c.b16 %v12198, %v12191
    %v12444 = vpack.c.b16 %v12199, %v12192
    %v12445 = vpack.c.b16 %v12200, %v12193
    %v12446 = vpack.c.b16 %v12201, %v12194
    %v12447 = vpack.c.b16 %v12202, %v12195
    %v12448 = vpack.c.b16 %v12203, %v12196
    %v12449 = vpack.c.b16 %v12204, %v12197
    %v12450 = vpack.c.b16 %v12212, %v12205
    %v12451 = vpack.c.b16 %v12213, %v12206
    %v12452 = vpack.c.b16 %v12214, %v12207
    %v12453 = vpack.c.b16 %v12215, %v12208
    %v12454 = vpack.c.b16 %v12216, %v12209
    %v12455 = vpack.c.b16 %v12217, %v12210
    %v12456 = vpack.c.b16 %v12218, %v12211
    %v12457 = vpack.c.b16 %v12226, %v12219
    %v12458 = vpack.c.b16 %v12227, %v12220
    %v12459 = vpack.c.b16 %v12228, %v12221
    %v12460 = vpack.c.b16 %v12229, %v12222
    %v12461 = vpack.c.b16 %v12230, %v12223
    %v12462 = vpack.c.b16 %v12231, %v12224
    %v12463 = vpack.c.b16 %v12232, %v12225
    %v12464 = vpack.c.b16 %v12240, %v12233
    %v12465 = vpack.c.b16 %v12241, %v12234
    %v12466 = vpack.c.b16 %v12242, %v12235
    %v12467 = vpack.c.b16 %v12243, %v12236
    %v12468 = vpack.c.b16 %v12244, %v12237
    %v12469 = vpack.c.b16 %v12245, %v12238
    %v12470 = vpack.c.b16 %v12246, %v12239
    %12695 = vmatpush.bf16.msra.mxu0 %v12296
    %12696 = vmatpush.bf16.msra.mxu0 %v12289
    %12697 = vmatpush.bf16.msra.mxu0 %v12282
    %12698 = vmatpush.bf16.msra.mxu0 %v12275
    %12699 = vmatpush.bf16.msra.mxu0 %v12268
    %12700 = vmatpush.bf16.msra.mxu0 %v12261
    %12701 = vmatpush.bf16.msra.mxu0 %v12254
    %12702 = vmatpush.bf16.msra.mxu0 %v12247
    %12703 = vmatmul.bf16.gmra.mxu0 %v11535
    %v12704 = vpop.f32.mrf.mxu0
    %v12705 = vadd.f32 %v11515, %v12704
    %v12706 = vpop.f32.mrf.mxu0
    %12707 = vdwg.mxu0
    %12708 = vmatpush.bf16.msra.mxu0 %v12352
    %12709 = vmatpush.bf16.msra.mxu0 %v12345
    %12710 = vmatpush.bf16.msra.mxu0 %v12338
    %12711 = vmatpush.bf16.msra.mxu0 %v12331
    %12712 = vmatpush.bf16.msra.mxu0 %v12324
    %12713 = vmatpush.bf16.msra.mxu0 %v12317
    %12714 = vmatpush.bf16.msra.mxu0 %v12310
    %12715 = vmatpush.bf16.msra.mxu0 %v12303
    %12716 = vmatmul.bf16.gmra.mxu0 %v11536
    %v12717 = vpop.f32.mrf.mxu0
    %v12718 = vadd.f32 %v12705, %v12717
    %v12719 = vpop.f32.mrf.mxu0
    %12720 = vdwg.mxu0
    %12721 = vmatpush.bf16.msra.mxu0 %v12408
    %12722 = vmatpush.bf16.msra.mxu0 %v12401
    %12723 = vmatpush.bf16.msra.mxu0 %v12394
    %12724 = vmatpush.bf16.msra.mxu0 %v12387
    %12725 = vmatpush.bf16.msra.mxu0 %v12380
    %12726 = vmatpush.bf16.msra.mxu0 %v12373
    %12727 = vmatpush.bf16.msra.mxu0 %v12366
    %12728 = vmatpush.bf16.msra.mxu0 %v12359
    %12729 = vmatmul.bf16.gmra.mxu0 %v11537
    %v12730 = vpop.f32.mrf.mxu0
    %v12731 = vadd.f32 %v12718, %v12730
    %v12732 = vpop.f32.mrf.mxu0
    %12733 = vdwg.mxu0
    %12734 = vmatpush.bf16.msra.mxu0 %v12464
    %12735 = vmatpush.bf16.msra.mxu0 %v12457
    %12736 = vmatpush.bf16.msra.mxu0 %v12450
    %12737 = vmatpush.bf16.msra.mxu0 %v12443
    %12738 = vmatpush.bf16.msra.mxu0 %v12436
    %12739 = vmatpush.bf16.msra.mxu0 %v12429
    %12740 = vmatpush.bf16.msra.mxu0 %v12422
    %12741 = vmatpush.bf16.msra.mxu0 %v12415
    %12742 = vmatmul.bf16.gmra.mxu0 %v11538
    %v12743 = vpop.f32.mrf.mxu0
    %v12744 = vadd.f32 %v12731, %v12743
    %v12745 = vpop.f32.mrf.mxu0
    %12746 = vdwg.mxu0
    %12747 = vmatpush.bf16.msra.mxu0 %v12297
    %12748 = vmatpush.bf16.msra.mxu0 %v12290
    %12749 = vmatpush.bf16.msra.mxu0 %v12283
    %12750 = vmatpush.bf16.msra.mxu0 %v12276
    %12751 = vmatpush.bf16.msra.mxu0 %v12269
    %12752 = vmatpush.bf16.msra.mxu0 %v12262
    %12753 = vmatpush.bf16.msra.mxu0 %v12255
    %12754 = vmatpush.bf16.msra.mxu0 %v12248
    %12755 = vmatmul.bf16.gmra.mxu0 %v11535
    %v12756 = vpop.f32.mrf.mxu0
    %v12757 = vadd.f32 %v11516, %v12756
    %v12758 = vpop.f32.mrf.mxu0
    %12759 = vdwg.mxu0
    %12760 = vmatpush.bf16.msra.mxu0 %v12353
    %12761 = vmatpush.bf16.msra.mxu0 %v12346
    %12762 = vmatpush.bf16.msra.mxu0 %v12339
    %12763 = vmatpush.bf16.msra.mxu0 %v12332
    %12764 = vmatpush.bf16.msra.mxu0 %v12325
    %12765 = vmatpush.bf16.msra.mxu0 %v12318
    %12766 = vmatpush.bf16.msra.mxu0 %v12311
    %12767 = vmatpush.bf16.msra.mxu0 %v12304
    %12768 = vmatmul.bf16.gmra.mxu0 %v11536
    %v12769 = vpop.f32.mrf.mxu0
    %v12770 = vadd.f32 %v12757, %v12769
    %v12771 = vpop.f32.mrf.mxu0
    %12772 = vdwg.mxu0
    %12773 = vmatpush.bf16.msra.mxu0 %v12409
    %12774 = vmatpush.bf16.msra.mxu0 %v12402
    %12775 = vmatpush.bf16.msra.mxu0 %v12395
    %12776 = vmatpush.bf16.msra.mxu0 %v12388
    %12777 = vmatpush.bf16.msra.mxu0 %v12381
    %12778 = vmatpush.bf16.msra.mxu0 %v12374
    %12779 = vmatpush.bf16.msra.mxu0 %v12367
    %12780 = vmatpush.bf16.msra.mxu0 %v12360
    %12781 = vmatmul.bf16.gmra.mxu0 %v11537
    %v12782 = vpop.f32.mrf.mxu0
    %v12783 = vadd.f32 %v12770, %v12782
    %v12784 = vpop.f32.mrf.mxu0
    %12785 = vdwg.mxu0
    %12786 = vmatpush.bf16.msra.mxu0 %v12465
    %12787 = vmatpush.bf16.msra.mxu0 %v12458
    %12788 = vmatpush.bf16.msra.mxu0 %v12451
    %12789 = vmatpush.bf16.msra.mxu0 %v12444
    %12790 = vmatpush.bf16.msra.mxu0 %v12437
    %12791 = vmatpush.bf16.msra.mxu0 %v12430
    %12792 = vmatpush.bf16.msra.mxu0 %v12423
    %12793 = vmatpush.bf16.msra.mxu0 %v12416
    %12794 = vmatmul.bf16.gmra.mxu0 %v11538
    %v12795 = vpop.f32.mrf.mxu0
    %v12796 = vadd.f32 %v12783, %v12795
    %v12797 = vpop.f32.mrf.mxu0
    %12798 = vdwg.mxu0
    %12799 = vmatpush.bf16.msra.mxu0 %v12298
    %12800 = vmatpush.bf16.msra.mxu0 %v12291
    %12801 = vmatpush.bf16.msra.mxu0 %v12284
    %12802 = vmatpush.bf16.msra.mxu0 %v12277
    %12803 = vmatpush.bf16.msra.mxu0 %v12270
    %12804 = vmatpush.bf16.msra.mxu0 %v12263
    %12805 = vmatpush.bf16.msra.mxu0 %v12256
    %12806 = vmatpush.bf16.msra.mxu0 %v12249
    %12807 = vmatmul.bf16.gmra.mxu0 %v11535
    %v12808 = vpop.f32.mrf.mxu0
    %v12809 = vadd.f32 %v11517, %v12808
    %v12810 = vpop.f32.mrf.mxu0
    %12811 = vdwg.mxu0
    %12812 = vmatpush.bf16.msra.mxu0 %v12354
    %12813 = vmatpush.bf16.msra.mxu0 %v12347
    %12814 = vmatpush.bf16.msra.mxu0 %v12340
    %12815 = vmatpush.bf16.msra.mxu0 %v12333
    %12816 = vmatpush.bf16.msra.mxu0 %v12326
    %12817 = vmatpush.bf16.msra.mxu0 %v12319
    %12818 = vmatpush.bf16.msra.mxu0 %v12312
    %12819 = vmatpush.bf16.msra.mxu0 %v12305
    %12820 = vmatmul.bf16.gmra.mxu0 %v11536
    %v12821 = vpop.f32.mrf.mxu0
    %v12822 = vadd.f32 %v12809, %v12821
    %v12823 = vpop.f32.mrf.mxu0
    %12824 = vdwg.mxu0
    %12825 = vmatpush.bf16.msra.mxu0 %v12410
    %12826 = vmatpush.bf16.msra.mxu0 %v12403
    %12827 = vmatpush.bf16.msra.mxu0 %v12396
    %12828 = vmatpush.bf16.msra.mxu0 %v12389
    %12829 = vmatpush.bf16.msra.mxu0 %v12382
    %12830 = vmatpush.bf16.msra.mxu0 %v12375
    %12831 = vmatpush.bf16.msra.mxu0 %v12368
    %12832 = vmatpush.bf16.msra.mxu0 %v12361
    %12833 = vmatmul.bf16.gmra.mxu0 %v11537
    %v12834 = vpop.f32.mrf.mxu0
    %v12835 = vadd.f32 %v12822, %v12834
    %v12836 = vpop.f32.mrf.mxu0
    %12837 = vdwg.mxu0
    %12838 = vmatpush.bf16.msra.mxu0 %v12466
    %12839 = vmatpush.bf16.msra.mxu0 %v12459
    %12840 = vmatpush.bf16.msra.mxu0 %v12452
    %12841 = vmatpush.bf16.msra.mxu0 %v12445
    %12842 = vmatpush.bf16.msra.mxu0 %v12438
    %12843 = vmatpush.bf16.msra.mxu0 %v12431
    %12844 = vmatpush.bf16.msra.mxu0 %v12424
    %12845 = vmatpush.bf16.msra.mxu0 %v12417
    %12846 = vmatmul.bf16.gmra.mxu0 %v11538
    %v12847 = vpop.f32.mrf.mxu0
    %v12848 = vadd.f32 %v12835, %v12847
    %v12849 = vpop.f32.mrf.mxu0
    %12850 = vdwg.mxu0
    %12851 = vmatpush.bf16.msra.mxu0 %v12299
    %12852 = vmatpush.bf16.msra.mxu0 %v12292
    %12853 = vmatpush.bf16.msra.mxu0 %v12285
    %12854 = vmatpush.bf16.msra.mxu0 %v12278
    %12855 = vmatpush.bf16.msra.mxu0 %v12271
    %12856 = vmatpush.bf16.msra.mxu0 %v12264
    %12857 = vmatpush.bf16.msra.mxu0 %v12257
    %12858 = vmatpush.bf16.msra.mxu0 %v12250
    %12859 = vmatmul.bf16.gmra.mxu0 %v11535
    %v12860 = vpop.f32.mrf.mxu0
    %v12861 = vadd.f32 %v11518, %v12860
    %v12862 = vpop.f32.mrf.mxu0
    %12863 = vdwg.mxu0
    %12864 = vmatpush.bf16.msra.mxu0 %v12355
    %12865 = vmatpush.bf16.msra.mxu0 %v12348
    %12866 = vmatpush.bf16.msra.mxu0 %v12341
    %12867 = vmatpush.bf16.msra.mxu0 %v12334
    %12868 = vmatpush.bf16.msra.mxu0 %v12327
    %12869 = vmatpush.bf16.msra.mxu0 %v12320
    %12870 = vmatpush.bf16.msra.mxu0 %v12313
    %12871 = vmatpush.bf16.msra.mxu0 %v12306
    %12872 = vmatmul.bf16.gmra.mxu0 %v11536
    %v12873 = vpop.f32.mrf.mxu0
    %v12874 = vadd.f32 %v12861, %v12873
    %v12875 = vpop.f32.mrf.mxu0
    %12876 = vdwg.mxu0
    %12877 = vmatpush.bf16.msra.mxu0 %v12411
    %12878 = vmatpush.bf16.msra.mxu0 %v12404
    %12879 = vmatpush.bf16.msra.mxu0 %v12397
    %12880 = vmatpush.bf16.msra.mxu0 %v12390
    %12881 = vmatpush.bf16.msra.mxu0 %v12383
    %12882 = vmatpush.bf16.msra.mxu0 %v12376
    %12883 = vmatpush.bf16.msra.mxu0 %v12369
    %12884 = vmatpush.bf16.msra.mxu0 %v12362
    %12885 = vmatmul.bf16.gmra.mxu0 %v11537
    %v12886 = vpop.f32.mrf.mxu0
    %v12887 = vadd.f32 %v12874, %v12886
    %v12888 = vpop.f32.mrf.mxu0
    %12889 = vdwg.mxu0
    %12890 = vmatpush.bf16.msra.mxu0 %v12467
    %12891 = vmatpush.bf16.msra.mxu0 %v12460
    %12892 = vmatpush.bf16.msra.mxu0 %v12453
    %12893 = vmatpush.bf16.msra.mxu0 %v12446
    %12894 = vmatpush.bf16.msra.mxu0 %v12439
    %12895 = vmatpush.bf16.msra.mxu0 %v12432
    %12896 = vmatpush.bf16.msra.mxu0 %v12425
    %12897 = vmatpush.bf16.msra.mxu0 %v12418
    %12898 = vmatmul.bf16.gmra.mxu0 %v11538
    %v12899 = vpop.f32.mrf.mxu0
    %v12900 = vadd.f32 %v12887, %v12899
    %v12901 = vpop.f32.mrf.mxu0
    %12902 = vdwg.mxu0
    %12903 = vmatpush.bf16.msra.mxu0 %v12300
    %12904 = vmatpush.bf16.msra.mxu0 %v12293
    %12905 = vmatpush.bf16.msra.mxu0 %v12286
    %12906 = vmatpush.bf16.msra.mxu0 %v12279
    %12907 = vmatpush.bf16.msra.mxu0 %v12272
    %12908 = vmatpush.bf16.msra.mxu0 %v12265
    %12909 = vmatpush.bf16.msra.mxu0 %v12258
    %12910 = vmatpush.bf16.msra.mxu0 %v12251
    %12911 = vmatmul.bf16.gmra.mxu0 %v11535
    %v12912 = vpop.f32.mrf.mxu0
    %v12913 = vadd.f32 %v11519, %v12912
    %v12914 = vpop.f32.mrf.mxu0
    %12915 = vdwg.mxu0
    %12916 = vmatpush.bf16.msra.mxu0 %v12356
    %12917 = vmatpush.bf16.msra.mxu0 %v12349
    %12918 = vmatpush.bf16.msra.mxu0 %v12342
    %12919 = vmatpush.bf16.msra.mxu0 %v12335
    %12920 = vmatpush.bf16.msra.mxu0 %v12328
    %12921 = vmatpush.bf16.msra.mxu0 %v12321
    %12922 = vmatpush.bf16.msra.mxu0 %v12314
    %12923 = vmatpush.bf16.msra.mxu0 %v12307
    %12924 = vmatmul.bf16.gmra.mxu0 %v11536
    %v12925 = vpop.f32.mrf.mxu0
    %v12926 = vadd.f32 %v12913, %v12925
    %v12927 = vpop.f32.mrf.mxu0
    %12928 = vdwg.mxu0
    %12929 = vmatpush.bf16.msra.mxu0 %v12412
    %12930 = vmatpush.bf16.msra.mxu0 %v12405
    %12931 = vmatpush.bf16.msra.mxu0 %v12398
    %12932 = vmatpush.bf16.msra.mxu0 %v12391
    %12933 = vmatpush.bf16.msra.mxu0 %v12384
    %12934 = vmatpush.bf16.msra.mxu0 %v12377
    %12935 = vmatpush.bf16.msra.mxu0 %v12370
    %12936 = vmatpush.bf16.msra.mxu0 %v12363
    %12937 = vmatmul.bf16.gmra.mxu0 %v11537
    %v12938 = vpop.f32.mrf.mxu0
    %v12939 = vadd.f32 %v12926, %v12938
    %v12940 = vpop.f32.mrf.mxu0
    %12941 = vdwg.mxu0
    %12942 = vmatpush.bf16.msra.mxu0 %v12468
    %12943 = vmatpush.bf16.msra.mxu0 %v12461
    %12944 = vmatpush.bf16.msra.mxu0 %v12454
    %12945 = vmatpush.bf16.msra.mxu0 %v12447
    %12946 = vmatpush.bf16.msra.mxu0 %v12440
    %12947 = vmatpush.bf16.msra.mxu0 %v12433
    %12948 = vmatpush.bf16.msra.mxu0 %v12426
    %12949 = vmatpush.bf16.msra.mxu0 %v12419
    %12950 = vmatmul.bf16.gmra.mxu0 %v11538
    %v12951 = vpop.f32.mrf.mxu0
    %v12952 = vadd.f32 %v12939, %v12951
    %v12953 = vpop.f32.mrf.mxu0
    %12954 = vdwg.mxu0
    %12955 = vmatpush.bf16.msra.mxu0 %v12301
    %12956 = vmatpush.bf16.msra.mxu0 %v12294
    %12957 = vmatpush.bf16.msra.mxu0 %v12287
    %12958 = vmatpush.bf16.msra.mxu0 %v12280
    %12959 = vmatpush.bf16.msra.mxu0 %v12273
    %12960 = vmatpush.bf16.msra.mxu0 %v12266
    %12961 = vmatpush.bf16.msra.mxu0 %v12259
    %12962 = vmatpush.bf16.msra.mxu0 %v12252
    %12963 = vmatmul.bf16.gmra.mxu0 %v11535
    %v12964 = vpop.f32.mrf.mxu0
    %v12965 = vadd.f32 %v11520, %v12964
    %v12966 = vpop.f32.mrf.mxu0
    %12967 = vdwg.mxu0
    %12968 = vmatpush.bf16.msra.mxu0 %v12357
    %12969 = vmatpush.bf16.msra.mxu0 %v12350
    %12970 = vmatpush.bf16.msra.mxu0 %v12343
    %12971 = vmatpush.bf16.msra.mxu0 %v12336
    %12972 = vmatpush.bf16.msra.mxu0 %v12329
    %12973 = vmatpush.bf16.msra.mxu0 %v12322
    %12974 = vmatpush.bf16.msra.mxu0 %v12315
    %12975 = vmatpush.bf16.msra.mxu0 %v12308
    %12976 = vmatmul.bf16.gmra.mxu0 %v11536
    %v12977 = vpop.f32.mrf.mxu0
    %v12978 = vadd.f32 %v12965, %v12977
    %v12979 = vpop.f32.mrf.mxu0
    %12980 = vdwg.mxu0
    %12981 = vmatpush.bf16.msra.mxu0 %v12413
    %12982 = vmatpush.bf16.msra.mxu0 %v12406
    %12983 = vmatpush.bf16.msra.mxu0 %v12399
    %12984 = vmatpush.bf16.msra.mxu0 %v12392
    %12985 = vmatpush.bf16.msra.mxu0 %v12385
    %12986 = vmatpush.bf16.msra.mxu0 %v12378
    %12987 = vmatpush.bf16.msra.mxu0 %v12371
    %12988 = vmatpush.bf16.msra.mxu0 %v12364
    %12989 = vmatmul.bf16.gmra.mxu0 %v11537
    %v12990 = vpop.f32.mrf.mxu0
    %v12991 = vadd.f32 %v12978, %v12990
    %v12992 = vpop.f32.mrf.mxu0
    %12993 = vdwg.mxu0
    %12994 = vmatpush.bf16.msra.mxu0 %v12469
    %12995 = vmatpush.bf16.msra.mxu0 %v12462
    %12996 = vmatpush.bf16.msra.mxu0 %v12455
    %12997 = vmatpush.bf16.msra.mxu0 %v12448
    %12998 = vmatpush.bf16.msra.mxu0 %v12441
    %12999 = vmatpush.bf16.msra.mxu0 %v12434
    %13000 = vmatpush.bf16.msra.mxu0 %v12427
    %13001 = vmatpush.bf16.msra.mxu0 %v12420
    %13002 = vmatmul.bf16.gmra.mxu0 %v11538
    %v13003 = vpop.f32.mrf.mxu0
    %v13004 = vadd.f32 %v12991, %v13003
    %v13005 = vpop.f32.mrf.mxu0
    %13006 = vdwg.mxu0
    %13007 = vmatpush.bf16.msra.mxu0 %v12302
    %13008 = vmatpush.bf16.msra.mxu0 %v12295
    %13009 = vmatpush.bf16.msra.mxu0 %v12288
    %13010 = vmatpush.bf16.msra.mxu0 %v12281
    %13011 = vmatpush.bf16.msra.mxu0 %v12274
    %13012 = vmatpush.bf16.msra.mxu0 %v12267
    %13013 = vmatpush.bf16.msra.mxu0 %v12260
    %13014 = vmatpush.bf16.msra.mxu0 %v12253
    %13015 = vmatmul.bf16.gmra.mxu0 %v11535
    %v13016 = vpop.f32.mrf.mxu0
    %v13017 = vadd.f32 %v11521, %v13016
    %v13018 = vpop.f32.mrf.mxu0
    %13019 = vdwg.mxu0
    %13020 = vmatpush.bf16.msra.mxu0 %v12358
    %13021 = vmatpush.bf16.msra.mxu0 %v12351
    %13022 = vmatpush.bf16.msra.mxu0 %v12344
    %13023 = vmatpush.bf16.msra.mxu0 %v12337
    %13024 = vmatpush.bf16.msra.mxu0 %v12330
    %13025 = vmatpush.bf16.msra.mxu0 %v12323
    %13026 = vmatpush.bf16.msra.mxu0 %v12316
    %13027 = vmatpush.bf16.msra.mxu0 %v12309
    %13028 = vmatmul.bf16.gmra.mxu0 %v11536
    %v13029 = vpop.f32.mrf.mxu0
    %v13030 = vadd.f32 %v13017, %v13029
    %v13031 = vpop.f32.mrf.mxu0
    %13032 = vdwg.mxu0
    %13033 = vmatpush.bf16.msra.mxu0 %v12414
    %13034 = vmatpush.bf16.msra.mxu0 %v12407
    %13035 = vmatpush.bf16.msra.mxu0 %v12400
    %13036 = vmatpush.bf16.msra.mxu0 %v12393
    %13037 = vmatpush.bf16.msra.mxu0 %v12386
    %13038 = vmatpush.bf16.msra.mxu0 %v12379
    %13039 = vmatpush.bf16.msra.mxu0 %v12372
    %13040 = vmatpush.bf16.msra.mxu0 %v12365
    %13041 = vmatmul.bf16.gmra.mxu0 %v11537
    %v13042 = vpop.f32.mrf.mxu0
    %v13043 = vadd.f32 %v13030, %v13042
    %v13044 = vpop.f32.mrf.mxu0
    %13045 = vdwg.mxu0
    %13046 = vmatpush.bf16.msra.mxu0 %v12470
    %13047 = vmatpush.bf16.msra.mxu0 %v12463
    %13048 = vmatpush.bf16.msra.mxu0 %v12456
    %13049 = vmatpush.bf16.msra.mxu0 %v12449
    %13050 = vmatpush.bf16.msra.mxu0 %v12442
    %13051 = vmatpush.bf16.msra.mxu0 %v12435
    %13052 = vmatpush.bf16.msra.mxu0 %v12428
    %13053 = vmatpush.bf16.msra.mxu0 %v12421
    %13054 = vmatmul.bf16.gmra.mxu0 %v11538
    %v13055 = vpop.f32.mrf.mxu0
    %v13056 = vadd.f32 %v13043, %v13055
    %v13057 = vpop.f32.mrf.mxu0
    %13058 = vdwg.mxu0
    %v13059 = vxor.u32 %v12744, 2147483648
    %v13060 = vxor.u32 %v12796, 2147483648
    %v13061 = vxor.u32 %v12848, 2147483648
    %v13062 = vxor.u32 %v12900, 2147483648
    %v13063 = vxor.u32 %v12952, 2147483648
    %v13064 = vxor.u32 %v13004, 2147483648
    %v13065 = vxor.u32 %v13056, 2147483648
    %v13066 = vmul.f32 %v13059, 1.442695
    %v13067 = vpow.pop %v13066
    %v13068 = vmul.f32 %v13060, 1.442695
    %v13069 = vpow.pop %v13068
    %v13070 = vmul.f32 %v13061, 1.442695
    %v13071 = vpow.pop %v13070
    %v13072 = vmul.f32 %v13062, 1.442695
    %v13073 = vpow.pop %v13072
    %v13074 = vmul.f32 %v13063, 1.442695
    %v13075 = vpow.pop %v13074
    %v13076 = vmul.f32 %v13064, 1.442695
    %v13077 = vpow.pop %v13076
    %v13078 = vmul.f32 %v13065, 1.442695
    %v13079 = vpow.pop %v13078
    %v13080 = vadd.f32 %v13067, 1.0
    %v13081 = vadd.f32 %v13069, 1.0
    %v13082 = vadd.f32 %v13071, 1.0
    %v13083 = vadd.f32 %v13073, 1.0
    %v13084 = vadd.f32 %v13075, 1.0
    %v13085 = vadd.f32 %v13077, 1.0
    %v13086 = vadd.f32 %v13079, 1.0
    %v13087 = vrcp.pop %v13080
    %v13088 = vmul.f32 %v13080, %v13087
    %v13089 = vsub.f32 1.0, %v13088
    %v13090 = vmul.f32 %v13087, %v13089
    %v13091 = vadd.f32 %v13087, %v13090
    %vm13092 = vweird.f32 %v13080
    %vm13093 = vweird.f32 %v13087
    %vm13094 = vmor %vm13092, %vm13093
    %v13095 = vsel %vm13094, %v13087, %v13091
    %v13096 = vand.u32 2147483647, %v13080
    %vm13097 = vcmp.eq.f32.partialorder %v13096, 8.507059e+37
    %v13098 = vand.u32 %v13080, 2147483648
    %v13099 = vor.u32 1.1754944e-38, %v13098
    %v13100 = vsel %vm13097, %v13099, %v13095
    %v13101 = vmul.f32 1.0, %v13100
    %v13102 = vrcp.pop %v13081
    %v13103 = vmul.f32 %v13081, %v13102
    %v13104 = vsub.f32 1.0, %v13103
    %v13105 = vmul.f32 %v13102, %v13104
    %v13106 = vadd.f32 %v13102, %v13105
    %vm13107 = vweird.f32 %v13081
    %vm13108 = vweird.f32 %v13102
    %vm13109 = vmor %vm13107, %vm13108
    %v13110 = vsel %vm13109, %v13102, %v13106
    %v13111 = vand.u32 2147483647, %v13081
    %vm13112 = vcmp.eq.f32.partialorder %v13111, 8.507059e+37
    %v13113 = vand.u32 %v13081, 2147483648
    %v13114 = vor.u32 1.1754944e-38, %v13113
    %v13115 = vsel %vm13112, %v13114, %v13110
    %v13116 = vmul.f32 1.0, %v13115
    %v13117 = vrcp.pop %v13082
    %v13118 = vmul.f32 %v13082, %v13117
    %v13119 = vsub.f32 1.0, %v13118
    %v13120 = vmul.f32 %v13117, %v13119
    %v13121 = vadd.f32 %v13117, %v13120
    %vm13122 = vweird.f32 %v13082
    %vm13123 = vweird.f32 %v13117
    %vm13124 = vmor %vm13122, %vm13123
    %v13125 = vsel %vm13124, %v13117, %v13121
    %v13126 = vand.u32 2147483647, %v13082
    %vm13127 = vcmp.eq.f32.partialorder %v13126, 8.507059e+37
    %v13128 = vand.u32 %v13082, 2147483648
    %v13129 = vor.u32 1.1754944e-38, %v13128
    %v13130 = vsel %vm13127, %v13129, %v13125
    %v13131 = vmul.f32 1.0, %v13130
    %v13132 = vrcp.pop %v13083
    %v13133 = vmul.f32 %v13083, %v13132
    %v13134 = vsub.f32 1.0, %v13133
    %v13135 = vmul.f32 %v13132, %v13134
    %v13136 = vadd.f32 %v13132, %v13135
    %vm13137 = vweird.f32 %v13083
    %vm13138 = vweird.f32 %v13132
    %vm13139 = vmor %vm13137, %vm13138
    %v13140 = vsel %vm13139, %v13132, %v13136
    %v13141 = vand.u32 2147483647, %v13083
    %vm13142 = vcmp.eq.f32.partialorder %v13141, 8.507059e+37
    %v13143 = vand.u32 %v13083, 2147483648
    %v13144 = vor.u32 1.1754944e-38, %v13143
    %v13145 = vsel %vm13142, %v13144, %v13140
    %v13146 = vmul.f32 1.0, %v13145
    %v13147 = vrcp.pop %v13084
    %v13148 = vmul.f32 %v13084, %v13147
    %v13149 = vsub.f32 1.0, %v13148
    %v13150 = vmul.f32 %v13147, %v13149
    %v13151 = vadd.f32 %v13147, %v13150
    %vm13152 = vweird.f32 %v13084
    %vm13153 = vweird.f32 %v13147
    %vm13154 = vmor %vm13152, %vm13153
    %v13155 = vsel %vm13154, %v13147, %v13151
    %v13156 = vand.u32 2147483647, %v13084
    %vm13157 = vcmp.eq.f32.partialorder %v13156, 8.507059e+37
    %v13158 = vand.u32 %v13084, 2147483648
    %v13159 = vor.u32 1.1754944e-38, %v13158
    %v13160 = vsel %vm13157, %v13159, %v13155
    %v13161 = vmul.f32 1.0, %v13160
    %v13162 = vrcp.pop %v13085
    %v13163 = vmul.f32 %v13085, %v13162
    %v13164 = vsub.f32 1.0, %v13163
    %v13165 = vmul.f32 %v13162, %v13164
    %v13166 = vadd.f32 %v13162, %v13165
    %vm13167 = vweird.f32 %v13085
    %vm13168 = vweird.f32 %v13162
    %vm13169 = vmor %vm13167, %vm13168
    %v13170 = vsel %vm13169, %v13162, %v13166
    %v13171 = vand.u32 2147483647, %v13085
    %vm13172 = vcmp.eq.f32.partialorder %v13171, 8.507059e+37
    %v13173 = vand.u32 %v13085, 2147483648
    %v13174 = vor.u32 1.1754944e-38, %v13173
    %v13175 = vsel %vm13172, %v13174, %v13170
    %v13176 = vmul.f32 1.0, %v13175
    %v13177 = vrcp.pop %v13086
    %v13178 = vmul.f32 %v13086, %v13177
    %v13179 = vsub.f32 1.0, %v13178
    %v13180 = vmul.f32 %v13177, %v13179
    %v13181 = vadd.f32 %v13177, %v13180
    %vm13182 = vweird.f32 %v13086
    %vm13183 = vweird.f32 %v13177
    %vm13184 = vmor %vm13182, %vm13183
    %v13185 = vsel %vm13184, %v13177, %v13181
    %v13186 = vand.u32 2147483647, %v13086
    %vm13187 = vcmp.eq.f32.partialorder %v13186, 8.507059e+37
    %v13188 = vand.u32 %v13086, 2147483648
    %v13189 = vor.u32 1.1754944e-38, %v13188
    %v13190 = vsel %vm13187, %v13189, %v13185
    %v13191 = vmul.f32 1.0, %v13190
    %v13198 = vrot.slane %v13116, 4
    %v13199 = vrot.slane %v13146, 4
    %v13200 = vrot.slane %v13176, 4
    %v13201 = vsel %vm5264, %v13101, %v13198
    %v13202 = vsel %vm5264, %v13131, %v13199
    %v13203 = vsel %vm5264, %v13161, %v13200
    %13207 = vst [vmem:[#allocation6] sm:$0xff] %v13201
    %13208 = vst [vmem:[#allocation6 + $0x8] sm:$0xff] %v13202
    %13209 = vst [vmem:[#allocation6 + $0x10] sm:$0xff] %v13203
    %13210 = vst.msk [vmem:[#allocation6 + $0x18] sm:$0xf] %vm9297, %v13191
    // Predicated region
    $region46: #{vae_forward.1} parent=1 // pred_check
      _
    $region47: #{vae_forward.1} parent=1 // pred_check_branch
      %13212 = sbr.rel (0) target = $region49
    $region48: #{vae_forward.1} parent=1 // pred_region
      %13214 = vsyncadd [#allocation3], 0
      %s13216 = sshll.u32 [#allocation2], 4
      %s13217 = int_to_ptr.vmem [resolvable:$true] %s13216
      %s13218 = sshll.u32 %s11, 4
      %s13219 = int_to_ptr.hbm [resolvable:$true] %s13218
      %13221 = dma.vmem_to_hbm [thread:$0]  %s13217, 448, %s13219, [#allocation3]
    $region49: #{vae_forward.1} parent=1 // pred_fallthru
      _
    // Predicated region
    $region50: #{vae_forward.1} parent=1 // pred_check
      _
    $region51: #{vae_forward.1} parent=1 // pred_check_branch
      %13223 = sbr.rel (0) target = $region53
    $region52: #{vae_forward.1} parent=1 // pred_region
      %13225 = vsyncadd [#allocation5], 0
      %s13227 = sshll.u32 [#allocation4], 4
      %s13228 = int_to_ptr.vmem [resolvable:$true] %s13227
      %s13229 = sshll.u32 %s12, 4
      %s13230 = int_to_ptr.hbm [resolvable:$true] %s13229
      %13232 = dma.vmem_to_hbm [thread:$0]  %s13228, 448, %s13230, [#allocation5]
    $region53: #{vae_forward.1} parent=1 // pred_fallthru
      _
    // Predicated region
    $region54: #{vae_forward.1} parent=1 // pred_check
      _
    $region55: #{vae_forward.1} parent=1 // pred_check_branch
      %13234 = sbr.rel (0) target = $region57
    $region56: #{vae_forward.1} parent=1 // pred_region
      %13236 = vsyncadd [#allocation5], 0
      %s13238 = sshll.u32 [#allocation6], 4
      %s13239 = int_to_ptr.vmem [resolvable:$true] %s13238
      %s13240 = sshll.u32 %s13, 4
      %s13241 = int_to_ptr.hbm [resolvable:$true] %s13240
      %13243 = dma.vmem_to_hbm [thread:$0]  %s13239, 448, %s13241, [#allocation5]
    $region57: #{vae_forward.1} parent=1 // pred_fallthru
      _
    // Predicated region
    $region58: #{vae_forward.1} parent=1 // pred_check
      _
    $region59: #{vae_forward.1} parent=1 // pred_check_branch
      %13245 = sbr.rel (0) target = $region61
    $region60: #{vae_forward.1} parent=1 // pred_region
      _
    $region61: #{vae_forward.1} parent=1 // pred_fallthru
      _
    // Predicated region
    $region62: #{vae_forward.1} parent=1 // pred_check
      _
    $region63: #{vae_forward.1} parent=1 // pred_check_branch
      %13247 = sbr.rel (0) target = $region65
    $region64: #{vae_forward.1} parent=1 // pred_region
      %13249 = dma.done [#allocation3], 448
    $region65: #{vae_forward.1} parent=1 // pred_fallthru
      _
    // Predicated region
    $region66: #{vae_forward.1} parent=1 // pred_check
      _
    $region67: #{vae_forward.1} parent=1 // pred_check_branch
      %13251 = sbr.rel (0) target = $region69
    $region68: #{vae_forward.1} parent=1 // pred_region
      %13253 = dma.done [#allocation5], 448
    $region69: #{vae_forward.1} parent=1 // pred_fallthru
      _
    // Predicated region
    $region70: #{vae_forward.1} parent=1 // pred_check
      _
    $region71: #{vae_forward.1} parent=1 // pred_check_branch
      %13255 = sbr.rel (0) target = $region73
    $region72: #{vae_forward.1} parent=1 // pred_region
      %13257 = dma.done [#allocation5], 448
    $region73: #{vae_forward.1} parent=1 // pred_fallthru
      _
    // Predicated region
    $region74: #{vae_forward.1} parent=1 // pred_check
      _
    $region75: #{vae_forward.1} parent=1 // pred_check_branch
      %13259 = sbr.rel (0) target = $region77
    $region76: #{vae_forward.1} parent=1 // pred_region
      _
    $region77: #{vae_forward.1} parent=1 // pred_fallthru
      _
    %13260 = vsyncpa [#allocation3], 1
    %13261 = vsyncpa [#allocation5], 1

</llo_original>
